<compile_context>
chip_gen: v7x
topology: tpu7x:2x2x1
jax: 0.10.0
libtpu: 0.0.40
codegen_flags: <defaults>
</compile_context>

<pallas_src>
import numpy as np
import jax
import jax.numpy as jnp
from jax.experimental import pallas as pl
from jax.experimental.pallas import tpu as pltpu

jax.config.update("jax_default_matmul_precision", "float32")

# -------------------- model hyper-params (small, deterministic) --------------------
B = 2        # batch
T = 8        # sequence length
C_IN = 4     # input channels
DIM = 32     # encoder feature dim ("dim" in the torch module; default 128 -> shrunk)
ALPHA = 0.05
T_TEMP = 0.07  # self.T is passed to time_frequency_contrastive_loss but never used

_EPS_NORM = 1e-12   # F.normalize default eps
_EPS_FFT = 1e-6     # convert_coeff eps


# ================================ Pallas kernels ================================

def fused_front(x_q, x_k, w_f, w_fz, w_s, dft):
    """Encoder projections + TF contrastive loss + normalise + DFT + amplitude.

    Single grid step; everything VMEM resident.
    Returns (tf_loss_sum(1,1), q_amp, q_re, q_im, k_amp, k_re, k_im) with the
    spectra shaped (B, F, DIM).
    """
    b, t, c = x_q.shape
    d = w_s.shape[1]
    f = dft.shape[1]
    xq2 = x_q.reshape(b * t, c)
    xk2 = x_k.reshape(b * t, c)

    def kernel(xq_ref, xk_ref, wf_ref, wfz_ref, ws_ref, dft_ref,
               tf_ref, qa_ref, qr_ref, qi_ref, ka_ref, kr_ref, ki_ref):
        xq = xq_ref[...]
        xk = xk_ref[...]
        # encoder projections (x_feature, frequency_trend_z = x @ [W_s|W_t], q_s, k_s)
        feat = jnp.dot(xq, wf_ref[...], preferred_element_type=jnp.float32)   # (B*T, 2D)
        fz = jnp.dot(xq, wfz_ref[...], preferred_element_type=jnp.float32)    # (B*T, 2D)
        q_s = jnp.dot(xq, ws_ref[...], preferred_element_type=jnp.float32)    # (B*T, D)
        k_s = jnp.dot(xk, ws_ref[...], preferred_element_type=jnp.float32)    # (B*T, D)

        # ---- time_frequency_contrastive_loss (un-scaled sum over batch) ----
        tf_sum = jnp.float32(0.0)
        for bi in range(b):                                  # static unroll, B small
            fb = feat[bi * t:(bi + 1) * t, :]                # (T, 2D)
            zb = fz[bi * t:(bi + 1) * t, :]                  # (T, 2D)
            pos = jnp.sum(fb * zb, axis=-1, keepdims=True)   # (T, 1)
            pos = pos / jnp.maximum(jnp.sqrt(jnp.sum(pos * pos)), _EPS_NORM)
            pos = jnp.exp(pos)
            neg = jax.lax.dot_general(fb, zb, (((1,), (1,)), ((), ())),
                                      preferred_element_type=jnp.float32)     # (T, T)
            neg = neg / jnp.maximum(
                jnp.sqrt(jnp.sum(neg * neg, axis=-1, keepdims=True)), _EPS_NORM)
            neg = jnp.sum(jnp.exp(neg), axis=-1, keepdims=True)
            tf_sum = tf_sum + (-jnp.sum(jnp.log(pos / neg)))
        tf_ref[...] = tf_sum.reshape(1, 1)

        # ---- F.normalize(dim=-1) -> rfft (DFT matmul) -> convert_coeff amplitude ----
        cosm = dft_ref[0]          # (F, T)
        nsin = dft_ref[1]          # (F, T) == -sin
        frow = jax.lax.broadcasted_iota(jnp.int32, (f, d), 0)
        if t % 2 == 0:
            zero_im = (frow == 0) | (frow == f - 1)          # DC + Nyquist rows
        else:
            zero_im = frow == 0                               # DC row only
        for src, a_ref, r_ref, i_ref in ((q_s, qa_ref, qr_ref, qi_ref),
                                         (k_s, ka_ref, kr_ref, ki_ref)):
            for bi in range(b):
                sb = src[bi * t:(bi + 1) * t, :]                              # (T, D)
                nrm = jnp.sqrt(jnp.sum(sb * sb, axis=-1, keepdims=True))
                sn = sb / jnp.maximum(nrm, _EPS_NORM)
                real = jnp.dot(cosm, sn, preferred_element_type=jnp.float32)  # (F, D)
                imag = jnp.dot(nsin, sn, preferred_element_type=jnp.float32)  # (F, D)
                # pin identically-zero imag bins to exactly +0.0 (atan2 branch stability)
                imag = jnp.where(zero_im, jnp.float32(0.0), imag)
                re_e = real + jnp.float32(_EPS_FFT)
                im_e = imag + jnp.float32(_EPS_FFT)
                a_ref[bi] = jnp.sqrt(re_e * re_e + im_e * im_e)
                r_ref[bi] = real
                i_ref[bi] = imag

    scal = jax.ShapeDtypeStruct((1, 1), jnp.float32)
    spec = jax.ShapeDtypeStruct((b, f, d), jnp.float32)
    spec_bs = pl.BlockSpec((b, f, d), lambda i: (0, 0, 0))
    return pl.pallas_call(
        kernel,
        out_shape=(scal, spec, spec, spec, spec, spec, spec),
        grid=(1,),
        in_specs=[pl.BlockSpec((b * t, c), lambda i: (0, 0)),
                  pl.BlockSpec((b * t, c), lambda i: (0, 0)),
                  pl.BlockSpec(w_f.shape, lambda i: (0, 0)),
                  pl.BlockSpec(w_fz.shape, lambda i: (0, 0)),
                  pl.BlockSpec(w_s.shape, lambda i: (0, 0)),
                  pl.BlockSpec(dft.shape, lambda i: (0, 0, 0))],
        out_specs=(pl.BlockSpec((1, 1), lambda i: (0, 0)),
                   spec_bs, spec_bs, spec_bs, spec_bs, spec_bs, spec_bs),
        compiler_params=pltpu.CompilerParams(dimension_semantics=("arbitrary",)),
    )(xq2, xk2, w_f, w_fz, w_s, dft)


def fused_seasonal(z_amp, z_ph):
    """Both instance-contrastive losses (amplitude + phase) in one single-step call.

    z_*: (F, 2B, D), i.e. torch's cat([z1,z2],0).transpose(0,1) built in the wrapper.
    Returns icl(amp) + icl(phase).  The tril/triu diagonal removal of the torch code is
    realised by masking the diagonal to -inf before log_softmax (mathematically identical).
    """
    f, n, d = z_amp.shape
    b = n // 2

    def kernel(za_ref, zp_ref, out_ref):
        row = jax.lax.broadcasted_iota(jnp.int32, (f, n, n), 1)
        col = jax.lax.broadcasted_iota(jnp.int32, (f, n, n), 2)
        diag = row == col
        # positives: (i, B+i) for i<B and (B+i, i)
        pos_mask = ((row < b) & (col == row + b)) | ((row >= b) & (col == row - b))
        total = jnp.float32(0.0)
        for z_ref in (za_ref, zp_ref):
            z = z_ref[...]                                        # (F, 2B, D)
            sim = jnp.einsum("fnd,fmd->fnm", z, z,
                             preferred_element_type=jnp.float32)  # (F, 2B, 2B)
            masked = jnp.where(diag, jnp.float32(-1e30), sim)
            m = jnp.max(masked, axis=-1, keepdims=True)
            lse = jnp.log(jnp.sum(jnp.exp(masked - m), axis=-1, keepdims=True)) + m
            nll = lse - masked                                    # -log_softmax
            total = total + jnp.sum(jnp.where(pos_mask, nll, jnp.float32(0.0)))
        out_ref[...] = total.reshape(1, 1)

    out = pl.pallas_call(
        kernel,
        out_shape=jax.ShapeDtypeStruct((1, 1), jnp.float32),
        grid=(1,),
        in_specs=[pl.BlockSpec((f, n, d), lambda i: (0, 0, 0)),
                  pl.BlockSpec((f, n, d), lambda i: (0, 0, 0))],
        out_specs=pl.BlockSpec((1, 1), lambda i: (0, 0)),
        compiler_params=pltpu.CompilerParams(dimension_semantics=("arbitrary",)),
    )(z_amp, z_ph)
    # (mean over (F,B) of part1 + mean over (F,B) of part2) / 2, summed over both pairs
    return out[0, 0] / (2.0 * f * b)


# ================================ model glue ================================

def make_params(key):
    k1, k2, k3 = jax.random.split(key, 3)
    s = 1.0 / np.sqrt(C_IN)
    return {
        "W_t": jax.random.normal(k1, (C_IN, DIM), jnp.float32) * s,
        "W_s": jax.random.normal(k2, (C_IN, DIM), jnp.float32) * s,
        "W_f": jax.random.normal(k3, (C_IN, 2 * DIM), jnp.float32) * s,
    }


def _dft_matrices(t_len):
    """Stacked (2, F, T) [cos; -sin] real-DFT matrix (rfft along the time axis)."""
    f = t_len // 2 + 1
    ang = 2.0 * np.pi * np.arange(f)[:, None] * np.arange(t_len)[None, :] / t_len
    return jnp.asarray(np.stack([np.cos(ang), -np.sin(ang)], axis=0), jnp.float32)


def mff_ft_forward(x_q, x_k, params, alpha=ALPHA):
    # rand_idx (np.random.randint) is computed but unused in the torch forward -> omitted.
    w_s, w_t, w_f = params["W_s"], params["W_t"], params["W_f"]
    # frequency_trend_z = cat([q_s, q_t], -1) == x_q @ [W_s | W_t]; AdaptiveAvgPool1d(2*dim)
    # on a length-2*dim axis is the identity, so `liner` is a no-op.
    w_fz = jnp.concatenate([w_s, w_t], axis=-1)
    dft = _dft_matrices(x_q.shape[1])

    tf_sum, q_amp, q_re, q_im, k_amp, k_re, k_im = fused_front(
        x_q, x_k, w_f, w_fz, w_s, dft)
    loss = alpha * tf_sum[0, 0]

    # TODO(synk): atan2 has no guaranteed Mosaic lowering, so the phase (and the tiny
    # concat/transpose glue) is computed in plain JAX between the two fused kernels.
    q_ph = jnp.arctan2(q_im, q_re + _EPS_FFT)
    k_ph = jnp.arctan2(k_im, k_re + _EPS_FFT)
    z_amp = jnp.transpose(jnp.concatenate([q_amp, k_amp], axis=0), (1, 0, 2))  # (F,2B,D)
    z_ph = jnp.transpose(jnp.concatenate([q_ph, k_ph], axis=0), (1, 0, 2))

    seasonal = fused_seasonal(z_amp, z_ph)
    return loss + alpha * (seasonal / 2.0)


# ================================ pure-JAX reference ================================

def _ref_icl(z1, z2):
    bsz = z1.shape[0]
    z = jnp.concatenate([z1, z2], axis=0)
    z = jnp.transpose(z, (1, 0, 2))
    sim = jnp.einsum("fbd,fcd->fbc", z, z)
    logits = jnp.tril(sim, k=-1)[:, :, :-1] + jnp.triu(sim, k=1)[:, :, 1:]
    logits = -jax.nn.log_softmax(logits, axis=-1)
    i = jnp.arange(bsz)
    return (logits[:, i, bsz + i - 1].mean() + logits[:, bsz + i, i].mean()) / 2.0


def _ref_tf(t_z, f_z, alpha):
    pos = jnp.sum(t_z * f_z, axis=-1)
    pos = pos / jnp.maximum(jnp.linalg.norm(pos, axis=1, keepdims=True), _EPS_NORM)
    pos = jnp.exp(pos)
    neg = jnp.einsum("btc,bsc->bts", t_z, f_z)
    neg = neg / jnp.maximum(jnp.linalg.norm(neg, axis=-1, keepdims=True), _EPS_NORM)
    neg = jnp.sum(jnp.exp(neg), axis=-1)
    return alpha * (-jnp.sum(jnp.log(pos / neg)))


def _ref_convert_coeff(xc, t_len):
    re = jnp.real(xc)
    im = jnp.imag(xc)
    # For real input the imaginary part at DC (and Nyquist when T is even) is identically
    # zero; pin it to exactly +0.0 (what torch.fft.rfft produces) so atan2's +/-pi branch
    # is deterministic and comparable against the DFT-matmul kernel path.
    f = xc.shape[1]
    rows = [0] + ([f - 1] if t_len % 2 == 0 else [])
    mask = np.zeros((1, f, 1), dtype=bool)
    mask[:, rows, :] = True
    im = jnp.where(jnp.asarray(mask), jnp.float32(0.0), im)
    amp = jnp.sqrt((re + _EPS_FFT) ** 2 + (im + _EPS_FFT) ** 2)
    ph = jnp.arctan2(im, re + _EPS_FFT)
    return amp, ph


def ref_forward(x_q, x_k, params, alpha=ALPHA):
    q_t = jnp.einsum("btc,cd->btd", x_q, params["W_t"])
    q_s = jnp.einsum("btc,cd->btd", x_q, params["W_s"])
    feat = jnp.einsum("btc,cd->btd", x_q, params["W_f"])
    f_z = jnp.concatenate([q_s, q_t], axis=-1)
    loss = _ref_tf(feat, f_z, alpha)

    def nrm(v):
        return v / jnp.maximum(jnp.linalg.norm(v, axis=-1, keepdims=True), _EPS_NORM)

    k_s = jnp.einsum("btc,cd->btd", x_k, params["W_s"])
    t_len = x_q.shape[1]
    qf = jnp.fft.rfft(nrm(q_s), axis=1)
    kf = jnp.fft.rfft(nrm(k_s), axis=1)
    qa, qp = _ref_convert_coeff(qf, t_len)
    ka, kp = _ref_convert_coeff(kf, t_len)
    seasonal = _ref_icl(qa, ka) + _ref_icl(qp, kp)
    return loss + alpha * (seasonal / 2.0)


# ================================ main ================================

if __name__ == "__main__":
    key = jax.random.PRNGKey(0)
    kq, kk, kp = jax.random.split(key, 3)
    x_q = jax.random.normal(kq, (B, T, C_IN), jnp.float32)
    x_k = jax.random.normal(kk, (B, T, C_IN), jnp.float32)
    params = make_params(kp)

    fwd = jax.jit(mff_ft_forward)
    loss = jax.block_until_ready(fwd(x_q, x_k, params))
    loss_ref = jax.block_until_ready(ref_forward(x_q, x_k, params))

    np.testing.assert_allclose(np.asarray(loss), np.asarray(loss_ref),
                               rtol=2e-3, atol=2e-3)
    print("KERNEL_OK")
</pallas_src>

<mosaic_0001>
module attributes {stable_mosaic.version = 11 : i64} {
  func.func @kernel(%arg0: i32, %arg1: memref<16x4xf32, #tpu.memory_space<vmem>>, %arg2: memref<16x4xf32, #tpu.memory_space<vmem>>, %arg3: memref<4x64xf32, #tpu.memory_space<vmem>>, %arg4: memref<4x64xf32, #tpu.memory_space<vmem>>, %arg5: memref<4x32xf32, #tpu.memory_space<vmem>>, %arg6: memref<2x5x8xf32, #tpu.memory_space<vmem>>, %arg7: memref<1x1xf32, #tpu.memory_space<vmem>>, %arg8: memref<2x5x32xf32, #tpu.memory_space<vmem>>, %arg9: memref<2x5x32xf32, #tpu.memory_space<vmem>>, %arg10: memref<2x5x32xf32, #tpu.memory_space<vmem>>, %arg11: memref<2x5x32xf32, #tpu.memory_space<vmem>>, %arg12: memref<2x5x32xf32, #tpu.memory_space<vmem>>, %arg13: memref<2x5x32xf32, #tpu.memory_space<vmem>>) attributes {dimension_semantics = [#tpu.dimension_semantics<arbitrary>], iteration_bounds = array<i64: 1>, scalar_prefetch = 0 : i64, scratch_operands = 0 : i64, tpu.core_type = #tpu.core_type<tc>, window_params = [{pipeline_mode = #tpu.pipeline_mode<synchronous>, transform_indices = @transform_0, window_bounds = array<i64: 16, 4>}, {pipeline_mode = #tpu.pipeline_mode<synchronous>, transform_indices = @transform_1, window_bounds = array<i64: 16, 4>}, {pipeline_mode = #tpu.pipeline_mode<synchronous>, transform_indices = @transform_2, window_bounds = array<i64: 4, 64>}, {pipeline_mode = #tpu.pipeline_mode<synchronous>, transform_indices = @transform_3, window_bounds = array<i64: 4, 64>}, {pipeline_mode = #tpu.pipeline_mode<synchronous>, transform_indices = @transform_4, window_bounds = array<i64: 4, 32>}, {pipeline_mode = #tpu.pipeline_mode<synchronous>, transform_indices = @transform_5, window_bounds = array<i64: 2, 5, 8>}, {pipeline_mode = #tpu.pipeline_mode<synchronous>, transform_indices = @transform_6, window_bounds = array<i64: 1, 1>}, {pipeline_mode = #tpu.pipeline_mode<synchronous>, transform_indices = @transform_7, window_bounds = array<i64: 2, 5, 32>}, {pipeline_mode = #tpu.pipeline_mode<synchronous>, transform_indices = @transform_8, window_bounds = array<i64: 2, 5, 32>}, {pipeline_mode = #tpu.pipeline_mode<synchronous>, transform_indices = @transform_9, window_bounds = array<i64: 2, 5, 32>}, {pipeline_mode = #tpu.pipeline_mode<synchronous>, transform_indices = @transform_10, window_bounds = array<i64: 2, 5, 32>}, {pipeline_mode = #tpu.pipeline_mode<synchronous>, transform_indices = @transform_11, window_bounds = array<i64: 2, 5, 32>}, {pipeline_mode = #tpu.pipeline_mode<synchronous>, transform_indices = @transform_12, window_bounds = array<i64: 2, 5, 32>}]} {
    %c0 = arith.constant 0 : index
    %c0_0 = arith.constant 0 : index
    %0 = vector.load %arg1[%c0, %c0_0] : memref<16x4xf32, #tpu.memory_space<vmem>>, vector<16x4xf32>
    %c0_1 = arith.constant 0 : index
    %c0_2 = arith.constant 0 : index
    %1 = vector.load %arg2[%c0_1, %c0_2] : memref<16x4xf32, #tpu.memory_space<vmem>>, vector<16x4xf32>
    %c0_3 = arith.constant 0 : index
    %c0_4 = arith.constant 0 : index
    %2 = vector.load %arg3[%c0_3, %c0_4] : memref<4x64xf32, #tpu.memory_space<vmem>>, vector<4x64xf32>
    %cst = arith.constant dense<0.000000e+00> : vector<16x64xf32>
    %3 = tpu.matmul %0, %2, %cst {dimension_numbers = #tpu.dot_dimension_numbers<[1], [0], [0], [1], [0, 0, 1, 1], [], []>, precision = #tpu.contract_precision<fp32>} : vector<16x4xf32>, vector<4x64xf32>, vector<16x64xf32> -> vector<16x64xf32>
    %c0_5 = arith.constant 0 : index
    %c0_6 = arith.constant 0 : index
    %4 = vector.load %arg4[%c0_5, %c0_6] : memref<4x64xf32, #tpu.memory_space<vmem>>, vector<4x64xf32>
    %cst_7 = arith.constant dense<0.000000e+00> : vector<16x64xf32>
    %5 = tpu.matmul %0, %4, %cst_7 {dimension_numbers = #tpu.dot_dimension_numbers<[1], [0], [0], [1], [0, 0, 1, 1], [], []>, precision = #tpu.contract_precision<fp32>} : vector<16x4xf32>, vector<4x64xf32>, vector<16x64xf32> -> vector<16x64xf32>
    %c0_8 = arith.constant 0 : index
    %c0_9 = arith.constant 0 : index
    %6 = vector.load %arg5[%c0_8, %c0_9] : memref<4x32xf32, #tpu.memory_space<vmem>>, vector<4x32xf32>
    %cst_10 = arith.constant dense<0.000000e+00> : vector<16x32xf32>
    %7 = tpu.matmul %0, %6, %cst_10 {dimension_numbers = #tpu.dot_dimension_numbers<[1], [0], [0], [1], [0, 0, 1, 1], [], []>, precision = #tpu.contract_precision<fp32>} : vector<16x4xf32>, vector<4x32xf32>, vector<16x32xf32> -> vector<16x32xf32>
    %c0_11 = arith.constant 0 : index
    %c0_12 = arith.constant 0 : index
    %8 = vector.load %arg5[%c0_11, %c0_12] : memref<4x32xf32, #tpu.memory_space<vmem>>, vector<4x32xf32>
    %cst_13 = arith.constant dense<0.000000e+00> : vector<16x32xf32>
    %9 = tpu.matmul %1, %8, %cst_13 {dimension_numbers = #tpu.dot_dimension_numbers<[1], [0], [0], [1], [0, 0, 1, 1], [], []>, precision = #tpu.contract_precision<fp32>} : vector<16x4xf32>, vector<4x32xf32>, vector<16x32xf32> -> vector<16x32xf32>
    %10 = vector.extract_strided_slice %3 {offsets = [0, 0], sizes = [8, 64], strides = [1, 1]} : vector<16x64xf32> to vector<8x64xf32>
    %11 = vector.extract_strided_slice %5 {offsets = [0, 0], sizes = [8, 64], strides = [1, 1]} : vector<16x64xf32> to vector<8x64xf32>
    %12 = arith.mulf %10, %11 : vector<8x64xf32>
    %cst_14 = arith.constant dense<0.000000e+00> : vector<8xf32>
    %13 = vector.multi_reduction <add>, %12, %cst_14 [1] : vector<8x64xf32> to vector<8xf32>
    %14 = vector.shape_cast %13 : vector<8xf32> to vector<8x1xf32>
    %15 = arith.mulf %14, %14 : vector<8x1xf32>
    %16 = vector.shape_cast %15 : vector<8x1xf32> to vector<1x8x1xf32>
    %cst_15 = arith.constant dense<0.000000e+00> : vector<1xf32>
    %17 = vector.multi_reduction <add>, %16, %cst_15 [1, 2] : vector<1x8x1xf32> to vector<1xf32>
    %18 = vector.shape_cast %17 : vector<1xf32> to vector<1x1x1xf32>
    %19 = vector.extract %18[0, 0, 0] : f32 from vector<1x1x1xf32>
    %20 = math.sqrt %19 : f32
    %cst_16 = arith.constant 9.99999996E-13 : f32
    %21 = arith.maximumf %20, %cst_16 : f32
    %22 = vector.broadcast %21 : f32 to vector<8x1xf32>
    %23 = arith.divf %14, %22 : vector<8x1xf32>
    %24 = math.exp %23 : vector<8x1xf32>
    %cst_17 = arith.constant dense<0.000000e+00> : vector<8x8xf32>
    %25 = tpu.matmul %10, %11, %cst_17 {dimension_numbers = #tpu.dot_dimension_numbers<[1], [1], [0], [0], [0, 0, 1, 0], [], []>, precision = #tpu.contract_precision<fp32>} : vector<8x64xf32>, vector<8x64xf32>, vector<8x8xf32> -> vector<8x8xf32>
    %26 = arith.mulf %25, %25 : vector<8x8xf32>
    %cst_18 = arith.constant dense<0.000000e+00> : vector<8xf32>
    %27 = vector.multi_reduction <add>, %26, %cst_18 [1] : vector<8x8xf32> to vector<8xf32>
    %28 = vector.shape_cast %27 : vector<8xf32> to vector<8x1xf32>
    %29 = math.sqrt %28 : vector<8x1xf32>
    %cst_19 = arith.constant 9.99999996E-13 : f32
    %30 = vector.broadcast %cst_19 : f32 to vector<8x1xf32>
    %31 = arith.maximumf %29, %30 : vector<8x1xf32>
    %32 = vector.broadcast %31 : vector<8x1xf32> to vector<8x8xf32>
    %33 = arith.divf %25, %32 : vector<8x8xf32>
    %34 = math.exp %33 : vector<8x8xf32>
    %cst_20 = arith.constant dense<0.000000e+00> : vector<8xf32>
    %35 = vector.multi_reduction <add>, %34, %cst_20 [1] : vector<8x8xf32> to vector<8xf32>
    %36 = vector.shape_cast %35 : vector<8xf32> to vector<8x1xf32>
    %37 = arith.divf %24, %36 : vector<8x1xf32>
    %38 = math.log %37 : vector<8x1xf32>
    %39 = vector.shape_cast %38 : vector<8x1xf32> to vector<1x8x1xf32>
    %cst_21 = arith.constant dense<0.000000e+00> : vector<1xf32>
    %40 = vector.multi_reduction <add>, %39, %cst_21 [1, 2] : vector<1x8x1xf32> to vector<1xf32>
    %41 = vector.shape_cast %40 : vector<1xf32> to vector<1x1x1xf32>
    %42 = vector.extract %41[0, 0, 0] : f32 from vector<1x1x1xf32>
    %cst_22 = arith.constant 0.000000e+00 : f32
    %43 = arith.subf %cst_22, %42 : f32
    %cst_23 = arith.constant 0.000000e+00 : f32
    %44 = arith.addf %cst_23, %43 : f32
    %45 = vector.extract_strided_slice %3 {offsets = [8, 0], sizes = [8, 64], strides = [1, 1]} : vector<16x64xf32> to vector<8x64xf32>
    %46 = vector.extract_strided_slice %5 {offsets = [8, 0], sizes = [8, 64], strides = [1, 1]} : vector<16x64xf32> to vector<8x64xf32>
    %47 = arith.mulf %45, %46 : vector<8x64xf32>
    %cst_24 = arith.constant dense<0.000000e+00> : vector<8xf32>
    %48 = vector.multi_reduction <add>, %47, %cst_24 [1] : vector<8x64xf32> to vector<8xf32>
    %49 = vector.shape_cast %48 : vector<8xf32> to vector<8x1xf32>
    %50 = arith.mulf %49, %49 : vector<8x1xf32>
    %51 = vector.shape_cast %50 : vector<8x1xf32> to vector<1x8x1xf32>
    %cst_25 = arith.constant dense<0.000000e+00> : vector<1xf32>
    %52 = vector.multi_reduction <add>, %51, %cst_25 [1, 2] : vector<1x8x1xf32> to vector<1xf32>
    %53 = vector.shape_cast %52 : vector<1xf32> to vector<1x1x1xf32>
    %54 = vector.extract %53[0, 0, 0] : f32 from vector<1x1x1xf32>
    %55 = math.sqrt %54 : f32
    %cst_26 = arith.constant 9.99999996E-13 : f32
    %56 = arith.maximumf %55, %cst_26 : f32
    %57 = vector.broadcast %56 : f32 to vector<8x1xf32>
    %58 = arith.divf %49, %57 : vector<8x1xf32>
    %59 = math.exp %58 : vector<8x1xf32>
    %cst_27 = arith.constant dense<0.000000e+00> : vector<8x8xf32>
    %60 = tpu.matmul %45, %46, %cst_27 {dimension_numbers = #tpu.dot_dimension_numbers<[1], [1], [0], [0], [0, 0, 1, 0], [], []>, precision = #tpu.contract_precision<fp32>} : vector<8x64xf32>, vector<8x64xf32>, vector<8x8xf32> -> vector<8x8xf32>
    %61 = arith.mulf %60, %60 : vector<8x8xf32>
    %cst_28 = arith.constant dense<0.000000e+00> : vector<8xf32>
    %62 = vector.multi_reduction <add>, %61, %cst_28 [1] : vector<8x8xf32> to vector<8xf32>
    %63 = vector.shape_cast %62 : vector<8xf32> to vector<8x1xf32>
    %64 = math.sqrt %63 : vector<8x1xf32>
    %cst_29 = arith.constant 9.99999996E-13 : f32
    %65 = vector.broadcast %cst_29 : f32 to vector<8x1xf32>
    %66 = arith.maximumf %64, %65 : vector<8x1xf32>
    %67 = vector.broadcast %66 : vector<8x1xf32> to vector<8x8xf32>
    %68 = arith.divf %60, %67 : vector<8x8xf32>
    %69 = math.exp %68 : vector<8x8xf32>
    %cst_30 = arith.constant dense<0.000000e+00> : vector<8xf32>
    %70 = vector.multi_reduction <add>, %69, %cst_30 [1] : vector<8x8xf32> to vector<8xf32>
    %71 = vector.shape_cast %70 : vector<8xf32> to vector<8x1xf32>
    %72 = arith.divf %59, %71 : vector<8x1xf32>
    %73 = math.log %72 : vector<8x1xf32>
    %74 = vector.shape_cast %73 : vector<8x1xf32> to vector<1x8x1xf32>
    %cst_31 = arith.constant dense<0.000000e+00> : vector<1xf32>
    %75 = vector.multi_reduction <add>, %74, %cst_31 [1, 2] : vector<1x8x1xf32> to vector<1xf32>
    %76 = vector.shape_cast %75 : vector<1xf32> to vector<1x1x1xf32>
    %77 = vector.extract %76[0, 0, 0] : f32 from vector<1x1x1xf32>
    %cst_32 = arith.constant 0.000000e+00 : f32
    %78 = arith.subf %cst_32, %77 : f32
    %79 = arith.addf %44, %78 : f32
    %80 = vector.broadcast %79 : f32 to vector<1x1xf32>
    %c0_33 = arith.constant 0 : index
    %c0_34 = arith.constant 0 : index
    %81 = vector.load %arg7[%c0_33, %c0_34] : memref<1x1xf32, #tpu.memory_space<vmem>>, vector<1x1xf32>
    tpu.vector_store %arg7[%c0_33, %c0_34], %80 {strides = array<i32>} : memref<1x1xf32, #tpu.memory_space<vmem>>, vector<1x1xf32>,
    %c0_35 = arith.constant 0 : index
    %c0_36 = arith.constant 0 : index
    %c0_37 = arith.constant 0 : index
    %82 = vector.load %arg6[%c0_35, %c0_36, %c0_37] : memref<2x5x8xf32, #tpu.memory_space<vmem>>, vector<1x5x8xf32>
    %83 = vector.shape_cast %82 : vector<1x5x8xf32> to vector<5x8xf32>
    %c1 = arith.constant 1 : index
    %c0_38 = arith.constant 0 : index
    %c0_39 = arith.constant 0 : index
    %84 = vector.load %arg6[%c1, %c0_38, %c0_39] : memref<2x5x8xf32, #tpu.memory_space<vmem>>, vector<1x5x8xf32>
    %85 = vector.shape_cast %84 : vector<1x5x8xf32> to vector<5x8xf32>
    %86 = tpu.iota {dimensions = array<i32: 0>} : vector<5x32xi32>
    %c0_i32 = arith.constant 0 : i32
    %87 = vector.broadcast %c0_i32 : i32 to vector<5x32xi32>
    %88 = arith.cmpi eq, %86, %87 : vector<5x32xi32>
    %c4_i32 = arith.constant 4 : i32
    %89 = vector.broadcast %c4_i32 : i32 to vector<5x32xi32>
    %90 = arith.cmpi eq, %86, %89 : vector<5x32xi32>
    %91 = arith.ori %88, %90 : vector<5x32xi1>
    %92 = vector.extract_strided_slice %7 {offsets = [0, 0], sizes = [8, 32], strides = [1, 1]} : vector<16x32xf32> to vector<8x32xf32>
    %93 = arith.mulf %92, %92 : vector<8x32xf32>
    %cst_40 = arith.constant dense<0.000000e+00> : vector<8xf32>
    %94 = vector.multi_reduction <add>, %93, %cst_40 [1] : vector<8x32xf32> to vector<8xf32>
    %95 = vector.shape_cast %94 : vector<8xf32> to vector<8x1xf32>
    %96 = math.sqrt %95 : vector<8x1xf32>
    %cst_41 = arith.constant 9.99999996E-13 : f32
    %97 = vector.broadcast %cst_41 : f32 to vector<8x1xf32>
    %98 = arith.maximumf %96, %97 : vector<8x1xf32>
    %99 = vector.broadcast %98 : vector<8x1xf32> to vector<8x32xf32>
    %100 = arith.divf %92, %99 : vector<8x32xf32>
    %cst_42 = arith.constant dense<0.000000e+00> : vector<5x32xf32>
    %101 = tpu.matmul %83, %100, %cst_42 {dimension_numbers = #tpu.dot_dimension_numbers<[1], [0], [0], [1], [0, 0, 1, 1], [], []>, precision = #tpu.contract_precision<fp32>} : vector<5x8xf32>, vector<8x32xf32>, vector<5x32xf32> -> vector<5x32xf32>
    %cst_43 = arith.constant dense<0.000000e+00> : vector<5x32xf32>
    %102 = tpu.matmul %85, %100, %cst_43 {dimension_numbers = #tpu.dot_dimension_numbers<[1], [0], [0], [1], [0, 0, 1, 1], [], []>, precision = #tpu.contract_precision<fp32>} : vector<5x8xf32>, vector<8x32xf32>, vector<5x32xf32> -> vector<5x32xf32>
    %cst_44 = arith.constant 0.000000e+00 : f32
    %103 = vector.broadcast %cst_44 : f32 to vector<5x32xf32>
    %104 = arith.select %91, %103, %102 : vector<5x32xi1>, vector<5x32xf32>
    %cst_45 = arith.constant 9.99999997E-7 : f32
    %105 = vector.broadcast %cst_45 : f32 to vector<5x32xf32>
    %106 = arith.addf %101, %105 : vector<5x32xf32>
    %cst_46 = arith.constant 9.99999997E-7 : f32
    %107 = vector.broadcast %cst_46 : f32 to vector<5x32xf32>
    %108 = arith.addf %104, %107 : vector<5x32xf32>
    %109 = arith.mulf %106, %106 : vector<5x32xf32>
    %110 = arith.mulf %108, %108 : vector<5x32xf32>
    %111 = arith.addf %109, %110 : vector<5x32xf32>
    %112 = math.sqrt %111 : vector<5x32xf32>
    %c0_47 = arith.constant 0 : index
    %c0_48 = arith.constant 0 : index
    %c0_49 = arith.constant 0 : index
    %113 = vector.load %arg8[%c0_47, %c0_48, %c0_49] : memref<2x5x32xf32, #tpu.memory_space<vmem>>, vector<1x5x32xf32>
    %114 = vector.shape_cast %113 : vector<1x5x32xf32> to vector<5x32xf32>
    %115 = vector.shape_cast %112 : vector<5x32xf32> to vector<1x5x32xf32>
    tpu.vector_store %arg8[%c0_47, %c0_48, %c0_49], %115 {strides = array<i32>} : memref<2x5x32xf32, #tpu.memory_space<vmem>>, vector<1x5x32xf32>,
    %c0_50 = arith.constant 0 : index
    %c0_51 = arith.constant 0 : index
    %c0_52 = arith.constant 0 : index
    %116 = vector.load %arg9[%c0_50, %c0_51, %c0_52] : memref<2x5x32xf32, #tpu.memory_space<vmem>>, vector<1x5x32xf32>
    %117 = vector.shape_cast %116 : vector<1x5x32xf32> to vector<5x32xf32>
    %118 = vector.shape_cast %101 : vector<5x32xf32> to vector<1x5x32xf32>
    tpu.vector_store %arg9[%c0_50, %c0_51, %c0_52], %118 {strides = array<i32>} : memref<2x5x32xf32, #tpu.memory_space<vmem>>, vector<1x5x32xf32>,
    %c0_53 = arith.constant 0 : index
    %c0_54 = arith.constant 0 : index
    %c0_55 = arith.constant 0 : index
    %119 = vector.load %arg10[%c0_53, %c0_54, %c0_55] : memref<2x5x32xf32, #tpu.memory_space<vmem>>, vector<1x5x32xf32>
    %120 = vector.shape_cast %119 : vector<1x5x32xf32> to vector<5x32xf32>
    %121 = vector.shape_cast %104 : vector<5x32xf32> to vector<1x5x32xf32>
    tpu.vector_store %arg10[%c0_53, %c0_54, %c0_55], %121 {strides = array<i32>} : memref<2x5x32xf32, #tpu.memory_space<vmem>>, vector<1x5x32xf32>,
    %122 = vector.extract_strided_slice %7 {offsets = [8, 0], sizes = [8, 32], strides = [1, 1]} : vector<16x32xf32> to vector<8x32xf32>
    %123 = arith.mulf %122, %122 : vector<8x32xf32>
    %cst_56 = arith.constant dense<0.000000e+00> : vector<8xf32>
    %124 = vector.multi_reduction <add>, %123, %cst_56 [1] : vector<8x32xf32> to vector<8xf32>
    %125 = vector.shape_cast %124 : vector<8xf32> to vector<8x1xf32>
    %126 = math.sqrt %125 : vector<8x1xf32>
    %cst_57 = arith.constant 9.99999996E-13 : f32
    %127 = vector.broadcast %cst_57 : f32 to vector<8x1xf32>
    %128 = arith.maximumf %126, %127 : vector<8x1xf32>
    %129 = vector.broadcast %128 : vector<8x1xf32> to vector<8x32xf32>
    %130 = arith.divf %122, %129 : vector<8x32xf32>
    %cst_58 = arith.constant dense<0.000000e+00> : vector<5x32xf32>
    %131 = tpu.matmul %83, %130, %cst_58 {dimension_numbers = #tpu.dot_dimension_numbers<[1], [0], [0], [1], [0, 0, 1, 1], [], []>, precision = #tpu.contract_precision<fp32>} : vector<5x8xf32>, vector<8x32xf32>, vector<5x32xf32> -> vector<5x32xf32>
    %cst_59 = arith.constant dense<0.000000e+00> : vector<5x32xf32>
    %132 = tpu.matmul %85, %130, %cst_59 {dimension_numbers = #tpu.dot_dimension_numbers<[1], [0], [0], [1], [0, 0, 1, 1], [], []>, precision = #tpu.contract_precision<fp32>} : vector<5x8xf32>, vector<8x32xf32>, vector<5x32xf32> -> vector<5x32xf32>
    %cst_60 = arith.constant 0.000000e+00 : f32
    %133 = vector.broadcast %cst_60 : f32 to vector<5x32xf32>
    %134 = arith.select %91, %133, %132 : vector<5x32xi1>, vector<5x32xf32>
    %cst_61 = arith.constant 9.99999997E-7 : f32
    %135 = vector.broadcast %cst_61 : f32 to vector<5x32xf32>
    %136 = arith.addf %131, %135 : vector<5x32xf32>
    %cst_62 = arith.constant 9.99999997E-7 : f32
    %137 = vector.broadcast %cst_62 : f32 to vector<5x32xf32>
    %138 = arith.addf %134, %137 : vector<5x32xf32>
    %139 = arith.mulf %136, %136 : vector<5x32xf32>
    %140 = arith.mulf %138, %138 : vector<5x32xf32>
    %141 = arith.addf %139, %140 : vector<5x32xf32>
    %142 = math.sqrt %141 : vector<5x32xf32>
    %c1_63 = arith.constant 1 : index
    %c0_64 = arith.constant 0 : index
    %c0_65 = arith.constant 0 : index
    %143 = vector.load %arg8[%c1_63, %c0_64, %c0_65] : memref<2x5x32xf32, #tpu.memory_space<vmem>>, vector<1x5x32xf32>
    %144 = vector.shape_cast %143 : vector<1x5x32xf32> to vector<5x32xf32>
    %145 = vector.shape_cast %142 : vector<5x32xf32> to vector<1x5x32xf32>
    tpu.vector_store %arg8[%c1_63, %c0_64, %c0_65], %145 {strides = array<i32>} : memref<2x5x32xf32, #tpu.memory_space<vmem>>, vector<1x5x32xf32>,
    %c1_66 = arith.constant 1 : index
    %c0_67 = arith.constant 0 : index
    %c0_68 = arith.constant 0 : index
    %146 = vector.load %arg9[%c1_66, %c0_67, %c0_68] : memref<2x5x32xf32, #tpu.memory_space<vmem>>, vector<1x5x32xf32>
    %147 = vector.shape_cast %146 : vector<1x5x32xf32> to vector<5x32xf32>
    %148 = vector.shape_cast %131 : vector<5x32xf32> to vector<1x5x32xf32>
    tpu.vector_store %arg9[%c1_66, %c0_67, %c0_68], %148 {strides = array<i32>} : memref<2x5x32xf32, #tpu.memory_space<vmem>>, vector<1x5x32xf32>,
    %c1_69 = arith.constant 1 : index
    %c0_70 = arith.constant 0 : index
    %c0_71 = arith.constant 0 : index
    %149 = vector.load %arg10[%c1_69, %c0_70, %c0_71] : memref<2x5x32xf32, #tpu.memory_space<vmem>>, vector<1x5x32xf32>
    %150 = vector.shape_cast %149 : vector<1x5x32xf32> to vector<5x32xf32>
    %151 = vector.shape_cast %134 : vector<5x32xf32> to vector<1x5x32xf32>
    tpu.vector_store %arg10[%c1_69, %c0_70, %c0_71], %151 {strides = array<i32>} : memref<2x5x32xf32, #tpu.memory_space<vmem>>, vector<1x5x32xf32>,
    %152 = vector.extract_strided_slice %9 {offsets = [0, 0], sizes = [8, 32], strides = [1, 1]} : vector<16x32xf32> to vector<8x32xf32>
    %153 = arith.mulf %152, %152 : vector<8x32xf32>
    %cst_72 = arith.constant dense<0.000000e+00> : vector<8xf32>
    %154 = vector.multi_reduction <add>, %153, %cst_72 [1] : vector<8x32xf32> to vector<8xf32>
    %155 = vector.shape_cast %154 : vector<8xf32> to vector<8x1xf32>
    %156 = math.sqrt %155 : vector<8x1xf32>
    %cst_73 = arith.constant 9.99999996E-13 : f32
    %157 = vector.broadcast %cst_73 : f32 to vector<8x1xf32>
    %158 = arith.maximumf %156, %157 : vector<8x1xf32>
    %159 = vector.broadcast %158 : vector<8x1xf32> to vector<8x32xf32>
    %160 = arith.divf %152, %159 : vector<8x32xf32>
    %cst_74 = arith.constant dense<0.000000e+00> : vector<5x32xf32>
    %161 = tpu.matmul %83, %160, %cst_74 {dimension_numbers = #tpu.dot_dimension_numbers<[1], [0], [0], [1], [0, 0, 1, 1], [], []>, precision = #tpu.contract_precision<fp32>} : vector<5x8xf32>, vector<8x32xf32>, vector<5x32xf32> -> vector<5x32xf32>
    %cst_75 = arith.constant dense<0.000000e+00> : vector<5x32xf32>
    %162 = tpu.matmul %85, %160, %cst_75 {dimension_numbers = #tpu.dot_dimension_numbers<[1], [0], [0], [1], [0, 0, 1, 1], [], []>, precision = #tpu.contract_precision<fp32>} : vector<5x8xf32>, vector<8x32xf32>, vector<5x32xf32> -> vector<5x32xf32>
    %cst_76 = arith.constant 0.000000e+00 : f32
    %163 = vector.broadcast %cst_76 : f32 to vector<5x32xf32>
    %164 = arith.select %91, %163, %162 : vector<5x32xi1>, vector<5x32xf32>
    %cst_77 = arith.constant 9.99999997E-7 : f32
    %165 = vector.broadcast %cst_77 : f32 to vector<5x32xf32>
    %166 = arith.addf %161, %165 : vector<5x32xf32>
    %cst_78 = arith.constant 9.99999997E-7 : f32
    %167 = vector.broadcast %cst_78 : f32 to vector<5x32xf32>
    %168 = arith.addf %164, %167 : vector<5x32xf32>
    %169 = arith.mulf %166, %166 : vector<5x32xf32>
    %170 = arith.mulf %168, %168 : vector<5x32xf32>
    %171 = arith.addf %169, %170 : vector<5x32xf32>
    %172 = math.sqrt %171 : vector<5x32xf32>
    %c0_79 = arith.constant 0 : index
    %c0_80 = arith.constant 0 : index
    %c0_81 = arith.constant 0 : index
    %173 = vector.load %arg11[%c0_79, %c0_80, %c0_81] : memref<2x5x32xf32, #tpu.memory_space<vmem>>, vector<1x5x32xf32>
    %174 = vector.shape_cast %173 : vector<1x5x32xf32> to vector<5x32xf32>
    %175 = vector.shape_cast %172 : vector<5x32xf32> to vector<1x5x32xf32>
    tpu.vector_store %arg11[%c0_79, %c0_80, %c0_81], %175 {strides = array<i32>} : memref<2x5x32xf32, #tpu.memory_space<vmem>>, vector<1x5x32xf32>,
    %c0_82 = arith.constant 0 : index
    %c0_83 = arith.constant 0 : index
    %c0_84 = arith.constant 0 : index
    %176 = vector.load %arg12[%c0_82, %c0_83, %c0_84] : memref<2x5x32xf32, #tpu.memory_space<vmem>>, vector<1x5x32xf32>
    %177 = vector.shape_cast %176 : vector<1x5x32xf32> to vector<5x32xf32>
    %178 = vector.shape_cast %161 : vector<5x32xf32> to vector<1x5x32xf32>
    tpu.vector_store %arg12[%c0_82, %c0_83, %c0_84], %178 {strides = array<i32>} : memref<2x5x32xf32, #tpu.memory_space<vmem>>, vector<1x5x32xf32>,
    %c0_85 = arith.constant 0 : index
    %c0_86 = arith.constant 0 : index
    %c0_87 = arith.constant 0 : index
    %179 = vector.load %arg13[%c0_85, %c0_86, %c0_87] : memref<2x5x32xf32, #tpu.memory_space<vmem>>, vector<1x5x32xf32>
    %180 = vector.shape_cast %179 : vector<1x5x32xf32> to vector<5x32xf32>
    %181 = vector.shape_cast %164 : vector<5x32xf32> to vector<1x5x32xf32>
    tpu.vector_store %arg13[%c0_85, %c0_86, %c0_87], %181 {strides = array<i32>} : memref<2x5x32xf32, #tpu.memory_space<vmem>>, vector<1x5x32xf32>,
    %182 = vector.extract_strided_slice %9 {offsets = [8, 0], sizes = [8, 32], strides = [1, 1]} : vector<16x32xf32> to vector<8x32xf32>
    %183 = arith.mulf %182, %182 : vector<8x32xf32>
    %cst_88 = arith.constant dense<0.000000e+00> : vector<8xf32>
    %184 = vector.multi_reduction <add>, %183, %cst_88 [1] : vector<8x32xf32> to vector<8xf32>
    %185 = vector.shape_cast %184 : vector<8xf32> to vector<8x1xf32>
    %186 = math.sqrt %185 : vector<8x1xf32>
    %cst_89 = arith.constant 9.99999996E-13 : f32
    %187 = vector.broadcast %cst_89 : f32 to vector<8x1xf32>
    %188 = arith.maximumf %186, %187 : vector<8x1xf32>
    %189 = vector.broadcast %188 : vector<8x1xf32> to vector<8x32xf32>
    %190 = arith.divf %182, %189 : vector<8x32xf32>
    %cst_90 = arith.constant dense<0.000000e+00> : vector<5x32xf32>
    %191 = tpu.matmul %83, %190, %cst_90 {dimension_numbers = #tpu.dot_dimension_numbers<[1], [0], [0], [1], [0, 0, 1, 1], [], []>, precision = #tpu.contract_precision<fp32>} : vector<5x8xf32>, vector<8x32xf32>, vector<5x32xf32> -> vector<5x32xf32>
    %cst_91 = arith.constant dense<0.000000e+00> : vector<5x32xf32>
    %192 = tpu.matmul %85, %190, %cst_91 {dimension_numbers = #tpu.dot_dimension_numbers<[1], [0], [0], [1], [0, 0, 1, 1], [], []>, precision = #tpu.contract_precision<fp32>} : vector<5x8xf32>, vector<8x32xf32>, vector<5x32xf32> -> vector<5x32xf32>
    %cst_92 = arith.constant 0.000000e+00 : f32
    %193 = vector.broadcast %cst_92 : f32 to vector<5x32xf32>
    %194 = arith.select %91, %193, %192 : vector<5x32xi1>, vector<5x32xf32>
    %cst_93 = arith.constant 9.99999997E-7 : f32
    %195 = vector.broadcast %cst_93 : f32 to vector<5x32xf32>
    %196 = arith.addf %191, %195 : vector<5x32xf32>
    %cst_94 = arith.constant 9.99999997E-7 : f32
    %197 = vector.broadcast %cst_94 : f32 to vector<5x32xf32>
    %198 = arith.addf %194, %197 : vector<5x32xf32>
    %199 = arith.mulf %196, %196 : vector<5x32xf32>
    %200 = arith.mulf %198, %198 : vector<5x32xf32>
    %201 = arith.addf %199, %200 : vector<5x32xf32>
    %202 = math.sqrt %201 : vector<5x32xf32>
    %c1_95 = arith.constant 1 : index
    %c0_96 = arith.constant 0 : index
    %c0_97 = arith.constant 0 : index
    %203 = vector.load %arg11[%c1_95, %c0_96, %c0_97] : memref<2x5x32xf32, #tpu.memory_space<vmem>>, vector<1x5x32xf32>
    %204 = vector.shape_cast %203 : vector<1x5x32xf32> to vector<5x32xf32>
    %205 = vector.shape_cast %202 : vector<5x32xf32> to vector<1x5x32xf32>
    tpu.vector_store %arg11[%c1_95, %c0_96, %c0_97], %205 {strides = array<i32>} : memref<2x5x32xf32, #tpu.memory_space<vmem>>, vector<1x5x32xf32>,
    %c1_98 = arith.constant 1 : index
    %c0_99 = arith.constant 0 : index
    %c0_100 = arith.constant 0 : index
    %206 = vector.load %arg12[%c1_98, %c0_99, %c0_100] : memref<2x5x32xf32, #tpu.memory_space<vmem>>, vector<1x5x32xf32>
    %207 = vector.shape_cast %206 : vector<1x5x32xf32> to vector<5x32xf32>
    %208 = vector.shape_cast %191 : vector<5x32xf32> to vector<1x5x32xf32>
    tpu.vector_store %arg12[%c1_98, %c0_99, %c0_100], %208 {strides = array<i32>} : memref<2x5x32xf32, #tpu.memory_space<vmem>>, vector<1x5x32xf32>,
    %c1_101 = arith.constant 1 : index
    %c0_102 = arith.constant 0 : index
    %c0_103 = arith.constant 0 : index
    %209 = vector.load %arg13[%c1_101, %c0_102, %c0_103] : memref<2x5x32xf32, #tpu.memory_space<vmem>>, vector<1x5x32xf32>
    %210 = vector.shape_cast %209 : vector<1x5x32xf32> to vector<5x32xf32>
    %211 = vector.shape_cast %194 : vector<5x32xf32> to vector<1x5x32xf32>
    tpu.vector_store %arg13[%c1_101, %c0_102, %c0_103], %211 {strides = array<i32>} : memref<2x5x32xf32, #tpu.memory_space<vmem>>, vector<1x5x32xf32>,
    return
  }
  func.func @transform_0(%arg0: i32) -> (i32, i32) {
    %c0_i32 = arith.constant 0 : i32
    %c0_i32_0 = arith.constant 0 : i32
    %c0_i32_1 = arith.constant 0 : i32
    return %c0_i32, %c0_i32_0 : i32, i32
  }
  func.func @transform_1(%arg0: i32) -> (i32, i32) {
    %c0_i32 = arith.constant 0 : i32
    %c0_i32_0 = arith.constant 0 : i32
    %c0_i32_1 = arith.constant 0 : i32
    return %c0_i32, %c0_i32_0 : i32, i32
  }
  func.func @transform_2(%arg0: i32) -> (i32, i32) {
    %c0_i32 = arith.constant 0 : i32
    %c0_i32_0 = arith.constant 0 : i32
    %c0_i32_1 = arith.constant 0 : i32
    return %c0_i32, %c0_i32_0 : i32, i32
  }
  func.func @transform_3(%arg0: i32) -> (i32, i32) {
    %c0_i32 = arith.constant 0 : i32
    %c0_i32_0 = arith.constant 0 : i32
    %c0_i32_1 = arith.constant 0 : i32
    return %c0_i32, %c0_i32_0 : i32, i32
  }
  func.func @transform_4(%arg0: i32) -> (i32, i32) {
    %c0_i32 = arith.constant 0 : i32
    %c0_i32_0 = arith.constant 0 : i32
    %c0_i32_1 = arith.constant 0 : i32
    return %c0_i32, %c0_i32_0 : i32, i32
  }
  func.func @transform_5(%arg0: i32) -> (i32, i32, i32) {
    %c0_i32 = arith.constant 0 : i32
    %c0_i32_0 = arith.constant 0 : i32
    %c0_i32_1 = arith.constant 0 : i32
    %c0_i32_2 = arith.constant 0 : i32
    return %c0_i32, %c0_i32_0, %c0_i32_1 : i32, i32, i32
  }
  func.func @transform_6(%arg0: i32) -> (i32, i32) {
    %c0_i32 = arith.constant 0 : i32
    %c0_i32_0 = arith.constant 0 : i32
    %c0_i32_1 = arith.constant 0 : i32
    return %c0_i32, %c0_i32_0 : i32, i32
  }
  func.func @transform_7(%arg0: i32) -> (i32, i32, i32) {
    %c0_i32 = arith.constant 0 : i32
    %c0_i32_0 = arith.constant 0 : i32
    %c0_i32_1 = arith.constant 0 : i32
    %c0_i32_2 = arith.constant 0 : i32
    return %c0_i32, %c0_i32_0, %c0_i32_1 : i32, i32, i32
  }
  func.func @transform_8(%arg0: i32) -> (i32, i32, i32) {
    %c0_i32 = arith.constant 0 : i32
    %c0_i32_0 = arith.constant 0 : i32
    %c0_i32_1 = arith.constant 0 : i32
    %c0_i32_2 = arith.constant 0 : i32
    return %c0_i32, %c0_i32_0, %c0_i32_1 : i32, i32, i32
  }
  func.func @transform_9(%arg0: i32) -> (i32, i32, i32) {
    %c0_i32 = arith.constant 0 : i32
    %c0_i32_0 = arith.constant 0 : i32
    %c0_i32_1 = arith.constant 0 : i32
    %c0_i32_2 = arith.constant 0 : i32
    return %c0_i32, %c0_i32_0, %c0_i32_1 : i32, i32, i32
  }
  func.func @transform_10(%arg0: i32) -> (i32, i32, i32) {
    %c0_i32 = arith.constant 0 : i32
    %c0_i32_0 = arith.constant 0 : i32
    %c0_i32_1 = arith.constant 0 : i32
    %c0_i32_2 = arith.constant 0 : i32
    return %c0_i32, %c0_i32_0, %c0_i32_1 : i32, i32, i32
  }
  func.func @transform_11(%arg0: i32) -> (i32, i32, i32) {
    %c0_i32 = arith.constant 0 : i32
    %c0_i32_0 = arith.constant 0 : i32
    %c0_i32_1 = arith.constant 0 : i32
    %c0_i32_2 = arith.constant 0 : i32
    return %c0_i32, %c0_i32_0, %c0_i32_1 : i32, i32, i32
  }
  func.func @transform_12(%arg0: i32) -> (i32, i32, i32) {
    %c0_i32 = arith.constant 0 : i32
    %c0_i32_0 = arith.constant 0 : i32
    %c0_i32_1 = arith.constant 0 : i32
    %c0_i32_2 = arith.constant 0 : i32
    return %c0_i32, %c0_i32_0, %c0_i32_1 : i32, i32, i32
  }
}

module attributes {stable_mosaic.version = 11 : i64} {
  func.func @kernel(%arg0: i32, %arg1: memref<5x4x32xf32, #tpu.memory_space<vmem>>, %arg2: memref<5x4x32xf32, #tpu.memory_space<vmem>>, %arg3: memref<1x1xf32, #tpu.memory_space<vmem>>) attributes {dimension_semantics = [#tpu.dimension_semantics<arbitrary>], iteration_bounds = array<i64: 1>, scalar_prefetch = 0 : i64, scratch_operands = 0 : i64, tpu.core_type = #tpu.core_type<tc>, window_params = [{pipeline_mode = #tpu.pipeline_mode<synchronous>, transform_indices = @transform_0, window_bounds = array<i64: 5, 4, 32>}, {pipeline_mode = #tpu.pipeline_mode<synchronous>, transform_indices = @transform_1, window_bounds = array<i64: 5, 4, 32>}, {pipeline_mode = #tpu.pipeline_mode<synchronous>, transform_indices = @transform_2, window_bounds = array<i64: 1, 1>}]} {
    %0 = tpu.iota {dimensions = array<i32: 1>} : vector<5x4x4xi32>
    %1 = tpu.iota {dimensions = array<i32: 2>} : vector<5x4x4xi32>
    %2 = arith.cmpi eq, %0, %1 : vector<5x4x4xi32>
    %c2_i32 = arith.constant 2 : i32
    %3 = vector.broadcast %c2_i32 : i32 to vector<5x4x4xi32>
    %4 = arith.cmpi slt, %0, %3 : vector<5x4x4xi32>
    %c2_i32_0 = arith.constant 2 : i32
    %5 = vector.broadcast %c2_i32_0 : i32 to vector<5x4x4xi32>
    %6 = arith.addi %0, %5 : vector<5x4x4xi32>
    %7 = arith.cmpi eq, %1, %6 : vector<5x4x4xi32>
    %8 = arith.andi %4, %7 : vector<5x4x4xi1>
    %c2_i32_1 = arith.constant 2 : i32
    %9 = vector.broadcast %c2_i32_1 : i32 to vector<5x4x4xi32>
    %10 = arith.cmpi sge, %0, %9 : vector<5x4x4xi32>
    %c2_i32_2 = arith.constant 2 : i32
    %11 = vector.broadcast %c2_i32_2 : i32 to vector<5x4x4xi32>
    %12 = arith.subi %0, %11 : vector<5x4x4xi32>
    %13 = arith.cmpi eq, %1, %12 : vector<5x4x4xi32>
    %14 = arith.andi %10, %13 : vector<5x4x4xi1>
    %15 = arith.ori %8, %14 : vector<5x4x4xi1>
    %c0 = arith.constant 0 : index
    %c0_3 = arith.constant 0 : index
    %c0_4 = arith.constant 0 : index
    %16 = vector.load %arg1[%c0, %c0_3, %c0_4] : memref<5x4x32xf32, #tpu.memory_space<vmem>>, vector<5x4x32xf32>
    "tpu.trace_start"() <{level = 10 : i32, message = "fnd,fmd->fnm"}> : () -> ()
    %cst = arith.constant dense<0.000000e+00> : vector<5x4x4xf32>
    %17 = tpu.matmul %16, %16, %cst {dimension_numbers = #tpu.dot_dimension_numbers<[2], [2], [1], [1], [0, 0, 0, 1, 1, 1], [0], [0]>, precision = #tpu.contract_precision<fp32>} : vector<5x4x32xf32>, vector<5x4x32xf32>, vector<5x4x4xf32> -> vector<5x4x4xf32>
    %cst_5 = arith.constant -1.000000e+30 : f32
    "tpu.trace_stop"() : () -> ()
    %18 = vector.broadcast %cst_5 : f32 to vector<5x4x4xf32>
    %19 = arith.select %2, %18, %17 : vector<5x4x4xi1>, vector<5x4x4xf32>
    %cst_6 = arith.constant dense<0xFF800000> : vector<5x4xf32>
    %20 = vector.multi_reduction <maximumf>, %19, %cst_6 [2] : vector<5x4x4xf32> to vector<5x4xf32>
    %21 = vector.shape_cast %20 : vector<5x4xf32> to vector<5x4x1xf32>
    %22 = vector.broadcast %21 : vector<5x4x1xf32> to vector<5x4x4xf32>
    %23 = arith.subf %19, %22 : vector<5x4x4xf32>
    %24 = math.exp %23 : vector<5x4x4xf32>
    %cst_7 = arith.constant dense<0.000000e+00> : vector<5x4xf32>
    %25 = vector.multi_reduction <add>, %24, %cst_7 [2] : vector<5x4x4xf32> to vector<5x4xf32>
    %26 = vector.shape_cast %25 : vector<5x4xf32> to vector<5x4x1xf32>
    %27 = math.log %26 : vector<5x4x1xf32>
    %28 = arith.addf %27, %21 : vector<5x4x1xf32>
    %29 = vector.broadcast %28 : vector<5x4x1xf32> to vector<5x4x4xf32>
    %30 = arith.subf %29, %19 : vector<5x4x4xf32>
    %cst_8 = arith.constant 0.000000e+00 : f32
    %31 = vector.broadcast %cst_8 : f32 to vector<5x4x4xf32>
    %32 = arith.select %15, %30, %31 : vector<5x4x4xi1>, vector<5x4x4xf32>
    %33 = vector.shape_cast %32 : vector<5x4x4xf32> to vector<1x5x4x4xf32>
    %cst_9 = arith.constant dense<0.000000e+00> : vector<1xf32>
    %34 = vector.multi_reduction <add>, %33, %cst_9 [1, 2, 3] : vector<1x5x4x4xf32> to vector<1xf32>
    %35 = vector.shape_cast %34 : vector<1xf32> to vector<1x1x1x1xf32>
    %36 = vector.extract %35[0, 0, 0, 0] : f32 from vector<1x1x1x1xf32>
    %cst_10 = arith.constant 0.000000e+00 : f32
    %37 = arith.addf %cst_10, %36 : f32
    %c0_11 = arith.constant 0 : index
    %c0_12 = arith.constant 0 : index
    %c0_13 = arith.constant 0 : index
    %38 = vector.load %arg2[%c0_11, %c0_12, %c0_13] : memref<5x4x32xf32, #tpu.memory_space<vmem>>, vector<5x4x32xf32>
    "tpu.trace_start"() <{level = 10 : i32, message = "fnd,fmd->fnm"}> : () -> ()
    %cst_14 = arith.constant dense<0.000000e+00> : vector<5x4x4xf32>
    %39 = tpu.matmul %38, %38, %cst_14 {dimension_numbers = #tpu.dot_dimension_numbers<[2], [2], [1], [1], [0, 0, 0, 1, 1, 1], [0], [0]>, precision = #tpu.contract_precision<fp32>} : vector<5x4x32xf32>, vector<5x4x32xf32>, vector<5x4x4xf32> -> vector<5x4x4xf32>
    %cst_15 = arith.constant -1.000000e+30 : f32
    "tpu.trace_stop"() : () -> ()
    %40 = vector.broadcast %cst_15 : f32 to vector<5x4x4xf32>
    %41 = arith.select %2, %40, %39 : vector<5x4x4xi1>, vector<5x4x4xf32>
    %cst_16 = arith.constant dense<0xFF800000> : vector<5x4xf32>
    %42 = vector.multi_reduction <maximumf>, %41, %cst_16 [2] : vector<5x4x4xf32> to vector<5x4xf32>
    %43 = vector.shape_cast %42 : vector<5x4xf32> to vector<5x4x1xf32>
    %44 = vector.broadcast %43 : vector<5x4x1xf32> to vector<5x4x4xf32>
    %45 = arith.subf %41, %44 : vector<5x4x4xf32>
    %46 = math.exp %45 : vector<5x4x4xf32>
    %cst_17 = arith.constant dense<0.000000e+00> : vector<5x4xf32>
    %47 = vector.multi_reduction <add>, %46, %cst_17 [2] : vector<5x4x4xf32> to vector<5x4xf32>
    %48 = vector.shape_cast %47 : vector<5x4xf32> to vector<5x4x1xf32>
    %49 = math.log %48 : vector<5x4x1xf32>
    %50 = arith.addf %49, %43 : vector<5x4x1xf32>
    %51 = vector.broadcast %50 : vector<5x4x1xf32> to vector<5x4x4xf32>
    %52 = arith.subf %51, %41 : vector<5x4x4xf32>
    %cst_18 = arith.constant 0.000000e+00 : f32
    %53 = vector.broadcast %cst_18 : f32 to vector<5x4x4xf32>
    %54 = arith.select %15, %52, %53 : vector<5x4x4xi1>, vector<5x4x4xf32>
    %55 = vector.shape_cast %54 : vector<5x4x4xf32> to vector<1x5x4x4xf32>
    %cst_19 = arith.constant dense<0.000000e+00> : vector<1xf32>
    %56 = vector.multi_reduction <add>, %55, %cst_19 [1, 2, 3] : vector<1x5x4x4xf32> to vector<1xf32>
    %57 = vector.shape_cast %56 : vector<1xf32> to vector<1x1x1x1xf32>
    %58 = vector.extract %57[0, 0, 0, 0] : f32 from vector<1x1x1x1xf32>
    %59 = arith.addf %37, %58 : f32
    %60 = vector.broadcast %59 : f32 to vector<1x1xf32>
    %c0_20 = arith.constant 0 : index
    %c0_21 = arith.constant 0 : index
    %61 = vector.load %arg3[%c0_20, %c0_21] : memref<1x1xf32, #tpu.memory_space<vmem>>, vector<1x1xf32>
    tpu.vector_store %arg3[%c0_20, %c0_21], %60 {strides = array<i32>} : memref<1x1xf32, #tpu.memory_space<vmem>>, vector<1x1xf32>,
    return
  }
  func.func @transform_0(%arg0: i32) -> (i32, i32, i32) {
    %c0_i32 = arith.constant 0 : i32
    %c0_i32_0 = arith.constant 0 : i32
    %c0_i32_1 = arith.constant 0 : i32
    %c0_i32_2 = arith.constant 0 : i32
    return %c0_i32, %c0_i32_0, %c0_i32_1 : i32, i32, i32
  }
  func.func @transform_1(%arg0: i32) -> (i32, i32, i32) {
    %c0_i32 = arith.constant 0 : i32
    %c0_i32_0 = arith.constant 0 : i32
    %c0_i32_1 = arith.constant 0 : i32
    %c0_i32_2 = arith.constant 0 : i32
    return %c0_i32, %c0_i32_0, %c0_i32_1 : i32, i32, i32
  }
  func.func @transform_2(%arg0: i32) -> (i32, i32) {
    %c0_i32 = arith.constant 0 : i32
    %c0_i32_0 = arith.constant 0 : i32
    %c0_i32_1 = arith.constant 0 : i32
    return %c0_i32, %c0_i32_0 : i32, i32
  }
}

</mosaic_0001>

<llo_original>
// kernel: mff_ft_forward.3
$region0: #{mff_ft_forward.3}
  #allocation0 [shape = 'u32[]', space=smem, size = 0x4, offset = 0x4, fixed_abs, tag = 'smem constant byte address 0x4 - core index']
  #allocation1 [shape = 'u32[144,128]{1,0:T(1,128)}', space=vmem, size = 0x12000, scoped, tag = 'internal scratch']
  %s0 = inlined_call_operand.vmem [shape: f32[5,4,32], index: 0, kind: input, shape index: {}]
  %s1 = inlined_call_operand.vmem [shape: f32[5,4,32], index: 1, kind: input, shape index: {}]
  %s2 = inlined_call_operand.hbm [shape: f32[1,1], index: 2, kind: output, shape index: {}]
  %s3 = sld [smem:[#allocation0]]
  $region18: #{mff_ft_forward.3} parent=0
    _
  %s5 = ssub.s32 1, %s3
  %s6 = scalar_select 0, %s5, %s3
  $region1: #{mff_ft_forward.3} parent=0
    #allocation2 [shape = 'u8[512]{0}', space=vmem, size = 0x400, scoped, tag = 'output window, operand 0, single buffered']
    #allocation3 [shape = 's32[1]{0}', space=sflag, size = 0x4, scoped, tag = 'scoped memory for mff_ft_forward.3']
    %7 = vsyncpa [#allocation3], 0
    // Predicated region
    $region2: #{mff_ft_forward.3} parent=1 // pred_check
      _
    $region3: #{mff_ft_forward.3} parent=1 // pred_check_branch
      %9 = sbr.rel (0) target = $region5
    $region4: #{mff_ft_forward.3} parent=1 // pred_region
      _
    $region5: #{mff_ft_forward.3} parent=1 // pred_fallthru
      _
    // Predicated region
    $region6: #{mff_ft_forward.3} parent=1 // pred_check
      _
    $region7: #{mff_ft_forward.3} parent=1 // pred_check_branch
      %11 = sbr.rel (0) target = $region9
    $region8: #{mff_ft_forward.3} parent=1 // pred_region
      _
    $region9: #{mff_ft_forward.3} parent=1 // pred_fallthru
      _
    %v12 = vlaneseq
    %v13 = vshrl.u32 %v12, 7
    %v14 = vlaneseq
    %v15 = vand.u32 %v14, 127
    %vm16 = vcmp.eq.s32.totalorder %v13, %v15
    %vm17 = vcmp.lt.s32.totalorder %v13, 2
    %v18 = vadd.s32 %v13, 2
    %vm19 = vcmp.eq.s32.totalorder %v15, %v18
    %vm20 = vmand %vm17, %vm19
    %vm21 = vcmp.ge.s32.totalorder %v13, 2
    %v22 = vsub.s32 %v13, 2
    %vm23 = vcmp.eq.s32.totalorder %v15, %v22
    %vm24 = vmand %vm21, %vm23
    %vm25 = vmor %vm20, %vm24
    %v26 = vld [vmem:[%s0] sm:$0xf]
    %v27 = vld [vmem:[%s0 + $0x4] sm:$0xf]
    %v28 = vld [vmem:[%s0 + $0x8] sm:$0xf]
    %v29 = vld [vmem:[%s0 + $0xc] sm:$0xf]
    %v30 = vld [vmem:[%s0 + $0x10] sm:$0xf]
    %vm31 = vcmask 261120
    %v33 = vsel %vm31, %v26, 0
    %35 = vmatprep.subr.mxu0 0.0
    %v36 = vand.u32 %v33, 4294901760
    %37 = vmatpush1.xpose.msra.mxu0 %v36
    %38 = vmatprep.subr.mxu0 0.0
    %39 = vmatpush1.xpose.msra.mxu0 0.0
    %40 = vmatprep.subr.mxu0 0.0
    %41 = vmatpush1.xpose.msra.mxu0 0.0
    %42 = vmatprep.subr.mxu0 0.0
    %43 = vmatpush1.xpose.msra.mxu0 0.0
    %44 = vmatprep.subr.mxu0 0.0
    %45 = vmatpush1.xpose.msra.mxu0 0.0
    %46 = vmatprep.subr.mxu0 0.0
    %47 = vmatpush1.xpose.msra.mxu0 0.0
    %48 = vmatprep.subr.mxu0 0.0
    %49 = vmatpush1.xpose.msra.mxu0 0.0
    %50 = vmatprep.subr.mxu0 0.0
    %51 = vmatpush1.xpose.msra.mxu0 0.0
    %52 = vmatprep.subr.mxu0 0.0
    %53 = vmatpush1.xpose.msra.mxu0 0.0
    %54 = vmatprep.subr.mxu0 0.0
    %55 = vmatpush1.xpose.msra.mxu0 0.0
    %56 = vmatprep.subr.mxu0 0.0
    %57 = vmatpush1.xpose.msra.mxu0 0.0
    %58 = vmatprep.subr.mxu0 0.0
    %59 = vmatpush1.xpose.msra.mxu0 0.0
    %60 = vmatprep.subr.mxu0 0.0
    %61 = vmatpush1.xpose.msra.mxu0 0.0
    %62 = vmatprep.subr.mxu0 0.0
    %63 = vmatpush1.xpose.msra.mxu0 0.0
    %64 = vmatprep.subr.mxu0 0.0
    %65 = vmatpush1.xpose.msra.mxu0 0.0
    %66 = vmatprep.subr.mxu0 0.0
    %67 = vmatpush1.xpose.msra.mxu0 0.0
    %68 = vmatprep.subr.mxu0 0.0
    %69 = vmatpush1.xpose.msra.mxu0 0.0
    %70 = vmatprep.subr.mxu0 0.0
    %71 = vmatpush1.xpose.msra.mxu0 0.0
    %72 = vmatprep.subr.mxu0 0.0
    %73 = vmatpush1.xpose.msra.mxu0 0.0
    %74 = vmatprep.subr.mxu0 0.0
    %75 = vmatpush1.xpose.msra.mxu0 0.0
    %76 = vmatprep.subr.mxu0 0.0
    %77 = vmatpush1.xpose.msra.mxu0 0.0
    %78 = vmatprep.subr.mxu0 0.0
    %79 = vmatpush1.xpose.msra.mxu0 0.0
    %80 = vmatprep.subr.mxu0 0.0
    %81 = vmatpush1.xpose.msra.mxu0 0.0
    %82 = vmatprep.subr.mxu0 0.0
    %83 = vmatpush1.xpose.msra.mxu0 0.0
    %84 = vmatprep.subr.mxu0 0.0
    %85 = vmatpush1.xpose.msra.mxu0 0.0
    %86 = vmatprep.subr.mxu0 0.0
    %87 = vmatpush1.xpose.msra.mxu0 0.0
    %88 = vmatprep.subr.mxu0 0.0
    %89 = vmatpush1.xpose.msra.mxu0 0.0
    %90 = vmatprep.subr.mxu0 0.0
    %91 = vmatpush1.xpose.msra.mxu0 0.0
    %92 = vmatprep.subr.mxu0 0.0
    %93 = vmatpush1.xpose.msra.mxu0 0.0
    %94 = vmatprep.subr.mxu0 0.0
    %95 = vmatpush1.xpose.msra.mxu0 0.0
    %96 = vmatprep.subr.mxu0 0.0
    %97 = vmatpush1.xpose.msra.mxu0 0.0
    %98 = vmatprep.subr.mxu0 0.0
    %99 = vmatpush1.xpose.msra.mxu0 0.0
    %100 = vmatprep.mubr.f32.mxu0 0.0
    %v101 = vand.u32 %v33, 4294901760
    %v102 = vsub.f32 %v33, %v101
    %v103 = vand.u32 %v102, 4294901760
    %v104 = vsub.f32 %v102, %v103
    %v105 = vand.u32 %v104, 4294901760
    %106 = vmatmul.mubr.f32.gmra.mrb[0].mxu0 %v105
    %v107 = vpop.f32.mrb[0].mxu0
    %v108 = vadd.f32 0.0, %v107
    %v109 = vpop.f32.mrb[0].mxu0
    %110 = vdwg.mxu0
    %111 = vmatprep.subr.mxu0 0.0
    %v112 = vand.u32 %v33, 4294901760
    %v113 = vsub.f32 %v33, %v112
    %v114 = vand.u32 %v113, 4294901760
    %v115 = vsub.f32 %v113, %v114
    %v116 = vand.u32 %v115, 4294901760
    %117 = vmatpush1.xpose.msra.mxu0 %v116
    %118 = vmatprep.subr.mxu0 0.0
    %119 = vmatpush1.xpose.msra.mxu0 0.0
    %120 = vmatprep.subr.mxu0 0.0
    %121 = vmatpush1.xpose.msra.mxu0 0.0
    %122 = vmatprep.subr.mxu0 0.0
    %123 = vmatpush1.xpose.msra.mxu0 0.0
    %124 = vmatprep.subr.mxu0 0.0
    %125 = vmatpush1.xpose.msra.mxu0 0.0
    %126 = vmatprep.subr.mxu0 0.0
    %127 = vmatpush1.xpose.msra.mxu0 0.0
    %128 = vmatprep.subr.mxu0 0.0
    %129 = vmatpush1.xpose.msra.mxu0 0.0
    %130 = vmatprep.subr.mxu0 0.0
    %131 = vmatpush1.xpose.msra.mxu0 0.0
    %132 = vmatprep.subr.mxu0 0.0
    %133 = vmatpush1.xpose.msra.mxu0 0.0
    %134 = vmatprep.subr.mxu0 0.0
    %135 = vmatpush1.xpose.msra.mxu0 0.0
    %136 = vmatprep.subr.mxu0 0.0
    %137 = vmatpush1.xpose.msra.mxu0 0.0
    %138 = vmatprep.subr.mxu0 0.0
    %139 = vmatpush1.xpose.msra.mxu0 0.0
    %140 = vmatprep.subr.mxu0 0.0
    %141 = vmatpush1.xpose.msra.mxu0 0.0
    %142 = vmatprep.subr.mxu0 0.0
    %143 = vmatpush1.xpose.msra.mxu0 0.0
    %144 = vmatprep.subr.mxu0 0.0
    %145 = vmatpush1.xpose.msra.mxu0 0.0
    %146 = vmatprep.subr.mxu0 0.0
    %147 = vmatpush1.xpose.msra.mxu0 0.0
    %148 = vmatprep.subr.mxu0 0.0
    %149 = vmatpush1.xpose.msra.mxu0 0.0
    %150 = vmatprep.subr.mxu0 0.0
    %151 = vmatpush1.xpose.msra.mxu0 0.0
    %152 = vmatprep.subr.mxu0 0.0
    %153 = vmatpush1.xpose.msra.mxu0 0.0
    %154 = vmatprep.subr.mxu0 0.0
    %155 = vmatpush1.xpose.msra.mxu0 0.0
    %156 = vmatprep.subr.mxu0 0.0
    %157 = vmatpush1.xpose.msra.mxu0 0.0
    %158 = vmatprep.subr.mxu0 0.0
    %159 = vmatpush1.xpose.msra.mxu0 0.0
    %160 = vmatprep.subr.mxu0 0.0
    %161 = vmatpush1.xpose.msra.mxu0 0.0
    %162 = vmatprep.subr.mxu0 0.0
    %163 = vmatpush1.xpose.msra.mxu0 0.0
    %164 = vmatprep.subr.mxu0 0.0
    %165 = vmatpush1.xpose.msra.mxu0 0.0
    %166 = vmatprep.subr.mxu0 0.0
    %167 = vmatpush1.xpose.msra.mxu0 0.0
    %168 = vmatprep.subr.mxu0 0.0
    %169 = vmatpush1.xpose.msra.mxu0 0.0
    %170 = vmatprep.subr.mxu0 0.0
    %171 = vmatpush1.xpose.msra.mxu0 0.0
    %172 = vmatprep.subr.mxu0 0.0
    %173 = vmatpush1.xpose.msra.mxu0 0.0
    %174 = vmatprep.subr.mxu0 0.0
    %175 = vmatpush1.xpose.msra.mxu0 0.0
    %176 = vmatprep.subr.mxu0 0.0
    %177 = vmatpush1.xpose.msra.mxu0 0.0
    %178 = vmatprep.subr.mxu0 0.0
    %179 = vmatpush1.xpose.msra.mxu0 0.0
    %180 = vmatprep.mubr.f32.mxu0 0.0
    %v181 = vand.u32 %v33, 4294901760
    %182 = vmatmul.mubr.f32.gmra.mrb[0].mxu0 %v181
    %v183 = vpop.f32.mrb[0].mxu0
    %v184 = vadd.f32 %v108, %v183
    %v185 = vpop.f32.mrb[0].mxu0
    %186 = vdwg.mxu0
    %187 = vmatprep.subr.mxu0 0.0
    %v188 = vand.u32 %v33, 4294901760
    %v189 = vsub.f32 %v33, %v188
    %190 = vmatpush1.xpose.msra.mxu0 %v189
    %191 = vmatprep.subr.mxu0 0.0
    %192 = vmatpush1.xpose.msra.mxu0 0.0
    %193 = vmatprep.subr.mxu0 0.0
    %194 = vmatpush1.xpose.msra.mxu0 0.0
    %195 = vmatprep.subr.mxu0 0.0
    %196 = vmatpush1.xpose.msra.mxu0 0.0
    %197 = vmatprep.subr.mxu0 0.0
    %198 = vmatpush1.xpose.msra.mxu0 0.0
    %199 = vmatprep.subr.mxu0 0.0
    %200 = vmatpush1.xpose.msra.mxu0 0.0
    %201 = vmatprep.subr.mxu0 0.0
    %202 = vmatpush1.xpose.msra.mxu0 0.0
    %203 = vmatprep.subr.mxu0 0.0
    %204 = vmatpush1.xpose.msra.mxu0 0.0
    %205 = vmatprep.subr.mxu0 0.0
    %206 = vmatpush1.xpose.msra.mxu0 0.0
    %207 = vmatprep.subr.mxu0 0.0
    %208 = vmatpush1.xpose.msra.mxu0 0.0
    %209 = vmatprep.subr.mxu0 0.0
    %210 = vmatpush1.xpose.msra.mxu0 0.0
    %211 = vmatprep.subr.mxu0 0.0
    %212 = vmatpush1.xpose.msra.mxu0 0.0
    %213 = vmatprep.subr.mxu0 0.0
    %214 = vmatpush1.xpose.msra.mxu0 0.0
    %215 = vmatprep.subr.mxu0 0.0
    %216 = vmatpush1.xpose.msra.mxu0 0.0
    %217 = vmatprep.subr.mxu0 0.0
    %218 = vmatpush1.xpose.msra.mxu0 0.0
    %219 = vmatprep.subr.mxu0 0.0
    %220 = vmatpush1.xpose.msra.mxu0 0.0
    %221 = vmatprep.subr.mxu0 0.0
    %222 = vmatpush1.xpose.msra.mxu0 0.0
    %223 = vmatprep.subr.mxu0 0.0
    %224 = vmatpush1.xpose.msra.mxu0 0.0
    %225 = vmatprep.subr.mxu0 0.0
    %226 = vmatpush1.xpose.msra.mxu0 0.0
    %227 = vmatprep.subr.mxu0 0.0
    %228 = vmatpush1.xpose.msra.mxu0 0.0
    %229 = vmatprep.subr.mxu0 0.0
    %230 = vmatpush1.xpose.msra.mxu0 0.0
    %231 = vmatprep.subr.mxu0 0.0
    %232 = vmatpush1.xpose.msra.mxu0 0.0
    %233 = vmatprep.subr.mxu0 0.0
    %234 = vmatpush1.xpose.msra.mxu0 0.0
    %235 = vmatprep.subr.mxu0 0.0
    %236 = vmatpush1.xpose.msra.mxu0 0.0
    %237 = vmatprep.subr.mxu0 0.0
    %238 = vmatpush1.xpose.msra.mxu0 0.0
    %239 = vmatprep.subr.mxu0 0.0
    %240 = vmatpush1.xpose.msra.mxu0 0.0
    %241 = vmatprep.subr.mxu0 0.0
    %242 = vmatpush1.xpose.msra.mxu0 0.0
    %243 = vmatprep.subr.mxu0 0.0
    %244 = vmatpush1.xpose.msra.mxu0 0.0
    %245 = vmatprep.subr.mxu0 0.0
    %246 = vmatpush1.xpose.msra.mxu0 0.0
    %247 = vmatprep.subr.mxu0 0.0
    %248 = vmatpush1.xpose.msra.mxu0 0.0
    %249 = vmatprep.subr.mxu0 0.0
    %250 = vmatpush1.xpose.msra.mxu0 0.0
    %251 = vmatprep.subr.mxu0 0.0
    %252 = vmatpush1.xpose.msra.mxu0 0.0
    %253 = vmatprep.mubr.f32.mxu0 0.0
    %v254 = vand.u32 %v33, 4294901760
    %v255 = vsub.f32 %v33, %v254
    %256 = vmatmul.mubr.f32.gmra.mrb[0].mxu0 %v255
    %v257 = vpop.f32.mrb[0].mxu0
    %v258 = vadd.f32 %v184, %v257
    %v259 = vpop.f32.mrb[0].mxu0
    %260 = vdwg.mxu0
    %261 = vmatprep.subr.mxu0 0.0
    %v262 = vand.u32 %v33, 4294901760
    %263 = vmatpush1.xpose.msra.mxu0 %v262
    %264 = vmatprep.subr.mxu0 0.0
    %265 = vmatpush1.xpose.msra.mxu0 0.0
    %266 = vmatprep.subr.mxu0 0.0
    %267 = vmatpush1.xpose.msra.mxu0 0.0
    %268 = vmatprep.subr.mxu0 0.0
    %269 = vmatpush1.xpose.msra.mxu0 0.0
    %270 = vmatprep.subr.mxu0 0.0
    %271 = vmatpush1.xpose.msra.mxu0 0.0
    %272 = vmatprep.subr.mxu0 0.0
    %273 = vmatpush1.xpose.msra.mxu0 0.0
    %274 = vmatprep.subr.mxu0 0.0
    %275 = vmatpush1.xpose.msra.mxu0 0.0
    %276 = vmatprep.subr.mxu0 0.0
    %277 = vmatpush1.xpose.msra.mxu0 0.0
    %278 = vmatprep.subr.mxu0 0.0
    %279 = vmatpush1.xpose.msra.mxu0 0.0
    %280 = vmatprep.subr.mxu0 0.0
    %281 = vmatpush1.xpose.msra.mxu0 0.0
    %282 = vmatprep.subr.mxu0 0.0
    %283 = vmatpush1.xpose.msra.mxu0 0.0
    %284 = vmatprep.subr.mxu0 0.0
    %285 = vmatpush1.xpose.msra.mxu0 0.0
    %286 = vmatprep.subr.mxu0 0.0
    %287 = vmatpush1.xpose.msra.mxu0 0.0
    %288 = vmatprep.subr.mxu0 0.0
    %289 = vmatpush1.xpose.msra.mxu0 0.0
    %290 = vmatprep.subr.mxu0 0.0
    %291 = vmatpush1.xpose.msra.mxu0 0.0
    %292 = vmatprep.subr.mxu0 0.0
    %293 = vmatpush1.xpose.msra.mxu0 0.0
    %294 = vmatprep.subr.mxu0 0.0
    %295 = vmatpush1.xpose.msra.mxu0 0.0
    %296 = vmatprep.subr.mxu0 0.0
    %297 = vmatpush1.xpose.msra.mxu0 0.0
    %298 = vmatprep.subr.mxu0 0.0
    %299 = vmatpush1.xpose.msra.mxu0 0.0
    %300 = vmatprep.subr.mxu0 0.0
    %301 = vmatpush1.xpose.msra.mxu0 0.0
    %302 = vmatprep.subr.mxu0 0.0
    %303 = vmatpush1.xpose.msra.mxu0 0.0
    %304 = vmatprep.subr.mxu0 0.0
    %305 = vmatpush1.xpose.msra.mxu0 0.0
    %306 = vmatprep.subr.mxu0 0.0
    %307 = vmatpush1.xpose.msra.mxu0 0.0
    %308 = vmatprep.subr.mxu0 0.0
    %309 = vmatpush1.xpose.msra.mxu0 0.0
    %310 = vmatprep.subr.mxu0 0.0
    %311 = vmatpush1.xpose.msra.mxu0 0.0
    %312 = vmatprep.subr.mxu0 0.0
    %313 = vmatpush1.xpose.msra.mxu0 0.0
    %314 = vmatprep.subr.mxu0 0.0
    %315 = vmatpush1.xpose.msra.mxu0 0.0
    %316 = vmatprep.subr.mxu0 0.0
    %317 = vmatpush1.xpose.msra.mxu0 0.0
    %318 = vmatprep.subr.mxu0 0.0
    %319 = vmatpush1.xpose.msra.mxu0 0.0
    %320 = vmatprep.subr.mxu0 0.0
    %321 = vmatpush1.xpose.msra.mxu0 0.0
    %322 = vmatprep.subr.mxu0 0.0
    %323 = vmatpush1.xpose.msra.mxu0 0.0
    %324 = vmatprep.subr.mxu0 0.0
    %325 = vmatpush1.xpose.msra.mxu0 0.0
    %326 = vmatprep.mubr.f32.mxu0 0.0
    %v327 = vand.u32 %v33, 4294901760
    %v328 = vsub.f32 %v33, %v327
    %v329 = vand.u32 %v328, 4294901760
    %330 = vmatmul.mubr.f32.gmra.mrb[0].mxu0 %v329
    %v331 = vpop.f32.mrb[0].mxu0
    %v332 = vadd.f32 %v258, %v331
    %v333 = vpop.f32.mrb[0].mxu0
    %334 = vdwg.mxu0
    %335 = vmatprep.subr.mxu0 0.0
    %v336 = vand.u32 %v33, 4294901760
    %v337 = vsub.f32 %v33, %v336
    %v338 = vand.u32 %v337, 4294901760
    %339 = vmatpush1.xpose.msra.mxu0 %v338
    %340 = vmatprep.subr.mxu0 0.0
    %341 = vmatpush1.xpose.msra.mxu0 0.0
    %342 = vmatprep.subr.mxu0 0.0
    %343 = vmatpush1.xpose.msra.mxu0 0.0
    %344 = vmatprep.subr.mxu0 0.0
    %345 = vmatpush1.xpose.msra.mxu0 0.0
    %346 = vmatprep.subr.mxu0 0.0
    %347 = vmatpush1.xpose.msra.mxu0 0.0
    %348 = vmatprep.subr.mxu0 0.0
    %349 = vmatpush1.xpose.msra.mxu0 0.0
    %350 = vmatprep.subr.mxu0 0.0
    %351 = vmatpush1.xpose.msra.mxu0 0.0
    %352 = vmatprep.subr.mxu0 0.0
    %353 = vmatpush1.xpose.msra.mxu0 0.0
    %354 = vmatprep.subr.mxu0 0.0
    %355 = vmatpush1.xpose.msra.mxu0 0.0
    %356 = vmatprep.subr.mxu0 0.0
    %357 = vmatpush1.xpose.msra.mxu0 0.0
    %358 = vmatprep.subr.mxu0 0.0
    %359 = vmatpush1.xpose.msra.mxu0 0.0
    %360 = vmatprep.subr.mxu0 0.0
    %361 = vmatpush1.xpose.msra.mxu0 0.0
    %362 = vmatprep.subr.mxu0 0.0
    %363 = vmatpush1.xpose.msra.mxu0 0.0
    %364 = vmatprep.subr.mxu0 0.0
    %365 = vmatpush1.xpose.msra.mxu0 0.0
    %366 = vmatprep.subr.mxu0 0.0
    %367 = vmatpush1.xpose.msra.mxu0 0.0
    %368 = vmatprep.subr.mxu0 0.0
    %369 = vmatpush1.xpose.msra.mxu0 0.0
    %370 = vmatprep.subr.mxu0 0.0
    %371 = vmatpush1.xpose.msra.mxu0 0.0
    %372 = vmatprep.subr.mxu0 0.0
    %373 = vmatpush1.xpose.msra.mxu0 0.0
    %374 = vmatprep.subr.mxu0 0.0
    %375 = vmatpush1.xpose.msra.mxu0 0.0
    %376 = vmatprep.subr.mxu0 0.0
    %377 = vmatpush1.xpose.msra.mxu0 0.0
    %378 = vmatprep.subr.mxu0 0.0
    %379 = vmatpush1.xpose.msra.mxu0 0.0
    %380 = vmatprep.subr.mxu0 0.0
    %381 = vmatpush1.xpose.msra.mxu0 0.0
    %382 = vmatprep.subr.mxu0 0.0
    %383 = vmatpush1.xpose.msra.mxu0 0.0
    %384 = vmatprep.subr.mxu0 0.0
    %385 = vmatpush1.xpose.msra.mxu0 0.0
    %386 = vmatprep.subr.mxu0 0.0
    %387 = vmatpush1.xpose.msra.mxu0 0.0
    %388 = vmatprep.subr.mxu0 0.0
    %389 = vmatpush1.xpose.msra.mxu0 0.0
    %390 = vmatprep.subr.mxu0 0.0
    %391 = vmatpush1.xpose.msra.mxu0 0.0
    %392 = vmatprep.subr.mxu0 0.0
    %393 = vmatpush1.xpose.msra.mxu0 0.0
    %394 = vmatprep.subr.mxu0 0.0
    %395 = vmatpush1.xpose.msra.mxu0 0.0
    %396 = vmatprep.subr.mxu0 0.0
    %397 = vmatpush1.xpose.msra.mxu0 0.0
    %398 = vmatprep.subr.mxu0 0.0
    %399 = vmatpush1.xpose.msra.mxu0 0.0
    %400 = vmatprep.subr.mxu0 0.0
    %401 = vmatpush1.xpose.msra.mxu0 0.0
    %402 = vmatprep.mubr.f32.mxu0 0.0
    %v403 = vand.u32 %v33, 4294901760
    %404 = vmatmul.mubr.f32.gmra.mrb[0].mxu0 %v403
    %v405 = vpop.f32.mrb[0].mxu0
    %v406 = vadd.f32 %v332, %v405
    %v407 = vpop.f32.mrb[0].mxu0
    %408 = vdwg.mxu0
    %409 = vmatprep.subr.mxu0 0.0
    %v410 = vand.u32 %v33, 4294901760
    %411 = vmatpush1.xpose.msra.mxu0 %v410
    %412 = vmatprep.subr.mxu0 0.0
    %413 = vmatpush1.xpose.msra.mxu0 0.0
    %414 = vmatprep.subr.mxu0 0.0
    %415 = vmatpush1.xpose.msra.mxu0 0.0
    %416 = vmatprep.subr.mxu0 0.0
    %417 = vmatpush1.xpose.msra.mxu0 0.0
    %418 = vmatprep.subr.mxu0 0.0
    %419 = vmatpush1.xpose.msra.mxu0 0.0
    %420 = vmatprep.subr.mxu0 0.0
    %421 = vmatpush1.xpose.msra.mxu0 0.0
    %422 = vmatprep.subr.mxu0 0.0
    %423 = vmatpush1.xpose.msra.mxu0 0.0
    %424 = vmatprep.subr.mxu0 0.0
    %425 = vmatpush1.xpose.msra.mxu0 0.0
    %426 = vmatprep.subr.mxu0 0.0
    %427 = vmatpush1.xpose.msra.mxu0 0.0
    %428 = vmatprep.subr.mxu0 0.0
    %429 = vmatpush1.xpose.msra.mxu0 0.0
    %430 = vmatprep.subr.mxu0 0.0
    %431 = vmatpush1.xpose.msra.mxu0 0.0
    %432 = vmatprep.subr.mxu0 0.0
    %433 = vmatpush1.xpose.msra.mxu0 0.0
    %434 = vmatprep.subr.mxu0 0.0
    %435 = vmatpush1.xpose.msra.mxu0 0.0
    %436 = vmatprep.subr.mxu0 0.0
    %437 = vmatpush1.xpose.msra.mxu0 0.0
    %438 = vmatprep.subr.mxu0 0.0
    %439 = vmatpush1.xpose.msra.mxu0 0.0
    %440 = vmatprep.subr.mxu0 0.0
    %441 = vmatpush1.xpose.msra.mxu0 0.0
    %442 = vmatprep.subr.mxu0 0.0
    %443 = vmatpush1.xpose.msra.mxu0 0.0
    %444 = vmatprep.subr.mxu0 0.0
    %445 = vmatpush1.xpose.msra.mxu0 0.0
    %446 = vmatprep.subr.mxu0 0.0
    %447 = vmatpush1.xpose.msra.mxu0 0.0
    %448 = vmatprep.subr.mxu0 0.0
    %449 = vmatpush1.xpose.msra.mxu0 0.0
    %450 = vmatprep.subr.mxu0 0.0
    %451 = vmatpush1.xpose.msra.mxu0 0.0
    %452 = vmatprep.subr.mxu0 0.0
    %453 = vmatpush1.xpose.msra.mxu0 0.0
    %454 = vmatprep.subr.mxu0 0.0
    %455 = vmatpush1.xpose.msra.mxu0 0.0
    %456 = vmatprep.subr.mxu0 0.0
    %457 = vmatpush1.xpose.msra.mxu0 0.0
    %458 = vmatprep.subr.mxu0 0.0
    %459 = vmatpush1.xpose.msra.mxu0 0.0
    %460 = vmatprep.subr.mxu0 0.0
    %461 = vmatpush1.xpose.msra.mxu0 0.0
    %462 = vmatprep.subr.mxu0 0.0
    %463 = vmatpush1.xpose.msra.mxu0 0.0
    %464 = vmatprep.subr.mxu0 0.0
    %465 = vmatpush1.xpose.msra.mxu0 0.0
    %466 = vmatprep.subr.mxu0 0.0
    %467 = vmatpush1.xpose.msra.mxu0 0.0
    %468 = vmatprep.subr.mxu0 0.0
    %469 = vmatpush1.xpose.msra.mxu0 0.0
    %470 = vmatprep.subr.mxu0 0.0
    %471 = vmatpush1.xpose.msra.mxu0 0.0
    %472 = vmatprep.subr.mxu0 0.0
    %473 = vmatpush1.xpose.msra.mxu0 0.0
    %474 = vmatprep.mubr.f32.mxu0 0.0
    %v475 = vand.u32 %v33, 4294901760
    %476 = vmatmul.mubr.f32.gmra.mrb[0].mxu0 %v475
    %v477 = vpop.f32.mrb[0].mxu0
    %v478 = vadd.f32 %v406, %v477
    %v479 = vpop.f32.mrb[0].mxu0
    %480 = vdwg.mxu0
    %v482 = vsel %vm31, %v27, 0
    %484 = vmatprep.subr.mxu0 0.0
    %v485 = vand.u32 %v482, 4294901760
    %486 = vmatpush1.xpose.msra.mxu0 %v485
    %487 = vmatprep.subr.mxu0 0.0
    %488 = vmatpush1.xpose.msra.mxu0 0.0
    %489 = vmatprep.subr.mxu0 0.0
    %490 = vmatpush1.xpose.msra.mxu0 0.0
    %491 = vmatprep.subr.mxu0 0.0
    %492 = vmatpush1.xpose.msra.mxu0 0.0
    %493 = vmatprep.subr.mxu0 0.0
    %494 = vmatpush1.xpose.msra.mxu0 0.0
    %495 = vmatprep.subr.mxu0 0.0
    %496 = vmatpush1.xpose.msra.mxu0 0.0
    %497 = vmatprep.subr.mxu0 0.0
    %498 = vmatpush1.xpose.msra.mxu0 0.0
    %499 = vmatprep.subr.mxu0 0.0
    %500 = vmatpush1.xpose.msra.mxu0 0.0
    %501 = vmatprep.subr.mxu0 0.0
    %502 = vmatpush1.xpose.msra.mxu0 0.0
    %503 = vmatprep.subr.mxu0 0.0
    %504 = vmatpush1.xpose.msra.mxu0 0.0
    %505 = vmatprep.subr.mxu0 0.0
    %506 = vmatpush1.xpose.msra.mxu0 0.0
    %507 = vmatprep.subr.mxu0 0.0
    %508 = vmatpush1.xpose.msra.mxu0 0.0
    %509 = vmatprep.subr.mxu0 0.0
    %510 = vmatpush1.xpose.msra.mxu0 0.0
    %511 = vmatprep.subr.mxu0 0.0
    %512 = vmatpush1.xpose.msra.mxu0 0.0
    %513 = vmatprep.subr.mxu0 0.0
    %514 = vmatpush1.xpose.msra.mxu0 0.0
    %515 = vmatprep.subr.mxu0 0.0
    %516 = vmatpush1.xpose.msra.mxu0 0.0
    %517 = vmatprep.subr.mxu0 0.0
    %518 = vmatpush1.xpose.msra.mxu0 0.0
    %519 = vmatprep.subr.mxu0 0.0
    %520 = vmatpush1.xpose.msra.mxu0 0.0
    %521 = vmatprep.subr.mxu0 0.0
    %522 = vmatpush1.xpose.msra.mxu0 0.0
    %523 = vmatprep.subr.mxu0 0.0
    %524 = vmatpush1.xpose.msra.mxu0 0.0
    %525 = vmatprep.subr.mxu0 0.0
    %526 = vmatpush1.xpose.msra.mxu0 0.0
    %527 = vmatprep.subr.mxu0 0.0
    %528 = vmatpush1.xpose.msra.mxu0 0.0
    %529 = vmatprep.subr.mxu0 0.0
    %530 = vmatpush1.xpose.msra.mxu0 0.0
    %531 = vmatprep.subr.mxu0 0.0
    %532 = vmatpush1.xpose.msra.mxu0 0.0
    %533 = vmatprep.subr.mxu0 0.0
    %534 = vmatpush1.xpose.msra.mxu0 0.0
    %535 = vmatprep.subr.mxu0 0.0
    %536 = vmatpush1.xpose.msra.mxu0 0.0
    %537 = vmatprep.subr.mxu0 0.0
    %538 = vmatpush1.xpose.msra.mxu0 0.0
    %539 = vmatprep.subr.mxu0 0.0
    %540 = vmatpush1.xpose.msra.mxu0 0.0
    %541 = vmatprep.subr.mxu0 0.0
    %542 = vmatpush1.xpose.msra.mxu0 0.0
    %543 = vmatprep.subr.mxu0 0.0
    %544 = vmatpush1.xpose.msra.mxu0 0.0
    %545 = vmatprep.subr.mxu0 0.0
    %546 = vmatpush1.xpose.msra.mxu0 0.0
    %547 = vmatprep.subr.mxu0 0.0
    %548 = vmatpush1.xpose.msra.mxu0 0.0
    %549 = vmatprep.mubr.f32.mxu0 0.0
    %v550 = vand.u32 %v482, 4294901760
    %v551 = vsub.f32 %v482, %v550
    %v552 = vand.u32 %v551, 4294901760
    %v553 = vsub.f32 %v551, %v552
    %v554 = vand.u32 %v553, 4294901760
    %555 = vmatmul.mubr.f32.gmra.mrb[0].mxu0 %v554
    %v556 = vpop.f32.mrb[0].mxu0
    %v557 = vadd.f32 0.0, %v556
    %v558 = vpop.f32.mrb[0].mxu0
    %559 = vdwg.mxu0
    %560 = vmatprep.subr.mxu0 0.0
    %v561 = vand.u32 %v482, 4294901760
    %v562 = vsub.f32 %v482, %v561
    %v563 = vand.u32 %v562, 4294901760
    %v564 = vsub.f32 %v562, %v563
    %v565 = vand.u32 %v564, 4294901760
    %566 = vmatpush1.xpose.msra.mxu0 %v565
    %567 = vmatprep.subr.mxu0 0.0
    %568 = vmatpush1.xpose.msra.mxu0 0.0
    %569 = vmatprep.subr.mxu0 0.0
    %570 = vmatpush1.xpose.msra.mxu0 0.0
    %571 = vmatprep.subr.mxu0 0.0
    %572 = vmatpush1.xpose.msra.mxu0 0.0
    %573 = vmatprep.subr.mxu0 0.0
    %574 = vmatpush1.xpose.msra.mxu0 0.0
    %575 = vmatprep.subr.mxu0 0.0
    %576 = vmatpush1.xpose.msra.mxu0 0.0
    %577 = vmatprep.subr.mxu0 0.0
    %578 = vmatpush1.xpose.msra.mxu0 0.0
    %579 = vmatprep.subr.mxu0 0.0
    %580 = vmatpush1.xpose.msra.mxu0 0.0
    %581 = vmatprep.subr.mxu0 0.0
    %582 = vmatpush1.xpose.msra.mxu0 0.0
    %583 = vmatprep.subr.mxu0 0.0
    %584 = vmatpush1.xpose.msra.mxu0 0.0
    %585 = vmatprep.subr.mxu0 0.0
    %586 = vmatpush1.xpose.msra.mxu0 0.0
    %587 = vmatprep.subr.mxu0 0.0
    %588 = vmatpush1.xpose.msra.mxu0 0.0
    %589 = vmatprep.subr.mxu0 0.0
    %590 = vmatpush1.xpose.msra.mxu0 0.0
    %591 = vmatprep.subr.mxu0 0.0
    %592 = vmatpush1.xpose.msra.mxu0 0.0
    %593 = vmatprep.subr.mxu0 0.0
    %594 = vmatpush1.xpose.msra.mxu0 0.0
    %595 = vmatprep.subr.mxu0 0.0
    %596 = vmatpush1.xpose.msra.mxu0 0.0
    %597 = vmatprep.subr.mxu0 0.0
    %598 = vmatpush1.xpose.msra.mxu0 0.0
    %599 = vmatprep.subr.mxu0 0.0
    %600 = vmatpush1.xpose.msra.mxu0 0.0
    %601 = vmatprep.subr.mxu0 0.0
    %602 = vmatpush1.xpose.msra.mxu0 0.0
    %603 = vmatprep.subr.mxu0 0.0
    %604 = vmatpush1.xpose.msra.mxu0 0.0
    %605 = vmatprep.subr.mxu0 0.0
    %606 = vmatpush1.xpose.msra.mxu0 0.0
    %607 = vmatprep.subr.mxu0 0.0
    %608 = vmatpush1.xpose.msra.mxu0 0.0
    %609 = vmatprep.subr.mxu0 0.0
    %610 = vmatpush1.xpose.msra.mxu0 0.0
    %611 = vmatprep.subr.mxu0 0.0
    %612 = vmatpush1.xpose.msra.mxu0 0.0
    %613 = vmatprep.subr.mxu0 0.0
    %614 = vmatpush1.xpose.msra.mxu0 0.0
    %615 = vmatprep.subr.mxu0 0.0
    %616 = vmatpush1.xpose.msra.mxu0 0.0
    %617 = vmatprep.subr.mxu0 0.0
    %618 = vmatpush1.xpose.msra.mxu0 0.0
    %619 = vmatprep.subr.mxu0 0.0
    %620 = vmatpush1.xpose.msra.mxu0 0.0
    %621 = vmatprep.subr.mxu0 0.0
    %622 = vmatpush1.xpose.msra.mxu0 0.0
    %623 = vmatprep.subr.mxu0 0.0
    %624 = vmatpush1.xpose.msra.mxu0 0.0
    %625 = vmatprep.subr.mxu0 0.0
    %626 = vmatpush1.xpose.msra.mxu0 0.0
    %627 = vmatprep.subr.mxu0 0.0
    %628 = vmatpush1.xpose.msra.mxu0 0.0
    %629 = vmatprep.mubr.f32.mxu0 0.0
    %v630 = vand.u32 %v482, 4294901760
    %631 = vmatmul.mubr.f32.gmra.mrb[0].mxu0 %v630
    %v632 = vpop.f32.mrb[0].mxu0
    %v633 = vadd.f32 %v557, %v632
    %v634 = vpop.f32.mrb[0].mxu0
    %635 = vdwg.mxu0
    %636 = vmatprep.subr.mxu0 0.0
    %v637 = vand.u32 %v482, 4294901760
    %v638 = vsub.f32 %v482, %v637
    %639 = vmatpush1.xpose.msra.mxu0 %v638
    %640 = vmatprep.subr.mxu0 0.0
    %641 = vmatpush1.xpose.msra.mxu0 0.0
    %642 = vmatprep.subr.mxu0 0.0
    %643 = vmatpush1.xpose.msra.mxu0 0.0
    %644 = vmatprep.subr.mxu0 0.0
    %645 = vmatpush1.xpose.msra.mxu0 0.0
    %646 = vmatprep.subr.mxu0 0.0
    %647 = vmatpush1.xpose.msra.mxu0 0.0
    %648 = vmatprep.subr.mxu0 0.0
    %649 = vmatpush1.xpose.msra.mxu0 0.0
    %650 = vmatprep.subr.mxu0 0.0
    %651 = vmatpush1.xpose.msra.mxu0 0.0
    %652 = vmatprep.subr.mxu0 0.0
    %653 = vmatpush1.xpose.msra.mxu0 0.0
    %654 = vmatprep.subr.mxu0 0.0
    %655 = vmatpush1.xpose.msra.mxu0 0.0
    %656 = vmatprep.subr.mxu0 0.0
    %657 = vmatpush1.xpose.msra.mxu0 0.0
    %658 = vmatprep.subr.mxu0 0.0
    %659 = vmatpush1.xpose.msra.mxu0 0.0
    %660 = vmatprep.subr.mxu0 0.0
    %661 = vmatpush1.xpose.msra.mxu0 0.0
    %662 = vmatprep.subr.mxu0 0.0
    %663 = vmatpush1.xpose.msra.mxu0 0.0
    %664 = vmatprep.subr.mxu0 0.0
    %665 = vmatpush1.xpose.msra.mxu0 0.0
    %666 = vmatprep.subr.mxu0 0.0
    %667 = vmatpush1.xpose.msra.mxu0 0.0
    %668 = vmatprep.subr.mxu0 0.0
    %669 = vmatpush1.xpose.msra.mxu0 0.0
    %670 = vmatprep.subr.mxu0 0.0
    %671 = vmatpush1.xpose.msra.mxu0 0.0
    %672 = vmatprep.subr.mxu0 0.0
    %673 = vmatpush1.xpose.msra.mxu0 0.0
    %674 = vmatprep.subr.mxu0 0.0
    %675 = vmatpush1.xpose.msra.mxu0 0.0
    %676 = vmatprep.subr.mxu0 0.0
    %677 = vmatpush1.xpose.msra.mxu0 0.0
    %678 = vmatprep.subr.mxu0 0.0
    %679 = vmatpush1.xpose.msra.mxu0 0.0
    %680 = vmatprep.subr.mxu0 0.0
    %681 = vmatpush1.xpose.msra.mxu0 0.0
    %682 = vmatprep.subr.mxu0 0.0
    %683 = vmatpush1.xpose.msra.mxu0 0.0
    %684 = vmatprep.subr.mxu0 0.0
    %685 = vmatpush1.xpose.msra.mxu0 0.0
    %686 = vmatprep.subr.mxu0 0.0
    %687 = vmatpush1.xpose.msra.mxu0 0.0
    %688 = vmatprep.subr.mxu0 0.0
    %689 = vmatpush1.xpose.msra.mxu0 0.0
    %690 = vmatprep.subr.mxu0 0.0
    %691 = vmatpush1.xpose.msra.mxu0 0.0
    %692 = vmatprep.subr.mxu0 0.0
    %693 = vmatpush1.xpose.msra.mxu0 0.0
    %694 = vmatprep.subr.mxu0 0.0
    %695 = vmatpush1.xpose.msra.mxu0 0.0
    %696 = vmatprep.subr.mxu0 0.0
    %697 = vmatpush1.xpose.msra.mxu0 0.0
    %698 = vmatprep.subr.mxu0 0.0
    %699 = vmatpush1.xpose.msra.mxu0 0.0
    %700 = vmatprep.subr.mxu0 0.0
    %701 = vmatpush1.xpose.msra.mxu0 0.0
    %702 = vmatprep.mubr.f32.mxu0 0.0
    %v703 = vand.u32 %v482, 4294901760
    %v704 = vsub.f32 %v482, %v703
    %705 = vmatmul.mubr.f32.gmra.mrb[0].mxu0 %v704
    %v706 = vpop.f32.mrb[0].mxu0
    %v707 = vadd.f32 %v633, %v706
    %v708 = vpop.f32.mrb[0].mxu0
    %709 = vdwg.mxu0
    %710 = vmatprep.subr.mxu0 0.0
    %v711 = vand.u32 %v482, 4294901760
    %712 = vmatpush1.xpose.msra.mxu0 %v711
    %713 = vmatprep.subr.mxu0 0.0
    %714 = vmatpush1.xpose.msra.mxu0 0.0
    %715 = vmatprep.subr.mxu0 0.0
    %716 = vmatpush1.xpose.msra.mxu0 0.0
    %717 = vmatprep.subr.mxu0 0.0
    %718 = vmatpush1.xpose.msra.mxu0 0.0
    %719 = vmatprep.subr.mxu0 0.0
    %720 = vmatpush1.xpose.msra.mxu0 0.0
    %721 = vmatprep.subr.mxu0 0.0
    %722 = vmatpush1.xpose.msra.mxu0 0.0
    %723 = vmatprep.subr.mxu0 0.0
    %724 = vmatpush1.xpose.msra.mxu0 0.0
    %725 = vmatprep.subr.mxu0 0.0
    %726 = vmatpush1.xpose.msra.mxu0 0.0
    %727 = vmatprep.subr.mxu0 0.0
    %728 = vmatpush1.xpose.msra.mxu0 0.0
    %729 = vmatprep.subr.mxu0 0.0
    %730 = vmatpush1.xpose.msra.mxu0 0.0
    %731 = vmatprep.subr.mxu0 0.0
    %732 = vmatpush1.xpose.msra.mxu0 0.0
    %733 = vmatprep.subr.mxu0 0.0
    %734 = vmatpush1.xpose.msra.mxu0 0.0
    %735 = vmatprep.subr.mxu0 0.0
    %736 = vmatpush1.xpose.msra.mxu0 0.0
    %737 = vmatprep.subr.mxu0 0.0
    %738 = vmatpush1.xpose.msra.mxu0 0.0
    %739 = vmatprep.subr.mxu0 0.0
    %740 = vmatpush1.xpose.msra.mxu0 0.0
    %741 = vmatprep.subr.mxu0 0.0
    %742 = vmatpush1.xpose.msra.mxu0 0.0
    %743 = vmatprep.subr.mxu0 0.0
    %744 = vmatpush1.xpose.msra.mxu0 0.0
    %745 = vmatprep.subr.mxu0 0.0
    %746 = vmatpush1.xpose.msra.mxu0 0.0
    %747 = vmatprep.subr.mxu0 0.0
    %748 = vmatpush1.xpose.msra.mxu0 0.0
    %749 = vmatprep.subr.mxu0 0.0
    %750 = vmatpush1.xpose.msra.mxu0 0.0
    %751 = vmatprep.subr.mxu0 0.0
    %752 = vmatpush1.xpose.msra.mxu0 0.0
    %753 = vmatprep.subr.mxu0 0.0
    %754 = vmatpush1.xpose.msra.mxu0 0.0
    %755 = vmatprep.subr.mxu0 0.0
    %756 = vmatpush1.xpose.msra.mxu0 0.0
    %757 = vmatprep.subr.mxu0 0.0
    %758 = vmatpush1.xpose.msra.mxu0 0.0
    %759 = vmatprep.subr.mxu0 0.0
    %760 = vmatpush1.xpose.msra.mxu0 0.0
    %761 = vmatprep.subr.mxu0 0.0
    %762 = vmatpush1.xpose.msra.mxu0 0.0
    %763 = vmatprep.subr.mxu0 0.0
    %764 = vmatpush1.xpose.msra.mxu0 0.0
    %765 = vmatprep.subr.mxu0 0.0
    %766 = vmatpush1.xpose.msra.mxu0 0.0
    %767 = vmatprep.subr.mxu0 0.0
    %768 = vmatpush1.xpose.msra.mxu0 0.0
    %769 = vmatprep.subr.mxu0 0.0
    %770 = vmatpush1.xpose.msra.mxu0 0.0
    %771 = vmatprep.subr.mxu0 0.0
    %772 = vmatpush1.xpose.msra.mxu0 0.0
    %773 = vmatprep.subr.mxu0 0.0
    %774 = vmatpush1.xpose.msra.mxu0 0.0
    %775 = vmatprep.mubr.f32.mxu0 0.0
    %v776 = vand.u32 %v482, 4294901760
    %v777 = vsub.f32 %v482, %v776
    %v778 = vand.u32 %v777, 4294901760
    %779 = vmatmul.mubr.f32.gmra.mrb[0].mxu0 %v778
    %v780 = vpop.f32.mrb[0].mxu0
    %v781 = vadd.f32 %v707, %v780
    %v782 = vpop.f32.mrb[0].mxu0
    %783 = vdwg.mxu0
    %784 = vmatprep.subr.mxu0 0.0
    %v785 = vand.u32 %v482, 4294901760
    %v786 = vsub.f32 %v482, %v785
    %v787 = vand.u32 %v786, 4294901760
    %788 = vmatpush1.xpose.msra.mxu0 %v787
    %789 = vmatprep.subr.mxu0 0.0
    %790 = vmatpush1.xpose.msra.mxu0 0.0
    %791 = vmatprep.subr.mxu0 0.0
    %792 = vmatpush1.xpose.msra.mxu0 0.0
    %793 = vmatprep.subr.mxu0 0.0
    %794 = vmatpush1.xpose.msra.mxu0 0.0
    %795 = vmatprep.subr.mxu0 0.0
    %796 = vmatpush1.xpose.msra.mxu0 0.0
    %797 = vmatprep.subr.mxu0 0.0
    %798 = vmatpush1.xpose.msra.mxu0 0.0
    %799 = vmatprep.subr.mxu0 0.0
    %800 = vmatpush1.xpose.msra.mxu0 0.0
    %801 = vmatprep.subr.mxu0 0.0
    %802 = vmatpush1.xpose.msra.mxu0 0.0
    %803 = vmatprep.subr.mxu0 0.0
    %804 = vmatpush1.xpose.msra.mxu0 0.0
    %805 = vmatprep.subr.mxu0 0.0
    %806 = vmatpush1.xpose.msra.mxu0 0.0
    %807 = vmatprep.subr.mxu0 0.0
    %808 = vmatpush1.xpose.msra.mxu0 0.0
    %809 = vmatprep.subr.mxu0 0.0
    %810 = vmatpush1.xpose.msra.mxu0 0.0
    %811 = vmatprep.subr.mxu0 0.0
    %812 = vmatpush1.xpose.msra.mxu0 0.0
    %813 = vmatprep.subr.mxu0 0.0
    %814 = vmatpush1.xpose.msra.mxu0 0.0
    %815 = vmatprep.subr.mxu0 0.0
    %816 = vmatpush1.xpose.msra.mxu0 0.0
    %817 = vmatprep.subr.mxu0 0.0
    %818 = vmatpush1.xpose.msra.mxu0 0.0
    %819 = vmatprep.subr.mxu0 0.0
    %820 = vmatpush1.xpose.msra.mxu0 0.0
    %821 = vmatprep.subr.mxu0 0.0
    %822 = vmatpush1.xpose.msra.mxu0 0.0
    %823 = vmatprep.subr.mxu0 0.0
    %824 = vmatpush1.xpose.msra.mxu0 0.0
    %825 = vmatprep.subr.mxu0 0.0
    %826 = vmatpush1.xpose.msra.mxu0 0.0
    %827 = vmatprep.subr.mxu0 0.0
    %828 = vmatpush1.xpose.msra.mxu0 0.0
    %829 = vmatprep.subr.mxu0 0.0
    %830 = vmatpush1.xpose.msra.mxu0 0.0
    %831 = vmatprep.subr.mxu0 0.0
    %832 = vmatpush1.xpose.msra.mxu0 0.0
    %833 = vmatprep.subr.mxu0 0.0
    %834 = vmatpush1.xpose.msra.mxu0 0.0
    %835 = vmatprep.subr.mxu0 0.0
    %836 = vmatpush1.xpose.msra.mxu0 0.0
    %837 = vmatprep.subr.mxu0 0.0
    %838 = vmatpush1.xpose.msra.mxu0 0.0
    %839 = vmatprep.subr.mxu0 0.0
    %840 = vmatpush1.xpose.msra.mxu0 0.0
    %841 = vmatprep.subr.mxu0 0.0
    %842 = vmatpush1.xpose.msra.mxu0 0.0
    %843 = vmatprep.subr.mxu0 0.0
    %844 = vmatpush1.xpose.msra.mxu0 0.0
    %845 = vmatprep.subr.mxu0 0.0
    %846 = vmatpush1.xpose.msra.mxu0 0.0
    %847 = vmatprep.subr.mxu0 0.0
    %848 = vmatpush1.xpose.msra.mxu0 0.0
    %849 = vmatprep.subr.mxu0 0.0
    %850 = vmatpush1.xpose.msra.mxu0 0.0
    %851 = vmatprep.mubr.f32.mxu0 0.0
    %v852 = vand.u32 %v482, 4294901760
    %853 = vmatmul.mubr.f32.gmra.mrb[0].mxu0 %v852
    %v854 = vpop.f32.mrb[0].mxu0
    %v855 = vadd.f32 %v781, %v854
    %v856 = vpop.f32.mrb[0].mxu0
    %857 = vdwg.mxu0
    %858 = vmatprep.subr.mxu0 0.0
    %v859 = vand.u32 %v482, 4294901760
    %860 = vmatpush1.xpose.msra.mxu0 %v859
    %861 = vmatprep.subr.mxu0 0.0
    %862 = vmatpush1.xpose.msra.mxu0 0.0
    %863 = vmatprep.subr.mxu0 0.0
    %864 = vmatpush1.xpose.msra.mxu0 0.0
    %865 = vmatprep.subr.mxu0 0.0
    %866 = vmatpush1.xpose.msra.mxu0 0.0
    %867 = vmatprep.subr.mxu0 0.0
    %868 = vmatpush1.xpose.msra.mxu0 0.0
    %869 = vmatprep.subr.mxu0 0.0
    %870 = vmatpush1.xpose.msra.mxu0 0.0
    %871 = vmatprep.subr.mxu0 0.0
    %872 = vmatpush1.xpose.msra.mxu0 0.0
    %873 = vmatprep.subr.mxu0 0.0
    %874 = vmatpush1.xpose.msra.mxu0 0.0
    %875 = vmatprep.subr.mxu0 0.0
    %876 = vmatpush1.xpose.msra.mxu0 0.0
    %877 = vmatprep.subr.mxu0 0.0
    %878 = vmatpush1.xpose.msra.mxu0 0.0
    %879 = vmatprep.subr.mxu0 0.0
    %880 = vmatpush1.xpose.msra.mxu0 0.0
    %881 = vmatprep.subr.mxu0 0.0
    %882 = vmatpush1.xpose.msra.mxu0 0.0
    %883 = vmatprep.subr.mxu0 0.0
    %884 = vmatpush1.xpose.msra.mxu0 0.0
    %885 = vmatprep.subr.mxu0 0.0
    %886 = vmatpush1.xpose.msra.mxu0 0.0
    %887 = vmatprep.subr.mxu0 0.0
    %888 = vmatpush1.xpose.msra.mxu0 0.0
    %889 = vmatprep.subr.mxu0 0.0
    %890 = vmatpush1.xpose.msra.mxu0 0.0
    %891 = vmatprep.subr.mxu0 0.0
    %892 = vmatpush1.xpose.msra.mxu0 0.0
    %893 = vmatprep.subr.mxu0 0.0
    %894 = vmatpush1.xpose.msra.mxu0 0.0
    %895 = vmatprep.subr.mxu0 0.0
    %896 = vmatpush1.xpose.msra.mxu0 0.0
    %897 = vmatprep.subr.mxu0 0.0
    %898 = vmatpush1.xpose.msra.mxu0 0.0
    %899 = vmatprep.subr.mxu0 0.0
    %900 = vmatpush1.xpose.msra.mxu0 0.0
    %901 = vmatprep.subr.mxu0 0.0
    %902 = vmatpush1.xpose.msra.mxu0 0.0
    %903 = vmatprep.subr.mxu0 0.0
    %904 = vmatpush1.xpose.msra.mxu0 0.0
    %905 = vmatprep.subr.mxu0 0.0
    %906 = vmatpush1.xpose.msra.mxu0 0.0
    %907 = vmatprep.subr.mxu0 0.0
    %908 = vmatpush1.xpose.msra.mxu0 0.0
    %909 = vmatprep.subr.mxu0 0.0
    %910 = vmatpush1.xpose.msra.mxu0 0.0
    %911 = vmatprep.subr.mxu0 0.0
    %912 = vmatpush1.xpose.msra.mxu0 0.0
    %913 = vmatprep.subr.mxu0 0.0
    %914 = vmatpush1.xpose.msra.mxu0 0.0
    %915 = vmatprep.subr.mxu0 0.0
    %916 = vmatpush1.xpose.msra.mxu0 0.0
    %917 = vmatprep.subr.mxu0 0.0
    %918 = vmatpush1.xpose.msra.mxu0 0.0
    %919 = vmatprep.subr.mxu0 0.0
    %920 = vmatpush1.xpose.msra.mxu0 0.0
    %921 = vmatprep.subr.mxu0 0.0
    %922 = vmatpush1.xpose.msra.mxu0 0.0
    %923 = vmatprep.mubr.f32.mxu0 0.0
    %v924 = vand.u32 %v482, 4294901760
    %925 = vmatmul.mubr.f32.gmra.mrb[0].mxu0 %v924
    %v926 = vpop.f32.mrb[0].mxu0
    %v927 = vadd.f32 %v855, %v926
    %v928 = vpop.f32.mrb[0].mxu0
    %929 = vdwg.mxu0
    %v931 = vsel %vm31, %v28, 0
    %933 = vmatprep.subr.mxu0 0.0
    %v934 = vand.u32 %v931, 4294901760
    %935 = vmatpush1.xpose.msra.mxu0 %v934
    %936 = vmatprep.subr.mxu0 0.0
    %937 = vmatpush1.xpose.msra.mxu0 0.0
    %938 = vmatprep.subr.mxu0 0.0
    %939 = vmatpush1.xpose.msra.mxu0 0.0
    %940 = vmatprep.subr.mxu0 0.0
    %941 = vmatpush1.xpose.msra.mxu0 0.0
    %942 = vmatprep.subr.mxu0 0.0
    %943 = vmatpush1.xpose.msra.mxu0 0.0
    %944 = vmatprep.subr.mxu0 0.0
    %945 = vmatpush1.xpose.msra.mxu0 0.0
    %946 = vmatprep.subr.mxu0 0.0
    %947 = vmatpush1.xpose.msra.mxu0 0.0
    %948 = vmatprep.subr.mxu0 0.0
    %949 = vmatpush1.xpose.msra.mxu0 0.0
    %950 = vmatprep.subr.mxu0 0.0
    %951 = vmatpush1.xpose.msra.mxu0 0.0
    %952 = vmatprep.subr.mxu0 0.0
    %953 = vmatpush1.xpose.msra.mxu0 0.0
    %954 = vmatprep.subr.mxu0 0.0
    %955 = vmatpush1.xpose.msra.mxu0 0.0
    %956 = vmatprep.subr.mxu0 0.0
    %957 = vmatpush1.xpose.msra.mxu0 0.0
    %958 = vmatprep.subr.mxu0 0.0
    %959 = vmatpush1.xpose.msra.mxu0 0.0
    %960 = vmatprep.subr.mxu0 0.0
    %961 = vmatpush1.xpose.msra.mxu0 0.0
    %962 = vmatprep.subr.mxu0 0.0
    %963 = vmatpush1.xpose.msra.mxu0 0.0
    %964 = vmatprep.subr.mxu0 0.0
    %965 = vmatpush1.xpose.msra.mxu0 0.0
    %966 = vmatprep.subr.mxu0 0.0
    %967 = vmatpush1.xpose.msra.mxu0 0.0
    %968 = vmatprep.subr.mxu0 0.0
    %969 = vmatpush1.xpose.msra.mxu0 0.0
    %970 = vmatprep.subr.mxu0 0.0
    %971 = vmatpush1.xpose.msra.mxu0 0.0
    %972 = vmatprep.subr.mxu0 0.0
    %973 = vmatpush1.xpose.msra.mxu0 0.0
    %974 = vmatprep.subr.mxu0 0.0
    %975 = vmatpush1.xpose.msra.mxu0 0.0
    %976 = vmatprep.subr.mxu0 0.0
    %977 = vmatpush1.xpose.msra.mxu0 0.0
    %978 = vmatprep.subr.mxu0 0.0
    %979 = vmatpush1.xpose.msra.mxu0 0.0
    %980 = vmatprep.subr.mxu0 0.0
    %981 = vmatpush1.xpose.msra.mxu0 0.0
    %982 = vmatprep.subr.mxu0 0.0
    %983 = vmatpush1.xpose.msra.mxu0 0.0
    %984 = vmatprep.subr.mxu0 0.0
    %985 = vmatpush1.xpose.msra.mxu0 0.0
    %986 = vmatprep.subr.mxu0 0.0
    %987 = vmatpush1.xpose.msra.mxu0 0.0
    %988 = vmatprep.subr.mxu0 0.0
    %989 = vmatpush1.xpose.msra.mxu0 0.0
    %990 = vmatprep.subr.mxu0 0.0
    %991 = vmatpush1.xpose.msra.mxu0 0.0
    %992 = vmatprep.subr.mxu0 0.0
    %993 = vmatpush1.xpose.msra.mxu0 0.0
    %994 = vmatprep.subr.mxu0 0.0
    %995 = vmatpush1.xpose.msra.mxu0 0.0
    %996 = vmatprep.subr.mxu0 0.0
    %997 = vmatpush1.xpose.msra.mxu0 0.0
    %998 = vmatprep.mubr.f32.mxu0 0.0
    %v999 = vand.u32 %v931, 4294901760
    %v1000 = vsub.f32 %v931, %v999
    %v1001 = vand.u32 %v1000, 4294901760
    %v1002 = vsub.f32 %v1000, %v1001
    %v1003 = vand.u32 %v1002, 4294901760
    %1004 = vmatmul.mubr.f32.gmra.mrb[0].mxu0 %v1003
    %v1005 = vpop.f32.mrb[0].mxu0
    %v1006 = vadd.f32 0.0, %v1005
    %v1007 = vpop.f32.mrb[0].mxu0
    %1008 = vdwg.mxu0
    %1009 = vmatprep.subr.mxu0 0.0
    %v1010 = vand.u32 %v931, 4294901760
    %v1011 = vsub.f32 %v931, %v1010
    %v1012 = vand.u32 %v1011, 4294901760
    %v1013 = vsub.f32 %v1011, %v1012
    %v1014 = vand.u32 %v1013, 4294901760
    %1015 = vmatpush1.xpose.msra.mxu0 %v1014
    %1016 = vmatprep.subr.mxu0 0.0
    %1017 = vmatpush1.xpose.msra.mxu0 0.0
    %1018 = vmatprep.subr.mxu0 0.0
    %1019 = vmatpush1.xpose.msra.mxu0 0.0
    %1020 = vmatprep.subr.mxu0 0.0
    %1021 = vmatpush1.xpose.msra.mxu0 0.0
    %1022 = vmatprep.subr.mxu0 0.0
    %1023 = vmatpush1.xpose.msra.mxu0 0.0
    %1024 = vmatprep.subr.mxu0 0.0
    %1025 = vmatpush1.xpose.msra.mxu0 0.0
    %1026 = vmatprep.subr.mxu0 0.0
    %1027 = vmatpush1.xpose.msra.mxu0 0.0
    %1028 = vmatprep.subr.mxu0 0.0
    %1029 = vmatpush1.xpose.msra.mxu0 0.0
    %1030 = vmatprep.subr.mxu0 0.0
    %1031 = vmatpush1.xpose.msra.mxu0 0.0
    %1032 = vmatprep.subr.mxu0 0.0
    %1033 = vmatpush1.xpose.msra.mxu0 0.0
    %1034 = vmatprep.subr.mxu0 0.0
    %1035 = vmatpush1.xpose.msra.mxu0 0.0
    %1036 = vmatprep.subr.mxu0 0.0
    %1037 = vmatpush1.xpose.msra.mxu0 0.0
    %1038 = vmatprep.subr.mxu0 0.0
    %1039 = vmatpush1.xpose.msra.mxu0 0.0
    %1040 = vmatprep.subr.mxu0 0.0
    %1041 = vmatpush1.xpose.msra.mxu0 0.0
    %1042 = vmatprep.subr.mxu0 0.0
    %1043 = vmatpush1.xpose.msra.mxu0 0.0
    %1044 = vmatprep.subr.mxu0 0.0
    %1045 = vmatpush1.xpose.msra.mxu0 0.0
    %1046 = vmatprep.subr.mxu0 0.0
    %1047 = vmatpush1.xpose.msra.mxu0 0.0
    %1048 = vmatprep.subr.mxu0 0.0
    %1049 = vmatpush1.xpose.msra.mxu0 0.0
    %1050 = vmatprep.subr.mxu0 0.0
    %1051 = vmatpush1.xpose.msra.mxu0 0.0
    %1052 = vmatprep.subr.mxu0 0.0
    %1053 = vmatpush1.xpose.msra.mxu0 0.0
    %1054 = vmatprep.subr.mxu0 0.0
    %1055 = vmatpush1.xpose.msra.mxu0 0.0
    %1056 = vmatprep.subr.mxu0 0.0
    %1057 = vmatpush1.xpose.msra.mxu0 0.0
    %1058 = vmatprep.subr.mxu0 0.0
    %1059 = vmatpush1.xpose.msra.mxu0 0.0
    %1060 = vmatprep.subr.mxu0 0.0
    %1061 = vmatpush1.xpose.msra.mxu0 0.0
    %1062 = vmatprep.subr.mxu0 0.0
    %1063 = vmatpush1.xpose.msra.mxu0 0.0
    %1064 = vmatprep.subr.mxu0 0.0
    %1065 = vmatpush1.xpose.msra.mxu0 0.0
    %1066 = vmatprep.subr.mxu0 0.0
    %1067 = vmatpush1.xpose.msra.mxu0 0.0
    %1068 = vmatprep.subr.mxu0 0.0
    %1069 = vmatpush1.xpose.msra.mxu0 0.0
    %1070 = vmatprep.subr.mxu0 0.0
    %1071 = vmatpush1.xpose.msra.mxu0 0.0
    %1072 = vmatprep.subr.mxu0 0.0
    %1073 = vmatpush1.xpose.msra.mxu0 0.0
    %1074 = vmatprep.subr.mxu0 0.0
    %1075 = vmatpush1.xpose.msra.mxu0 0.0
    %1076 = vmatprep.subr.mxu0 0.0
    %1077 = vmatpush1.xpose.msra.mxu0 0.0
    %1078 = vmatprep.mubr.f32.mxu0 0.0
    %v1079 = vand.u32 %v931, 4294901760
    %1080 = vmatmul.mubr.f32.gmra.mrb[0].mxu0 %v1079
    %v1081 = vpop.f32.mrb[0].mxu0
    %v1082 = vadd.f32 %v1006, %v1081
    %v1083 = vpop.f32.mrb[0].mxu0
    %1084 = vdwg.mxu0
    %1085 = vmatprep.subr.mxu0 0.0
    %v1086 = vand.u32 %v931, 4294901760
    %v1087 = vsub.f32 %v931, %v1086
    %1088 = vmatpush1.xpose.msra.mxu0 %v1087
    %1089 = vmatprep.subr.mxu0 0.0
    %1090 = vmatpush1.xpose.msra.mxu0 0.0
    %1091 = vmatprep.subr.mxu0 0.0
    %1092 = vmatpush1.xpose.msra.mxu0 0.0
    %1093 = vmatprep.subr.mxu0 0.0
    %1094 = vmatpush1.xpose.msra.mxu0 0.0
    %1095 = vmatprep.subr.mxu0 0.0
    %1096 = vmatpush1.xpose.msra.mxu0 0.0
    %1097 = vmatprep.subr.mxu0 0.0
    %1098 = vmatpush1.xpose.msra.mxu0 0.0
    %1099 = vmatprep.subr.mxu0 0.0
    %1100 = vmatpush1.xpose.msra.mxu0 0.0
    %1101 = vmatprep.subr.mxu0 0.0
    %1102 = vmatpush1.xpose.msra.mxu0 0.0
    %1103 = vmatprep.subr.mxu0 0.0
    %1104 = vmatpush1.xpose.msra.mxu0 0.0
    %1105 = vmatprep.subr.mxu0 0.0
    %1106 = vmatpush1.xpose.msra.mxu0 0.0
    %1107 = vmatprep.subr.mxu0 0.0
    %1108 = vmatpush1.xpose.msra.mxu0 0.0
    %1109 = vmatprep.subr.mxu0 0.0
    %1110 = vmatpush1.xpose.msra.mxu0 0.0
    %1111 = vmatprep.subr.mxu0 0.0
    %1112 = vmatpush1.xpose.msra.mxu0 0.0
    %1113 = vmatprep.subr.mxu0 0.0
    %1114 = vmatpush1.xpose.msra.mxu0 0.0
    %1115 = vmatprep.subr.mxu0 0.0
    %1116 = vmatpush1.xpose.msra.mxu0 0.0
    %1117 = vmatprep.subr.mxu0 0.0
    %1118 = vmatpush1.xpose.msra.mxu0 0.0
    %1119 = vmatprep.subr.mxu0 0.0
    %1120 = vmatpush1.xpose.msra.mxu0 0.0
    %1121 = vmatprep.subr.mxu0 0.0
    %1122 = vmatpush1.xpose.msra.mxu0 0.0
    %1123 = vmatprep.subr.mxu0 0.0
    %1124 = vmatpush1.xpose.msra.mxu0 0.0
    %1125 = vmatprep.subr.mxu0 0.0
    %1126 = vmatpush1.xpose.msra.mxu0 0.0
    %1127 = vmatprep.subr.mxu0 0.0
    %1128 = vmatpush1.xpose.msra.mxu0 0.0
    %1129 = vmatprep.subr.mxu0 0.0
    %1130 = vmatpush1.xpose.msra.mxu0 0.0
    %1131 = vmatprep.subr.mxu0 0.0
    %1132 = vmatpush1.xpose.msra.mxu0 0.0
    %1133 = vmatprep.subr.mxu0 0.0
    %1134 = vmatpush1.xpose.msra.mxu0 0.0
    %1135 = vmatprep.subr.mxu0 0.0
    %1136 = vmatpush1.xpose.msra.mxu0 0.0
    %1137 = vmatprep.subr.mxu0 0.0
    %1138 = vmatpush1.xpose.msra.mxu0 0.0
    %1139 = vmatprep.subr.mxu0 0.0
    %1140 = vmatpush1.xpose.msra.mxu0 0.0
    %1141 = vmatprep.subr.mxu0 0.0
    %1142 = vmatpush1.xpose.msra.mxu0 0.0
    %1143 = vmatprep.subr.mxu0 0.0
    %1144 = vmatpush1.xpose.msra.mxu0 0.0
    %1145 = vmatprep.subr.mxu0 0.0
    %1146 = vmatpush1.xpose.msra.mxu0 0.0
    %1147 = vmatprep.subr.mxu0 0.0
    %1148 = vmatpush1.xpose.msra.mxu0 0.0
    %1149 = vmatprep.subr.mxu0 0.0
    %1150 = vmatpush1.xpose.msra.mxu0 0.0
    %1151 = vmatprep.mubr.f32.mxu0 0.0
    %v1152 = vand.u32 %v931, 4294901760
    %v1153 = vsub.f32 %v931, %v1152
    %1154 = vmatmul.mubr.f32.gmra.mrb[0].mxu0 %v1153
    %v1155 = vpop.f32.mrb[0].mxu0
    %v1156 = vadd.f32 %v1082, %v1155
    %v1157 = vpop.f32.mrb[0].mxu0
    %1158 = vdwg.mxu0
    %1159 = vmatprep.subr.mxu0 0.0
    %v1160 = vand.u32 %v931, 4294901760
    %1161 = vmatpush1.xpose.msra.mxu0 %v1160
    %1162 = vmatprep.subr.mxu0 0.0
    %1163 = vmatpush1.xpose.msra.mxu0 0.0
    %1164 = vmatprep.subr.mxu0 0.0
    %1165 = vmatpush1.xpose.msra.mxu0 0.0
    %1166 = vmatprep.subr.mxu0 0.0
    %1167 = vmatpush1.xpose.msra.mxu0 0.0
    %1168 = vmatprep.subr.mxu0 0.0
    %1169 = vmatpush1.xpose.msra.mxu0 0.0
    %1170 = vmatprep.subr.mxu0 0.0
    %1171 = vmatpush1.xpose.msra.mxu0 0.0
    %1172 = vmatprep.subr.mxu0 0.0
    %1173 = vmatpush1.xpose.msra.mxu0 0.0
    %1174 = vmatprep.subr.mxu0 0.0
    %1175 = vmatpush1.xpose.msra.mxu0 0.0
    %1176 = vmatprep.subr.mxu0 0.0
    %1177 = vmatpush1.xpose.msra.mxu0 0.0
    %1178 = vmatprep.subr.mxu0 0.0
    %1179 = vmatpush1.xpose.msra.mxu0 0.0
    %1180 = vmatprep.subr.mxu0 0.0
    %1181 = vmatpush1.xpose.msra.mxu0 0.0
    %1182 = vmatprep.subr.mxu0 0.0
    %1183 = vmatpush1.xpose.msra.mxu0 0.0
    %1184 = vmatprep.subr.mxu0 0.0
    %1185 = vmatpush1.xpose.msra.mxu0 0.0
    %1186 = vmatprep.subr.mxu0 0.0
    %1187 = vmatpush1.xpose.msra.mxu0 0.0
    %1188 = vmatprep.subr.mxu0 0.0
    %1189 = vmatpush1.xpose.msra.mxu0 0.0
    %1190 = vmatprep.subr.mxu0 0.0
    %1191 = vmatpush1.xpose.msra.mxu0 0.0
    %1192 = vmatprep.subr.mxu0 0.0
    %1193 = vmatpush1.xpose.msra.mxu0 0.0
    %1194 = vmatprep.subr.mxu0 0.0
    %1195 = vmatpush1.xpose.msra.mxu0 0.0
    %1196 = vmatprep.subr.mxu0 0.0
    %1197 = vmatpush1.xpose.msra.mxu0 0.0
    %1198 = vmatprep.subr.mxu0 0.0
    %1199 = vmatpush1.xpose.msra.mxu0 0.0
    %1200 = vmatprep.subr.mxu0 0.0
    %1201 = vmatpush1.xpose.msra.mxu0 0.0
    %1202 = vmatprep.subr.mxu0 0.0
    %1203 = vmatpush1.xpose.msra.mxu0 0.0
    %1204 = vmatprep.subr.mxu0 0.0
    %1205 = vmatpush1.xpose.msra.mxu0 0.0
    %1206 = vmatprep.subr.mxu0 0.0
    %1207 = vmatpush1.xpose.msra.mxu0 0.0
    %1208 = vmatprep.subr.mxu0 0.0
    %1209 = vmatpush1.xpose.msra.mxu0 0.0
    %1210 = vmatprep.subr.mxu0 0.0
    %1211 = vmatpush1.xpose.msra.mxu0 0.0
    %1212 = vmatprep.subr.mxu0 0.0
    %1213 = vmatpush1.xpose.msra.mxu0 0.0
    %1214 = vmatprep.subr.mxu0 0.0
    %1215 = vmatpush1.xpose.msra.mxu0 0.0
    %1216 = vmatprep.subr.mxu0 0.0
    %1217 = vmatpush1.xpose.msra.mxu0 0.0
    %1218 = vmatprep.subr.mxu0 0.0
    %1219 = vmatpush1.xpose.msra.mxu0 0.0
    %1220 = vmatprep.subr.mxu0 0.0
    %1221 = vmatpush1.xpose.msra.mxu0 0.0
    %1222 = vmatprep.subr.mxu0 0.0
    %1223 = vmatpush1.xpose.msra.mxu0 0.0
    %1224 = vmatprep.mubr.f32.mxu0 0.0
    %v1225 = vand.u32 %v931, 4294901760
    %v1226 = vsub.f32 %v931, %v1225
    %v1227 = vand.u32 %v1226, 4294901760
    %1228 = vmatmul.mubr.f32.gmra.mrb[0].mxu0 %v1227
    %v1229 = vpop.f32.mrb[0].mxu0
    %v1230 = vadd.f32 %v1156, %v1229
    %v1231 = vpop.f32.mrb[0].mxu0
    %1232 = vdwg.mxu0
    %1233 = vmatprep.subr.mxu0 0.0
    %v1234 = vand.u32 %v931, 4294901760
    %v1235 = vsub.f32 %v931, %v1234
    %v1236 = vand.u32 %v1235, 4294901760
    %1237 = vmatpush1.xpose.msra.mxu0 %v1236
    %1238 = vmatprep.subr.mxu0 0.0
    %1239 = vmatpush1.xpose.msra.mxu0 0.0
    %1240 = vmatprep.subr.mxu0 0.0
    %1241 = vmatpush1.xpose.msra.mxu0 0.0
    %1242 = vmatprep.subr.mxu0 0.0
    %1243 = vmatpush1.xpose.msra.mxu0 0.0
    %1244 = vmatprep.subr.mxu0 0.0
    %1245 = vmatpush1.xpose.msra.mxu0 0.0
    %1246 = vmatprep.subr.mxu0 0.0
    %1247 = vmatpush1.xpose.msra.mxu0 0.0
    %1248 = vmatprep.subr.mxu0 0.0
    %1249 = vmatpush1.xpose.msra.mxu0 0.0
    %1250 = vmatprep.subr.mxu0 0.0
    %1251 = vmatpush1.xpose.msra.mxu0 0.0
    %1252 = vmatprep.subr.mxu0 0.0
    %1253 = vmatpush1.xpose.msra.mxu0 0.0
    %1254 = vmatprep.subr.mxu0 0.0
    %1255 = vmatpush1.xpose.msra.mxu0 0.0
    %1256 = vmatprep.subr.mxu0 0.0
    %1257 = vmatpush1.xpose.msra.mxu0 0.0
    %1258 = vmatprep.subr.mxu0 0.0
    %1259 = vmatpush1.xpose.msra.mxu0 0.0
    %1260 = vmatprep.subr.mxu0 0.0
    %1261 = vmatpush1.xpose.msra.mxu0 0.0
    %1262 = vmatprep.subr.mxu0 0.0
    %1263 = vmatpush1.xpose.msra.mxu0 0.0
    %1264 = vmatprep.subr.mxu0 0.0
    %1265 = vmatpush1.xpose.msra.mxu0 0.0
    %1266 = vmatprep.subr.mxu0 0.0
    %1267 = vmatpush1.xpose.msra.mxu0 0.0
    %1268 = vmatprep.subr.mxu0 0.0
    %1269 = vmatpush1.xpose.msra.mxu0 0.0
    %1270 = vmatprep.subr.mxu0 0.0
    %1271 = vmatpush1.xpose.msra.mxu0 0.0
    %1272 = vmatprep.subr.mxu0 0.0
    %1273 = vmatpush1.xpose.msra.mxu0 0.0
    %1274 = vmatprep.subr.mxu0 0.0
    %1275 = vmatpush1.xpose.msra.mxu0 0.0
    %1276 = vmatprep.subr.mxu0 0.0
    %1277 = vmatpush1.xpose.msra.mxu0 0.0
    %1278 = vmatprep.subr.mxu0 0.0
    %1279 = vmatpush1.xpose.msra.mxu0 0.0
    %1280 = vmatprep.subr.mxu0 0.0
    %1281 = vmatpush1.xpose.msra.mxu0 0.0
    %1282 = vmatprep.subr.mxu0 0.0
    %1283 = vmatpush1.xpose.msra.mxu0 0.0
    %1284 = vmatprep.subr.mxu0 0.0
    %1285 = vmatpush1.xpose.msra.mxu0 0.0
    %1286 = vmatprep.subr.mxu0 0.0
    %1287 = vmatpush1.xpose.msra.mxu0 0.0
    %1288 = vmatprep.subr.mxu0 0.0
    %1289 = vmatpush1.xpose.msra.mxu0 0.0
    %1290 = vmatprep.subr.mxu0 0.0
    %1291 = vmatpush1.xpose.msra.mxu0 0.0
    %1292 = vmatprep.subr.mxu0 0.0
    %1293 = vmatpush1.xpose.msra.mxu0 0.0
    %1294 = vmatprep.subr.mxu0 0.0
    %1295 = vmatpush1.xpose.msra.mxu0 0.0
    %1296 = vmatprep.subr.mxu0 0.0
    %1297 = vmatpush1.xpose.msra.mxu0 0.0
    %1298 = vmatprep.subr.mxu0 0.0
    %1299 = vmatpush1.xpose.msra.mxu0 0.0
    %1300 = vmatprep.mubr.f32.mxu0 0.0
    %v1301 = vand.u32 %v931, 4294901760
    %1302 = vmatmul.mubr.f32.gmra.mrb[0].mxu0 %v1301
    %v1303 = vpop.f32.mrb[0].mxu0
    %v1304 = vadd.f32 %v1230, %v1303
    %v1305 = vpop.f32.mrb[0].mxu0
    %1306 = vdwg.mxu0
    %1307 = vmatprep.subr.mxu0 0.0
    %v1308 = vand.u32 %v931, 4294901760
    %1309 = vmatpush1.xpose.msra.mxu0 %v1308
    %1310 = vmatprep.subr.mxu0 0.0
    %1311 = vmatpush1.xpose.msra.mxu0 0.0
    %1312 = vmatprep.subr.mxu0 0.0
    %1313 = vmatpush1.xpose.msra.mxu0 0.0
    %1314 = vmatprep.subr.mxu0 0.0
    %1315 = vmatpush1.xpose.msra.mxu0 0.0
    %1316 = vmatprep.subr.mxu0 0.0
    %1317 = vmatpush1.xpose.msra.mxu0 0.0
    %1318 = vmatprep.subr.mxu0 0.0
    %1319 = vmatpush1.xpose.msra.mxu0 0.0
    %1320 = vmatprep.subr.mxu0 0.0
    %1321 = vmatpush1.xpose.msra.mxu0 0.0
    %1322 = vmatprep.subr.mxu0 0.0
    %1323 = vmatpush1.xpose.msra.mxu0 0.0
    %1324 = vmatprep.subr.mxu0 0.0
    %1325 = vmatpush1.xpose.msra.mxu0 0.0
    %1326 = vmatprep.subr.mxu0 0.0
    %1327 = vmatpush1.xpose.msra.mxu0 0.0
    %1328 = vmatprep.subr.mxu0 0.0
    %1329 = vmatpush1.xpose.msra.mxu0 0.0
    %1330 = vmatprep.subr.mxu0 0.0
    %1331 = vmatpush1.xpose.msra.mxu0 0.0
    %1332 = vmatprep.subr.mxu0 0.0
    %1333 = vmatpush1.xpose.msra.mxu0 0.0
    %1334 = vmatprep.subr.mxu0 0.0
    %1335 = vmatpush1.xpose.msra.mxu0 0.0
    %1336 = vmatprep.subr.mxu0 0.0
    %1337 = vmatpush1.xpose.msra.mxu0 0.0
    %1338 = vmatprep.subr.mxu0 0.0
    %1339 = vmatpush1.xpose.msra.mxu0 0.0
    %1340 = vmatprep.subr.mxu0 0.0
    %1341 = vmatpush1.xpose.msra.mxu0 0.0
    %1342 = vmatprep.subr.mxu0 0.0
    %1343 = vmatpush1.xpose.msra.mxu0 0.0
    %1344 = vmatprep.subr.mxu0 0.0
    %1345 = vmatpush1.xpose.msra.mxu0 0.0
    %1346 = vmatprep.subr.mxu0 0.0
    %1347 = vmatpush1.xpose.msra.mxu0 0.0
    %1348 = vmatprep.subr.mxu0 0.0
    %1349 = vmatpush1.xpose.msra.mxu0 0.0
    %1350 = vmatprep.subr.mxu0 0.0
    %1351 = vmatpush1.xpose.msra.mxu0 0.0
    %1352 = vmatprep.subr.mxu0 0.0
    %1353 = vmatpush1.xpose.msra.mxu0 0.0
    %1354 = vmatprep.subr.mxu0 0.0
    %1355 = vmatpush1.xpose.msra.mxu0 0.0
    %1356 = vmatprep.subr.mxu0 0.0
    %1357 = vmatpush1.xpose.msra.mxu0 0.0
    %1358 = vmatprep.subr.mxu0 0.0
    %1359 = vmatpush1.xpose.msra.mxu0 0.0
    %1360 = vmatprep.subr.mxu0 0.0
    %1361 = vmatpush1.xpose.msra.mxu0 0.0
    %1362 = vmatprep.subr.mxu0 0.0
    %1363 = vmatpush1.xpose.msra.mxu0 0.0
    %1364 = vmatprep.subr.mxu0 0.0
    %1365 = vmatpush1.xpose.msra.mxu0 0.0
    %1366 = vmatprep.subr.mxu0 0.0
    %1367 = vmatpush1.xpose.msra.mxu0 0.0
    %1368 = vmatprep.subr.mxu0 0.0
    %1369 = vmatpush1.xpose.msra.mxu0 0.0
    %1370 = vmatprep.subr.mxu0 0.0
    %1371 = vmatpush1.xpose.msra.mxu0 0.0
    %1372 = vmatprep.mubr.f32.mxu0 0.0
    %v1373 = vand.u32 %v931, 4294901760
    %1374 = vmatmul.mubr.f32.gmra.mrb[0].mxu0 %v1373
    %v1375 = vpop.f32.mrb[0].mxu0
    %v1376 = vadd.f32 %v1304, %v1375
    %v1377 = vpop.f32.mrb[0].mxu0
    %1378 = vdwg.mxu0
    %v1380 = vsel %vm31, %v29, 0
    %1382 = vmatprep.subr.mxu0 0.0
    %v1383 = vand.u32 %v1380, 4294901760
    %1384 = vmatpush1.xpose.msra.mxu0 %v1383
    %1385 = vmatprep.subr.mxu0 0.0
    %1386 = vmatpush1.xpose.msra.mxu0 0.0
    %1387 = vmatprep.subr.mxu0 0.0
    %1388 = vmatpush1.xpose.msra.mxu0 0.0
    %1389 = vmatprep.subr.mxu0 0.0
    %1390 = vmatpush1.xpose.msra.mxu0 0.0
    %1391 = vmatprep.subr.mxu0 0.0
    %1392 = vmatpush1.xpose.msra.mxu0 0.0
    %1393 = vmatprep.subr.mxu0 0.0
    %1394 = vmatpush1.xpose.msra.mxu0 0.0
    %1395 = vmatprep.subr.mxu0 0.0
    %1396 = vmatpush1.xpose.msra.mxu0 0.0
    %1397 = vmatprep.subr.mxu0 0.0
    %1398 = vmatpush1.xpose.msra.mxu0 0.0
    %1399 = vmatprep.subr.mxu0 0.0
    %1400 = vmatpush1.xpose.msra.mxu0 0.0
    %1401 = vmatprep.subr.mxu0 0.0
    %1402 = vmatpush1.xpose.msra.mxu0 0.0
    %1403 = vmatprep.subr.mxu0 0.0
    %1404 = vmatpush1.xpose.msra.mxu0 0.0
    %1405 = vmatprep.subr.mxu0 0.0
    %1406 = vmatpush1.xpose.msra.mxu0 0.0
    %1407 = vmatprep.subr.mxu0 0.0
    %1408 = vmatpush1.xpose.msra.mxu0 0.0
    %1409 = vmatprep.subr.mxu0 0.0
    %1410 = vmatpush1.xpose.msra.mxu0 0.0
    %1411 = vmatprep.subr.mxu0 0.0
    %1412 = vmatpush1.xpose.msra.mxu0 0.0
    %1413 = vmatprep.subr.mxu0 0.0
    %1414 = vmatpush1.xpose.msra.mxu0 0.0
    %1415 = vmatprep.subr.mxu0 0.0
    %1416 = vmatpush1.xpose.msra.mxu0 0.0
    %1417 = vmatprep.subr.mxu0 0.0
    %1418 = vmatpush1.xpose.msra.mxu0 0.0
    %1419 = vmatprep.subr.mxu0 0.0
    %1420 = vmatpush1.xpose.msra.mxu0 0.0
    %1421 = vmatprep.subr.mxu0 0.0
    %1422 = vmatpush1.xpose.msra.mxu0 0.0
    %1423 = vmatprep.subr.mxu0 0.0
    %1424 = vmatpush1.xpose.msra.mxu0 0.0
    %1425 = vmatprep.subr.mxu0 0.0
    %1426 = vmatpush1.xpose.msra.mxu0 0.0
    %1427 = vmatprep.subr.mxu0 0.0
    %1428 = vmatpush1.xpose.msra.mxu0 0.0
    %1429 = vmatprep.subr.mxu0 0.0
    %1430 = vmatpush1.xpose.msra.mxu0 0.0
    %1431 = vmatprep.subr.mxu0 0.0
    %1432 = vmatpush1.xpose.msra.mxu0 0.0
    %1433 = vmatprep.subr.mxu0 0.0
    %1434 = vmatpush1.xpose.msra.mxu0 0.0
    %1435 = vmatprep.subr.mxu0 0.0
    %1436 = vmatpush1.xpose.msra.mxu0 0.0
    %1437 = vmatprep.subr.mxu0 0.0
    %1438 = vmatpush1.xpose.msra.mxu0 0.0
    %1439 = vmatprep.subr.mxu0 0.0
    %1440 = vmatpush1.xpose.msra.mxu0 0.0
    %1441 = vmatprep.subr.mxu0 0.0
    %1442 = vmatpush1.xpose.msra.mxu0 0.0
    %1443 = vmatprep.subr.mxu0 0.0
    %1444 = vmatpush1.xpose.msra.mxu0 0.0
    %1445 = vmatprep.subr.mxu0 0.0
    %1446 = vmatpush1.xpose.msra.mxu0 0.0
    %1447 = vmatprep.mubr.f32.mxu0 0.0
    %v1448 = vand.u32 %v1380, 4294901760
    %v1449 = vsub.f32 %v1380, %v1448
    %v1450 = vand.u32 %v1449, 4294901760
    %v1451 = vsub.f32 %v1449, %v1450
    %v1452 = vand.u32 %v1451, 4294901760
    %1453 = vmatmul.mubr.f32.gmra.mrb[0].mxu0 %v1452
    %v1454 = vpop.f32.mrb[0].mxu0
    %v1455 = vadd.f32 0.0, %v1454
    %v1456 = vpop.f32.mrb[0].mxu0
    %1457 = vdwg.mxu0
    %1458 = vmatprep.subr.mxu0 0.0
    %v1459 = vand.u32 %v1380, 4294901760
    %v1460 = vsub.f32 %v1380, %v1459
    %v1461 = vand.u32 %v1460, 4294901760
    %v1462 = vsub.f32 %v1460, %v1461
    %v1463 = vand.u32 %v1462, 4294901760
    %1464 = vmatpush1.xpose.msra.mxu0 %v1463
    %1465 = vmatprep.subr.mxu0 0.0
    %1466 = vmatpush1.xpose.msra.mxu0 0.0
    %1467 = vmatprep.subr.mxu0 0.0
    %1468 = vmatpush1.xpose.msra.mxu0 0.0
    %1469 = vmatprep.subr.mxu0 0.0
    %1470 = vmatpush1.xpose.msra.mxu0 0.0
    %1471 = vmatprep.subr.mxu0 0.0
    %1472 = vmatpush1.xpose.msra.mxu0 0.0
    %1473 = vmatprep.subr.mxu0 0.0
    %1474 = vmatpush1.xpose.msra.mxu0 0.0
    %1475 = vmatprep.subr.mxu0 0.0
    %1476 = vmatpush1.xpose.msra.mxu0 0.0
    %1477 = vmatprep.subr.mxu0 0.0
    %1478 = vmatpush1.xpose.msra.mxu0 0.0
    %1479 = vmatprep.subr.mxu0 0.0
    %1480 = vmatpush1.xpose.msra.mxu0 0.0
    %1481 = vmatprep.subr.mxu0 0.0
    %1482 = vmatpush1.xpose.msra.mxu0 0.0
    %1483 = vmatprep.subr.mxu0 0.0
    %1484 = vmatpush1.xpose.msra.mxu0 0.0
    %1485 = vmatprep.subr.mxu0 0.0
    %1486 = vmatpush1.xpose.msra.mxu0 0.0
    %1487 = vmatprep.subr.mxu0 0.0
    %1488 = vmatpush1.xpose.msra.mxu0 0.0
    %1489 = vmatprep.subr.mxu0 0.0
    %1490 = vmatpush1.xpose.msra.mxu0 0.0
    %1491 = vmatprep.subr.mxu0 0.0
    %1492 = vmatpush1.xpose.msra.mxu0 0.0
    %1493 = vmatprep.subr.mxu0 0.0
    %1494 = vmatpush1.xpose.msra.mxu0 0.0
    %1495 = vmatprep.subr.mxu0 0.0
    %1496 = vmatpush1.xpose.msra.mxu0 0.0
    %1497 = vmatprep.subr.mxu0 0.0
    %1498 = vmatpush1.xpose.msra.mxu0 0.0
    %1499 = vmatprep.subr.mxu0 0.0
    %1500 = vmatpush1.xpose.msra.mxu0 0.0
    %1501 = vmatprep.subr.mxu0 0.0
    %1502 = vmatpush1.xpose.msra.mxu0 0.0
    %1503 = vmatprep.subr.mxu0 0.0
    %1504 = vmatpush1.xpose.msra.mxu0 0.0
    %1505 = vmatprep.subr.mxu0 0.0
    %1506 = vmatpush1.xpose.msra.mxu0 0.0
    %1507 = vmatprep.subr.mxu0 0.0
    %1508 = vmatpush1.xpose.msra.mxu0 0.0
    %1509 = vmatprep.subr.mxu0 0.0
    %1510 = vmatpush1.xpose.msra.mxu0 0.0
    %1511 = vmatprep.subr.mxu0 0.0
    %1512 = vmatpush1.xpose.msra.mxu0 0.0
    %1513 = vmatprep.subr.mxu0 0.0
    %1514 = vmatpush1.xpose.msra.mxu0 0.0
    %1515 = vmatprep.subr.mxu0 0.0
    %1516 = vmatpush1.xpose.msra.mxu0 0.0
    %1517 = vmatprep.subr.mxu0 0.0
    %1518 = vmatpush1.xpose.msra.mxu0 0.0
    %1519 = vmatprep.subr.mxu0 0.0
    %1520 = vmatpush1.xpose.msra.mxu0 0.0
    %1521 = vmatprep.subr.mxu0 0.0
    %1522 = vmatpush1.xpose.msra.mxu0 0.0
    %1523 = vmatprep.subr.mxu0 0.0
    %1524 = vmatpush1.xpose.msra.mxu0 0.0
    %1525 = vmatprep.subr.mxu0 0.0
    %1526 = vmatpush1.xpose.msra.mxu0 0.0
    %1527 = vmatprep.mubr.f32.mxu0 0.0
    %v1528 = vand.u32 %v1380, 4294901760
    %1529 = vmatmul.mubr.f32.gmra.mrb[0].mxu0 %v1528
    %v1530 = vpop.f32.mrb[0].mxu0
    %v1531 = vadd.f32 %v1455, %v1530
    %v1532 = vpop.f32.mrb[0].mxu0
    %1533 = vdwg.mxu0
    %1534 = vmatprep.subr.mxu0 0.0
    %v1535 = vand.u32 %v1380, 4294901760
    %v1536 = vsub.f32 %v1380, %v1535
    %1537 = vmatpush1.xpose.msra.mxu0 %v1536
    %1538 = vmatprep.subr.mxu0 0.0
    %1539 = vmatpush1.xpose.msra.mxu0 0.0
    %1540 = vmatprep.subr.mxu0 0.0
    %1541 = vmatpush1.xpose.msra.mxu0 0.0
    %1542 = vmatprep.subr.mxu0 0.0
    %1543 = vmatpush1.xpose.msra.mxu0 0.0
    %1544 = vmatprep.subr.mxu0 0.0
    %1545 = vmatpush1.xpose.msra.mxu0 0.0
    %1546 = vmatprep.subr.mxu0 0.0
    %1547 = vmatpush1.xpose.msra.mxu0 0.0
    %1548 = vmatprep.subr.mxu0 0.0
    %1549 = vmatpush1.xpose.msra.mxu0 0.0
    %1550 = vmatprep.subr.mxu0 0.0
    %1551 = vmatpush1.xpose.msra.mxu0 0.0
    %1552 = vmatprep.subr.mxu0 0.0
    %1553 = vmatpush1.xpose.msra.mxu0 0.0
    %1554 = vmatprep.subr.mxu0 0.0
    %1555 = vmatpush1.xpose.msra.mxu0 0.0
    %1556 = vmatprep.subr.mxu0 0.0
    %1557 = vmatpush1.xpose.msra.mxu0 0.0
    %1558 = vmatprep.subr.mxu0 0.0
    %1559 = vmatpush1.xpose.msra.mxu0 0.0
    %1560 = vmatprep.subr.mxu0 0.0
    %1561 = vmatpush1.xpose.msra.mxu0 0.0
    %1562 = vmatprep.subr.mxu0 0.0
    %1563 = vmatpush1.xpose.msra.mxu0 0.0
    %1564 = vmatprep.subr.mxu0 0.0
    %1565 = vmatpush1.xpose.msra.mxu0 0.0
    %1566 = vmatprep.subr.mxu0 0.0
    %1567 = vmatpush1.xpose.msra.mxu0 0.0
    %1568 = vmatprep.subr.mxu0 0.0
    %1569 = vmatpush1.xpose.msra.mxu0 0.0
    %1570 = vmatprep.subr.mxu0 0.0
    %1571 = vmatpush1.xpose.msra.mxu0 0.0
    %1572 = vmatprep.subr.mxu0 0.0
    %1573 = vmatpush1.xpose.msra.mxu0 0.0
    %1574 = vmatprep.subr.mxu0 0.0
    %1575 = vmatpush1.xpose.msra.mxu0 0.0
    %1576 = vmatprep.subr.mxu0 0.0
    %1577 = vmatpush1.xpose.msra.mxu0 0.0
    %1578 = vmatprep.subr.mxu0 0.0
    %1579 = vmatpush1.xpose.msra.mxu0 0.0
    %1580 = vmatprep.subr.mxu0 0.0
    %1581 = vmatpush1.xpose.msra.mxu0 0.0
    %1582 = vmatprep.subr.mxu0 0.0
    %1583 = vmatpush1.xpose.msra.mxu0 0.0
    %1584 = vmatprep.subr.mxu0 0.0
    %1585 = vmatpush1.xpose.msra.mxu0 0.0
    %1586 = vmatprep.subr.mxu0 0.0
    %1587 = vmatpush1.xpose.msra.mxu0 0.0
    %1588 = vmatprep.subr.mxu0 0.0
    %1589 = vmatpush1.xpose.msra.mxu0 0.0
    %1590 = vmatprep.subr.mxu0 0.0
    %1591 = vmatpush1.xpose.msra.mxu0 0.0
    %1592 = vmatprep.subr.mxu0 0.0
    %1593 = vmatpush1.xpose.msra.mxu0 0.0
    %1594 = vmatprep.subr.mxu0 0.0
    %1595 = vmatpush1.xpose.msra.mxu0 0.0
    %1596 = vmatprep.subr.mxu0 0.0
    %1597 = vmatpush1.xpose.msra.mxu0 0.0
    %1598 = vmatprep.subr.mxu0 0.0
    %1599 = vmatpush1.xpose.msra.mxu0 0.0
    %1600 = vmatprep.mubr.f32.mxu0 0.0
    %v1601 = vand.u32 %v1380, 4294901760
    %v1602 = vsub.f32 %v1380, %v1601
    %1603 = vmatmul.mubr.f32.gmra.mrb[0].mxu0 %v1602
    %v1604 = vpop.f32.mrb[0].mxu0
    %v1605 = vadd.f32 %v1531, %v1604
    %v1606 = vpop.f32.mrb[0].mxu0
    %1607 = vdwg.mxu0
    %1608 = vmatprep.subr.mxu0 0.0
    %v1609 = vand.u32 %v1380, 4294901760
    %1610 = vmatpush1.xpose.msra.mxu0 %v1609
    %1611 = vmatprep.subr.mxu0 0.0
    %1612 = vmatpush1.xpose.msra.mxu0 0.0
    %1613 = vmatprep.subr.mxu0 0.0
    %1614 = vmatpush1.xpose.msra.mxu0 0.0
    %1615 = vmatprep.subr.mxu0 0.0
    %1616 = vmatpush1.xpose.msra.mxu0 0.0
    %1617 = vmatprep.subr.mxu0 0.0
    %1618 = vmatpush1.xpose.msra.mxu0 0.0
    %1619 = vmatprep.subr.mxu0 0.0
    %1620 = vmatpush1.xpose.msra.mxu0 0.0
    %1621 = vmatprep.subr.mxu0 0.0
    %1622 = vmatpush1.xpose.msra.mxu0 0.0
    %1623 = vmatprep.subr.mxu0 0.0
    %1624 = vmatpush1.xpose.msra.mxu0 0.0
    %1625 = vmatprep.subr.mxu0 0.0
    %1626 = vmatpush1.xpose.msra.mxu0 0.0
    %1627 = vmatprep.subr.mxu0 0.0
    %1628 = vmatpush1.xpose.msra.mxu0 0.0
    %1629 = vmatprep.subr.mxu0 0.0
    %1630 = vmatpush1.xpose.msra.mxu0 0.0
    %1631 = vmatprep.subr.mxu0 0.0
    %1632 = vmatpush1.xpose.msra.mxu0 0.0
    %1633 = vmatprep.subr.mxu0 0.0
    %1634 = vmatpush1.xpose.msra.mxu0 0.0
    %1635 = vmatprep.subr.mxu0 0.0
    %1636 = vmatpush1.xpose.msra.mxu0 0.0
    %1637 = vmatprep.subr.mxu0 0.0
    %1638 = vmatpush1.xpose.msra.mxu0 0.0
    %1639 = vmatprep.subr.mxu0 0.0
    %1640 = vmatpush1.xpose.msra.mxu0 0.0
    %1641 = vmatprep.subr.mxu0 0.0
    %1642 = vmatpush1.xpose.msra.mxu0 0.0
    %1643 = vmatprep.subr.mxu0 0.0
    %1644 = vmatpush1.xpose.msra.mxu0 0.0
    %1645 = vmatprep.subr.mxu0 0.0
    %1646 = vmatpush1.xpose.msra.mxu0 0.0
    %1647 = vmatprep.subr.mxu0 0.0
    %1648 = vmatpush1.xpose.msra.mxu0 0.0
    %1649 = vmatprep.subr.mxu0 0.0
    %1650 = vmatpush1.xpose.msra.mxu0 0.0
    %1651 = vmatprep.subr.mxu0 0.0
    %1652 = vmatpush1.xpose.msra.mxu0 0.0
    %1653 = vmatprep.subr.mxu0 0.0
    %1654 = vmatpush1.xpose.msra.mxu0 0.0
    %1655 = vmatprep.subr.mxu0 0.0
    %1656 = vmatpush1.xpose.msra.mxu0 0.0
    %1657 = vmatprep.subr.mxu0 0.0
    %1658 = vmatpush1.xpose.msra.mxu0 0.0
    %1659 = vmatprep.subr.mxu0 0.0
    %1660 = vmatpush1.xpose.msra.mxu0 0.0
    %1661 = vmatprep.subr.mxu0 0.0
    %1662 = vmatpush1.xpose.msra.mxu0 0.0
    %1663 = vmatprep.subr.mxu0 0.0
    %1664 = vmatpush1.xpose.msra.mxu0 0.0
    %1665 = vmatprep.subr.mxu0 0.0
    %1666 = vmatpush1.xpose.msra.mxu0 0.0
    %1667 = vmatprep.subr.mxu0 0.0
    %1668 = vmatpush1.xpose.msra.mxu0 0.0
    %1669 = vmatprep.subr.mxu0 0.0
    %1670 = vmatpush1.xpose.msra.mxu0 0.0
    %1671 = vmatprep.subr.mxu0 0.0
    %1672 = vmatpush1.xpose.msra.mxu0 0.0
    %1673 = vmatprep.mubr.f32.mxu0 0.0
    %v1674 = vand.u32 %v1380, 4294901760
    %v1675 = vsub.f32 %v1380, %v1674
    %v1676 = vand.u32 %v1675, 4294901760
    %1677 = vmatmul.mubr.f32.gmra.mrb[0].mxu0 %v1676
    %v1678 = vpop.f32.mrb[0].mxu0
    %v1679 = vadd.f32 %v1605, %v1678
    %v1680 = vpop.f32.mrb[0].mxu0
    %1681 = vdwg.mxu0
    %1682 = vmatprep.subr.mxu0 0.0
    %v1683 = vand.u32 %v1380, 4294901760
    %v1684 = vsub.f32 %v1380, %v1683
    %v1685 = vand.u32 %v1684, 4294901760
    %1686 = vmatpush1.xpose.msra.mxu0 %v1685
    %1687 = vmatprep.subr.mxu0 0.0
    %1688 = vmatpush1.xpose.msra.mxu0 0.0
    %1689 = vmatprep.subr.mxu0 0.0
    %1690 = vmatpush1.xpose.msra.mxu0 0.0
    %1691 = vmatprep.subr.mxu0 0.0
    %1692 = vmatpush1.xpose.msra.mxu0 0.0
    %1693 = vmatprep.subr.mxu0 0.0
    %1694 = vmatpush1.xpose.msra.mxu0 0.0
    %1695 = vmatprep.subr.mxu0 0.0
    %1696 = vmatpush1.xpose.msra.mxu0 0.0
    %1697 = vmatprep.subr.mxu0 0.0
    %1698 = vmatpush1.xpose.msra.mxu0 0.0
    %1699 = vmatprep.subr.mxu0 0.0
    %1700 = vmatpush1.xpose.msra.mxu0 0.0
    %1701 = vmatprep.subr.mxu0 0.0
    %1702 = vmatpush1.xpose.msra.mxu0 0.0
    %1703 = vmatprep.subr.mxu0 0.0
    %1704 = vmatpush1.xpose.msra.mxu0 0.0
    %1705 = vmatprep.subr.mxu0 0.0
    %1706 = vmatpush1.xpose.msra.mxu0 0.0
    %1707 = vmatprep.subr.mxu0 0.0
    %1708 = vmatpush1.xpose.msra.mxu0 0.0
    %1709 = vmatprep.subr.mxu0 0.0
    %1710 = vmatpush1.xpose.msra.mxu0 0.0
    %1711 = vmatprep.subr.mxu0 0.0
    %1712 = vmatpush1.xpose.msra.mxu0 0.0
    %1713 = vmatprep.subr.mxu0 0.0
    %1714 = vmatpush1.xpose.msra.mxu0 0.0
    %1715 = vmatprep.subr.mxu0 0.0
    %1716 = vmatpush1.xpose.msra.mxu0 0.0
    %1717 = vmatprep.subr.mxu0 0.0
    %1718 = vmatpush1.xpose.msra.mxu0 0.0
    %1719 = vmatprep.subr.mxu0 0.0
    %1720 = vmatpush1.xpose.msra.mxu0 0.0
    %1721 = vmatprep.subr.mxu0 0.0
    %1722 = vmatpush1.xpose.msra.mxu0 0.0
    %1723 = vmatprep.subr.mxu0 0.0
    %1724 = vmatpush1.xpose.msra.mxu0 0.0
    %1725 = vmatprep.subr.mxu0 0.0
    %1726 = vmatpush1.xpose.msra.mxu0 0.0
    %1727 = vmatprep.subr.mxu0 0.0
    %1728 = vmatpush1.xpose.msra.mxu0 0.0
    %1729 = vmatprep.subr.mxu0 0.0
    %1730 = vmatpush1.xpose.msra.mxu0 0.0
    %1731 = vmatprep.subr.mxu0 0.0
    %1732 = vmatpush1.xpose.msra.mxu0 0.0
    %1733 = vmatprep.subr.mxu0 0.0
    %1734 = vmatpush1.xpose.msra.mxu0 0.0
    %1735 = vmatprep.subr.mxu0 0.0
    %1736 = vmatpush1.xpose.msra.mxu0 0.0
    %1737 = vmatprep.subr.mxu0 0.0
    %1738 = vmatpush1.xpose.msra.mxu0 0.0
    %1739 = vmatprep.subr.mxu0 0.0
    %1740 = vmatpush1.xpose.msra.mxu0 0.0
    %1741 = vmatprep.subr.mxu0 0.0
    %1742 = vmatpush1.xpose.msra.mxu0 0.0
    %1743 = vmatprep.subr.mxu0 0.0
    %1744 = vmatpush1.xpose.msra.mxu0 0.0
    %1745 = vmatprep.subr.mxu0 0.0
    %1746 = vmatpush1.xpose.msra.mxu0 0.0
    %1747 = vmatprep.subr.mxu0 0.0
    %1748 = vmatpush1.xpose.msra.mxu0 0.0
    %1749 = vmatprep.mubr.f32.mxu0 0.0
    %v1750 = vand.u32 %v1380, 4294901760
    %1751 = vmatmul.mubr.f32.gmra.mrb[0].mxu0 %v1750
    %v1752 = vpop.f32.mrb[0].mxu0
    %v1753 = vadd.f32 %v1679, %v1752
    %v1754 = vpop.f32.mrb[0].mxu0
    %1755 = vdwg.mxu0
    %1756 = vmatprep.subr.mxu0 0.0
    %v1757 = vand.u32 %v1380, 4294901760
    %1758 = vmatpush1.xpose.msra.mxu0 %v1757
    %1759 = vmatprep.subr.mxu0 0.0
    %1760 = vmatpush1.xpose.msra.mxu0 0.0
    %1761 = vmatprep.subr.mxu0 0.0
    %1762 = vmatpush1.xpose.msra.mxu0 0.0
    %1763 = vmatprep.subr.mxu0 0.0
    %1764 = vmatpush1.xpose.msra.mxu0 0.0
    %1765 = vmatprep.subr.mxu0 0.0
    %1766 = vmatpush1.xpose.msra.mxu0 0.0
    %1767 = vmatprep.subr.mxu0 0.0
    %1768 = vmatpush1.xpose.msra.mxu0 0.0
    %1769 = vmatprep.subr.mxu0 0.0
    %1770 = vmatpush1.xpose.msra.mxu0 0.0
    %1771 = vmatprep.subr.mxu0 0.0
    %1772 = vmatpush1.xpose.msra.mxu0 0.0
    %1773 = vmatprep.subr.mxu0 0.0
    %1774 = vmatpush1.xpose.msra.mxu0 0.0
    %1775 = vmatprep.subr.mxu0 0.0
    %1776 = vmatpush1.xpose.msra.mxu0 0.0
    %1777 = vmatprep.subr.mxu0 0.0
    %1778 = vmatpush1.xpose.msra.mxu0 0.0
    %1779 = vmatprep.subr.mxu0 0.0
    %1780 = vmatpush1.xpose.msra.mxu0 0.0
    %1781 = vmatprep.subr.mxu0 0.0
    %1782 = vmatpush1.xpose.msra.mxu0 0.0
    %1783 = vmatprep.subr.mxu0 0.0
    %1784 = vmatpush1.xpose.msra.mxu0 0.0
    %1785 = vmatprep.subr.mxu0 0.0
    %1786 = vmatpush1.xpose.msra.mxu0 0.0
    %1787 = vmatprep.subr.mxu0 0.0
    %1788 = vmatpush1.xpose.msra.mxu0 0.0
    %1789 = vmatprep.subr.mxu0 0.0
    %1790 = vmatpush1.xpose.msra.mxu0 0.0
    %1791 = vmatprep.subr.mxu0 0.0
    %1792 = vmatpush1.xpose.msra.mxu0 0.0
    %1793 = vmatprep.subr.mxu0 0.0
    %1794 = vmatpush1.xpose.msra.mxu0 0.0
    %1795 = vmatprep.subr.mxu0 0.0
    %1796 = vmatpush1.xpose.msra.mxu0 0.0
    %1797 = vmatprep.subr.mxu0 0.0
    %1798 = vmatpush1.xpose.msra.mxu0 0.0
    %1799 = vmatprep.subr.mxu0 0.0
    %1800 = vmatpush1.xpose.msra.mxu0 0.0
    %1801 = vmatprep.subr.mxu0 0.0
    %1802 = vmatpush1.xpose.msra.mxu0 0.0
    %1803 = vmatprep.subr.mxu0 0.0
    %1804 = vmatpush1.xpose.msra.mxu0 0.0
    %1805 = vmatprep.subr.mxu0 0.0
    %1806 = vmatpush1.xpose.msra.mxu0 0.0
    %1807 = vmatprep.subr.mxu0 0.0
    %1808 = vmatpush1.xpose.msra.mxu0 0.0
    %1809 = vmatprep.subr.mxu0 0.0
    %1810 = vmatpush1.xpose.msra.mxu0 0.0
    %1811 = vmatprep.subr.mxu0 0.0
    %1812 = vmatpush1.xpose.msra.mxu0 0.0
    %1813 = vmatprep.subr.mxu0 0.0
    %1814 = vmatpush1.xpose.msra.mxu0 0.0
    %1815 = vmatprep.subr.mxu0 0.0
    %1816 = vmatpush1.xpose.msra.mxu0 0.0
    %1817 = vmatprep.subr.mxu0 0.0
    %1818 = vmatpush1.xpose.msra.mxu0 0.0
    %1819 = vmatprep.subr.mxu0 0.0
    %1820 = vmatpush1.xpose.msra.mxu0 0.0
    %1821 = vmatprep.mubr.f32.mxu0 0.0
    %v1822 = vand.u32 %v1380, 4294901760
    %1823 = vmatmul.mubr.f32.gmra.mrb[0].mxu0 %v1822
    %v1824 = vpop.f32.mrb[0].mxu0
    %v1825 = vadd.f32 %v1753, %v1824
    %v1826 = vpop.f32.mrb[0].mxu0
    %1827 = vdwg.mxu0
    %v1829 = vsel %vm31, %v30, 0
    %1831 = vmatprep.subr.mxu0 0.0
    %v1832 = vand.u32 %v1829, 4294901760
    %1833 = vmatpush1.xpose.msra.mxu0 %v1832
    %1834 = vmatprep.subr.mxu0 0.0
    %1835 = vmatpush1.xpose.msra.mxu0 0.0
    %1836 = vmatprep.subr.mxu0 0.0
    %1837 = vmatpush1.xpose.msra.mxu0 0.0
    %1838 = vmatprep.subr.mxu0 0.0
    %1839 = vmatpush1.xpose.msra.mxu0 0.0
    %1840 = vmatprep.subr.mxu0 0.0
    %1841 = vmatpush1.xpose.msra.mxu0 0.0
    %1842 = vmatprep.subr.mxu0 0.0
    %1843 = vmatpush1.xpose.msra.mxu0 0.0
    %1844 = vmatprep.subr.mxu0 0.0
    %1845 = vmatpush1.xpose.msra.mxu0 0.0
    %1846 = vmatprep.subr.mxu0 0.0
    %1847 = vmatpush1.xpose.msra.mxu0 0.0
    %1848 = vmatprep.subr.mxu0 0.0
    %1849 = vmatpush1.xpose.msra.mxu0 0.0
    %1850 = vmatprep.subr.mxu0 0.0
    %1851 = vmatpush1.xpose.msra.mxu0 0.0
    %1852 = vmatprep.subr.mxu0 0.0
    %1853 = vmatpush1.xpose.msra.mxu0 0.0
    %1854 = vmatprep.subr.mxu0 0.0
    %1855 = vmatpush1.xpose.msra.mxu0 0.0
    %1856 = vmatprep.subr.mxu0 0.0
    %1857 = vmatpush1.xpose.msra.mxu0 0.0
    %1858 = vmatprep.subr.mxu0 0.0
    %1859 = vmatpush1.xpose.msra.mxu0 0.0
    %1860 = vmatprep.subr.mxu0 0.0
    %1861 = vmatpush1.xpose.msra.mxu0 0.0
    %1862 = vmatprep.subr.mxu0 0.0
    %1863 = vmatpush1.xpose.msra.mxu0 0.0
    %1864 = vmatprep.subr.mxu0 0.0
    %1865 = vmatpush1.xpose.msra.mxu0 0.0
    %1866 = vmatprep.subr.mxu0 0.0
    %1867 = vmatpush1.xpose.msra.mxu0 0.0
    %1868 = vmatprep.subr.mxu0 0.0
    %1869 = vmatpush1.xpose.msra.mxu0 0.0
    %1870 = vmatprep.subr.mxu0 0.0
    %1871 = vmatpush1.xpose.msra.mxu0 0.0
    %1872 = vmatprep.subr.mxu0 0.0
    %1873 = vmatpush1.xpose.msra.mxu0 0.0
    %1874 = vmatprep.subr.mxu0 0.0
    %1875 = vmatpush1.xpose.msra.mxu0 0.0
    %1876 = vmatprep.subr.mxu0 0.0
    %1877 = vmatpush1.xpose.msra.mxu0 0.0
    %1878 = vmatprep.subr.mxu0 0.0
    %1879 = vmatpush1.xpose.msra.mxu0 0.0
    %1880 = vmatprep.subr.mxu0 0.0
    %1881 = vmatpush1.xpose.msra.mxu0 0.0
    %1882 = vmatprep.subr.mxu0 0.0
    %1883 = vmatpush1.xpose.msra.mxu0 0.0
    %1884 = vmatprep.subr.mxu0 0.0
    %1885 = vmatpush1.xpose.msra.mxu0 0.0
    %1886 = vmatprep.subr.mxu0 0.0
    %1887 = vmatpush1.xpose.msra.mxu0 0.0
    %1888 = vmatprep.subr.mxu0 0.0
    %1889 = vmatpush1.xpose.msra.mxu0 0.0
    %1890 = vmatprep.subr.mxu0 0.0
    %1891 = vmatpush1.xpose.msra.mxu0 0.0
    %1892 = vmatprep.subr.mxu0 0.0
    %1893 = vmatpush1.xpose.msra.mxu0 0.0
    %1894 = vmatprep.subr.mxu0 0.0
    %1895 = vmatpush1.xpose.msra.mxu0 0.0
    %1896 = vmatprep.mubr.f32.mxu0 0.0
    %v1897 = vand.u32 %v1829, 4294901760
    %v1898 = vsub.f32 %v1829, %v1897
    %v1899 = vand.u32 %v1898, 4294901760
    %v1900 = vsub.f32 %v1898, %v1899
    %v1901 = vand.u32 %v1900, 4294901760
    %1902 = vmatmul.mubr.f32.gmra.mrb[0].mxu0 %v1901
    %v1903 = vpop.f32.mrb[0].mxu0
    %v1904 = vadd.f32 0.0, %v1903
    %v1905 = vpop.f32.mrb[0].mxu0
    %1906 = vdwg.mxu0
    %1907 = vmatprep.subr.mxu0 0.0
    %v1908 = vand.u32 %v1829, 4294901760
    %v1909 = vsub.f32 %v1829, %v1908
    %v1910 = vand.u32 %v1909, 4294901760
    %v1911 = vsub.f32 %v1909, %v1910
    %v1912 = vand.u32 %v1911, 4294901760
    %1913 = vmatpush1.xpose.msra.mxu0 %v1912
    %1914 = vmatprep.subr.mxu0 0.0
    %1915 = vmatpush1.xpose.msra.mxu0 0.0
    %1916 = vmatprep.subr.mxu0 0.0
    %1917 = vmatpush1.xpose.msra.mxu0 0.0
    %1918 = vmatprep.subr.mxu0 0.0
    %1919 = vmatpush1.xpose.msra.mxu0 0.0
    %1920 = vmatprep.subr.mxu0 0.0
    %1921 = vmatpush1.xpose.msra.mxu0 0.0
    %1922 = vmatprep.subr.mxu0 0.0
    %1923 = vmatpush1.xpose.msra.mxu0 0.0
    %1924 = vmatprep.subr.mxu0 0.0
    %1925 = vmatpush1.xpose.msra.mxu0 0.0
    %1926 = vmatprep.subr.mxu0 0.0
    %1927 = vmatpush1.xpose.msra.mxu0 0.0
    %1928 = vmatprep.subr.mxu0 0.0
    %1929 = vmatpush1.xpose.msra.mxu0 0.0
    %1930 = vmatprep.subr.mxu0 0.0
    %1931 = vmatpush1.xpose.msra.mxu0 0.0
    %1932 = vmatprep.subr.mxu0 0.0
    %1933 = vmatpush1.xpose.msra.mxu0 0.0
    %1934 = vmatprep.subr.mxu0 0.0
    %1935 = vmatpush1.xpose.msra.mxu0 0.0
    %1936 = vmatprep.subr.mxu0 0.0
    %1937 = vmatpush1.xpose.msra.mxu0 0.0
    %1938 = vmatprep.subr.mxu0 0.0
    %1939 = vmatpush1.xpose.msra.mxu0 0.0
    %1940 = vmatprep.subr.mxu0 0.0
    %1941 = vmatpush1.xpose.msra.mxu0 0.0
    %1942 = vmatprep.subr.mxu0 0.0
    %1943 = vmatpush1.xpose.msra.mxu0 0.0
    %1944 = vmatprep.subr.mxu0 0.0
    %1945 = vmatpush1.xpose.msra.mxu0 0.0
    %1946 = vmatprep.subr.mxu0 0.0
    %1947 = vmatpush1.xpose.msra.mxu0 0.0
    %1948 = vmatprep.subr.mxu0 0.0
    %1949 = vmatpush1.xpose.msra.mxu0 0.0
    %1950 = vmatprep.subr.mxu0 0.0
    %1951 = vmatpush1.xpose.msra.mxu0 0.0
    %1952 = vmatprep.subr.mxu0 0.0
    %1953 = vmatpush1.xpose.msra.mxu0 0.0
    %1954 = vmatprep.subr.mxu0 0.0
    %1955 = vmatpush1.xpose.msra.mxu0 0.0
    %1956 = vmatprep.subr.mxu0 0.0
    %1957 = vmatpush1.xpose.msra.mxu0 0.0
    %1958 = vmatprep.subr.mxu0 0.0
    %1959 = vmatpush1.xpose.msra.mxu0 0.0
    %1960 = vmatprep.subr.mxu0 0.0
    %1961 = vmatpush1.xpose.msra.mxu0 0.0
    %1962 = vmatprep.subr.mxu0 0.0
    %1963 = vmatpush1.xpose.msra.mxu0 0.0
    %1964 = vmatprep.subr.mxu0 0.0
    %1965 = vmatpush1.xpose.msra.mxu0 0.0
    %1966 = vmatprep.subr.mxu0 0.0
    %1967 = vmatpush1.xpose.msra.mxu0 0.0
    %1968 = vmatprep.subr.mxu0 0.0
    %1969 = vmatpush1.xpose.msra.mxu0 0.0
    %1970 = vmatprep.subr.mxu0 0.0
    %1971 = vmatpush1.xpose.msra.mxu0 0.0
    %1972 = vmatprep.subr.mxu0 0.0
    %1973 = vmatpush1.xpose.msra.mxu0 0.0
    %1974 = vmatprep.subr.mxu0 0.0
    %1975 = vmatpush1.xpose.msra.mxu0 0.0
    %1976 = vmatprep.mubr.f32.mxu0 0.0
    %v1977 = vand.u32 %v1829, 4294901760
    %1978 = vmatmul.mubr.f32.gmra.mrb[0].mxu0 %v1977
    %v1979 = vpop.f32.mrb[0].mxu0
    %v1980 = vadd.f32 %v1904, %v1979
    %v1981 = vpop.f32.mrb[0].mxu0
    %1982 = vdwg.mxu0
    %1983 = vmatprep.subr.mxu0 0.0
    %v1984 = vand.u32 %v1829, 4294901760
    %v1985 = vsub.f32 %v1829, %v1984
    %1986 = vmatpush1.xpose.msra.mxu0 %v1985
    %1987 = vmatprep.subr.mxu0 0.0
    %1988 = vmatpush1.xpose.msra.mxu0 0.0
    %1989 = vmatprep.subr.mxu0 0.0
    %1990 = vmatpush1.xpose.msra.mxu0 0.0
    %1991 = vmatprep.subr.mxu0 0.0
    %1992 = vmatpush1.xpose.msra.mxu0 0.0
    %1993 = vmatprep.subr.mxu0 0.0
    %1994 = vmatpush1.xpose.msra.mxu0 0.0
    %1995 = vmatprep.subr.mxu0 0.0
    %1996 = vmatpush1.xpose.msra.mxu0 0.0
    %1997 = vmatprep.subr.mxu0 0.0
    %1998 = vmatpush1.xpose.msra.mxu0 0.0
    %1999 = vmatprep.subr.mxu0 0.0
    %2000 = vmatpush1.xpose.msra.mxu0 0.0
    %2001 = vmatprep.subr.mxu0 0.0
    %2002 = vmatpush1.xpose.msra.mxu0 0.0
    %2003 = vmatprep.subr.mxu0 0.0
    %2004 = vmatpush1.xpose.msra.mxu0 0.0
    %2005 = vmatprep.subr.mxu0 0.0
    %2006 = vmatpush1.xpose.msra.mxu0 0.0
    %2007 = vmatprep.subr.mxu0 0.0
    %2008 = vmatpush1.xpose.msra.mxu0 0.0
    %2009 = vmatprep.subr.mxu0 0.0
    %2010 = vmatpush1.xpose.msra.mxu0 0.0
    %2011 = vmatprep.subr.mxu0 0.0
    %2012 = vmatpush1.xpose.msra.mxu0 0.0
    %2013 = vmatprep.subr.mxu0 0.0
    %2014 = vmatpush1.xpose.msra.mxu0 0.0
    %2015 = vmatprep.subr.mxu0 0.0
    %2016 = vmatpush1.xpose.msra.mxu0 0.0
    %2017 = vmatprep.subr.mxu0 0.0
    %2018 = vmatpush1.xpose.msra.mxu0 0.0
    %2019 = vmatprep.subr.mxu0 0.0
    %2020 = vmatpush1.xpose.msra.mxu0 0.0
    %2021 = vmatprep.subr.mxu0 0.0
    %2022 = vmatpush1.xpose.msra.mxu0 0.0
    %2023 = vmatprep.subr.mxu0 0.0
    %2024 = vmatpush1.xpose.msra.mxu0 0.0
    %2025 = vmatprep.subr.mxu0 0.0
    %2026 = vmatpush1.xpose.msra.mxu0 0.0
    %2027 = vmatprep.subr.mxu0 0.0
    %2028 = vmatpush1.xpose.msra.mxu0 0.0
    %2029 = vmatprep.subr.mxu0 0.0
    %2030 = vmatpush1.xpose.msra.mxu0 0.0
    %2031 = vmatprep.subr.mxu0 0.0
    %2032 = vmatpush1.xpose.msra.mxu0 0.0
    %2033 = vmatprep.subr.mxu0 0.0
    %2034 = vmatpush1.xpose.msra.mxu0 0.0
    %2035 = vmatprep.subr.mxu0 0.0
    %2036 = vmatpush1.xpose.msra.mxu0 0.0
    %2037 = vmatprep.subr.mxu0 0.0
    %2038 = vmatpush1.xpose.msra.mxu0 0.0
    %2039 = vmatprep.subr.mxu0 0.0
    %2040 = vmatpush1.xpose.msra.mxu0 0.0
    %2041 = vmatprep.subr.mxu0 0.0
    %2042 = vmatpush1.xpose.msra.mxu0 0.0
    %2043 = vmatprep.subr.mxu0 0.0
    %2044 = vmatpush1.xpose.msra.mxu0 0.0
    %2045 = vmatprep.subr.mxu0 0.0
    %2046 = vmatpush1.xpose.msra.mxu0 0.0
    %2047 = vmatprep.subr.mxu0 0.0
    %2048 = vmatpush1.xpose.msra.mxu0 0.0
    %2049 = vmatprep.mubr.f32.mxu0 0.0
    %v2050 = vand.u32 %v1829, 4294901760
    %v2051 = vsub.f32 %v1829, %v2050
    %2052 = vmatmul.mubr.f32.gmra.mrb[0].mxu0 %v2051
    %v2053 = vpop.f32.mrb[0].mxu0
    %v2054 = vadd.f32 %v1980, %v2053
    %v2055 = vpop.f32.mrb[0].mxu0
    %2056 = vdwg.mxu0
    %2057 = vmatprep.subr.mxu0 0.0
    %v2058 = vand.u32 %v1829, 4294901760
    %2059 = vmatpush1.xpose.msra.mxu0 %v2058
    %2060 = vmatprep.subr.mxu0 0.0
    %2061 = vmatpush1.xpose.msra.mxu0 0.0
    %2062 = vmatprep.subr.mxu0 0.0
    %2063 = vmatpush1.xpose.msra.mxu0 0.0
    %2064 = vmatprep.subr.mxu0 0.0
    %2065 = vmatpush1.xpose.msra.mxu0 0.0
    %2066 = vmatprep.subr.mxu0 0.0
    %2067 = vmatpush1.xpose.msra.mxu0 0.0
    %2068 = vmatprep.subr.mxu0 0.0
    %2069 = vmatpush1.xpose.msra.mxu0 0.0
    %2070 = vmatprep.subr.mxu0 0.0
    %2071 = vmatpush1.xpose.msra.mxu0 0.0
    %2072 = vmatprep.subr.mxu0 0.0
    %2073 = vmatpush1.xpose.msra.mxu0 0.0
    %2074 = vmatprep.subr.mxu0 0.0
    %2075 = vmatpush1.xpose.msra.mxu0 0.0
    %2076 = vmatprep.subr.mxu0 0.0
    %2077 = vmatpush1.xpose.msra.mxu0 0.0
    %2078 = vmatprep.subr.mxu0 0.0
    %2079 = vmatpush1.xpose.msra.mxu0 0.0
    %2080 = vmatprep.subr.mxu0 0.0
    %2081 = vmatpush1.xpose.msra.mxu0 0.0
    %2082 = vmatprep.subr.mxu0 0.0
    %2083 = vmatpush1.xpose.msra.mxu0 0.0
    %2084 = vmatprep.subr.mxu0 0.0
    %2085 = vmatpush1.xpose.msra.mxu0 0.0
    %2086 = vmatprep.subr.mxu0 0.0
    %2087 = vmatpush1.xpose.msra.mxu0 0.0
    %2088 = vmatprep.subr.mxu0 0.0
    %2089 = vmatpush1.xpose.msra.mxu0 0.0
    %2090 = vmatprep.subr.mxu0 0.0
    %2091 = vmatpush1.xpose.msra.mxu0 0.0
    %2092 = vmatprep.subr.mxu0 0.0
    %2093 = vmatpush1.xpose.msra.mxu0 0.0
    %2094 = vmatprep.subr.mxu0 0.0
    %2095 = vmatpush1.xpose.msra.mxu0 0.0
    %2096 = vmatprep.subr.mxu0 0.0
    %2097 = vmatpush1.xpose.msra.mxu0 0.0
    %2098 = vmatprep.subr.mxu0 0.0
    %2099 = vmatpush1.xpose.msra.mxu0 0.0
    %2100 = vmatprep.subr.mxu0 0.0
    %2101 = vmatpush1.xpose.msra.mxu0 0.0
    %2102 = vmatprep.subr.mxu0 0.0
    %2103 = vmatpush1.xpose.msra.mxu0 0.0
    %2104 = vmatprep.subr.mxu0 0.0
    %2105 = vmatpush1.xpose.msra.mxu0 0.0
    %2106 = vmatprep.subr.mxu0 0.0
    %2107 = vmatpush1.xpose.msra.mxu0 0.0
    %2108 = vmatprep.subr.mxu0 0.0
    %2109 = vmatpush1.xpose.msra.mxu0 0.0
    %2110 = vmatprep.subr.mxu0 0.0
    %2111 = vmatpush1.xpose.msra.mxu0 0.0
    %2112 = vmatprep.subr.mxu0 0.0
    %2113 = vmatpush1.xpose.msra.mxu0 0.0
    %2114 = vmatprep.subr.mxu0 0.0
    %2115 = vmatpush1.xpose.msra.mxu0 0.0
    %2116 = vmatprep.subr.mxu0 0.0
    %2117 = vmatpush1.xpose.msra.mxu0 0.0
    %2118 = vmatprep.subr.mxu0 0.0
    %2119 = vmatpush1.xpose.msra.mxu0 0.0
    %2120 = vmatprep.subr.mxu0 0.0
    %2121 = vmatpush1.xpose.msra.mxu0 0.0
    %2122 = vmatprep.mubr.f32.mxu0 0.0
    %v2123 = vand.u32 %v1829, 4294901760
    %v2124 = vsub.f32 %v1829, %v2123
    %v2125 = vand.u32 %v2124, 4294901760
    %2126 = vmatmul.mubr.f32.gmra.mrb[0].mxu0 %v2125
    %v2127 = vpop.f32.mrb[0].mxu0
    %v2128 = vadd.f32 %v2054, %v2127
    %v2129 = vpop.f32.mrb[0].mxu0
    %2130 = vdwg.mxu0
    %2131 = vmatprep.subr.mxu0 0.0
    %v2132 = vand.u32 %v1829, 4294901760
    %v2133 = vsub.f32 %v1829, %v2132
    %v2134 = vand.u32 %v2133, 4294901760
    %2135 = vmatpush1.xpose.msra.mxu0 %v2134
    %2136 = vmatprep.subr.mxu0 0.0
    %2137 = vmatpush1.xpose.msra.mxu0 0.0
    %2138 = vmatprep.subr.mxu0 0.0
    %2139 = vmatpush1.xpose.msra.mxu0 0.0
    %2140 = vmatprep.subr.mxu0 0.0
    %2141 = vmatpush1.xpose.msra.mxu0 0.0
    %2142 = vmatprep.subr.mxu0 0.0
    %2143 = vmatpush1.xpose.msra.mxu0 0.0
    %2144 = vmatprep.subr.mxu0 0.0
    %2145 = vmatpush1.xpose.msra.mxu0 0.0
    %2146 = vmatprep.subr.mxu0 0.0
    %2147 = vmatpush1.xpose.msra.mxu0 0.0
    %2148 = vmatprep.subr.mxu0 0.0
    %2149 = vmatpush1.xpose.msra.mxu0 0.0
    %2150 = vmatprep.subr.mxu0 0.0
    %2151 = vmatpush1.xpose.msra.mxu0 0.0
    %2152 = vmatprep.subr.mxu0 0.0
    %2153 = vmatpush1.xpose.msra.mxu0 0.0
    %2154 = vmatprep.subr.mxu0 0.0
    %2155 = vmatpush1.xpose.msra.mxu0 0.0
    %2156 = vmatprep.subr.mxu0 0.0
    %2157 = vmatpush1.xpose.msra.mxu0 0.0
    %2158 = vmatprep.subr.mxu0 0.0
    %2159 = vmatpush1.xpose.msra.mxu0 0.0
    %2160 = vmatprep.subr.mxu0 0.0
    %2161 = vmatpush1.xpose.msra.mxu0 0.0
    %2162 = vmatprep.subr.mxu0 0.0
    %2163 = vmatpush1.xpose.msra.mxu0 0.0
    %2164 = vmatprep.subr.mxu0 0.0
    %2165 = vmatpush1.xpose.msra.mxu0 0.0
    %2166 = vmatprep.subr.mxu0 0.0
    %2167 = vmatpush1.xpose.msra.mxu0 0.0
    %2168 = vmatprep.subr.mxu0 0.0
    %2169 = vmatpush1.xpose.msra.mxu0 0.0
    %2170 = vmatprep.subr.mxu0 0.0
    %2171 = vmatpush1.xpose.msra.mxu0 0.0
    %2172 = vmatprep.subr.mxu0 0.0
    %2173 = vmatpush1.xpose.msra.mxu0 0.0
    %2174 = vmatprep.subr.mxu0 0.0
    %2175 = vmatpush1.xpose.msra.mxu0 0.0
    %2176 = vmatprep.subr.mxu0 0.0
    %2177 = vmatpush1.xpose.msra.mxu0 0.0
    %2178 = vmatprep.subr.mxu0 0.0
    %2179 = vmatpush1.xpose.msra.mxu0 0.0
    %2180 = vmatprep.subr.mxu0 0.0
    %2181 = vmatpush1.xpose.msra.mxu0 0.0
    %2182 = vmatprep.subr.mxu0 0.0
    %2183 = vmatpush1.xpose.msra.mxu0 0.0
    %2184 = vmatprep.subr.mxu0 0.0
    %2185 = vmatpush1.xpose.msra.mxu0 0.0
    %2186 = vmatprep.subr.mxu0 0.0
    %2187 = vmatpush1.xpose.msra.mxu0 0.0
    %2188 = vmatprep.subr.mxu0 0.0
    %2189 = vmatpush1.xpose.msra.mxu0 0.0
    %2190 = vmatprep.subr.mxu0 0.0
    %2191 = vmatpush1.xpose.msra.mxu0 0.0
    %2192 = vmatprep.subr.mxu0 0.0
    %2193 = vmatpush1.xpose.msra.mxu0 0.0
    %2194 = vmatprep.subr.mxu0 0.0
    %2195 = vmatpush1.xpose.msra.mxu0 0.0
    %2196 = vmatprep.subr.mxu0 0.0
    %2197 = vmatpush1.xpose.msra.mxu0 0.0
    %2198 = vmatprep.mubr.f32.mxu0 0.0
    %v2199 = vand.u32 %v1829, 4294901760
    %2200 = vmatmul.mubr.f32.gmra.mrb[0].mxu0 %v2199
    %v2201 = vpop.f32.mrb[0].mxu0
    %v2202 = vadd.f32 %v2128, %v2201
    %v2203 = vpop.f32.mrb[0].mxu0
    %2204 = vdwg.mxu0
    %2205 = vmatprep.subr.mxu0 0.0
    %v2206 = vand.u32 %v1829, 4294901760
    %2207 = vmatpush1.xpose.msra.mxu0 %v2206
    %2208 = vmatprep.subr.mxu0 0.0
    %2209 = vmatpush1.xpose.msra.mxu0 0.0
    %2210 = vmatprep.subr.mxu0 0.0
    %2211 = vmatpush1.xpose.msra.mxu0 0.0
    %2212 = vmatprep.subr.mxu0 0.0
    %2213 = vmatpush1.xpose.msra.mxu0 0.0
    %2214 = vmatprep.subr.mxu0 0.0
    %2215 = vmatpush1.xpose.msra.mxu0 0.0
    %2216 = vmatprep.subr.mxu0 0.0
    %2217 = vmatpush1.xpose.msra.mxu0 0.0
    %2218 = vmatprep.subr.mxu0 0.0
    %2219 = vmatpush1.xpose.msra.mxu0 0.0
    %2220 = vmatprep.subr.mxu0 0.0
    %2221 = vmatpush1.xpose.msra.mxu0 0.0
    %2222 = vmatprep.subr.mxu0 0.0
    %2223 = vmatpush1.xpose.msra.mxu0 0.0
    %2224 = vmatprep.subr.mxu0 0.0
    %2225 = vmatpush1.xpose.msra.mxu0 0.0
    %2226 = vmatprep.subr.mxu0 0.0
    %2227 = vmatpush1.xpose.msra.mxu0 0.0
    %2228 = vmatprep.subr.mxu0 0.0
    %2229 = vmatpush1.xpose.msra.mxu0 0.0
    %2230 = vmatprep.subr.mxu0 0.0
    %2231 = vmatpush1.xpose.msra.mxu0 0.0
    %2232 = vmatprep.subr.mxu0 0.0
    %2233 = vmatpush1.xpose.msra.mxu0 0.0
    %2234 = vmatprep.subr.mxu0 0.0
    %2235 = vmatpush1.xpose.msra.mxu0 0.0
    %2236 = vmatprep.subr.mxu0 0.0
    %2237 = vmatpush1.xpose.msra.mxu0 0.0
    %2238 = vmatprep.subr.mxu0 0.0
    %2239 = vmatpush1.xpose.msra.mxu0 0.0
    %2240 = vmatprep.subr.mxu0 0.0
    %2241 = vmatpush1.xpose.msra.mxu0 0.0
    %2242 = vmatprep.subr.mxu0 0.0
    %2243 = vmatpush1.xpose.msra.mxu0 0.0
    %2244 = vmatprep.subr.mxu0 0.0
    %2245 = vmatpush1.xpose.msra.mxu0 0.0
    %2246 = vmatprep.subr.mxu0 0.0
    %2247 = vmatpush1.xpose.msra.mxu0 0.0
    %2248 = vmatprep.subr.mxu0 0.0
    %2249 = vmatpush1.xpose.msra.mxu0 0.0
    %2250 = vmatprep.subr.mxu0 0.0
    %2251 = vmatpush1.xpose.msra.mxu0 0.0
    %2252 = vmatprep.subr.mxu0 0.0
    %2253 = vmatpush1.xpose.msra.mxu0 0.0
    %2254 = vmatprep.subr.mxu0 0.0
    %2255 = vmatpush1.xpose.msra.mxu0 0.0
    %2256 = vmatprep.subr.mxu0 0.0
    %2257 = vmatpush1.xpose.msra.mxu0 0.0
    %2258 = vmatprep.subr.mxu0 0.0
    %2259 = vmatpush1.xpose.msra.mxu0 0.0
    %2260 = vmatprep.subr.mxu0 0.0
    %2261 = vmatpush1.xpose.msra.mxu0 0.0
    %2262 = vmatprep.subr.mxu0 0.0
    %2263 = vmatpush1.xpose.msra.mxu0 0.0
    %2264 = vmatprep.subr.mxu0 0.0
    %2265 = vmatpush1.xpose.msra.mxu0 0.0
    %2266 = vmatprep.subr.mxu0 0.0
    %2267 = vmatpush1.xpose.msra.mxu0 0.0
    %2268 = vmatprep.subr.mxu0 0.0
    %2269 = vmatpush1.xpose.msra.mxu0 0.0
    %2270 = vmatprep.mubr.f32.mxu0 0.0
    %v2271 = vand.u32 %v1829, 4294901760
    %2272 = vmatmul.mubr.f32.gmra.mrb[0].mxu0 %v2271
    %v2273 = vpop.f32.mrb[0].mxu0
    %v2274 = vadd.f32 %v2202, %v2273
    %v2275 = vpop.f32.mrb[0].mxu0
    %2276 = vdwg.mxu0
    %v2277 = vsel %vm16, -1e+30, %v478
    %v2278 = vsel %vm16, -1e+30, %v927
    %v2279 = vsel %vm16, -1e+30, %v1376
    %v2280 = vsel %vm16, -1e+30, %v1825
    %v2281 = vsel %vm16, -1e+30, %v2274
    %vm2282 = vcmask 27648
    %v2283 = vsel %vm2282, %v2277, -inf
    %2284 = vmax.xlane.f32.xlu0 %v2283
    %v2285 = vpop.xlane.xlu0 %2284
    %v2286 = vsel %vm2282, %v2278, -inf
    %2287 = vmax.xlane.f32.xlu0 %v2286
    %v2288 = vpop.xlane.xlu0 %2287
    %v2289 = vsel %vm2282, %v2279, -inf
    %2290 = vmax.xlane.f32.xlu0 %v2289
    %v2291 = vpop.xlane.xlu0 %2290
    %v2292 = vsel %vm2282, %v2280, -inf
    %2293 = vmax.xlane.f32.xlu0 %v2292
    %v2294 = vpop.xlane.xlu0 %2293
    %v2295 = vsel %vm2282, %v2281, -inf
    %2296 = vmax.xlane.f32.xlu0 %v2295
    %v2297 = vpop.xlane.xlu0 %2296
    %v2298 = vsub.f32 %v2277, %v2285
    %v2299 = vsub.f32 %v2278, %v2288
    %v2300 = vsub.f32 %v2279, %v2291
    %v2301 = vsub.f32 %v2280, %v2294
    %v2302 = vsub.f32 %v2281, %v2297
    %v2303 = vmul.f32 %v2298, 1.442695
    %v2304 = vpow.pop %v2303
    %v2305 = vmul.f32 %v2299, 1.442695
    %v2306 = vpow.pop %v2305
    %v2307 = vmul.f32 %v2300, 1.442695
    %v2308 = vpow.pop %v2307
    %v2309 = vmul.f32 %v2301, 1.442695
    %v2310 = vpow.pop %v2309
    %v2311 = vmul.f32 %v2302, 1.442695
    %v2312 = vpow.pop %v2311
    %v2313 = vsel %vm2282, %v2304, 0.0
    %2314 = vadd.xlane.f32.xlu0 %v2313
    %v2315 = vpop.xlane.xlu0 %2314
    %v2316 = vsel %vm2282, %v2306, 0.0
    %2317 = vadd.xlane.f32.xlu0 %v2316
    %v2318 = vpop.xlane.xlu0 %2317
    %v2319 = vsel %vm2282, %v2308, 0.0
    %2320 = vadd.xlane.f32.xlu0 %v2319
    %v2321 = vpop.xlane.xlu0 %2320
    %v2322 = vsel %vm2282, %v2310, 0.0
    %2323 = vadd.xlane.f32.xlu0 %v2322
    %v2324 = vpop.xlane.xlu0 %2323
    %v2325 = vsel %vm2282, %v2312, 0.0
    %2326 = vadd.xlane.f32.xlu0 %v2325
    %v2327 = vpop.xlane.xlu0 %2326
    %v2328 = vlog2.pop %v2315
    %v2329 = vmul.f32 %v2328, 0.6931472
    %v2330 = vlog2.pop %v2318
    %v2331 = vmul.f32 %v2330, 0.6931472
    %v2332 = vlog2.pop %v2321
    %v2333 = vmul.f32 %v2332, 0.6931472
    %v2334 = vlog2.pop %v2324
    %v2335 = vmul.f32 %v2334, 0.6931472
    %v2336 = vlog2.pop %v2327
    %v2337 = vmul.f32 %v2336, 0.6931472
    %v2338 = vadd.f32 %v2329, %v2285
    %v2339 = vadd.f32 %v2331, %v2288
    %v2340 = vadd.f32 %v2333, %v2291
    %v2341 = vadd.f32 %v2335, %v2294
    %v2342 = vadd.f32 %v2337, %v2297
    %v2343 = vsub.f32 %v2338, %v2277
    %v2344 = vsub.f32 %v2339, %v2278
    %v2345 = vsub.f32 %v2340, %v2279
    %v2346 = vsub.f32 %v2341, %v2280
    %v2347 = vsub.f32 %v2342, %v2281
    %v2348 = vsel %vm25, %v2343, 0.0
    %v2349 = vsel %vm25, %v2344, 0.0
    %v2350 = vsel %vm25, %v2345, 0.0
    %v2351 = vsel %vm25, %v2346, 0.0
    %v2352 = vsel %vm25, %v2347, 0.0
    %v2353 = vsel %vm2282, %v2348, 0.0
    %v2354 = vsel %vm2282, %v2349, 0.0
    %v2355 = vadd.f32 %v2353, %v2354
    %v2356 = vsel %vm2282, %v2350, 0.0
    %v2357 = vadd.f32 %v2355, %v2356
    %v2358 = vsel %vm2282, %v2351, 0.0
    %v2359 = vadd.f32 %v2357, %v2358
    %v2360 = vsel %vm2282, %v2352, 0.0
    %v2361 = vadd.f32 %v2359, %v2360
    %2362 = vadd.xlane.f32.xlu0 %v2361
    %v2363 = vpop.xlane.xlu0 %2362
    %v2364 = vrot.slane %v2363, 4
    %v2365 = vadd.f32 %v2363, %v2364
    %v2366 = vrot.slane %v2365, 2
    %v2367 = vadd.f32 %v2365, %v2366
    %v2368 = vrot.slane %v2367, 1
    %v2369 = vadd.f32 %v2367, %v2368
    %s2370 = vtos %v2369
    %s2371 = sadd.f32 %s2370, 0.0
    %v2372 = vld [vmem:[%s1] sm:$0xf]
    %v2373 = vld [vmem:[%s1 + $0x4] sm:$0xf]
    %v2374 = vld [vmem:[%s1 + $0x8] sm:$0xf]
    %v2375 = vld [vmem:[%s1 + $0xc] sm:$0xf]
    %v2376 = vld [vmem:[%s1 + $0x10] sm:$0xf]
    %v2378 = vsel %vm31, %v2372, 0
    %2380 = vmatprep.subr.mxu0 0.0
    %v2381 = vand.u32 %v2378, 4294901760
    %2382 = vmatpush1.xpose.msra.mxu0 %v2381
    %2383 = vmatprep.subr.mxu0 0.0
    %2384 = vmatpush1.xpose.msra.mxu0 0.0
    %2385 = vmatprep.subr.mxu0 0.0
    %2386 = vmatpush1.xpose.msra.mxu0 0.0
    %2387 = vmatprep.subr.mxu0 0.0
    %2388 = vmatpush1.xpose.msra.mxu0 0.0
    %2389 = vmatprep.subr.mxu0 0.0
    %2390 = vmatpush1.xpose.msra.mxu0 0.0
    %2391 = vmatprep.subr.mxu0 0.0
    %2392 = vmatpush1.xpose.msra.mxu0 0.0
    %2393 = vmatprep.subr.mxu0 0.0
    %2394 = vmatpush1.xpose.msra.mxu0 0.0
    %2395 = vmatprep.subr.mxu0 0.0
    %2396 = vmatpush1.xpose.msra.mxu0 0.0
    %2397 = vmatprep.subr.mxu0 0.0
    %2398 = vmatpush1.xpose.msra.mxu0 0.0
    %2399 = vmatprep.subr.mxu0 0.0
    %2400 = vmatpush1.xpose.msra.mxu0 0.0
    %2401 = vmatprep.subr.mxu0 0.0
    %2402 = vmatpush1.xpose.msra.mxu0 0.0
    %2403 = vmatprep.subr.mxu0 0.0
    %2404 = vmatpush1.xpose.msra.mxu0 0.0
    %2405 = vmatprep.subr.mxu0 0.0
    %2406 = vmatpush1.xpose.msra.mxu0 0.0
    %2407 = vmatprep.subr.mxu0 0.0
    %2408 = vmatpush1.xpose.msra.mxu0 0.0
    %2409 = vmatprep.subr.mxu0 0.0
    %2410 = vmatpush1.xpose.msra.mxu0 0.0
    %2411 = vmatprep.subr.mxu0 0.0
    %2412 = vmatpush1.xpose.msra.mxu0 0.0
    %2413 = vmatprep.subr.mxu0 0.0
    %2414 = vmatpush1.xpose.msra.mxu0 0.0
    %2415 = vmatprep.subr.mxu0 0.0
    %2416 = vmatpush1.xpose.msra.mxu0 0.0
    %2417 = vmatprep.subr.mxu0 0.0
    %2418 = vmatpush1.xpose.msra.mxu0 0.0
    %2419 = vmatprep.subr.mxu0 0.0
    %2420 = vmatpush1.xpose.msra.mxu0 0.0
    %2421 = vmatprep.subr.mxu0 0.0
    %2422 = vmatpush1.xpose.msra.mxu0 0.0
    %2423 = vmatprep.subr.mxu0 0.0
    %2424 = vmatpush1.xpose.msra.mxu0 0.0
    %2425 = vmatprep.subr.mxu0 0.0
    %2426 = vmatpush1.xpose.msra.mxu0 0.0
    %2427 = vmatprep.subr.mxu0 0.0
    %2428 = vmatpush1.xpose.msra.mxu0 0.0
    %2429 = vmatprep.subr.mxu0 0.0
    %2430 = vmatpush1.xpose.msra.mxu0 0.0
    %2431 = vmatprep.subr.mxu0 0.0
    %2432 = vmatpush1.xpose.msra.mxu0 0.0
    %2433 = vmatprep.subr.mxu0 0.0
    %2434 = vmatpush1.xpose.msra.mxu0 0.0
    %2435 = vmatprep.subr.mxu0 0.0
    %2436 = vmatpush1.xpose.msra.mxu0 0.0
    %2437 = vmatprep.subr.mxu0 0.0
    %2438 = vmatpush1.xpose.msra.mxu0 0.0
    %2439 = vmatprep.subr.mxu0 0.0
    %2440 = vmatpush1.xpose.msra.mxu0 0.0
    %2441 = vmatprep.subr.mxu0 0.0
    %2442 = vmatpush1.xpose.msra.mxu0 0.0
    %2443 = vmatprep.subr.mxu0 0.0
    %2444 = vmatpush1.xpose.msra.mxu0 0.0
    %2445 = vmatprep.mubr.f32.mxu0 0.0
    %v2446 = vand.u32 %v2378, 4294901760
    %v2447 = vsub.f32 %v2378, %v2446
    %v2448 = vand.u32 %v2447, 4294901760
    %v2449 = vsub.f32 %v2447, %v2448
    %v2450 = vand.u32 %v2449, 4294901760
    %2451 = vmatmul.mubr.f32.gmra.mrb[0].mxu0 %v2450
    %v2452 = vpop.f32.mrb[0].mxu0
    %v2453 = vadd.f32 0.0, %v2452
    %v2454 = vpop.f32.mrb[0].mxu0
    %2455 = vdwg.mxu0
    %2456 = vmatprep.subr.mxu0 0.0
    %v2457 = vand.u32 %v2378, 4294901760
    %v2458 = vsub.f32 %v2378, %v2457
    %v2459 = vand.u32 %v2458, 4294901760
    %v2460 = vsub.f32 %v2458, %v2459
    %v2461 = vand.u32 %v2460, 4294901760
    %2462 = vmatpush1.xpose.msra.mxu0 %v2461
    %2463 = vmatprep.subr.mxu0 0.0
    %2464 = vmatpush1.xpose.msra.mxu0 0.0
    %2465 = vmatprep.subr.mxu0 0.0
    %2466 = vmatpush1.xpose.msra.mxu0 0.0
    %2467 = vmatprep.subr.mxu0 0.0
    %2468 = vmatpush1.xpose.msra.mxu0 0.0
    %2469 = vmatprep.subr.mxu0 0.0
    %2470 = vmatpush1.xpose.msra.mxu0 0.0
    %2471 = vmatprep.subr.mxu0 0.0
    %2472 = vmatpush1.xpose.msra.mxu0 0.0
    %2473 = vmatprep.subr.mxu0 0.0
    %2474 = vmatpush1.xpose.msra.mxu0 0.0
    %2475 = vmatprep.subr.mxu0 0.0
    %2476 = vmatpush1.xpose.msra.mxu0 0.0
    %2477 = vmatprep.subr.mxu0 0.0
    %2478 = vmatpush1.xpose.msra.mxu0 0.0
    %2479 = vmatprep.subr.mxu0 0.0
    %2480 = vmatpush1.xpose.msra.mxu0 0.0
    %2481 = vmatprep.subr.mxu0 0.0
    %2482 = vmatpush1.xpose.msra.mxu0 0.0
    %2483 = vmatprep.subr.mxu0 0.0
    %2484 = vmatpush1.xpose.msra.mxu0 0.0
    %2485 = vmatprep.subr.mxu0 0.0
    %2486 = vmatpush1.xpose.msra.mxu0 0.0
    %2487 = vmatprep.subr.mxu0 0.0
    %2488 = vmatpush1.xpose.msra.mxu0 0.0
    %2489 = vmatprep.subr.mxu0 0.0
    %2490 = vmatpush1.xpose.msra.mxu0 0.0
    %2491 = vmatprep.subr.mxu0 0.0
    %2492 = vmatpush1.xpose.msra.mxu0 0.0
    %2493 = vmatprep.subr.mxu0 0.0
    %2494 = vmatpush1.xpose.msra.mxu0 0.0
    %2495 = vmatprep.subr.mxu0 0.0
    %2496 = vmatpush1.xpose.msra.mxu0 0.0
    %2497 = vmatprep.subr.mxu0 0.0
    %2498 = vmatpush1.xpose.msra.mxu0 0.0
    %2499 = vmatprep.subr.mxu0 0.0
    %2500 = vmatpush1.xpose.msra.mxu0 0.0
    %2501 = vmatprep.subr.mxu0 0.0
    %2502 = vmatpush1.xpose.msra.mxu0 0.0
    %2503 = vmatprep.subr.mxu0 0.0
    %2504 = vmatpush1.xpose.msra.mxu0 0.0
    %2505 = vmatprep.subr.mxu0 0.0
    %2506 = vmatpush1.xpose.msra.mxu0 0.0
    %2507 = vmatprep.subr.mxu0 0.0
    %2508 = vmatpush1.xpose.msra.mxu0 0.0
    %2509 = vmatprep.subr.mxu0 0.0
    %2510 = vmatpush1.xpose.msra.mxu0 0.0
    %2511 = vmatprep.subr.mxu0 0.0
    %2512 = vmatpush1.xpose.msra.mxu0 0.0
    %2513 = vmatprep.subr.mxu0 0.0
    %2514 = vmatpush1.xpose.msra.mxu0 0.0
    %2515 = vmatprep.subr.mxu0 0.0
    %2516 = vmatpush1.xpose.msra.mxu0 0.0
    %2517 = vmatprep.subr.mxu0 0.0
    %2518 = vmatpush1.xpose.msra.mxu0 0.0
    %2519 = vmatprep.subr.mxu0 0.0
    %2520 = vmatpush1.xpose.msra.mxu0 0.0
    %2521 = vmatprep.subr.mxu0 0.0
    %2522 = vmatpush1.xpose.msra.mxu0 0.0
    %2523 = vmatprep.subr.mxu0 0.0
    %2524 = vmatpush1.xpose.msra.mxu0 0.0
    %2525 = vmatprep.mubr.f32.mxu0 0.0
    %v2526 = vand.u32 %v2378, 4294901760
    %2527 = vmatmul.mubr.f32.gmra.mrb[0].mxu0 %v2526
    %v2528 = vpop.f32.mrb[0].mxu0
    %v2529 = vadd.f32 %v2453, %v2528
    %v2530 = vpop.f32.mrb[0].mxu0
    %2531 = vdwg.mxu0
    %2532 = vmatprep.subr.mxu0 0.0
    %v2533 = vand.u32 %v2378, 4294901760
    %v2534 = vsub.f32 %v2378, %v2533
    %2535 = vmatpush1.xpose.msra.mxu0 %v2534
    %2536 = vmatprep.subr.mxu0 0.0
    %2537 = vmatpush1.xpose.msra.mxu0 0.0
    %2538 = vmatprep.subr.mxu0 0.0
    %2539 = vmatpush1.xpose.msra.mxu0 0.0
    %2540 = vmatprep.subr.mxu0 0.0
    %2541 = vmatpush1.xpose.msra.mxu0 0.0
    %2542 = vmatprep.subr.mxu0 0.0
    %2543 = vmatpush1.xpose.msra.mxu0 0.0
    %2544 = vmatprep.subr.mxu0 0.0
    %2545 = vmatpush1.xpose.msra.mxu0 0.0
    %2546 = vmatprep.subr.mxu0 0.0
    %2547 = vmatpush1.xpose.msra.mxu0 0.0
    %2548 = vmatprep.subr.mxu0 0.0
    %2549 = vmatpush1.xpose.msra.mxu0 0.0
    %2550 = vmatprep.subr.mxu0 0.0
    %2551 = vmatpush1.xpose.msra.mxu0 0.0
    %2552 = vmatprep.subr.mxu0 0.0
    %2553 = vmatpush1.xpose.msra.mxu0 0.0
    %2554 = vmatprep.subr.mxu0 0.0
    %2555 = vmatpush1.xpose.msra.mxu0 0.0
    %2556 = vmatprep.subr.mxu0 0.0
    %2557 = vmatpush1.xpose.msra.mxu0 0.0
    %2558 = vmatprep.subr.mxu0 0.0
    %2559 = vmatpush1.xpose.msra.mxu0 0.0
    %2560 = vmatprep.subr.mxu0 0.0
    %2561 = vmatpush1.xpose.msra.mxu0 0.0
    %2562 = vmatprep.subr.mxu0 0.0
    %2563 = vmatpush1.xpose.msra.mxu0 0.0
    %2564 = vmatprep.subr.mxu0 0.0
    %2565 = vmatpush1.xpose.msra.mxu0 0.0
    %2566 = vmatprep.subr.mxu0 0.0
    %2567 = vmatpush1.xpose.msra.mxu0 0.0
    %2568 = vmatprep.subr.mxu0 0.0
    %2569 = vmatpush1.xpose.msra.mxu0 0.0
    %2570 = vmatprep.subr.mxu0 0.0
    %2571 = vmatpush1.xpose.msra.mxu0 0.0
    %2572 = vmatprep.subr.mxu0 0.0
    %2573 = vmatpush1.xpose.msra.mxu0 0.0
    %2574 = vmatprep.subr.mxu0 0.0
    %2575 = vmatpush1.xpose.msra.mxu0 0.0
    %2576 = vmatprep.subr.mxu0 0.0
    %2577 = vmatpush1.xpose.msra.mxu0 0.0
    %2578 = vmatprep.subr.mxu0 0.0
    %2579 = vmatpush1.xpose.msra.mxu0 0.0
    %2580 = vmatprep.subr.mxu0 0.0
    %2581 = vmatpush1.xpose.msra.mxu0 0.0
    %2582 = vmatprep.subr.mxu0 0.0
    %2583 = vmatpush1.xpose.msra.mxu0 0.0
    %2584 = vmatprep.subr.mxu0 0.0
    %2585 = vmatpush1.xpose.msra.mxu0 0.0
    %2586 = vmatprep.subr.mxu0 0.0
    %2587 = vmatpush1.xpose.msra.mxu0 0.0
    %2588 = vmatprep.subr.mxu0 0.0
    %2589 = vmatpush1.xpose.msra.mxu0 0.0
    %2590 = vmatprep.subr.mxu0 0.0
    %2591 = vmatpush1.xpose.msra.mxu0 0.0
    %2592 = vmatprep.subr.mxu0 0.0
    %2593 = vmatpush1.xpose.msra.mxu0 0.0
    %2594 = vmatprep.subr.mxu0 0.0
    %2595 = vmatpush1.xpose.msra.mxu0 0.0
    %2596 = vmatprep.subr.mxu0 0.0
    %2597 = vmatpush1.xpose.msra.mxu0 0.0
    %2598 = vmatprep.mubr.f32.mxu0 0.0
    %v2599 = vand.u32 %v2378, 4294901760
    %v2600 = vsub.f32 %v2378, %v2599
    %2601 = vmatmul.mubr.f32.gmra.mrb[0].mxu0 %v2600
    %v2602 = vpop.f32.mrb[0].mxu0
    %v2603 = vadd.f32 %v2529, %v2602
    %v2604 = vpop.f32.mrb[0].mxu0
    %2605 = vdwg.mxu0
    %2606 = vmatprep.subr.mxu0 0.0
    %v2607 = vand.u32 %v2378, 4294901760
    %2608 = vmatpush1.xpose.msra.mxu0 %v2607
    %2609 = vmatprep.subr.mxu0 0.0
    %2610 = vmatpush1.xpose.msra.mxu0 0.0
    %2611 = vmatprep.subr.mxu0 0.0
    %2612 = vmatpush1.xpose.msra.mxu0 0.0
    %2613 = vmatprep.subr.mxu0 0.0
    %2614 = vmatpush1.xpose.msra.mxu0 0.0
    %2615 = vmatprep.subr.mxu0 0.0
    %2616 = vmatpush1.xpose.msra.mxu0 0.0
    %2617 = vmatprep.subr.mxu0 0.0
    %2618 = vmatpush1.xpose.msra.mxu0 0.0
    %2619 = vmatprep.subr.mxu0 0.0
    %2620 = vmatpush1.xpose.msra.mxu0 0.0
    %2621 = vmatprep.subr.mxu0 0.0
    %2622 = vmatpush1.xpose.msra.mxu0 0.0
    %2623 = vmatprep.subr.mxu0 0.0
    %2624 = vmatpush1.xpose.msra.mxu0 0.0
    %2625 = vmatprep.subr.mxu0 0.0
    %2626 = vmatpush1.xpose.msra.mxu0 0.0
    %2627 = vmatprep.subr.mxu0 0.0
    %2628 = vmatpush1.xpose.msra.mxu0 0.0
    %2629 = vmatprep.subr.mxu0 0.0
    %2630 = vmatpush1.xpose.msra.mxu0 0.0
    %2631 = vmatprep.subr.mxu0 0.0
    %2632 = vmatpush1.xpose.msra.mxu0 0.0
    %2633 = vmatprep.subr.mxu0 0.0
    %2634 = vmatpush1.xpose.msra.mxu0 0.0
    %2635 = vmatprep.subr.mxu0 0.0
    %2636 = vmatpush1.xpose.msra.mxu0 0.0
    %2637 = vmatprep.subr.mxu0 0.0
    %2638 = vmatpush1.xpose.msra.mxu0 0.0
    %2639 = vmatprep.subr.mxu0 0.0
    %2640 = vmatpush1.xpose.msra.mxu0 0.0
    %2641 = vmatprep.subr.mxu0 0.0
    %2642 = vmatpush1.xpose.msra.mxu0 0.0
    %2643 = vmatprep.subr.mxu0 0.0
    %2644 = vmatpush1.xpose.msra.mxu0 0.0
    %2645 = vmatprep.subr.mxu0 0.0
    %2646 = vmatpush1.xpose.msra.mxu0 0.0
    %2647 = vmatprep.subr.mxu0 0.0
    %2648 = vmatpush1.xpose.msra.mxu0 0.0
    %2649 = vmatprep.subr.mxu0 0.0
    %2650 = vmatpush1.xpose.msra.mxu0 0.0
    %2651 = vmatprep.subr.mxu0 0.0
    %2652 = vmatpush1.xpose.msra.mxu0 0.0
    %2653 = vmatprep.subr.mxu0 0.0
    %2654 = vmatpush1.xpose.msra.mxu0 0.0
    %2655 = vmatprep.subr.mxu0 0.0
    %2656 = vmatpush1.xpose.msra.mxu0 0.0
    %2657 = vmatprep.subr.mxu0 0.0
    %2658 = vmatpush1.xpose.msra.mxu0 0.0
    %2659 = vmatprep.subr.mxu0 0.0
    %2660 = vmatpush1.xpose.msra.mxu0 0.0
    %2661 = vmatprep.subr.mxu0 0.0
    %2662 = vmatpush1.xpose.msra.mxu0 0.0
    %2663 = vmatprep.subr.mxu0 0.0
    %2664 = vmatpush1.xpose.msra.mxu0 0.0
    %2665 = vmatprep.subr.mxu0 0.0
    %2666 = vmatpush1.xpose.msra.mxu0 0.0
    %2667 = vmatprep.subr.mxu0 0.0
    %2668 = vmatpush1.xpose.msra.mxu0 0.0
    %2669 = vmatprep.subr.mxu0 0.0
    %2670 = vmatpush1.xpose.msra.mxu0 0.0
    %2671 = vmatprep.mubr.f32.mxu0 0.0
    %v2672 = vand.u32 %v2378, 4294901760
    %v2673 = vsub.f32 %v2378, %v2672
    %v2674 = vand.u32 %v2673, 4294901760
    %2675 = vmatmul.mubr.f32.gmra.mrb[0].mxu0 %v2674
    %v2676 = vpop.f32.mrb[0].mxu0
    %v2677 = vadd.f32 %v2603, %v2676
    %v2678 = vpop.f32.mrb[0].mxu0
    %2679 = vdwg.mxu0
    %2680 = vmatprep.subr.mxu0 0.0
    %v2681 = vand.u32 %v2378, 4294901760
    %v2682 = vsub.f32 %v2378, %v2681
    %v2683 = vand.u32 %v2682, 4294901760
    %2684 = vmatpush1.xpose.msra.mxu0 %v2683
    %2685 = vmatprep.subr.mxu0 0.0
    %2686 = vmatpush1.xpose.msra.mxu0 0.0
    %2687 = vmatprep.subr.mxu0 0.0
    %2688 = vmatpush1.xpose.msra.mxu0 0.0
    %2689 = vmatprep.subr.mxu0 0.0
    %2690 = vmatpush1.xpose.msra.mxu0 0.0
    %2691 = vmatprep.subr.mxu0 0.0
    %2692 = vmatpush1.xpose.msra.mxu0 0.0
    %2693 = vmatprep.subr.mxu0 0.0
    %2694 = vmatpush1.xpose.msra.mxu0 0.0
    %2695 = vmatprep.subr.mxu0 0.0
    %2696 = vmatpush1.xpose.msra.mxu0 0.0
    %2697 = vmatprep.subr.mxu0 0.0
    %2698 = vmatpush1.xpose.msra.mxu0 0.0
    %2699 = vmatprep.subr.mxu0 0.0
    %2700 = vmatpush1.xpose.msra.mxu0 0.0
    %2701 = vmatprep.subr.mxu0 0.0
    %2702 = vmatpush1.xpose.msra.mxu0 0.0
    %2703 = vmatprep.subr.mxu0 0.0
    %2704 = vmatpush1.xpose.msra.mxu0 0.0
    %2705 = vmatprep.subr.mxu0 0.0
    %2706 = vmatpush1.xpose.msra.mxu0 0.0
    %2707 = vmatprep.subr.mxu0 0.0
    %2708 = vmatpush1.xpose.msra.mxu0 0.0
    %2709 = vmatprep.subr.mxu0 0.0
    %2710 = vmatpush1.xpose.msra.mxu0 0.0
    %2711 = vmatprep.subr.mxu0 0.0
    %2712 = vmatpush1.xpose.msra.mxu0 0.0
    %2713 = vmatprep.subr.mxu0 0.0
    %2714 = vmatpush1.xpose.msra.mxu0 0.0
    %2715 = vmatprep.subr.mxu0 0.0
    %2716 = vmatpush1.xpose.msra.mxu0 0.0
    %2717 = vmatprep.subr.mxu0 0.0
    %2718 = vmatpush1.xpose.msra.mxu0 0.0
    %2719 = vmatprep.subr.mxu0 0.0
    %2720 = vmatpush1.xpose.msra.mxu0 0.0
    %2721 = vmatprep.subr.mxu0 0.0
    %2722 = vmatpush1.xpose.msra.mxu0 0.0
    %2723 = vmatprep.subr.mxu0 0.0
    %2724 = vmatpush1.xpose.msra.mxu0 0.0
    %2725 = vmatprep.subr.mxu0 0.0
    %2726 = vmatpush1.xpose.msra.mxu0 0.0
    %2727 = vmatprep.subr.mxu0 0.0
    %2728 = vmatpush1.xpose.msra.mxu0 0.0
    %2729 = vmatprep.subr.mxu0 0.0
    %2730 = vmatpush1.xpose.msra.mxu0 0.0
    %2731 = vmatprep.subr.mxu0 0.0
    %2732 = vmatpush1.xpose.msra.mxu0 0.0
    %2733 = vmatprep.subr.mxu0 0.0
    %2734 = vmatpush1.xpose.msra.mxu0 0.0
    %2735 = vmatprep.subr.mxu0 0.0
    %2736 = vmatpush1.xpose.msra.mxu0 0.0
    %2737 = vmatprep.subr.mxu0 0.0
    %2738 = vmatpush1.xpose.msra.mxu0 0.0
    %2739 = vmatprep.subr.mxu0 0.0
    %2740 = vmatpush1.xpose.msra.mxu0 0.0
    %2741 = vmatprep.subr.mxu0 0.0
    %2742 = vmatpush1.xpose.msra.mxu0 0.0
    %2743 = vmatprep.subr.mxu0 0.0
    %2744 = vmatpush1.xpose.msra.mxu0 0.0
    %2745 = vmatprep.subr.mxu0 0.0
    %2746 = vmatpush1.xpose.msra.mxu0 0.0
    %2747 = vmatprep.mubr.f32.mxu0 0.0
    %v2748 = vand.u32 %v2378, 4294901760
    %2749 = vmatmul.mubr.f32.gmra.mrb[0].mxu0 %v2748
    %v2750 = vpop.f32.mrb[0].mxu0
    %v2751 = vadd.f32 %v2677, %v2750
    %v2752 = vpop.f32.mrb[0].mxu0
    %2753 = vdwg.mxu0
    %2754 = vmatprep.subr.mxu0 0.0
    %v2755 = vand.u32 %v2378, 4294901760
    %2756 = vmatpush1.xpose.msra.mxu0 %v2755
    %2757 = vmatprep.subr.mxu0 0.0
    %2758 = vmatpush1.xpose.msra.mxu0 0.0
    %2759 = vmatprep.subr.mxu0 0.0
    %2760 = vmatpush1.xpose.msra.mxu0 0.0
    %2761 = vmatprep.subr.mxu0 0.0
    %2762 = vmatpush1.xpose.msra.mxu0 0.0
    %2763 = vmatprep.subr.mxu0 0.0
    %2764 = vmatpush1.xpose.msra.mxu0 0.0
    %2765 = vmatprep.subr.mxu0 0.0
    %2766 = vmatpush1.xpose.msra.mxu0 0.0
    %2767 = vmatprep.subr.mxu0 0.0
    %2768 = vmatpush1.xpose.msra.mxu0 0.0
    %2769 = vmatprep.subr.mxu0 0.0
    %2770 = vmatpush1.xpose.msra.mxu0 0.0
    %2771 = vmatprep.subr.mxu0 0.0
    %2772 = vmatpush1.xpose.msra.mxu0 0.0
    %2773 = vmatprep.subr.mxu0 0.0
    %2774 = vmatpush1.xpose.msra.mxu0 0.0
    %2775 = vmatprep.subr.mxu0 0.0
    %2776 = vmatpush1.xpose.msra.mxu0 0.0
    %2777 = vmatprep.subr.mxu0 0.0
    %2778 = vmatpush1.xpose.msra.mxu0 0.0
    %2779 = vmatprep.subr.mxu0 0.0
    %2780 = vmatpush1.xpose.msra.mxu0 0.0
    %2781 = vmatprep.subr.mxu0 0.0
    %2782 = vmatpush1.xpose.msra.mxu0 0.0
    %2783 = vmatprep.subr.mxu0 0.0
    %2784 = vmatpush1.xpose.msra.mxu0 0.0
    %2785 = vmatprep.subr.mxu0 0.0
    %2786 = vmatpush1.xpose.msra.mxu0 0.0
    %2787 = vmatprep.subr.mxu0 0.0
    %2788 = vmatpush1.xpose.msra.mxu0 0.0
    %2789 = vmatprep.subr.mxu0 0.0
    %2790 = vmatpush1.xpose.msra.mxu0 0.0
    %2791 = vmatprep.subr.mxu0 0.0
    %2792 = vmatpush1.xpose.msra.mxu0 0.0
    %2793 = vmatprep.subr.mxu0 0.0
    %2794 = vmatpush1.xpose.msra.mxu0 0.0
    %2795 = vmatprep.subr.mxu0 0.0
    %2796 = vmatpush1.xpose.msra.mxu0 0.0
    %2797 = vmatprep.subr.mxu0 0.0
    %2798 = vmatpush1.xpose.msra.mxu0 0.0
    %2799 = vmatprep.subr.mxu0 0.0
    %2800 = vmatpush1.xpose.msra.mxu0 0.0
    %2801 = vmatprep.subr.mxu0 0.0
    %2802 = vmatpush1.xpose.msra.mxu0 0.0
    %2803 = vmatprep.subr.mxu0 0.0
    %2804 = vmatpush1.xpose.msra.mxu0 0.0
    %2805 = vmatprep.subr.mxu0 0.0
    %2806 = vmatpush1.xpose.msra.mxu0 0.0
    %2807 = vmatprep.subr.mxu0 0.0
    %2808 = vmatpush1.xpose.msra.mxu0 0.0
    %2809 = vmatprep.subr.mxu0 0.0
    %2810 = vmatpush1.xpose.msra.mxu0 0.0
    %2811 = vmatprep.subr.mxu0 0.0
    %2812 = vmatpush1.xpose.msra.mxu0 0.0
    %2813 = vmatprep.subr.mxu0 0.0
    %2814 = vmatpush1.xpose.msra.mxu0 0.0
    %2815 = vmatprep.subr.mxu0 0.0
    %2816 = vmatpush1.xpose.msra.mxu0 0.0
    %2817 = vmatprep.subr.mxu0 0.0
    %2818 = vmatpush1.xpose.msra.mxu0 0.0
    %2819 = vmatprep.mubr.f32.mxu0 0.0
    %v2820 = vand.u32 %v2378, 4294901760
    %2821 = vmatmul.mubr.f32.gmra.mrb[0].mxu0 %v2820
    %v2822 = vpop.f32.mrb[0].mxu0
    %v2823 = vadd.f32 %v2751, %v2822
    %v2824 = vpop.f32.mrb[0].mxu0
    %2825 = vdwg.mxu0
    %v2827 = vsel %vm31, %v2373, 0
    %2829 = vmatprep.subr.mxu0 0.0
    %v2830 = vand.u32 %v2827, 4294901760
    %2831 = vmatpush1.xpose.msra.mxu0 %v2830
    %2832 = vmatprep.subr.mxu0 0.0
    %2833 = vmatpush1.xpose.msra.mxu0 0.0
    %2834 = vmatprep.subr.mxu0 0.0
    %2835 = vmatpush1.xpose.msra.mxu0 0.0
    %2836 = vmatprep.subr.mxu0 0.0
    %2837 = vmatpush1.xpose.msra.mxu0 0.0
    %2838 = vmatprep.subr.mxu0 0.0
    %2839 = vmatpush1.xpose.msra.mxu0 0.0
    %2840 = vmatprep.subr.mxu0 0.0
    %2841 = vmatpush1.xpose.msra.mxu0 0.0
    %2842 = vmatprep.subr.mxu0 0.0
    %2843 = vmatpush1.xpose.msra.mxu0 0.0
    %2844 = vmatprep.subr.mxu0 0.0
    %2845 = vmatpush1.xpose.msra.mxu0 0.0
    %2846 = vmatprep.subr.mxu0 0.0
    %2847 = vmatpush1.xpose.msra.mxu0 0.0
    %2848 = vmatprep.subr.mxu0 0.0
    %2849 = vmatpush1.xpose.msra.mxu0 0.0
    %2850 = vmatprep.subr.mxu0 0.0
    %2851 = vmatpush1.xpose.msra.mxu0 0.0
    %2852 = vmatprep.subr.mxu0 0.0
    %2853 = vmatpush1.xpose.msra.mxu0 0.0
    %2854 = vmatprep.subr.mxu0 0.0
    %2855 = vmatpush1.xpose.msra.mxu0 0.0
    %2856 = vmatprep.subr.mxu0 0.0
    %2857 = vmatpush1.xpose.msra.mxu0 0.0
    %2858 = vmatprep.subr.mxu0 0.0
    %2859 = vmatpush1.xpose.msra.mxu0 0.0
    %2860 = vmatprep.subr.mxu0 0.0
    %2861 = vmatpush1.xpose.msra.mxu0 0.0
    %2862 = vmatprep.subr.mxu0 0.0
    %2863 = vmatpush1.xpose.msra.mxu0 0.0
    %2864 = vmatprep.subr.mxu0 0.0
    %2865 = vmatpush1.xpose.msra.mxu0 0.0
    %2866 = vmatprep.subr.mxu0 0.0
    %2867 = vmatpush1.xpose.msra.mxu0 0.0
    %2868 = vmatprep.subr.mxu0 0.0
    %2869 = vmatpush1.xpose.msra.mxu0 0.0
    %2870 = vmatprep.subr.mxu0 0.0
    %2871 = vmatpush1.xpose.msra.mxu0 0.0
    %2872 = vmatprep.subr.mxu0 0.0
    %2873 = vmatpush1.xpose.msra.mxu0 0.0
    %2874 = vmatprep.subr.mxu0 0.0
    %2875 = vmatpush1.xpose.msra.mxu0 0.0
    %2876 = vmatprep.subr.mxu0 0.0
    %2877 = vmatpush1.xpose.msra.mxu0 0.0
    %2878 = vmatprep.subr.mxu0 0.0
    %2879 = vmatpush1.xpose.msra.mxu0 0.0
    %2880 = vmatprep.subr.mxu0 0.0
    %2881 = vmatpush1.xpose.msra.mxu0 0.0
    %2882 = vmatprep.subr.mxu0 0.0
    %2883 = vmatpush1.xpose.msra.mxu0 0.0
    %2884 = vmatprep.subr.mxu0 0.0
    %2885 = vmatpush1.xpose.msra.mxu0 0.0
    %2886 = vmatprep.subr.mxu0 0.0
    %2887 = vmatpush1.xpose.msra.mxu0 0.0
    %2888 = vmatprep.subr.mxu0 0.0
    %2889 = vmatpush1.xpose.msra.mxu0 0.0
    %2890 = vmatprep.subr.mxu0 0.0
    %2891 = vmatpush1.xpose.msra.mxu0 0.0
    %2892 = vmatprep.subr.mxu0 0.0
    %2893 = vmatpush1.xpose.msra.mxu0 0.0
    %2894 = vmatprep.mubr.f32.mxu0 0.0
    %v2895 = vand.u32 %v2827, 4294901760
    %v2896 = vsub.f32 %v2827, %v2895
    %v2897 = vand.u32 %v2896, 4294901760
    %v2898 = vsub.f32 %v2896, %v2897
    %v2899 = vand.u32 %v2898, 4294901760
    %2900 = vmatmul.mubr.f32.gmra.mrb[0].mxu0 %v2899
    %v2901 = vpop.f32.mrb[0].mxu0
    %v2902 = vadd.f32 0.0, %v2901
    %v2903 = vpop.f32.mrb[0].mxu0
    %2904 = vdwg.mxu0
    %2905 = vmatprep.subr.mxu0 0.0
    %v2906 = vand.u32 %v2827, 4294901760
    %v2907 = vsub.f32 %v2827, %v2906
    %v2908 = vand.u32 %v2907, 4294901760
    %v2909 = vsub.f32 %v2907, %v2908
    %v2910 = vand.u32 %v2909, 4294901760
    %2911 = vmatpush1.xpose.msra.mxu0 %v2910
    %2912 = vmatprep.subr.mxu0 0.0
    %2913 = vmatpush1.xpose.msra.mxu0 0.0
    %2914 = vmatprep.subr.mxu0 0.0
    %2915 = vmatpush1.xpose.msra.mxu0 0.0
    %2916 = vmatprep.subr.mxu0 0.0
    %2917 = vmatpush1.xpose.msra.mxu0 0.0
    %2918 = vmatprep.subr.mxu0 0.0
    %2919 = vmatpush1.xpose.msra.mxu0 0.0
    %2920 = vmatprep.subr.mxu0 0.0
    %2921 = vmatpush1.xpose.msra.mxu0 0.0
    %2922 = vmatprep.subr.mxu0 0.0
    %2923 = vmatpush1.xpose.msra.mxu0 0.0
    %2924 = vmatprep.subr.mxu0 0.0
    %2925 = vmatpush1.xpose.msra.mxu0 0.0
    %2926 = vmatprep.subr.mxu0 0.0
    %2927 = vmatpush1.xpose.msra.mxu0 0.0
    %2928 = vmatprep.subr.mxu0 0.0
    %2929 = vmatpush1.xpose.msra.mxu0 0.0
    %2930 = vmatprep.subr.mxu0 0.0
    %2931 = vmatpush1.xpose.msra.mxu0 0.0
    %2932 = vmatprep.subr.mxu0 0.0
    %2933 = vmatpush1.xpose.msra.mxu0 0.0
    %2934 = vmatprep.subr.mxu0 0.0
    %2935 = vmatpush1.xpose.msra.mxu0 0.0
    %2936 = vmatprep.subr.mxu0 0.0
    %2937 = vmatpush1.xpose.msra.mxu0 0.0
    %2938 = vmatprep.subr.mxu0 0.0
    %2939 = vmatpush1.xpose.msra.mxu0 0.0
    %2940 = vmatprep.subr.mxu0 0.0
    %2941 = vmatpush1.xpose.msra.mxu0 0.0
    %2942 = vmatprep.subr.mxu0 0.0
    %2943 = vmatpush1.xpose.msra.mxu0 0.0
    %2944 = vmatprep.subr.mxu0 0.0
    %2945 = vmatpush1.xpose.msra.mxu0 0.0
    %2946 = vmatprep.subr.mxu0 0.0
    %2947 = vmatpush1.xpose.msra.mxu0 0.0
    %2948 = vmatprep.subr.mxu0 0.0
    %2949 = vmatpush1.xpose.msra.mxu0 0.0
    %2950 = vmatprep.subr.mxu0 0.0
    %2951 = vmatpush1.xpose.msra.mxu0 0.0
    %2952 = vmatprep.subr.mxu0 0.0
    %2953 = vmatpush1.xpose.msra.mxu0 0.0
    %2954 = vmatprep.subr.mxu0 0.0
    %2955 = vmatpush1.xpose.msra.mxu0 0.0
    %2956 = vmatprep.subr.mxu0 0.0
    %2957 = vmatpush1.xpose.msra.mxu0 0.0
    %2958 = vmatprep.subr.mxu0 0.0
    %2959 = vmatpush1.xpose.msra.mxu0 0.0
    %2960 = vmatprep.subr.mxu0 0.0
    %2961 = vmatpush1.xpose.msra.mxu0 0.0
    %2962 = vmatprep.subr.mxu0 0.0
    %2963 = vmatpush1.xpose.msra.mxu0 0.0
    %2964 = vmatprep.subr.mxu0 0.0
    %2965 = vmatpush1.xpose.msra.mxu0 0.0
    %2966 = vmatprep.subr.mxu0 0.0
    %2967 = vmatpush1.xpose.msra.mxu0 0.0
    %2968 = vmatprep.subr.mxu0 0.0
    %2969 = vmatpush1.xpose.msra.mxu0 0.0
    %2970 = vmatprep.subr.mxu0 0.0
    %2971 = vmatpush1.xpose.msra.mxu0 0.0
    %2972 = vmatprep.subr.mxu0 0.0
    %2973 = vmatpush1.xpose.msra.mxu0 0.0
    %2974 = vmatprep.mubr.f32.mxu0 0.0
    %v2975 = vand.u32 %v2827, 4294901760
    %2976 = vmatmul.mubr.f32.gmra.mrb[0].mxu0 %v2975
    %v2977 = vpop.f32.mrb[0].mxu0
    %v2978 = vadd.f32 %v2902, %v2977
    %v2979 = vpop.f32.mrb[0].mxu0
    %2980 = vdwg.mxu0
    %2981 = vmatprep.subr.mxu0 0.0
    %v2982 = vand.u32 %v2827, 4294901760
    %v2983 = vsub.f32 %v2827, %v2982
    %2984 = vmatpush1.xpose.msra.mxu0 %v2983
    %2985 = vmatprep.subr.mxu0 0.0
    %2986 = vmatpush1.xpose.msra.mxu0 0.0
    %2987 = vmatprep.subr.mxu0 0.0
    %2988 = vmatpush1.xpose.msra.mxu0 0.0
    %2989 = vmatprep.subr.mxu0 0.0
    %2990 = vmatpush1.xpose.msra.mxu0 0.0
    %2991 = vmatprep.subr.mxu0 0.0
    %2992 = vmatpush1.xpose.msra.mxu0 0.0
    %2993 = vmatprep.subr.mxu0 0.0
    %2994 = vmatpush1.xpose.msra.mxu0 0.0
    %2995 = vmatprep.subr.mxu0 0.0
    %2996 = vmatpush1.xpose.msra.mxu0 0.0
    %2997 = vmatprep.subr.mxu0 0.0
    %2998 = vmatpush1.xpose.msra.mxu0 0.0
    %2999 = vmatprep.subr.mxu0 0.0
    %3000 = vmatpush1.xpose.msra.mxu0 0.0
    %3001 = vmatprep.subr.mxu0 0.0
    %3002 = vmatpush1.xpose.msra.mxu0 0.0
    %3003 = vmatprep.subr.mxu0 0.0
    %3004 = vmatpush1.xpose.msra.mxu0 0.0
    %3005 = vmatprep.subr.mxu0 0.0
    %3006 = vmatpush1.xpose.msra.mxu0 0.0
    %3007 = vmatprep.subr.mxu0 0.0
    %3008 = vmatpush1.xpose.msra.mxu0 0.0
    %3009 = vmatprep.subr.mxu0 0.0
    %3010 = vmatpush1.xpose.msra.mxu0 0.0
    %3011 = vmatprep.subr.mxu0 0.0
    %3012 = vmatpush1.xpose.msra.mxu0 0.0
    %3013 = vmatprep.subr.mxu0 0.0
    %3014 = vmatpush1.xpose.msra.mxu0 0.0
    %3015 = vmatprep.subr.mxu0 0.0
    %3016 = vmatpush1.xpose.msra.mxu0 0.0
    %3017 = vmatprep.subr.mxu0 0.0
    %3018 = vmatpush1.xpose.msra.mxu0 0.0
    %3019 = vmatprep.subr.mxu0 0.0
    %3020 = vmatpush1.xpose.msra.mxu0 0.0
    %3021 = vmatprep.subr.mxu0 0.0
    %3022 = vmatpush1.xpose.msra.mxu0 0.0
    %3023 = vmatprep.subr.mxu0 0.0
    %3024 = vmatpush1.xpose.msra.mxu0 0.0
    %3025 = vmatprep.subr.mxu0 0.0
    %3026 = vmatpush1.xpose.msra.mxu0 0.0
    %3027 = vmatprep.subr.mxu0 0.0
    %3028 = vmatpush1.xpose.msra.mxu0 0.0
    %3029 = vmatprep.subr.mxu0 0.0
    %3030 = vmatpush1.xpose.msra.mxu0 0.0
    %3031 = vmatprep.subr.mxu0 0.0
    %3032 = vmatpush1.xpose.msra.mxu0 0.0
    %3033 = vmatprep.subr.mxu0 0.0
    %3034 = vmatpush1.xpose.msra.mxu0 0.0
    %3035 = vmatprep.subr.mxu0 0.0
    %3036 = vmatpush1.xpose.msra.mxu0 0.0
    %3037 = vmatprep.subr.mxu0 0.0
    %3038 = vmatpush1.xpose.msra.mxu0 0.0
    %3039 = vmatprep.subr.mxu0 0.0
    %3040 = vmatpush1.xpose.msra.mxu0 0.0
    %3041 = vmatprep.subr.mxu0 0.0
    %3042 = vmatpush1.xpose.msra.mxu0 0.0
    %3043 = vmatprep.subr.mxu0 0.0
    %3044 = vmatpush1.xpose.msra.mxu0 0.0
    %3045 = vmatprep.subr.mxu0 0.0
    %3046 = vmatpush1.xpose.msra.mxu0 0.0
    %3047 = vmatprep.mubr.f32.mxu0 0.0
    %v3048 = vand.u32 %v2827, 4294901760
    %v3049 = vsub.f32 %v2827, %v3048
    %3050 = vmatmul.mubr.f32.gmra.mrb[0].mxu0 %v3049
    %v3051 = vpop.f32.mrb[0].mxu0
    %v3052 = vadd.f32 %v2978, %v3051
    %v3053 = vpop.f32.mrb[0].mxu0
    %3054 = vdwg.mxu0
    %3055 = vmatprep.subr.mxu0 0.0
    %v3056 = vand.u32 %v2827, 4294901760
    %3057 = vmatpush1.xpose.msra.mxu0 %v3056
    %3058 = vmatprep.subr.mxu0 0.0
    %3059 = vmatpush1.xpose.msra.mxu0 0.0
    %3060 = vmatprep.subr.mxu0 0.0
    %3061 = vmatpush1.xpose.msra.mxu0 0.0
    %3062 = vmatprep.subr.mxu0 0.0
    %3063 = vmatpush1.xpose.msra.mxu0 0.0
    %3064 = vmatprep.subr.mxu0 0.0
    %3065 = vmatpush1.xpose.msra.mxu0 0.0
    %3066 = vmatprep.subr.mxu0 0.0
    %3067 = vmatpush1.xpose.msra.mxu0 0.0
    %3068 = vmatprep.subr.mxu0 0.0
    %3069 = vmatpush1.xpose.msra.mxu0 0.0
    %3070 = vmatprep.subr.mxu0 0.0
    %3071 = vmatpush1.xpose.msra.mxu0 0.0
    %3072 = vmatprep.subr.mxu0 0.0
    %3073 = vmatpush1.xpose.msra.mxu0 0.0
    %3074 = vmatprep.subr.mxu0 0.0
    %3075 = vmatpush1.xpose.msra.mxu0 0.0
    %3076 = vmatprep.subr.mxu0 0.0
    %3077 = vmatpush1.xpose.msra.mxu0 0.0
    %3078 = vmatprep.subr.mxu0 0.0
    %3079 = vmatpush1.xpose.msra.mxu0 0.0
    %3080 = vmatprep.subr.mxu0 0.0
    %3081 = vmatpush1.xpose.msra.mxu0 0.0
    %3082 = vmatprep.subr.mxu0 0.0
    %3083 = vmatpush1.xpose.msra.mxu0 0.0
    %3084 = vmatprep.subr.mxu0 0.0
    %3085 = vmatpush1.xpose.msra.mxu0 0.0
    %3086 = vmatprep.subr.mxu0 0.0
    %3087 = vmatpush1.xpose.msra.mxu0 0.0
    %3088 = vmatprep.subr.mxu0 0.0
    %3089 = vmatpush1.xpose.msra.mxu0 0.0
    %3090 = vmatprep.subr.mxu0 0.0
    %3091 = vmatpush1.xpose.msra.mxu0 0.0
    %3092 = vmatprep.subr.mxu0 0.0
    %3093 = vmatpush1.xpose.msra.mxu0 0.0
    %3094 = vmatprep.subr.mxu0 0.0
    %3095 = vmatpush1.xpose.msra.mxu0 0.0
    %3096 = vmatprep.subr.mxu0 0.0
    %3097 = vmatpush1.xpose.msra.mxu0 0.0
    %3098 = vmatprep.subr.mxu0 0.0
    %3099 = vmatpush1.xpose.msra.mxu0 0.0
    %3100 = vmatprep.subr.mxu0 0.0
    %3101 = vmatpush1.xpose.msra.mxu0 0.0
    %3102 = vmatprep.subr.mxu0 0.0
    %3103 = vmatpush1.xpose.msra.mxu0 0.0
    %3104 = vmatprep.subr.mxu0 0.0
    %3105 = vmatpush1.xpose.msra.mxu0 0.0
    %3106 = vmatprep.subr.mxu0 0.0
    %3107 = vmatpush1.xpose.msra.mxu0 0.0
    %3108 = vmatprep.subr.mxu0 0.0
    %3109 = vmatpush1.xpose.msra.mxu0 0.0
    %3110 = vmatprep.subr.mxu0 0.0
    %3111 = vmatpush1.xpose.msra.mxu0 0.0
    %3112 = vmatprep.subr.mxu0 0.0
    %3113 = vmatpush1.xpose.msra.mxu0 0.0
    %3114 = vmatprep.subr.mxu0 0.0
    %3115 = vmatpush1.xpose.msra.mxu0 0.0
    %3116 = vmatprep.subr.mxu0 0.0
    %3117 = vmatpush1.xpose.msra.mxu0 0.0
    %3118 = vmatprep.subr.mxu0 0.0
    %3119 = vmatpush1.xpose.msra.mxu0 0.0
    %3120 = vmatprep.mubr.f32.mxu0 0.0
    %v3121 = vand.u32 %v2827, 4294901760
    %v3122 = vsub.f32 %v2827, %v3121
    %v3123 = vand.u32 %v3122, 4294901760
    %3124 = vmatmul.mubr.f32.gmra.mrb[0].mxu0 %v3123
    %v3125 = vpop.f32.mrb[0].mxu0
    %v3126 = vadd.f32 %v3052, %v3125
    %v3127 = vpop.f32.mrb[0].mxu0
    %3128 = vdwg.mxu0
    %3129 = vmatprep.subr.mxu0 0.0
    %v3130 = vand.u32 %v2827, 4294901760
    %v3131 = vsub.f32 %v2827, %v3130
    %v3132 = vand.u32 %v3131, 4294901760
    %3133 = vmatpush1.xpose.msra.mxu0 %v3132
    %3134 = vmatprep.subr.mxu0 0.0
    %3135 = vmatpush1.xpose.msra.mxu0 0.0
    %3136 = vmatprep.subr.mxu0 0.0
    %3137 = vmatpush1.xpose.msra.mxu0 0.0
    %3138 = vmatprep.subr.mxu0 0.0
    %3139 = vmatpush1.xpose.msra.mxu0 0.0
    %3140 = vmatprep.subr.mxu0 0.0
    %3141 = vmatpush1.xpose.msra.mxu0 0.0
    %3142 = vmatprep.subr.mxu0 0.0
    %3143 = vmatpush1.xpose.msra.mxu0 0.0
    %3144 = vmatprep.subr.mxu0 0.0
    %3145 = vmatpush1.xpose.msra.mxu0 0.0
    %3146 = vmatprep.subr.mxu0 0.0
    %3147 = vmatpush1.xpose.msra.mxu0 0.0
    %3148 = vmatprep.subr.mxu0 0.0
    %3149 = vmatpush1.xpose.msra.mxu0 0.0
    %3150 = vmatprep.subr.mxu0 0.0
    %3151 = vmatpush1.xpose.msra.mxu0 0.0
    %3152 = vmatprep.subr.mxu0 0.0
    %3153 = vmatpush1.xpose.msra.mxu0 0.0
    %3154 = vmatprep.subr.mxu0 0.0
    %3155 = vmatpush1.xpose.msra.mxu0 0.0
    %3156 = vmatprep.subr.mxu0 0.0
    %3157 = vmatpush1.xpose.msra.mxu0 0.0
    %3158 = vmatprep.subr.mxu0 0.0
    %3159 = vmatpush1.xpose.msra.mxu0 0.0
    %3160 = vmatprep.subr.mxu0 0.0
    %3161 = vmatpush1.xpose.msra.mxu0 0.0
    %3162 = vmatprep.subr.mxu0 0.0
    %3163 = vmatpush1.xpose.msra.mxu0 0.0
    %3164 = vmatprep.subr.mxu0 0.0
    %3165 = vmatpush1.xpose.msra.mxu0 0.0
    %3166 = vmatprep.subr.mxu0 0.0
    %3167 = vmatpush1.xpose.msra.mxu0 0.0
    %3168 = vmatprep.subr.mxu0 0.0
    %3169 = vmatpush1.xpose.msra.mxu0 0.0
    %3170 = vmatprep.subr.mxu0 0.0
    %3171 = vmatpush1.xpose.msra.mxu0 0.0
    %3172 = vmatprep.subr.mxu0 0.0
    %3173 = vmatpush1.xpose.msra.mxu0 0.0
    %3174 = vmatprep.subr.mxu0 0.0
    %3175 = vmatpush1.xpose.msra.mxu0 0.0
    %3176 = vmatprep.subr.mxu0 0.0
    %3177 = vmatpush1.xpose.msra.mxu0 0.0
    %3178 = vmatprep.subr.mxu0 0.0
    %3179 = vmatpush1.xpose.msra.mxu0 0.0
    %3180 = vmatprep.subr.mxu0 0.0
    %3181 = vmatpush1.xpose.msra.mxu0 0.0
    %3182 = vmatprep.subr.mxu0 0.0
    %3183 = vmatpush1.xpose.msra.mxu0 0.0
    %3184 = vmatprep.subr.mxu0 0.0
    %3185 = vmatpush1.xpose.msra.mxu0 0.0
    %3186 = vmatprep.subr.mxu0 0.0
    %3187 = vmatpush1.xpose.msra.mxu0 0.0
    %3188 = vmatprep.subr.mxu0 0.0
    %3189 = vmatpush1.xpose.msra.mxu0 0.0
    %3190 = vmatprep.subr.mxu0 0.0
    %3191 = vmatpush1.xpose.msra.mxu0 0.0
    %3192 = vmatprep.subr.mxu0 0.0
    %3193 = vmatpush1.xpose.msra.mxu0 0.0
    %3194 = vmatprep.subr.mxu0 0.0
    %3195 = vmatpush1.xpose.msra.mxu0 0.0
    %3196 = vmatprep.mubr.f32.mxu0 0.0
    %v3197 = vand.u32 %v2827, 4294901760
    %3198 = vmatmul.mubr.f32.gmra.mrb[0].mxu0 %v3197
    %v3199 = vpop.f32.mrb[0].mxu0
    %v3200 = vadd.f32 %v3126, %v3199
    %v3201 = vpop.f32.mrb[0].mxu0
    %3202 = vdwg.mxu0
    %3203 = vmatprep.subr.mxu0 0.0
    %v3204 = vand.u32 %v2827, 4294901760
    %3205 = vmatpush1.xpose.msra.mxu0 %v3204
    %3206 = vmatprep.subr.mxu0 0.0
    %3207 = vmatpush1.xpose.msra.mxu0 0.0
    %3208 = vmatprep.subr.mxu0 0.0
    %3209 = vmatpush1.xpose.msra.mxu0 0.0
    %3210 = vmatprep.subr.mxu0 0.0
    %3211 = vmatpush1.xpose.msra.mxu0 0.0
    %3212 = vmatprep.subr.mxu0 0.0
    %3213 = vmatpush1.xpose.msra.mxu0 0.0
    %3214 = vmatprep.subr.mxu0 0.0
    %3215 = vmatpush1.xpose.msra.mxu0 0.0
    %3216 = vmatprep.subr.mxu0 0.0
    %3217 = vmatpush1.xpose.msra.mxu0 0.0
    %3218 = vmatprep.subr.mxu0 0.0
    %3219 = vmatpush1.xpose.msra.mxu0 0.0
    %3220 = vmatprep.subr.mxu0 0.0
    %3221 = vmatpush1.xpose.msra.mxu0 0.0
    %3222 = vmatprep.subr.mxu0 0.0
    %3223 = vmatpush1.xpose.msra.mxu0 0.0
    %3224 = vmatprep.subr.mxu0 0.0
    %3225 = vmatpush1.xpose.msra.mxu0 0.0
    %3226 = vmatprep.subr.mxu0 0.0
    %3227 = vmatpush1.xpose.msra.mxu0 0.0
    %3228 = vmatprep.subr.mxu0 0.0
    %3229 = vmatpush1.xpose.msra.mxu0 0.0
    %3230 = vmatprep.subr.mxu0 0.0
    %3231 = vmatpush1.xpose.msra.mxu0 0.0
    %3232 = vmatprep.subr.mxu0 0.0
    %3233 = vmatpush1.xpose.msra.mxu0 0.0
    %3234 = vmatprep.subr.mxu0 0.0
    %3235 = vmatpush1.xpose.msra.mxu0 0.0
    %3236 = vmatprep.subr.mxu0 0.0
    %3237 = vmatpush1.xpose.msra.mxu0 0.0
    %3238 = vmatprep.subr.mxu0 0.0
    %3239 = vmatpush1.xpose.msra.mxu0 0.0
    %3240 = vmatprep.subr.mxu0 0.0
    %3241 = vmatpush1.xpose.msra.mxu0 0.0
    %3242 = vmatprep.subr.mxu0 0.0
    %3243 = vmatpush1.xpose.msra.mxu0 0.0
    %3244 = vmatprep.subr.mxu0 0.0
    %3245 = vmatpush1.xpose.msra.mxu0 0.0
    %3246 = vmatprep.subr.mxu0 0.0
    %3247 = vmatpush1.xpose.msra.mxu0 0.0
    %3248 = vmatprep.subr.mxu0 0.0
    %3249 = vmatpush1.xpose.msra.mxu0 0.0
    %3250 = vmatprep.subr.mxu0 0.0
    %3251 = vmatpush1.xpose.msra.mxu0 0.0
    %3252 = vmatprep.subr.mxu0 0.0
    %3253 = vmatpush1.xpose.msra.mxu0 0.0
    %3254 = vmatprep.subr.mxu0 0.0
    %3255 = vmatpush1.xpose.msra.mxu0 0.0
    %3256 = vmatprep.subr.mxu0 0.0
    %3257 = vmatpush1.xpose.msra.mxu0 0.0
    %3258 = vmatprep.subr.mxu0 0.0
    %3259 = vmatpush1.xpose.msra.mxu0 0.0
    %3260 = vmatprep.subr.mxu0 0.0
    %3261 = vmatpush1.xpose.msra.mxu0 0.0
    %3262 = vmatprep.subr.mxu0 0.0
    %3263 = vmatpush1.xpose.msra.mxu0 0.0
    %3264 = vmatprep.subr.mxu0 0.0
    %3265 = vmatpush1.xpose.msra.mxu0 0.0
    %3266 = vmatprep.subr.mxu0 0.0
    %3267 = vmatpush1.xpose.msra.mxu0 0.0
    %3268 = vmatprep.mubr.f32.mxu0 0.0
    %v3269 = vand.u32 %v2827, 4294901760
    %3270 = vmatmul.mubr.f32.gmra.mrb[0].mxu0 %v3269
    %v3271 = vpop.f32.mrb[0].mxu0
    %v3272 = vadd.f32 %v3200, %v3271
    %v3273 = vpop.f32.mrb[0].mxu0
    %3274 = vdwg.mxu0
    %v3276 = vsel %vm31, %v2374, 0
    %3278 = vmatprep.subr.mxu0 0.0
    %v3279 = vand.u32 %v3276, 4294901760
    %3280 = vmatpush1.xpose.msra.mxu0 %v3279
    %3281 = vmatprep.subr.mxu0 0.0
    %3282 = vmatpush1.xpose.msra.mxu0 0.0
    %3283 = vmatprep.subr.mxu0 0.0
    %3284 = vmatpush1.xpose.msra.mxu0 0.0
    %3285 = vmatprep.subr.mxu0 0.0
    %3286 = vmatpush1.xpose.msra.mxu0 0.0
    %3287 = vmatprep.subr.mxu0 0.0
    %3288 = vmatpush1.xpose.msra.mxu0 0.0
    %3289 = vmatprep.subr.mxu0 0.0
    %3290 = vmatpush1.xpose.msra.mxu0 0.0
    %3291 = vmatprep.subr.mxu0 0.0
    %3292 = vmatpush1.xpose.msra.mxu0 0.0
    %3293 = vmatprep.subr.mxu0 0.0
    %3294 = vmatpush1.xpose.msra.mxu0 0.0
    %3295 = vmatprep.subr.mxu0 0.0
    %3296 = vmatpush1.xpose.msra.mxu0 0.0
    %3297 = vmatprep.subr.mxu0 0.0
    %3298 = vmatpush1.xpose.msra.mxu0 0.0
    %3299 = vmatprep.subr.mxu0 0.0
    %3300 = vmatpush1.xpose.msra.mxu0 0.0
    %3301 = vmatprep.subr.mxu0 0.0
    %3302 = vmatpush1.xpose.msra.mxu0 0.0
    %3303 = vmatprep.subr.mxu0 0.0
    %3304 = vmatpush1.xpose.msra.mxu0 0.0
    %3305 = vmatprep.subr.mxu0 0.0
    %3306 = vmatpush1.xpose.msra.mxu0 0.0
    %3307 = vmatprep.subr.mxu0 0.0
    %3308 = vmatpush1.xpose.msra.mxu0 0.0
    %3309 = vmatprep.subr.mxu0 0.0
    %3310 = vmatpush1.xpose.msra.mxu0 0.0
    %3311 = vmatprep.subr.mxu0 0.0
    %3312 = vmatpush1.xpose.msra.mxu0 0.0
    %3313 = vmatprep.subr.mxu0 0.0
    %3314 = vmatpush1.xpose.msra.mxu0 0.0
    %3315 = vmatprep.subr.mxu0 0.0
    %3316 = vmatpush1.xpose.msra.mxu0 0.0
    %3317 = vmatprep.subr.mxu0 0.0
    %3318 = vmatpush1.xpose.msra.mxu0 0.0
    %3319 = vmatprep.subr.mxu0 0.0
    %3320 = vmatpush1.xpose.msra.mxu0 0.0
    %3321 = vmatprep.subr.mxu0 0.0
    %3322 = vmatpush1.xpose.msra.mxu0 0.0
    %3323 = vmatprep.subr.mxu0 0.0
    %3324 = vmatpush1.xpose.msra.mxu0 0.0
    %3325 = vmatprep.subr.mxu0 0.0
    %3326 = vmatpush1.xpose.msra.mxu0 0.0
    %3327 = vmatprep.subr.mxu0 0.0
    %3328 = vmatpush1.xpose.msra.mxu0 0.0
    %3329 = vmatprep.subr.mxu0 0.0
    %3330 = vmatpush1.xpose.msra.mxu0 0.0
    %3331 = vmatprep.subr.mxu0 0.0
    %3332 = vmatpush1.xpose.msra.mxu0 0.0
    %3333 = vmatprep.subr.mxu0 0.0
    %3334 = vmatpush1.xpose.msra.mxu0 0.0
    %3335 = vmatprep.subr.mxu0 0.0
    %3336 = vmatpush1.xpose.msra.mxu0 0.0
    %3337 = vmatprep.subr.mxu0 0.0
    %3338 = vmatpush1.xpose.msra.mxu0 0.0
    %3339 = vmatprep.subr.mxu0 0.0
    %3340 = vmatpush1.xpose.msra.mxu0 0.0
    %3341 = vmatprep.subr.mxu0 0.0
    %3342 = vmatpush1.xpose.msra.mxu0 0.0
    %3343 = vmatprep.mubr.f32.mxu0 0.0
    %v3344 = vand.u32 %v3276, 4294901760
    %v3345 = vsub.f32 %v3276, %v3344
    %v3346 = vand.u32 %v3345, 4294901760
    %v3347 = vsub.f32 %v3345, %v3346
    %v3348 = vand.u32 %v3347, 4294901760
    %3349 = vmatmul.mubr.f32.gmra.mrb[0].mxu0 %v3348
    %v3350 = vpop.f32.mrb[0].mxu0
    %v3351 = vadd.f32 0.0, %v3350
    %v3352 = vpop.f32.mrb[0].mxu0
    %3353 = vdwg.mxu0
    %3354 = vmatprep.subr.mxu0 0.0
    %v3355 = vand.u32 %v3276, 4294901760
    %v3356 = vsub.f32 %v3276, %v3355
    %v3357 = vand.u32 %v3356, 4294901760
    %v3358 = vsub.f32 %v3356, %v3357
    %v3359 = vand.u32 %v3358, 4294901760
    %3360 = vmatpush1.xpose.msra.mxu0 %v3359
    %3361 = vmatprep.subr.mxu0 0.0
    %3362 = vmatpush1.xpose.msra.mxu0 0.0
    %3363 = vmatprep.subr.mxu0 0.0
    %3364 = vmatpush1.xpose.msra.mxu0 0.0
    %3365 = vmatprep.subr.mxu0 0.0
    %3366 = vmatpush1.xpose.msra.mxu0 0.0
    %3367 = vmatprep.subr.mxu0 0.0
    %3368 = vmatpush1.xpose.msra.mxu0 0.0
    %3369 = vmatprep.subr.mxu0 0.0
    %3370 = vmatpush1.xpose.msra.mxu0 0.0
    %3371 = vmatprep.subr.mxu0 0.0
    %3372 = vmatpush1.xpose.msra.mxu0 0.0
    %3373 = vmatprep.subr.mxu0 0.0
    %3374 = vmatpush1.xpose.msra.mxu0 0.0
    %3375 = vmatprep.subr.mxu0 0.0
    %3376 = vmatpush1.xpose.msra.mxu0 0.0
    %3377 = vmatprep.subr.mxu0 0.0
    %3378 = vmatpush1.xpose.msra.mxu0 0.0
    %3379 = vmatprep.subr.mxu0 0.0
    %3380 = vmatpush1.xpose.msra.mxu0 0.0
    %3381 = vmatprep.subr.mxu0 0.0
    %3382 = vmatpush1.xpose.msra.mxu0 0.0
    %3383 = vmatprep.subr.mxu0 0.0
    %3384 = vmatpush1.xpose.msra.mxu0 0.0
    %3385 = vmatprep.subr.mxu0 0.0
    %3386 = vmatpush1.xpose.msra.mxu0 0.0
    %3387 = vmatprep.subr.mxu0 0.0
    %3388 = vmatpush1.xpose.msra.mxu0 0.0
    %3389 = vmatprep.subr.mxu0 0.0
    %3390 = vmatpush1.xpose.msra.mxu0 0.0
    %3391 = vmatprep.subr.mxu0 0.0
    %3392 = vmatpush1.xpose.msra.mxu0 0.0
    %3393 = vmatprep.subr.mxu0 0.0
    %3394 = vmatpush1.xpose.msra.mxu0 0.0
    %3395 = vmatprep.subr.mxu0 0.0
    %3396 = vmatpush1.xpose.msra.mxu0 0.0
    %3397 = vmatprep.subr.mxu0 0.0
    %3398 = vmatpush1.xpose.msra.mxu0 0.0
    %3399 = vmatprep.subr.mxu0 0.0
    %3400 = vmatpush1.xpose.msra.mxu0 0.0
    %3401 = vmatprep.subr.mxu0 0.0
    %3402 = vmatpush1.xpose.msra.mxu0 0.0
    %3403 = vmatprep.subr.mxu0 0.0
    %3404 = vmatpush1.xpose.msra.mxu0 0.0
    %3405 = vmatprep.subr.mxu0 0.0
    %3406 = vmatpush1.xpose.msra.mxu0 0.0
    %3407 = vmatprep.subr.mxu0 0.0
    %3408 = vmatpush1.xpose.msra.mxu0 0.0
    %3409 = vmatprep.subr.mxu0 0.0
    %3410 = vmatpush1.xpose.msra.mxu0 0.0
    %3411 = vmatprep.subr.mxu0 0.0
    %3412 = vmatpush1.xpose.msra.mxu0 0.0
    %3413 = vmatprep.subr.mxu0 0.0
    %3414 = vmatpush1.xpose.msra.mxu0 0.0
    %3415 = vmatprep.subr.mxu0 0.0
    %3416 = vmatpush1.xpose.msra.mxu0 0.0
    %3417 = vmatprep.subr.mxu0 0.0
    %3418 = vmatpush1.xpose.msra.mxu0 0.0
    %3419 = vmatprep.subr.mxu0 0.0
    %3420 = vmatpush1.xpose.msra.mxu0 0.0
    %3421 = vmatprep.subr.mxu0 0.0
    %3422 = vmatpush1.xpose.msra.mxu0 0.0
    %3423 = vmatprep.mubr.f32.mxu0 0.0
    %v3424 = vand.u32 %v3276, 4294901760
    %3425 = vmatmul.mubr.f32.gmra.mrb[0].mxu0 %v3424
    %v3426 = vpop.f32.mrb[0].mxu0
    %v3427 = vadd.f32 %v3351, %v3426
    %v3428 = vpop.f32.mrb[0].mxu0
    %3429 = vdwg.mxu0
    %3430 = vmatprep.subr.mxu0 0.0
    %v3431 = vand.u32 %v3276, 4294901760
    %v3432 = vsub.f32 %v3276, %v3431
    %3433 = vmatpush1.xpose.msra.mxu0 %v3432
    %3434 = vmatprep.subr.mxu0 0.0
    %3435 = vmatpush1.xpose.msra.mxu0 0.0
    %3436 = vmatprep.subr.mxu0 0.0
    %3437 = vmatpush1.xpose.msra.mxu0 0.0
    %3438 = vmatprep.subr.mxu0 0.0
    %3439 = vmatpush1.xpose.msra.mxu0 0.0
    %3440 = vmatprep.subr.mxu0 0.0
    %3441 = vmatpush1.xpose.msra.mxu0 0.0
    %3442 = vmatprep.subr.mxu0 0.0
    %3443 = vmatpush1.xpose.msra.mxu0 0.0
    %3444 = vmatprep.subr.mxu0 0.0
    %3445 = vmatpush1.xpose.msra.mxu0 0.0
    %3446 = vmatprep.subr.mxu0 0.0
    %3447 = vmatpush1.xpose.msra.mxu0 0.0
    %3448 = vmatprep.subr.mxu0 0.0
    %3449 = vmatpush1.xpose.msra.mxu0 0.0
    %3450 = vmatprep.subr.mxu0 0.0
    %3451 = vmatpush1.xpose.msra.mxu0 0.0
    %3452 = vmatprep.subr.mxu0 0.0
    %3453 = vmatpush1.xpose.msra.mxu0 0.0
    %3454 = vmatprep.subr.mxu0 0.0
    %3455 = vmatpush1.xpose.msra.mxu0 0.0
    %3456 = vmatprep.subr.mxu0 0.0
    %3457 = vmatpush1.xpose.msra.mxu0 0.0
    %3458 = vmatprep.subr.mxu0 0.0
    %3459 = vmatpush1.xpose.msra.mxu0 0.0
    %3460 = vmatprep.subr.mxu0 0.0
    %3461 = vmatpush1.xpose.msra.mxu0 0.0
    %3462 = vmatprep.subr.mxu0 0.0
    %3463 = vmatpush1.xpose.msra.mxu0 0.0
    %3464 = vmatprep.subr.mxu0 0.0
    %3465 = vmatpush1.xpose.msra.mxu0 0.0
    %3466 = vmatprep.subr.mxu0 0.0
    %3467 = vmatpush1.xpose.msra.mxu0 0.0
    %3468 = vmatprep.subr.mxu0 0.0
    %3469 = vmatpush1.xpose.msra.mxu0 0.0
    %3470 = vmatprep.subr.mxu0 0.0
    %3471 = vmatpush1.xpose.msra.mxu0 0.0
    %3472 = vmatprep.subr.mxu0 0.0
    %3473 = vmatpush1.xpose.msra.mxu0 0.0
    %3474 = vmatprep.subr.mxu0 0.0
    %3475 = vmatpush1.xpose.msra.mxu0 0.0
    %3476 = vmatprep.subr.mxu0 0.0
    %3477 = vmatpush1.xpose.msra.mxu0 0.0
    %3478 = vmatprep.subr.mxu0 0.0
    %3479 = vmatpush1.xpose.msra.mxu0 0.0
    %3480 = vmatprep.subr.mxu0 0.0
    %3481 = vmatpush1.xpose.msra.mxu0 0.0
    %3482 = vmatprep.subr.mxu0 0.0
    %3483 = vmatpush1.xpose.msra.mxu0 0.0
    %3484 = vmatprep.subr.mxu0 0.0
    %3485 = vmatpush1.xpose.msra.mxu0 0.0
    %3486 = vmatprep.subr.mxu0 0.0
    %3487 = vmatpush1.xpose.msra.mxu0 0.0
    %3488 = vmatprep.subr.mxu0 0.0
    %3489 = vmatpush1.xpose.msra.mxu0 0.0
    %3490 = vmatprep.subr.mxu0 0.0
    %3491 = vmatpush1.xpose.msra.mxu0 0.0
    %3492 = vmatprep.subr.mxu0 0.0
    %3493 = vmatpush1.xpose.msra.mxu0 0.0
    %3494 = vmatprep.subr.mxu0 0.0
    %3495 = vmatpush1.xpose.msra.mxu0 0.0
    %3496 = vmatprep.mubr.f32.mxu0 0.0
    %v3497 = vand.u32 %v3276, 4294901760
    %v3498 = vsub.f32 %v3276, %v3497
    %3499 = vmatmul.mubr.f32.gmra.mrb[0].mxu0 %v3498
    %v3500 = vpop.f32.mrb[0].mxu0
    %v3501 = vadd.f32 %v3427, %v3500
    %v3502 = vpop.f32.mrb[0].mxu0
    %3503 = vdwg.mxu0
    %3504 = vmatprep.subr.mxu0 0.0
    %v3505 = vand.u32 %v3276, 4294901760
    %3506 = vmatpush1.xpose.msra.mxu0 %v3505
    %3507 = vmatprep.subr.mxu0 0.0
    %3508 = vmatpush1.xpose.msra.mxu0 0.0
    %3509 = vmatprep.subr.mxu0 0.0
    %3510 = vmatpush1.xpose.msra.mxu0 0.0
    %3511 = vmatprep.subr.mxu0 0.0
    %3512 = vmatpush1.xpose.msra.mxu0 0.0
    %3513 = vmatprep.subr.mxu0 0.0
    %3514 = vmatpush1.xpose.msra.mxu0 0.0
    %3515 = vmatprep.subr.mxu0 0.0
    %3516 = vmatpush1.xpose.msra.mxu0 0.0
    %3517 = vmatprep.subr.mxu0 0.0
    %3518 = vmatpush1.xpose.msra.mxu0 0.0
    %3519 = vmatprep.subr.mxu0 0.0
    %3520 = vmatpush1.xpose.msra.mxu0 0.0
    %3521 = vmatprep.subr.mxu0 0.0
    %3522 = vmatpush1.xpose.msra.mxu0 0.0
    %3523 = vmatprep.subr.mxu0 0.0
    %3524 = vmatpush1.xpose.msra.mxu0 0.0
    %3525 = vmatprep.subr.mxu0 0.0
    %3526 = vmatpush1.xpose.msra.mxu0 0.0
    %3527 = vmatprep.subr.mxu0 0.0
    %3528 = vmatpush1.xpose.msra.mxu0 0.0
    %3529 = vmatprep.subr.mxu0 0.0
    %3530 = vmatpush1.xpose.msra.mxu0 0.0
    %3531 = vmatprep.subr.mxu0 0.0
    %3532 = vmatpush1.xpose.msra.mxu0 0.0
    %3533 = vmatprep.subr.mxu0 0.0
    %3534 = vmatpush1.xpose.msra.mxu0 0.0
    %3535 = vmatprep.subr.mxu0 0.0
    %3536 = vmatpush1.xpose.msra.mxu0 0.0
    %3537 = vmatprep.subr.mxu0 0.0
    %3538 = vmatpush1.xpose.msra.mxu0 0.0
    %3539 = vmatprep.subr.mxu0 0.0
    %3540 = vmatpush1.xpose.msra.mxu0 0.0
    %3541 = vmatprep.subr.mxu0 0.0
    %3542 = vmatpush1.xpose.msra.mxu0 0.0
    %3543 = vmatprep.subr.mxu0 0.0
    %3544 = vmatpush1.xpose.msra.mxu0 0.0
    %3545 = vmatprep.subr.mxu0 0.0
    %3546 = vmatpush1.xpose.msra.mxu0 0.0
    %3547 = vmatprep.subr.mxu0 0.0
    %3548 = vmatpush1.xpose.msra.mxu0 0.0
    %3549 = vmatprep.subr.mxu0 0.0
    %3550 = vmatpush1.xpose.msra.mxu0 0.0
    %3551 = vmatprep.subr.mxu0 0.0
    %3552 = vmatpush1.xpose.msra.mxu0 0.0
    %3553 = vmatprep.subr.mxu0 0.0
    %3554 = vmatpush1.xpose.msra.mxu0 0.0
    %3555 = vmatprep.subr.mxu0 0.0
    %3556 = vmatpush1.xpose.msra.mxu0 0.0
    %3557 = vmatprep.subr.mxu0 0.0
    %3558 = vmatpush1.xpose.msra.mxu0 0.0
    %3559 = vmatprep.subr.mxu0 0.0
    %3560 = vmatpush1.xpose.msra.mxu0 0.0
    %3561 = vmatprep.subr.mxu0 0.0
    %3562 = vmatpush1.xpose.msra.mxu0 0.0
    %3563 = vmatprep.subr.mxu0 0.0
    %3564 = vmatpush1.xpose.msra.mxu0 0.0
    %3565 = vmatprep.subr.mxu0 0.0
    %3566 = vmatpush1.xpose.msra.mxu0 0.0
    %3567 = vmatprep.subr.mxu0 0.0
    %3568 = vmatpush1.xpose.msra.mxu0 0.0
    %3569 = vmatprep.mubr.f32.mxu0 0.0
    %v3570 = vand.u32 %v3276, 4294901760
    %v3571 = vsub.f32 %v3276, %v3570
    %v3572 = vand.u32 %v3571, 4294901760
    %3573 = vmatmul.mubr.f32.gmra.mrb[0].mxu0 %v3572
    %v3574 = vpop.f32.mrb[0].mxu0
    %v3575 = vadd.f32 %v3501, %v3574
    %v3576 = vpop.f32.mrb[0].mxu0
    %3577 = vdwg.mxu0
    %3578 = vmatprep.subr.mxu0 0.0
    %v3579 = vand.u32 %v3276, 4294901760
    %v3580 = vsub.f32 %v3276, %v3579
    %v3581 = vand.u32 %v3580, 4294901760
    %3582 = vmatpush1.xpose.msra.mxu0 %v3581
    %3583 = vmatprep.subr.mxu0 0.0
    %3584 = vmatpush1.xpose.msra.mxu0 0.0
    %3585 = vmatprep.subr.mxu0 0.0
    %3586 = vmatpush1.xpose.msra.mxu0 0.0
    %3587 = vmatprep.subr.mxu0 0.0
    %3588 = vmatpush1.xpose.msra.mxu0 0.0
    %3589 = vmatprep.subr.mxu0 0.0
    %3590 = vmatpush1.xpose.msra.mxu0 0.0
    %3591 = vmatprep.subr.mxu0 0.0
    %3592 = vmatpush1.xpose.msra.mxu0 0.0
    %3593 = vmatprep.subr.mxu0 0.0
    %3594 = vmatpush1.xpose.msra.mxu0 0.0
    %3595 = vmatprep.subr.mxu0 0.0
    %3596 = vmatpush1.xpose.msra.mxu0 0.0
    %3597 = vmatprep.subr.mxu0 0.0
    %3598 = vmatpush1.xpose.msra.mxu0 0.0
    %3599 = vmatprep.subr.mxu0 0.0
    %3600 = vmatpush1.xpose.msra.mxu0 0.0
    %3601 = vmatprep.subr.mxu0 0.0
    %3602 = vmatpush1.xpose.msra.mxu0 0.0
    %3603 = vmatprep.subr.mxu0 0.0
    %3604 = vmatpush1.xpose.msra.mxu0 0.0
    %3605 = vmatprep.subr.mxu0 0.0
    %3606 = vmatpush1.xpose.msra.mxu0 0.0
    %3607 = vmatprep.subr.mxu0 0.0
    %3608 = vmatpush1.xpose.msra.mxu0 0.0
    %3609 = vmatprep.subr.mxu0 0.0
    %3610 = vmatpush1.xpose.msra.mxu0 0.0
    %3611 = vmatprep.subr.mxu0 0.0
    %3612 = vmatpush1.xpose.msra.mxu0 0.0
    %3613 = vmatprep.subr.mxu0 0.0
    %3614 = vmatpush1.xpose.msra.mxu0 0.0
    %3615 = vmatprep.subr.mxu0 0.0
    %3616 = vmatpush1.xpose.msra.mxu0 0.0
    %3617 = vmatprep.subr.mxu0 0.0
    %3618 = vmatpush1.xpose.msra.mxu0 0.0
    %3619 = vmatprep.subr.mxu0 0.0
    %3620 = vmatpush1.xpose.msra.mxu0 0.0
    %3621 = vmatprep.subr.mxu0 0.0
    %3622 = vmatpush1.xpose.msra.mxu0 0.0
    %3623 = vmatprep.subr.mxu0 0.0
    %3624 = vmatpush1.xpose.msra.mxu0 0.0
    %3625 = vmatprep.subr.mxu0 0.0
    %3626 = vmatpush1.xpose.msra.mxu0 0.0
    %3627 = vmatprep.subr.mxu0 0.0
    %3628 = vmatpush1.xpose.msra.mxu0 0.0
    %3629 = vmatprep.subr.mxu0 0.0
    %3630 = vmatpush1.xpose.msra.mxu0 0.0
    %3631 = vmatprep.subr.mxu0 0.0
    %3632 = vmatpush1.xpose.msra.mxu0 0.0
    %3633 = vmatprep.subr.mxu0 0.0
    %3634 = vmatpush1.xpose.msra.mxu0 0.0
    %3635 = vmatprep.subr.mxu0 0.0
    %3636 = vmatpush1.xpose.msra.mxu0 0.0
    %3637 = vmatprep.subr.mxu0 0.0
    %3638 = vmatpush1.xpose.msra.mxu0 0.0
    %3639 = vmatprep.subr.mxu0 0.0
    %3640 = vmatpush1.xpose.msra.mxu0 0.0
    %3641 = vmatprep.subr.mxu0 0.0
    %3642 = vmatpush1.xpose.msra.mxu0 0.0
    %3643 = vmatprep.subr.mxu0 0.0
    %3644 = vmatpush1.xpose.msra.mxu0 0.0
    %3645 = vmatprep.mubr.f32.mxu0 0.0
    %v3646 = vand.u32 %v3276, 4294901760
    %3647 = vmatmul.mubr.f32.gmra.mrb[0].mxu0 %v3646
    %v3648 = vpop.f32.mrb[0].mxu0
    %v3649 = vadd.f32 %v3575, %v3648
    %v3650 = vpop.f32.mrb[0].mxu0
    %3651 = vdwg.mxu0
    %3652 = vmatprep.subr.mxu0 0.0
    %v3653 = vand.u32 %v3276, 4294901760
    %3654 = vmatpush1.xpose.msra.mxu0 %v3653
    %3655 = vmatprep.subr.mxu0 0.0
    %3656 = vmatpush1.xpose.msra.mxu0 0.0
    %3657 = vmatprep.subr.mxu0 0.0
    %3658 = vmatpush1.xpose.msra.mxu0 0.0
    %3659 = vmatprep.subr.mxu0 0.0
    %3660 = vmatpush1.xpose.msra.mxu0 0.0
    %3661 = vmatprep.subr.mxu0 0.0
    %3662 = vmatpush1.xpose.msra.mxu0 0.0
    %3663 = vmatprep.subr.mxu0 0.0
    %3664 = vmatpush1.xpose.msra.mxu0 0.0
    %3665 = vmatprep.subr.mxu0 0.0
    %3666 = vmatpush1.xpose.msra.mxu0 0.0
    %3667 = vmatprep.subr.mxu0 0.0
    %3668 = vmatpush1.xpose.msra.mxu0 0.0
    %3669 = vmatprep.subr.mxu0 0.0
    %3670 = vmatpush1.xpose.msra.mxu0 0.0
    %3671 = vmatprep.subr.mxu0 0.0
    %3672 = vmatpush1.xpose.msra.mxu0 0.0
    %3673 = vmatprep.subr.mxu0 0.0
    %3674 = vmatpush1.xpose.msra.mxu0 0.0
    %3675 = vmatprep.subr.mxu0 0.0
    %3676 = vmatpush1.xpose.msra.mxu0 0.0
    %3677 = vmatprep.subr.mxu0 0.0
    %3678 = vmatpush1.xpose.msra.mxu0 0.0
    %3679 = vmatprep.subr.mxu0 0.0
    %3680 = vmatpush1.xpose.msra.mxu0 0.0
    %3681 = vmatprep.subr.mxu0 0.0
    %3682 = vmatpush1.xpose.msra.mxu0 0.0
    %3683 = vmatprep.subr.mxu0 0.0
    %3684 = vmatpush1.xpose.msra.mxu0 0.0
    %3685 = vmatprep.subr.mxu0 0.0
    %3686 = vmatpush1.xpose.msra.mxu0 0.0
    %3687 = vmatprep.subr.mxu0 0.0
    %3688 = vmatpush1.xpose.msra.mxu0 0.0
    %3689 = vmatprep.subr.mxu0 0.0
    %3690 = vmatpush1.xpose.msra.mxu0 0.0
    %3691 = vmatprep.subr.mxu0 0.0
    %3692 = vmatpush1.xpose.msra.mxu0 0.0
    %3693 = vmatprep.subr.mxu0 0.0
    %3694 = vmatpush1.xpose.msra.mxu0 0.0
    %3695 = vmatprep.subr.mxu0 0.0
    %3696 = vmatpush1.xpose.msra.mxu0 0.0
    %3697 = vmatprep.subr.mxu0 0.0
    %3698 = vmatpush1.xpose.msra.mxu0 0.0
    %3699 = vmatprep.subr.mxu0 0.0
    %3700 = vmatpush1.xpose.msra.mxu0 0.0
    %3701 = vmatprep.subr.mxu0 0.0
    %3702 = vmatpush1.xpose.msra.mxu0 0.0
    %3703 = vmatprep.subr.mxu0 0.0
    %3704 = vmatpush1.xpose.msra.mxu0 0.0
    %3705 = vmatprep.subr.mxu0 0.0
    %3706 = vmatpush1.xpose.msra.mxu0 0.0
    %3707 = vmatprep.subr.mxu0 0.0
    %3708 = vmatpush1.xpose.msra.mxu0 0.0
    %3709 = vmatprep.subr.mxu0 0.0
    %3710 = vmatpush1.xpose.msra.mxu0 0.0
    %3711 = vmatprep.subr.mxu0 0.0
    %3712 = vmatpush1.xpose.msra.mxu0 0.0
    %3713 = vmatprep.subr.mxu0 0.0
    %3714 = vmatpush1.xpose.msra.mxu0 0.0
    %3715 = vmatprep.subr.mxu0 0.0
    %3716 = vmatpush1.xpose.msra.mxu0 0.0
    %3717 = vmatprep.mubr.f32.mxu0 0.0
    %v3718 = vand.u32 %v3276, 4294901760
    %3719 = vmatmul.mubr.f32.gmra.mrb[0].mxu0 %v3718
    %v3720 = vpop.f32.mrb[0].mxu0
    %v3721 = vadd.f32 %v3649, %v3720
    %v3722 = vpop.f32.mrb[0].mxu0
    %3723 = vdwg.mxu0
    %v3725 = vsel %vm31, %v2375, 0
    %3727 = vmatprep.subr.mxu0 0.0
    %v3728 = vand.u32 %v3725, 4294901760
    %3729 = vmatpush1.xpose.msra.mxu0 %v3728
    %3730 = vmatprep.subr.mxu0 0.0
    %3731 = vmatpush1.xpose.msra.mxu0 0.0
    %3732 = vmatprep.subr.mxu0 0.0
    %3733 = vmatpush1.xpose.msra.mxu0 0.0
    %3734 = vmatprep.subr.mxu0 0.0
    %3735 = vmatpush1.xpose.msra.mxu0 0.0
    %3736 = vmatprep.subr.mxu0 0.0
    %3737 = vmatpush1.xpose.msra.mxu0 0.0
    %3738 = vmatprep.subr.mxu0 0.0
    %3739 = vmatpush1.xpose.msra.mxu0 0.0
    %3740 = vmatprep.subr.mxu0 0.0
    %3741 = vmatpush1.xpose.msra.mxu0 0.0
    %3742 = vmatprep.subr.mxu0 0.0
    %3743 = vmatpush1.xpose.msra.mxu0 0.0
    %3744 = vmatprep.subr.mxu0 0.0
    %3745 = vmatpush1.xpose.msra.mxu0 0.0
    %3746 = vmatprep.subr.mxu0 0.0
    %3747 = vmatpush1.xpose.msra.mxu0 0.0
    %3748 = vmatprep.subr.mxu0 0.0
    %3749 = vmatpush1.xpose.msra.mxu0 0.0
    %3750 = vmatprep.subr.mxu0 0.0
    %3751 = vmatpush1.xpose.msra.mxu0 0.0
    %3752 = vmatprep.subr.mxu0 0.0
    %3753 = vmatpush1.xpose.msra.mxu0 0.0
    %3754 = vmatprep.subr.mxu0 0.0
    %3755 = vmatpush1.xpose.msra.mxu0 0.0
    %3756 = vmatprep.subr.mxu0 0.0
    %3757 = vmatpush1.xpose.msra.mxu0 0.0
    %3758 = vmatprep.subr.mxu0 0.0
    %3759 = vmatpush1.xpose.msra.mxu0 0.0
    %3760 = vmatprep.subr.mxu0 0.0
    %3761 = vmatpush1.xpose.msra.mxu0 0.0
    %3762 = vmatprep.subr.mxu0 0.0
    %3763 = vmatpush1.xpose.msra.mxu0 0.0
    %3764 = vmatprep.subr.mxu0 0.0
    %3765 = vmatpush1.xpose.msra.mxu0 0.0
    %3766 = vmatprep.subr.mxu0 0.0
    %3767 = vmatpush1.xpose.msra.mxu0 0.0
    %3768 = vmatprep.subr.mxu0 0.0
    %3769 = vmatpush1.xpose.msra.mxu0 0.0
    %3770 = vmatprep.subr.mxu0 0.0
    %3771 = vmatpush1.xpose.msra.mxu0 0.0
    %3772 = vmatprep.subr.mxu0 0.0
    %3773 = vmatpush1.xpose.msra.mxu0 0.0
    %3774 = vmatprep.subr.mxu0 0.0
    %3775 = vmatpush1.xpose.msra.mxu0 0.0
    %3776 = vmatprep.subr.mxu0 0.0
    %3777 = vmatpush1.xpose.msra.mxu0 0.0
    %3778 = vmatprep.subr.mxu0 0.0
    %3779 = vmatpush1.xpose.msra.mxu0 0.0
    %3780 = vmatprep.subr.mxu0 0.0
    %3781 = vmatpush1.xpose.msra.mxu0 0.0
    %3782 = vmatprep.subr.mxu0 0.0
    %3783 = vmatpush1.xpose.msra.mxu0 0.0
    %3784 = vmatprep.subr.mxu0 0.0
    %3785 = vmatpush1.xpose.msra.mxu0 0.0
    %3786 = vmatprep.subr.mxu0 0.0
    %3787 = vmatpush1.xpose.msra.mxu0 0.0
    %3788 = vmatprep.subr.mxu0 0.0
    %3789 = vmatpush1.xpose.msra.mxu0 0.0
    %3790 = vmatprep.subr.mxu0 0.0
    %3791 = vmatpush1.xpose.msra.mxu0 0.0
    %3792 = vmatprep.mubr.f32.mxu0 0.0
    %v3793 = vand.u32 %v3725, 4294901760
    %v3794 = vsub.f32 %v3725, %v3793
    %v3795 = vand.u32 %v3794, 4294901760
    %v3796 = vsub.f32 %v3794, %v3795
    %v3797 = vand.u32 %v3796, 4294901760
    %3798 = vmatmul.mubr.f32.gmra.mrb[0].mxu0 %v3797
    %v3799 = vpop.f32.mrb[0].mxu0
    %v3800 = vadd.f32 0.0, %v3799
    %v3801 = vpop.f32.mrb[0].mxu0
    %3802 = vdwg.mxu0
    %3803 = vmatprep.subr.mxu0 0.0
    %v3804 = vand.u32 %v3725, 4294901760
    %v3805 = vsub.f32 %v3725, %v3804
    %v3806 = vand.u32 %v3805, 4294901760
    %v3807 = vsub.f32 %v3805, %v3806
    %v3808 = vand.u32 %v3807, 4294901760
    %3809 = vmatpush1.xpose.msra.mxu0 %v3808
    %3810 = vmatprep.subr.mxu0 0.0
    %3811 = vmatpush1.xpose.msra.mxu0 0.0
    %3812 = vmatprep.subr.mxu0 0.0
    %3813 = vmatpush1.xpose.msra.mxu0 0.0
    %3814 = vmatprep.subr.mxu0 0.0
    %3815 = vmatpush1.xpose.msra.mxu0 0.0
    %3816 = vmatprep.subr.mxu0 0.0
    %3817 = vmatpush1.xpose.msra.mxu0 0.0
    %3818 = vmatprep.subr.mxu0 0.0
    %3819 = vmatpush1.xpose.msra.mxu0 0.0
    %3820 = vmatprep.subr.mxu0 0.0
    %3821 = vmatpush1.xpose.msra.mxu0 0.0
    %3822 = vmatprep.subr.mxu0 0.0
    %3823 = vmatpush1.xpose.msra.mxu0 0.0
    %3824 = vmatprep.subr.mxu0 0.0
    %3825 = vmatpush1.xpose.msra.mxu0 0.0
    %3826 = vmatprep.subr.mxu0 0.0
    %3827 = vmatpush1.xpose.msra.mxu0 0.0
    %3828 = vmatprep.subr.mxu0 0.0
    %3829 = vmatpush1.xpose.msra.mxu0 0.0
    %3830 = vmatprep.subr.mxu0 0.0
    %3831 = vmatpush1.xpose.msra.mxu0 0.0
    %3832 = vmatprep.subr.mxu0 0.0
    %3833 = vmatpush1.xpose.msra.mxu0 0.0
    %3834 = vmatprep.subr.mxu0 0.0
    %3835 = vmatpush1.xpose.msra.mxu0 0.0
    %3836 = vmatprep.subr.mxu0 0.0
    %3837 = vmatpush1.xpose.msra.mxu0 0.0
    %3838 = vmatprep.subr.mxu0 0.0
    %3839 = vmatpush1.xpose.msra.mxu0 0.0
    %3840 = vmatprep.subr.mxu0 0.0
    %3841 = vmatpush1.xpose.msra.mxu0 0.0
    %3842 = vmatprep.subr.mxu0 0.0
    %3843 = vmatpush1.xpose.msra.mxu0 0.0
    %3844 = vmatprep.subr.mxu0 0.0
    %3845 = vmatpush1.xpose.msra.mxu0 0.0
    %3846 = vmatprep.subr.mxu0 0.0
    %3847 = vmatpush1.xpose.msra.mxu0 0.0
    %3848 = vmatprep.subr.mxu0 0.0
    %3849 = vmatpush1.xpose.msra.mxu0 0.0
    %3850 = vmatprep.subr.mxu0 0.0
    %3851 = vmatpush1.xpose.msra.mxu0 0.0
    %3852 = vmatprep.subr.mxu0 0.0
    %3853 = vmatpush1.xpose.msra.mxu0 0.0
    %3854 = vmatprep.subr.mxu0 0.0
    %3855 = vmatpush1.xpose.msra.mxu0 0.0
    %3856 = vmatprep.subr.mxu0 0.0
    %3857 = vmatpush1.xpose.msra.mxu0 0.0
    %3858 = vmatprep.subr.mxu0 0.0
    %3859 = vmatpush1.xpose.msra.mxu0 0.0
    %3860 = vmatprep.subr.mxu0 0.0
    %3861 = vmatpush1.xpose.msra.mxu0 0.0
    %3862 = vmatprep.subr.mxu0 0.0
    %3863 = vmatpush1.xpose.msra.mxu0 0.0
    %3864 = vmatprep.subr.mxu0 0.0
    %3865 = vmatpush1.xpose.msra.mxu0 0.0
    %3866 = vmatprep.subr.mxu0 0.0
    %3867 = vmatpush1.xpose.msra.mxu0 0.0
    %3868 = vmatprep.subr.mxu0 0.0
    %3869 = vmatpush1.xpose.msra.mxu0 0.0
    %3870 = vmatprep.subr.mxu0 0.0
    %3871 = vmatpush1.xpose.msra.mxu0 0.0
    %3872 = vmatprep.mubr.f32.mxu0 0.0
    %v3873 = vand.u32 %v3725, 4294901760
    %3874 = vmatmul.mubr.f32.gmra.mrb[0].mxu0 %v3873
    %v3875 = vpop.f32.mrb[0].mxu0
    %v3876 = vadd.f32 %v3800, %v3875
    %v3877 = vpop.f32.mrb[0].mxu0
    %3878 = vdwg.mxu0
    %3879 = vmatprep.subr.mxu0 0.0
    %v3880 = vand.u32 %v3725, 4294901760
    %v3881 = vsub.f32 %v3725, %v3880
    %3882 = vmatpush1.xpose.msra.mxu0 %v3881
    %3883 = vmatprep.subr.mxu0 0.0
    %3884 = vmatpush1.xpose.msra.mxu0 0.0
    %3885 = vmatprep.subr.mxu0 0.0
    %3886 = vmatpush1.xpose.msra.mxu0 0.0
    %3887 = vmatprep.subr.mxu0 0.0
    %3888 = vmatpush1.xpose.msra.mxu0 0.0
    %3889 = vmatprep.subr.mxu0 0.0
    %3890 = vmatpush1.xpose.msra.mxu0 0.0
    %3891 = vmatprep.subr.mxu0 0.0
    %3892 = vmatpush1.xpose.msra.mxu0 0.0
    %3893 = vmatprep.subr.mxu0 0.0
    %3894 = vmatpush1.xpose.msra.mxu0 0.0
    %3895 = vmatprep.subr.mxu0 0.0
    %3896 = vmatpush1.xpose.msra.mxu0 0.0
    %3897 = vmatprep.subr.mxu0 0.0
    %3898 = vmatpush1.xpose.msra.mxu0 0.0
    %3899 = vmatprep.subr.mxu0 0.0
    %3900 = vmatpush1.xpose.msra.mxu0 0.0
    %3901 = vmatprep.subr.mxu0 0.0
    %3902 = vmatpush1.xpose.msra.mxu0 0.0
    %3903 = vmatprep.subr.mxu0 0.0
    %3904 = vmatpush1.xpose.msra.mxu0 0.0
    %3905 = vmatprep.subr.mxu0 0.0
    %3906 = vmatpush1.xpose.msra.mxu0 0.0
    %3907 = vmatprep.subr.mxu0 0.0
    %3908 = vmatpush1.xpose.msra.mxu0 0.0
    %3909 = vmatprep.subr.mxu0 0.0
    %3910 = vmatpush1.xpose.msra.mxu0 0.0
    %3911 = vmatprep.subr.mxu0 0.0
    %3912 = vmatpush1.xpose.msra.mxu0 0.0
    %3913 = vmatprep.subr.mxu0 0.0
    %3914 = vmatpush1.xpose.msra.mxu0 0.0
    %3915 = vmatprep.subr.mxu0 0.0
    %3916 = vmatpush1.xpose.msra.mxu0 0.0
    %3917 = vmatprep.subr.mxu0 0.0
    %3918 = vmatpush1.xpose.msra.mxu0 0.0
    %3919 = vmatprep.subr.mxu0 0.0
    %3920 = vmatpush1.xpose.msra.mxu0 0.0
    %3921 = vmatprep.subr.mxu0 0.0
    %3922 = vmatpush1.xpose.msra.mxu0 0.0
    %3923 = vmatprep.subr.mxu0 0.0
    %3924 = vmatpush1.xpose.msra.mxu0 0.0
    %3925 = vmatprep.subr.mxu0 0.0
    %3926 = vmatpush1.xpose.msra.mxu0 0.0
    %3927 = vmatprep.subr.mxu0 0.0
    %3928 = vmatpush1.xpose.msra.mxu0 0.0
    %3929 = vmatprep.subr.mxu0 0.0
    %3930 = vmatpush1.xpose.msra.mxu0 0.0
    %3931 = vmatprep.subr.mxu0 0.0
    %3932 = vmatpush1.xpose.msra.mxu0 0.0
    %3933 = vmatprep.subr.mxu0 0.0
    %3934 = vmatpush1.xpose.msra.mxu0 0.0
    %3935 = vmatprep.subr.mxu0 0.0
    %3936 = vmatpush1.xpose.msra.mxu0 0.0
    %3937 = vmatprep.subr.mxu0 0.0
    %3938 = vmatpush1.xpose.msra.mxu0 0.0
    %3939 = vmatprep.subr.mxu0 0.0
    %3940 = vmatpush1.xpose.msra.mxu0 0.0
    %3941 = vmatprep.subr.mxu0 0.0
    %3942 = vmatpush1.xpose.msra.mxu0 0.0
    %3943 = vmatprep.subr.mxu0 0.0
    %3944 = vmatpush1.xpose.msra.mxu0 0.0
    %3945 = vmatprep.mubr.f32.mxu0 0.0
    %v3946 = vand.u32 %v3725, 4294901760
    %v3947 = vsub.f32 %v3725, %v3946
    %3948 = vmatmul.mubr.f32.gmra.mrb[0].mxu0 %v3947
    %v3949 = vpop.f32.mrb[0].mxu0
    %v3950 = vadd.f32 %v3876, %v3949
    %v3951 = vpop.f32.mrb[0].mxu0
    %3952 = vdwg.mxu0
    %3953 = vmatprep.subr.mxu0 0.0
    %v3954 = vand.u32 %v3725, 4294901760
    %3955 = vmatpush1.xpose.msra.mxu0 %v3954
    %3956 = vmatprep.subr.mxu0 0.0
    %3957 = vmatpush1.xpose.msra.mxu0 0.0
    %3958 = vmatprep.subr.mxu0 0.0
    %3959 = vmatpush1.xpose.msra.mxu0 0.0
    %3960 = vmatprep.subr.mxu0 0.0
    %3961 = vmatpush1.xpose.msra.mxu0 0.0
    %3962 = vmatprep.subr.mxu0 0.0
    %3963 = vmatpush1.xpose.msra.mxu0 0.0
    %3964 = vmatprep.subr.mxu0 0.0
    %3965 = vmatpush1.xpose.msra.mxu0 0.0
    %3966 = vmatprep.subr.mxu0 0.0
    %3967 = vmatpush1.xpose.msra.mxu0 0.0
    %3968 = vmatprep.subr.mxu0 0.0
    %3969 = vmatpush1.xpose.msra.mxu0 0.0
    %3970 = vmatprep.subr.mxu0 0.0
    %3971 = vmatpush1.xpose.msra.mxu0 0.0
    %3972 = vmatprep.subr.mxu0 0.0
    %3973 = vmatpush1.xpose.msra.mxu0 0.0
    %3974 = vmatprep.subr.mxu0 0.0
    %3975 = vmatpush1.xpose.msra.mxu0 0.0
    %3976 = vmatprep.subr.mxu0 0.0
    %3977 = vmatpush1.xpose.msra.mxu0 0.0
    %3978 = vmatprep.subr.mxu0 0.0
    %3979 = vmatpush1.xpose.msra.mxu0 0.0
    %3980 = vmatprep.subr.mxu0 0.0
    %3981 = vmatpush1.xpose.msra.mxu0 0.0
    %3982 = vmatprep.subr.mxu0 0.0
    %3983 = vmatpush1.xpose.msra.mxu0 0.0
    %3984 = vmatprep.subr.mxu0 0.0
    %3985 = vmatpush1.xpose.msra.mxu0 0.0
    %3986 = vmatprep.subr.mxu0 0.0
    %3987 = vmatpush1.xpose.msra.mxu0 0.0
    %3988 = vmatprep.subr.mxu0 0.0
    %3989 = vmatpush1.xpose.msra.mxu0 0.0
    %3990 = vmatprep.subr.mxu0 0.0
    %3991 = vmatpush1.xpose.msra.mxu0 0.0
    %3992 = vmatprep.subr.mxu0 0.0
    %3993 = vmatpush1.xpose.msra.mxu0 0.0
    %3994 = vmatprep.subr.mxu0 0.0
    %3995 = vmatpush1.xpose.msra.mxu0 0.0
    %3996 = vmatprep.subr.mxu0 0.0
    %3997 = vmatpush1.xpose.msra.mxu0 0.0
    %3998 = vmatprep.subr.mxu0 0.0
    %3999 = vmatpush1.xpose.msra.mxu0 0.0
    %4000 = vmatprep.subr.mxu0 0.0
    %4001 = vmatpush1.xpose.msra.mxu0 0.0
    %4002 = vmatprep.subr.mxu0 0.0
    %4003 = vmatpush1.xpose.msra.mxu0 0.0
    %4004 = vmatprep.subr.mxu0 0.0
    %4005 = vmatpush1.xpose.msra.mxu0 0.0
    %4006 = vmatprep.subr.mxu0 0.0
    %4007 = vmatpush1.xpose.msra.mxu0 0.0
    %4008 = vmatprep.subr.mxu0 0.0
    %4009 = vmatpush1.xpose.msra.mxu0 0.0
    %4010 = vmatprep.subr.mxu0 0.0
    %4011 = vmatpush1.xpose.msra.mxu0 0.0
    %4012 = vmatprep.subr.mxu0 0.0
    %4013 = vmatpush1.xpose.msra.mxu0 0.0
    %4014 = vmatprep.subr.mxu0 0.0
    %4015 = vmatpush1.xpose.msra.mxu0 0.0
    %4016 = vmatprep.subr.mxu0 0.0
    %4017 = vmatpush1.xpose.msra.mxu0 0.0
    %4018 = vmatprep.mubr.f32.mxu0 0.0
    %v4019 = vand.u32 %v3725, 4294901760
    %v4020 = vsub.f32 %v3725, %v4019
    %v4021 = vand.u32 %v4020, 4294901760
    %4022 = vmatmul.mubr.f32.gmra.mrb[0].mxu0 %v4021
    %v4023 = vpop.f32.mrb[0].mxu0
    %v4024 = vadd.f32 %v3950, %v4023
    %v4025 = vpop.f32.mrb[0].mxu0
    %4026 = vdwg.mxu0
    %4027 = vmatprep.subr.mxu0 0.0
    %v4028 = vand.u32 %v3725, 4294901760
    %v4029 = vsub.f32 %v3725, %v4028
    %v4030 = vand.u32 %v4029, 4294901760
    %4031 = vmatpush1.xpose.msra.mxu0 %v4030
    %4032 = vmatprep.subr.mxu0 0.0
    %4033 = vmatpush1.xpose.msra.mxu0 0.0
    %4034 = vmatprep.subr.mxu0 0.0
    %4035 = vmatpush1.xpose.msra.mxu0 0.0
    %4036 = vmatprep.subr.mxu0 0.0
    %4037 = vmatpush1.xpose.msra.mxu0 0.0
    %4038 = vmatprep.subr.mxu0 0.0
    %4039 = vmatpush1.xpose.msra.mxu0 0.0
    %4040 = vmatprep.subr.mxu0 0.0
    %4041 = vmatpush1.xpose.msra.mxu0 0.0
    %4042 = vmatprep.subr.mxu0 0.0
    %4043 = vmatpush1.xpose.msra.mxu0 0.0
    %4044 = vmatprep.subr.mxu0 0.0
    %4045 = vmatpush1.xpose.msra.mxu0 0.0
    %4046 = vmatprep.subr.mxu0 0.0
    %4047 = vmatpush1.xpose.msra.mxu0 0.0
    %4048 = vmatprep.subr.mxu0 0.0
    %4049 = vmatpush1.xpose.msra.mxu0 0.0
    %4050 = vmatprep.subr.mxu0 0.0
    %4051 = vmatpush1.xpose.msra.mxu0 0.0
    %4052 = vmatprep.subr.mxu0 0.0
    %4053 = vmatpush1.xpose.msra.mxu0 0.0
    %4054 = vmatprep.subr.mxu0 0.0
    %4055 = vmatpush1.xpose.msra.mxu0 0.0
    %4056 = vmatprep.subr.mxu0 0.0
    %4057 = vmatpush1.xpose.msra.mxu0 0.0
    %4058 = vmatprep.subr.mxu0 0.0
    %4059 = vmatpush1.xpose.msra.mxu0 0.0
    %4060 = vmatprep.subr.mxu0 0.0
    %4061 = vmatpush1.xpose.msra.mxu0 0.0
    %4062 = vmatprep.subr.mxu0 0.0
    %4063 = vmatpush1.xpose.msra.mxu0 0.0
    %4064 = vmatprep.subr.mxu0 0.0
    %4065 = vmatpush1.xpose.msra.mxu0 0.0
    %4066 = vmatprep.subr.mxu0 0.0
    %4067 = vmatpush1.xpose.msra.mxu0 0.0
    %4068 = vmatprep.subr.mxu0 0.0
    %4069 = vmatpush1.xpose.msra.mxu0 0.0
    %4070 = vmatprep.subr.mxu0 0.0
    %4071 = vmatpush1.xpose.msra.mxu0 0.0
    %4072 = vmatprep.subr.mxu0 0.0
    %4073 = vmatpush1.xpose.msra.mxu0 0.0
    %4074 = vmatprep.subr.mxu0 0.0
    %4075 = vmatpush1.xpose.msra.mxu0 0.0
    %4076 = vmatprep.subr.mxu0 0.0
    %4077 = vmatpush1.xpose.msra.mxu0 0.0
    %4078 = vmatprep.subr.mxu0 0.0
    %4079 = vmatpush1.xpose.msra.mxu0 0.0
    %4080 = vmatprep.subr.mxu0 0.0
    %4081 = vmatpush1.xpose.msra.mxu0 0.0
    %4082 = vmatprep.subr.mxu0 0.0
    %4083 = vmatpush1.xpose.msra.mxu0 0.0
    %4084 = vmatprep.subr.mxu0 0.0
    %4085 = vmatpush1.xpose.msra.mxu0 0.0
    %4086 = vmatprep.subr.mxu0 0.0
    %4087 = vmatpush1.xpose.msra.mxu0 0.0
    %4088 = vmatprep.subr.mxu0 0.0
    %4089 = vmatpush1.xpose.msra.mxu0 0.0
    %4090 = vmatprep.subr.mxu0 0.0
    %4091 = vmatpush1.xpose.msra.mxu0 0.0
    %4092 = vmatprep.subr.mxu0 0.0
    %4093 = vmatpush1.xpose.msra.mxu0 0.0
    %4094 = vmatprep.mubr.f32.mxu0 0.0
    %v4095 = vand.u32 %v3725, 4294901760
    %4096 = vmatmul.mubr.f32.gmra.mrb[0].mxu0 %v4095
    %v4097 = vpop.f32.mrb[0].mxu0
    %v4098 = vadd.f32 %v4024, %v4097
    %v4099 = vpop.f32.mrb[0].mxu0
    %4100 = vdwg.mxu0
    %4101 = vmatprep.subr.mxu0 0.0
    %v4102 = vand.u32 %v3725, 4294901760
    %4103 = vmatpush1.xpose.msra.mxu0 %v4102
    %4104 = vmatprep.subr.mxu0 0.0
    %4105 = vmatpush1.xpose.msra.mxu0 0.0
    %4106 = vmatprep.subr.mxu0 0.0
    %4107 = vmatpush1.xpose.msra.mxu0 0.0
    %4108 = vmatprep.subr.mxu0 0.0
    %4109 = vmatpush1.xpose.msra.mxu0 0.0
    %4110 = vmatprep.subr.mxu0 0.0
    %4111 = vmatpush1.xpose.msra.mxu0 0.0
    %4112 = vmatprep.subr.mxu0 0.0
    %4113 = vmatpush1.xpose.msra.mxu0 0.0
    %4114 = vmatprep.subr.mxu0 0.0
    %4115 = vmatpush1.xpose.msra.mxu0 0.0
    %4116 = vmatprep.subr.mxu0 0.0
    %4117 = vmatpush1.xpose.msra.mxu0 0.0
    %4118 = vmatprep.subr.mxu0 0.0
    %4119 = vmatpush1.xpose.msra.mxu0 0.0
    %4120 = vmatprep.subr.mxu0 0.0
    %4121 = vmatpush1.xpose.msra.mxu0 0.0
    %4122 = vmatprep.subr.mxu0 0.0
    %4123 = vmatpush1.xpose.msra.mxu0 0.0
    %4124 = vmatprep.subr.mxu0 0.0
    %4125 = vmatpush1.xpose.msra.mxu0 0.0
    %4126 = vmatprep.subr.mxu0 0.0
    %4127 = vmatpush1.xpose.msra.mxu0 0.0
    %4128 = vmatprep.subr.mxu0 0.0
    %4129 = vmatpush1.xpose.msra.mxu0 0.0
    %4130 = vmatprep.subr.mxu0 0.0
    %4131 = vmatpush1.xpose.msra.mxu0 0.0
    %4132 = vmatprep.subr.mxu0 0.0
    %4133 = vmatpush1.xpose.msra.mxu0 0.0
    %4134 = vmatprep.subr.mxu0 0.0
    %4135 = vmatpush1.xpose.msra.mxu0 0.0
    %4136 = vmatprep.subr.mxu0 0.0
    %4137 = vmatpush1.xpose.msra.mxu0 0.0
    %4138 = vmatprep.subr.mxu0 0.0
    %4139 = vmatpush1.xpose.msra.mxu0 0.0
    %4140 = vmatprep.subr.mxu0 0.0
    %4141 = vmatpush1.xpose.msra.mxu0 0.0
    %4142 = vmatprep.subr.mxu0 0.0
    %4143 = vmatpush1.xpose.msra.mxu0 0.0
    %4144 = vmatprep.subr.mxu0 0.0
    %4145 = vmatpush1.xpose.msra.mxu0 0.0
    %4146 = vmatprep.subr.mxu0 0.0
    %4147 = vmatpush1.xpose.msra.mxu0 0.0
    %4148 = vmatprep.subr.mxu0 0.0
    %4149 = vmatpush1.xpose.msra.mxu0 0.0
    %4150 = vmatprep.subr.mxu0 0.0
    %4151 = vmatpush1.xpose.msra.mxu0 0.0
    %4152 = vmatprep.subr.mxu0 0.0
    %4153 = vmatpush1.xpose.msra.mxu0 0.0
    %4154 = vmatprep.subr.mxu0 0.0
    %4155 = vmatpush1.xpose.msra.mxu0 0.0
    %4156 = vmatprep.subr.mxu0 0.0
    %4157 = vmatpush1.xpose.msra.mxu0 0.0
    %4158 = vmatprep.subr.mxu0 0.0
    %4159 = vmatpush1.xpose.msra.mxu0 0.0
    %4160 = vmatprep.subr.mxu0 0.0
    %4161 = vmatpush1.xpose.msra.mxu0 0.0
    %4162 = vmatprep.subr.mxu0 0.0
    %4163 = vmatpush1.xpose.msra.mxu0 0.0
    %4164 = vmatprep.subr.mxu0 0.0
    %4165 = vmatpush1.xpose.msra.mxu0 0.0
    %4166 = vmatprep.mubr.f32.mxu0 0.0
    %v4167 = vand.u32 %v3725, 4294901760
    %4168 = vmatmul.mubr.f32.gmra.mrb[0].mxu0 %v4167
    %v4169 = vpop.f32.mrb[0].mxu0
    %v4170 = vadd.f32 %v4098, %v4169
    %v4171 = vpop.f32.mrb[0].mxu0
    %4172 = vdwg.mxu0
    %v4174 = vsel %vm31, %v2376, 0
    %4176 = vmatprep.subr.mxu0 0.0
    %v4177 = vand.u32 %v4174, 4294901760
    %4178 = vmatpush1.xpose.msra.mxu0 %v4177
    %4179 = vmatprep.subr.mxu0 0.0
    %4180 = vmatpush1.xpose.msra.mxu0 0.0
    %4181 = vmatprep.subr.mxu0 0.0
    %4182 = vmatpush1.xpose.msra.mxu0 0.0
    %4183 = vmatprep.subr.mxu0 0.0
    %4184 = vmatpush1.xpose.msra.mxu0 0.0
    %4185 = vmatprep.subr.mxu0 0.0
    %4186 = vmatpush1.xpose.msra.mxu0 0.0
    %4187 = vmatprep.subr.mxu0 0.0
    %4188 = vmatpush1.xpose.msra.mxu0 0.0
    %4189 = vmatprep.subr.mxu0 0.0
    %4190 = vmatpush1.xpose.msra.mxu0 0.0
    %4191 = vmatprep.subr.mxu0 0.0
    %4192 = vmatpush1.xpose.msra.mxu0 0.0
    %4193 = vmatprep.subr.mxu0 0.0
    %4194 = vmatpush1.xpose.msra.mxu0 0.0
    %4195 = vmatprep.subr.mxu0 0.0
    %4196 = vmatpush1.xpose.msra.mxu0 0.0
    %4197 = vmatprep.subr.mxu0 0.0
    %4198 = vmatpush1.xpose.msra.mxu0 0.0
    %4199 = vmatprep.subr.mxu0 0.0
    %4200 = vmatpush1.xpose.msra.mxu0 0.0
    %4201 = vmatprep.subr.mxu0 0.0
    %4202 = vmatpush1.xpose.msra.mxu0 0.0
    %4203 = vmatprep.subr.mxu0 0.0
    %4204 = vmatpush1.xpose.msra.mxu0 0.0
    %4205 = vmatprep.subr.mxu0 0.0
    %4206 = vmatpush1.xpose.msra.mxu0 0.0
    %4207 = vmatprep.subr.mxu0 0.0
    %4208 = vmatpush1.xpose.msra.mxu0 0.0
    %4209 = vmatprep.subr.mxu0 0.0
    %4210 = vmatpush1.xpose.msra.mxu0 0.0
    %4211 = vmatprep.subr.mxu0 0.0
    %4212 = vmatpush1.xpose.msra.mxu0 0.0
    %4213 = vmatprep.subr.mxu0 0.0
    %4214 = vmatpush1.xpose.msra.mxu0 0.0
    %4215 = vmatprep.subr.mxu0 0.0
    %4216 = vmatpush1.xpose.msra.mxu0 0.0
    %4217 = vmatprep.subr.mxu0 0.0
    %4218 = vmatpush1.xpose.msra.mxu0 0.0
    %4219 = vmatprep.subr.mxu0 0.0
    %4220 = vmatpush1.xpose.msra.mxu0 0.0
    %4221 = vmatprep.subr.mxu0 0.0
    %4222 = vmatpush1.xpose.msra.mxu0 0.0
    %4223 = vmatprep.subr.mxu0 0.0
    %4224 = vmatpush1.xpose.msra.mxu0 0.0
    %4225 = vmatprep.subr.mxu0 0.0
    %4226 = vmatpush1.xpose.msra.mxu0 0.0
    %4227 = vmatprep.subr.mxu0 0.0
    %4228 = vmatpush1.xpose.msra.mxu0 0.0
    %4229 = vmatprep.subr.mxu0 0.0
    %4230 = vmatpush1.xpose.msra.mxu0 0.0
    %4231 = vmatprep.subr.mxu0 0.0
    %4232 = vmatpush1.xpose.msra.mxu0 0.0
    %4233 = vmatprep.subr.mxu0 0.0
    %4234 = vmatpush1.xpose.msra.mxu0 0.0
    %4235 = vmatprep.subr.mxu0 0.0
    %4236 = vmatpush1.xpose.msra.mxu0 0.0
    %4237 = vmatprep.subr.mxu0 0.0
    %4238 = vmatpush1.xpose.msra.mxu0 0.0
    %4239 = vmatprep.subr.mxu0 0.0
    %4240 = vmatpush1.xpose.msra.mxu0 0.0
    %4241 = vmatprep.mubr.f32.mxu0 0.0
    %v4242 = vand.u32 %v4174, 4294901760
    %v4243 = vsub.f32 %v4174, %v4242
    %v4244 = vand.u32 %v4243, 4294901760
    %v4245 = vsub.f32 %v4243, %v4244
    %v4246 = vand.u32 %v4245, 4294901760
    %4247 = vmatmul.mubr.f32.gmra.mrb[0].mxu0 %v4246
    %v4248 = vpop.f32.mrb[0].mxu0
    %v4249 = vadd.f32 0.0, %v4248
    %v4250 = vpop.f32.mrb[0].mxu0
    %4251 = vdwg.mxu0
    %4252 = vmatprep.subr.mxu0 0.0
    %v4253 = vand.u32 %v4174, 4294901760
    %v4254 = vsub.f32 %v4174, %v4253
    %v4255 = vand.u32 %v4254, 4294901760
    %v4256 = vsub.f32 %v4254, %v4255
    %v4257 = vand.u32 %v4256, 4294901760
    %4258 = vmatpush1.xpose.msra.mxu0 %v4257
    %4259 = vmatprep.subr.mxu0 0.0
    %4260 = vmatpush1.xpose.msra.mxu0 0.0
    %4261 = vmatprep.subr.mxu0 0.0
    %4262 = vmatpush1.xpose.msra.mxu0 0.0
    %4263 = vmatprep.subr.mxu0 0.0
    %4264 = vmatpush1.xpose.msra.mxu0 0.0
    %4265 = vmatprep.subr.mxu0 0.0
    %4266 = vmatpush1.xpose.msra.mxu0 0.0
    %4267 = vmatprep.subr.mxu0 0.0
    %4268 = vmatpush1.xpose.msra.mxu0 0.0
    %4269 = vmatprep.subr.mxu0 0.0
    %4270 = vmatpush1.xpose.msra.mxu0 0.0
    %4271 = vmatprep.subr.mxu0 0.0
    %4272 = vmatpush1.xpose.msra.mxu0 0.0
    %4273 = vmatprep.subr.mxu0 0.0
    %4274 = vmatpush1.xpose.msra.mxu0 0.0
    %4275 = vmatprep.subr.mxu0 0.0
    %4276 = vmatpush1.xpose.msra.mxu0 0.0
    %4277 = vmatprep.subr.mxu0 0.0
    %4278 = vmatpush1.xpose.msra.mxu0 0.0
    %4279 = vmatprep.subr.mxu0 0.0
    %4280 = vmatpush1.xpose.msra.mxu0 0.0
    %4281 = vmatprep.subr.mxu0 0.0
    %4282 = vmatpush1.xpose.msra.mxu0 0.0
    %4283 = vmatprep.subr.mxu0 0.0
    %4284 = vmatpush1.xpose.msra.mxu0 0.0
    %4285 = vmatprep.subr.mxu0 0.0
    %4286 = vmatpush1.xpose.msra.mxu0 0.0
    %4287 = vmatprep.subr.mxu0 0.0
    %4288 = vmatpush1.xpose.msra.mxu0 0.0
    %4289 = vmatprep.subr.mxu0 0.0
    %4290 = vmatpush1.xpose.msra.mxu0 0.0
    %4291 = vmatprep.subr.mxu0 0.0
    %4292 = vmatpush1.xpose.msra.mxu0 0.0
    %4293 = vmatprep.subr.mxu0 0.0
    %4294 = vmatpush1.xpose.msra.mxu0 0.0
    %4295 = vmatprep.subr.mxu0 0.0
    %4296 = vmatpush1.xpose.msra.mxu0 0.0
    %4297 = vmatprep.subr.mxu0 0.0
    %4298 = vmatpush1.xpose.msra.mxu0 0.0
    %4299 = vmatprep.subr.mxu0 0.0
    %4300 = vmatpush1.xpose.msra.mxu0 0.0
    %4301 = vmatprep.subr.mxu0 0.0
    %4302 = vmatpush1.xpose.msra.mxu0 0.0
    %4303 = vmatprep.subr.mxu0 0.0
    %4304 = vmatpush1.xpose.msra.mxu0 0.0
    %4305 = vmatprep.subr.mxu0 0.0
    %4306 = vmatpush1.xpose.msra.mxu0 0.0
    %4307 = vmatprep.subr.mxu0 0.0
    %4308 = vmatpush1.xpose.msra.mxu0 0.0
    %4309 = vmatprep.subr.mxu0 0.0
    %4310 = vmatpush1.xpose.msra.mxu0 0.0
    %4311 = vmatprep.subr.mxu0 0.0
    %4312 = vmatpush1.xpose.msra.mxu0 0.0
    %4313 = vmatprep.subr.mxu0 0.0
    %4314 = vmatpush1.xpose.msra.mxu0 0.0
    %4315 = vmatprep.subr.mxu0 0.0
    %4316 = vmatpush1.xpose.msra.mxu0 0.0
    %4317 = vmatprep.subr.mxu0 0.0
    %4318 = vmatpush1.xpose.msra.mxu0 0.0
    %4319 = vmatprep.subr.mxu0 0.0
    %4320 = vmatpush1.xpose.msra.mxu0 0.0
    %4321 = vmatprep.mubr.f32.mxu0 0.0
    %v4322 = vand.u32 %v4174, 4294901760
    %4323 = vmatmul.mubr.f32.gmra.mrb[0].mxu0 %v4322
    %v4324 = vpop.f32.mrb[0].mxu0
    %v4325 = vadd.f32 %v4249, %v4324
    %v4326 = vpop.f32.mrb[0].mxu0
    %4327 = vdwg.mxu0
    %4328 = vmatprep.subr.mxu0 0.0
    %v4329 = vand.u32 %v4174, 4294901760
    %v4330 = vsub.f32 %v4174, %v4329
    %4331 = vmatpush1.xpose.msra.mxu0 %v4330
    %4332 = vmatprep.subr.mxu0 0.0
    %4333 = vmatpush1.xpose.msra.mxu0 0.0
    %4334 = vmatprep.subr.mxu0 0.0
    %4335 = vmatpush1.xpose.msra.mxu0 0.0
    %4336 = vmatprep.subr.mxu0 0.0
    %4337 = vmatpush1.xpose.msra.mxu0 0.0
    %4338 = vmatprep.subr.mxu0 0.0
    %4339 = vmatpush1.xpose.msra.mxu0 0.0
    %4340 = vmatprep.subr.mxu0 0.0
    %4341 = vmatpush1.xpose.msra.mxu0 0.0
    %4342 = vmatprep.subr.mxu0 0.0
    %4343 = vmatpush1.xpose.msra.mxu0 0.0
    %4344 = vmatprep.subr.mxu0 0.0
    %4345 = vmatpush1.xpose.msra.mxu0 0.0
    %4346 = vmatprep.subr.mxu0 0.0
    %4347 = vmatpush1.xpose.msra.mxu0 0.0
    %4348 = vmatprep.subr.mxu0 0.0
    %4349 = vmatpush1.xpose.msra.mxu0 0.0
    %4350 = vmatprep.subr.mxu0 0.0
    %4351 = vmatpush1.xpose.msra.mxu0 0.0
    %4352 = vmatprep.subr.mxu0 0.0
    %4353 = vmatpush1.xpose.msra.mxu0 0.0
    %4354 = vmatprep.subr.mxu0 0.0
    %4355 = vmatpush1.xpose.msra.mxu0 0.0
    %4356 = vmatprep.subr.mxu0 0.0
    %4357 = vmatpush1.xpose.msra.mxu0 0.0
    %4358 = vmatprep.subr.mxu0 0.0
    %4359 = vmatpush1.xpose.msra.mxu0 0.0
    %4360 = vmatprep.subr.mxu0 0.0
    %4361 = vmatpush1.xpose.msra.mxu0 0.0
    %4362 = vmatprep.subr.mxu0 0.0
    %4363 = vmatpush1.xpose.msra.mxu0 0.0
    %4364 = vmatprep.subr.mxu0 0.0
    %4365 = vmatpush1.xpose.msra.mxu0 0.0
    %4366 = vmatprep.subr.mxu0 0.0
    %4367 = vmatpush1.xpose.msra.mxu0 0.0
    %4368 = vmatprep.subr.mxu0 0.0
    %4369 = vmatpush1.xpose.msra.mxu0 0.0
    %4370 = vmatprep.subr.mxu0 0.0
    %4371 = vmatpush1.xpose.msra.mxu0 0.0
    %4372 = vmatprep.subr.mxu0 0.0
    %4373 = vmatpush1.xpose.msra.mxu0 0.0
    %4374 = vmatprep.subr.mxu0 0.0
    %4375 = vmatpush1.xpose.msra.mxu0 0.0
    %4376 = vmatprep.subr.mxu0 0.0
    %4377 = vmatpush1.xpose.msra.mxu0 0.0
    %4378 = vmatprep.subr.mxu0 0.0
    %4379 = vmatpush1.xpose.msra.mxu0 0.0
    %4380 = vmatprep.subr.mxu0 0.0
    %4381 = vmatpush1.xpose.msra.mxu0 0.0
    %4382 = vmatprep.subr.mxu0 0.0
    %4383 = vmatpush1.xpose.msra.mxu0 0.0
    %4384 = vmatprep.subr.mxu0 0.0
    %4385 = vmatpush1.xpose.msra.mxu0 0.0
    %4386 = vmatprep.subr.mxu0 0.0
    %4387 = vmatpush1.xpose.msra.mxu0 0.0
    %4388 = vmatprep.subr.mxu0 0.0
    %4389 = vmatpush1.xpose.msra.mxu0 0.0
    %4390 = vmatprep.subr.mxu0 0.0
    %4391 = vmatpush1.xpose.msra.mxu0 0.0
    %4392 = vmatprep.subr.mxu0 0.0
    %4393 = vmatpush1.xpose.msra.mxu0 0.0
    %4394 = vmatprep.mubr.f32.mxu0 0.0
    %v4395 = vand.u32 %v4174, 4294901760
    %v4396 = vsub.f32 %v4174, %v4395
    %4397 = vmatmul.mubr.f32.gmra.mrb[0].mxu0 %v4396
    %v4398 = vpop.f32.mrb[0].mxu0
    %v4399 = vadd.f32 %v4325, %v4398
    %v4400 = vpop.f32.mrb[0].mxu0
    %4401 = vdwg.mxu0
    %4402 = vmatprep.subr.mxu0 0.0
    %v4403 = vand.u32 %v4174, 4294901760
    %4404 = vmatpush1.xpose.msra.mxu0 %v4403
    %4405 = vmatprep.subr.mxu0 0.0
    %4406 = vmatpush1.xpose.msra.mxu0 0.0
    %4407 = vmatprep.subr.mxu0 0.0
    %4408 = vmatpush1.xpose.msra.mxu0 0.0
    %4409 = vmatprep.subr.mxu0 0.0
    %4410 = vmatpush1.xpose.msra.mxu0 0.0
    %4411 = vmatprep.subr.mxu0 0.0
    %4412 = vmatpush1.xpose.msra.mxu0 0.0
    %4413 = vmatprep.subr.mxu0 0.0
    %4414 = vmatpush1.xpose.msra.mxu0 0.0
    %4415 = vmatprep.subr.mxu0 0.0
    %4416 = vmatpush1.xpose.msra.mxu0 0.0
    %4417 = vmatprep.subr.mxu0 0.0
    %4418 = vmatpush1.xpose.msra.mxu0 0.0
    %4419 = vmatprep.subr.mxu0 0.0
    %4420 = vmatpush1.xpose.msra.mxu0 0.0
    %4421 = vmatprep.subr.mxu0 0.0
    %4422 = vmatpush1.xpose.msra.mxu0 0.0
    %4423 = vmatprep.subr.mxu0 0.0
    %4424 = vmatpush1.xpose.msra.mxu0 0.0
    %4425 = vmatprep.subr.mxu0 0.0
    %4426 = vmatpush1.xpose.msra.mxu0 0.0
    %4427 = vmatprep.subr.mxu0 0.0
    %4428 = vmatpush1.xpose.msra.mxu0 0.0
    %4429 = vmatprep.subr.mxu0 0.0
    %4430 = vmatpush1.xpose.msra.mxu0 0.0
    %4431 = vmatprep.subr.mxu0 0.0
    %4432 = vmatpush1.xpose.msra.mxu0 0.0
    %4433 = vmatprep.subr.mxu0 0.0
    %4434 = vmatpush1.xpose.msra.mxu0 0.0
    %4435 = vmatprep.subr.mxu0 0.0
    %4436 = vmatpush1.xpose.msra.mxu0 0.0
    %4437 = vmatprep.subr.mxu0 0.0
    %4438 = vmatpush1.xpose.msra.mxu0 0.0
    %4439 = vmatprep.subr.mxu0 0.0
    %4440 = vmatpush1.xpose.msra.mxu0 0.0
    %4441 = vmatprep.subr.mxu0 0.0
    %4442 = vmatpush1.xpose.msra.mxu0 0.0
    %4443 = vmatprep.subr.mxu0 0.0
    %4444 = vmatpush1.xpose.msra.mxu0 0.0
    %4445 = vmatprep.subr.mxu0 0.0
    %4446 = vmatpush1.xpose.msra.mxu0 0.0
    %4447 = vmatprep.subr.mxu0 0.0
    %4448 = vmatpush1.xpose.msra.mxu0 0.0
    %4449 = vmatprep.subr.mxu0 0.0
    %4450 = vmatpush1.xpose.msra.mxu0 0.0
    %4451 = vmatprep.subr.mxu0 0.0
    %4452 = vmatpush1.xpose.msra.mxu0 0.0
    %4453 = vmatprep.subr.mxu0 0.0
    %4454 = vmatpush1.xpose.msra.mxu0 0.0
    %4455 = vmatprep.subr.mxu0 0.0
    %4456 = vmatpush1.xpose.msra.mxu0 0.0
    %4457 = vmatprep.subr.mxu0 0.0
    %4458 = vmatpush1.xpose.msra.mxu0 0.0
    %4459 = vmatprep.subr.mxu0 0.0
    %4460 = vmatpush1.xpose.msra.mxu0 0.0
    %4461 = vmatprep.subr.mxu0 0.0
    %4462 = vmatpush1.xpose.msra.mxu0 0.0
    %4463 = vmatprep.subr.mxu0 0.0
    %4464 = vmatpush1.xpose.msra.mxu0 0.0
    %4465 = vmatprep.subr.mxu0 0.0
    %4466 = vmatpush1.xpose.msra.mxu0 0.0
    %4467 = vmatprep.mubr.f32.mxu0 0.0
    %v4468 = vand.u32 %v4174, 4294901760
    %v4469 = vsub.f32 %v4174, %v4468
    %v4470 = vand.u32 %v4469, 4294901760
    %4471 = vmatmul.mubr.f32.gmra.mrb[0].mxu0 %v4470
    %v4472 = vpop.f32.mrb[0].mxu0
    %v4473 = vadd.f32 %v4399, %v4472
    %v4474 = vpop.f32.mrb[0].mxu0
    %4475 = vdwg.mxu0
    %4476 = vmatprep.subr.mxu0 0.0
    %v4477 = vand.u32 %v4174, 4294901760
    %v4478 = vsub.f32 %v4174, %v4477
    %v4479 = vand.u32 %v4478, 4294901760
    %4480 = vmatpush1.xpose.msra.mxu0 %v4479
    %4481 = vmatprep.subr.mxu0 0.0
    %4482 = vmatpush1.xpose.msra.mxu0 0.0
    %4483 = vmatprep.subr.mxu0 0.0
    %4484 = vmatpush1.xpose.msra.mxu0 0.0
    %4485 = vmatprep.subr.mxu0 0.0
    %4486 = vmatpush1.xpose.msra.mxu0 0.0
    %4487 = vmatprep.subr.mxu0 0.0
    %4488 = vmatpush1.xpose.msra.mxu0 0.0
    %4489 = vmatprep.subr.mxu0 0.0
    %4490 = vmatpush1.xpose.msra.mxu0 0.0
    %4491 = vmatprep.subr.mxu0 0.0
    %4492 = vmatpush1.xpose.msra.mxu0 0.0
    %4493 = vmatprep.subr.mxu0 0.0
    %4494 = vmatpush1.xpose.msra.mxu0 0.0
    %4495 = vmatprep.subr.mxu0 0.0
    %4496 = vmatpush1.xpose.msra.mxu0 0.0
    %4497 = vmatprep.subr.mxu0 0.0
    %4498 = vmatpush1.xpose.msra.mxu0 0.0
    %4499 = vmatprep.subr.mxu0 0.0
    %4500 = vmatpush1.xpose.msra.mxu0 0.0
    %4501 = vmatprep.subr.mxu0 0.0
    %4502 = vmatpush1.xpose.msra.mxu0 0.0
    %4503 = vmatprep.subr.mxu0 0.0
    %4504 = vmatpush1.xpose.msra.mxu0 0.0
    %4505 = vmatprep.subr.mxu0 0.0
    %4506 = vmatpush1.xpose.msra.mxu0 0.0
    %4507 = vmatprep.subr.mxu0 0.0
    %4508 = vmatpush1.xpose.msra.mxu0 0.0
    %4509 = vmatprep.subr.mxu0 0.0
    %4510 = vmatpush1.xpose.msra.mxu0 0.0
    %4511 = vmatprep.subr.mxu0 0.0
    %4512 = vmatpush1.xpose.msra.mxu0 0.0
    %4513 = vmatprep.subr.mxu0 0.0
    %4514 = vmatpush1.xpose.msra.mxu0 0.0
    %4515 = vmatprep.subr.mxu0 0.0
    %4516 = vmatpush1.xpose.msra.mxu0 0.0
    %4517 = vmatprep.subr.mxu0 0.0
    %4518 = vmatpush1.xpose.msra.mxu0 0.0
    %4519 = vmatprep.subr.mxu0 0.0
    %4520 = vmatpush1.xpose.msra.mxu0 0.0
    %4521 = vmatprep.subr.mxu0 0.0
    %4522 = vmatpush1.xpose.msra.mxu0 0.0
    %4523 = vmatprep.subr.mxu0 0.0
    %4524 = vmatpush1.xpose.msra.mxu0 0.0
    %4525 = vmatprep.subr.mxu0 0.0
    %4526 = vmatpush1.xpose.msra.mxu0 0.0
    %4527 = vmatprep.subr.mxu0 0.0
    %4528 = vmatpush1.xpose.msra.mxu0 0.0
    %4529 = vmatprep.subr.mxu0 0.0
    %4530 = vmatpush1.xpose.msra.mxu0 0.0
    %4531 = vmatprep.subr.mxu0 0.0
    %4532 = vmatpush1.xpose.msra.mxu0 0.0
    %4533 = vmatprep.subr.mxu0 0.0
    %4534 = vmatpush1.xpose.msra.mxu0 0.0
    %4535 = vmatprep.subr.mxu0 0.0
    %4536 = vmatpush1.xpose.msra.mxu0 0.0
    %4537 = vmatprep.subr.mxu0 0.0
    %4538 = vmatpush1.xpose.msra.mxu0 0.0
    %4539 = vmatprep.subr.mxu0 0.0
    %4540 = vmatpush1.xpose.msra.mxu0 0.0
    %4541 = vmatprep.subr.mxu0 0.0
    %4542 = vmatpush1.xpose.msra.mxu0 0.0
    %4543 = vmatprep.mubr.f32.mxu0 0.0
    %v4544 = vand.u32 %v4174, 4294901760
    %4545 = vmatmul.mubr.f32.gmra.mrb[0].mxu0 %v4544
    %v4546 = vpop.f32.mrb[0].mxu0
    %v4547 = vadd.f32 %v4473, %v4546
    %v4548 = vpop.f32.mrb[0].mxu0
    %4549 = vdwg.mxu0
    %4550 = vmatprep.subr.mxu0 0.0
    %v4551 = vand.u32 %v4174, 4294901760
    %4552 = vmatpush1.xpose.msra.mxu0 %v4551
    %4553 = vmatprep.subr.mxu0 0.0
    %4554 = vmatpush1.xpose.msra.mxu0 0.0
    %4555 = vmatprep.subr.mxu0 0.0
    %4556 = vmatpush1.xpose.msra.mxu0 0.0
    %4557 = vmatprep.subr.mxu0 0.0
    %4558 = vmatpush1.xpose.msra.mxu0 0.0
    %4559 = vmatprep.subr.mxu0 0.0
    %4560 = vmatpush1.xpose.msra.mxu0 0.0
    %4561 = vmatprep.subr.mxu0 0.0
    %4562 = vmatpush1.xpose.msra.mxu0 0.0
    %4563 = vmatprep.subr.mxu0 0.0
    %4564 = vmatpush1.xpose.msra.mxu0 0.0
    %4565 = vmatprep.subr.mxu0 0.0
    %4566 = vmatpush1.xpose.msra.mxu0 0.0
    %4567 = vmatprep.subr.mxu0 0.0
    %4568 = vmatpush1.xpose.msra.mxu0 0.0
    %4569 = vmatprep.subr.mxu0 0.0
    %4570 = vmatpush1.xpose.msra.mxu0 0.0
    %4571 = vmatprep.subr.mxu0 0.0
    %4572 = vmatpush1.xpose.msra.mxu0 0.0
    %4573 = vmatprep.subr.mxu0 0.0
    %4574 = vmatpush1.xpose.msra.mxu0 0.0
    %4575 = vmatprep.subr.mxu0 0.0
    %4576 = vmatpush1.xpose.msra.mxu0 0.0
    %4577 = vmatprep.subr.mxu0 0.0
    %4578 = vmatpush1.xpose.msra.mxu0 0.0
    %4579 = vmatprep.subr.mxu0 0.0
    %4580 = vmatpush1.xpose.msra.mxu0 0.0
    %4581 = vmatprep.subr.mxu0 0.0
    %4582 = vmatpush1.xpose.msra.mxu0 0.0
    %4583 = vmatprep.subr.mxu0 0.0
    %4584 = vmatpush1.xpose.msra.mxu0 0.0
    %4585 = vmatprep.subr.mxu0 0.0
    %4586 = vmatpush1.xpose.msra.mxu0 0.0
    %4587 = vmatprep.subr.mxu0 0.0
    %4588 = vmatpush1.xpose.msra.mxu0 0.0
    %4589 = vmatprep.subr.mxu0 0.0
    %4590 = vmatpush1.xpose.msra.mxu0 0.0
    %4591 = vmatprep.subr.mxu0 0.0
    %4592 = vmatpush1.xpose.msra.mxu0 0.0
    %4593 = vmatprep.subr.mxu0 0.0
    %4594 = vmatpush1.xpose.msra.mxu0 0.0
    %4595 = vmatprep.subr.mxu0 0.0
    %4596 = vmatpush1.xpose.msra.mxu0 0.0
    %4597 = vmatprep.subr.mxu0 0.0
    %4598 = vmatpush1.xpose.msra.mxu0 0.0
    %4599 = vmatprep.subr.mxu0 0.0
    %4600 = vmatpush1.xpose.msra.mxu0 0.0
    %4601 = vmatprep.subr.mxu0 0.0
    %4602 = vmatpush1.xpose.msra.mxu0 0.0
    %4603 = vmatprep.subr.mxu0 0.0
    %4604 = vmatpush1.xpose.msra.mxu0 0.0
    %4605 = vmatprep.subr.mxu0 0.0
    %4606 = vmatpush1.xpose.msra.mxu0 0.0
    %4607 = vmatprep.subr.mxu0 0.0
    %4608 = vmatpush1.xpose.msra.mxu0 0.0
    %4609 = vmatprep.subr.mxu0 0.0
    %4610 = vmatpush1.xpose.msra.mxu0 0.0
    %4611 = vmatprep.subr.mxu0 0.0
    %4612 = vmatpush1.xpose.msra.mxu0 0.0
    %4613 = vmatprep.subr.mxu0 0.0
    %4614 = vmatpush1.xpose.msra.mxu0 0.0
    %4615 = vmatprep.mubr.f32.mxu0 0.0
    %v4616 = vand.u32 %v4174, 4294901760
    %4617 = vmatmul.mubr.f32.gmra.mrb[0].mxu0 %v4616
    %v4618 = vpop.f32.mrb[0].mxu0
    %v4619 = vadd.f32 %v4547, %v4618
    %v4620 = vpop.f32.mrb[0].mxu0
    %4621 = vdwg.mxu0
    %v4622 = vsel %vm16, -1e+30, %v2823
    %v4623 = vsel %vm16, -1e+30, %v3272
    %v4624 = vsel %vm16, -1e+30, %v3721
    %v4625 = vsel %vm16, -1e+30, %v4170
    %v4626 = vsel %vm16, -1e+30, %v4619
    %v4627 = vsel %vm2282, %v4622, -inf
    %4628 = vmax.xlane.f32.xlu0 %v4627
    %v4629 = vpop.xlane.xlu0 %4628
    %v4630 = vsel %vm2282, %v4623, -inf
    %4631 = vmax.xlane.f32.xlu0 %v4630
    %v4632 = vpop.xlane.xlu0 %4631
    %v4633 = vsel %vm2282, %v4624, -inf
    %4634 = vmax.xlane.f32.xlu0 %v4633
    %v4635 = vpop.xlane.xlu0 %4634
    %v4636 = vsel %vm2282, %v4625, -inf
    %4637 = vmax.xlane.f32.xlu0 %v4636
    %v4638 = vpop.xlane.xlu0 %4637
    %v4639 = vsel %vm2282, %v4626, -inf
    %4640 = vmax.xlane.f32.xlu0 %v4639
    %v4641 = vpop.xlane.xlu0 %4640
    %v4642 = vsub.f32 %v4622, %v4629
    %v4643 = vsub.f32 %v4623, %v4632
    %v4644 = vsub.f32 %v4624, %v4635
    %v4645 = vsub.f32 %v4625, %v4638
    %v4646 = vsub.f32 %v4626, %v4641
    %v4647 = vmul.f32 %v4642, 1.442695
    %v4648 = vpow.pop %v4647
    %v4649 = vmul.f32 %v4643, 1.442695
    %v4650 = vpow.pop %v4649
    %v4651 = vmul.f32 %v4644, 1.442695
    %v4652 = vpow.pop %v4651
    %v4653 = vmul.f32 %v4645, 1.442695
    %v4654 = vpow.pop %v4653
    %v4655 = vmul.f32 %v4646, 1.442695
    %v4656 = vpow.pop %v4655
    %v4657 = vsel %vm2282, %v4648, 0.0
    %4658 = vadd.xlane.f32.xlu0 %v4657
    %v4659 = vpop.xlane.xlu0 %4658
    %v4660 = vsel %vm2282, %v4650, 0.0
    %4661 = vadd.xlane.f32.xlu0 %v4660
    %v4662 = vpop.xlane.xlu0 %4661
    %v4663 = vsel %vm2282, %v4652, 0.0
    %4664 = vadd.xlane.f32.xlu0 %v4663
    %v4665 = vpop.xlane.xlu0 %4664
    %v4666 = vsel %vm2282, %v4654, 0.0
    %4667 = vadd.xlane.f32.xlu0 %v4666
    %v4668 = vpop.xlane.xlu0 %4667
    %v4669 = vsel %vm2282, %v4656, 0.0
    %4670 = vadd.xlane.f32.xlu0 %v4669
    %v4671 = vpop.xlane.xlu0 %4670
    %v4672 = vlog2.pop %v4659
    %v4673 = vmul.f32 %v4672, 0.6931472
    %v4674 = vlog2.pop %v4662
    %v4675 = vmul.f32 %v4674, 0.6931472
    %v4676 = vlog2.pop %v4665
    %v4677 = vmul.f32 %v4676, 0.6931472
    %v4678 = vlog2.pop %v4668
    %v4679 = vmul.f32 %v4678, 0.6931472
    %v4680 = vlog2.pop %v4671
    %v4681 = vmul.f32 %v4680, 0.6931472
    %v4682 = vadd.f32 %v4673, %v4629
    %v4683 = vadd.f32 %v4675, %v4632
    %v4684 = vadd.f32 %v4677, %v4635
    %v4685 = vadd.f32 %v4679, %v4638
    %v4686 = vadd.f32 %v4681, %v4641
    %v4687 = vsub.f32 %v4682, %v4622
    %v4688 = vsub.f32 %v4683, %v4623
    %v4689 = vsub.f32 %v4684, %v4624
    %v4690 = vsub.f32 %v4685, %v4625
    %v4691 = vsub.f32 %v4686, %v4626
    %v4692 = vsel %vm25, %v4687, 0.0
    %v4693 = vsel %vm25, %v4688, 0.0
    %v4694 = vsel %vm25, %v4689, 0.0
    %v4695 = vsel %vm25, %v4690, 0.0
    %v4696 = vsel %vm25, %v4691, 0.0
    %v4697 = vsel %vm2282, %v4692, 0.0
    %v4698 = vsel %vm2282, %v4693, 0.0
    %v4699 = vadd.f32 %v4697, %v4698
    %v4700 = vsel %vm2282, %v4694, 0.0
    %v4701 = vadd.f32 %v4699, %v4700
    %v4702 = vsel %vm2282, %v4695, 0.0
    %v4703 = vadd.f32 %v4701, %v4702
    %v4704 = vsel %vm2282, %v4696, 0.0
    %v4705 = vadd.f32 %v4703, %v4704
    %4706 = vadd.xlane.f32.xlu0 %v4705
    %v4707 = vpop.xlane.xlu0 %4706
    %v4708 = vrot.slane %v4707, 4
    %v4709 = vadd.f32 %v4707, %v4708
    %v4710 = vrot.slane %v4709, 2
    %v4711 = vadd.f32 %v4709, %v4710
    %v4712 = vrot.slane %v4711, 1
    %v4713 = vadd.f32 %v4711, %v4712
    %s4714 = vtos %v4713
    %s4715 = sadd.f32 %s2371, %s4714
    %v4716 = vstv %s4715
    %vm4717 = vcmask 0
    %4718 = vst.msk [vmem:[#allocation2] sm:$0x1] %vm4717, %v4716
    // Predicated region
    $region10: #{mff_ft_forward.3} parent=1 // pred_check
      _
    $region11: #{mff_ft_forward.3} parent=1 // pred_check_branch
      %4720 = sbr.rel (0) target = $region13
    $region12: #{mff_ft_forward.3} parent=1 // pred_region
      %s4722 = ssub.s32 16, 16
      %4723 = vsyncadd [#allocation3], %s4722
      %s4725 = sshll.u32 [#allocation2], 4
      %s4726 = int_to_ptr.vmem [resolvable:$true] %s4725
      %4728 = dma.vmem_to_hbm [thread:$0]  %s4726, 16, %s2, [#allocation3]
    $region13: #{mff_ft_forward.3} parent=1 // pred_fallthru
      _
    // Predicated region
    $region14: #{mff_ft_forward.3} parent=1 // pred_check
      _
    $region15: #{mff_ft_forward.3} parent=1 // pred_check_branch
      %4730 = sbr.rel (0) target = $region17
    $region16: #{mff_ft_forward.3} parent=1 // pred_region
      %4731 = dma.done [#allocation3], 16
    $region17: #{mff_ft_forward.3} parent=1 // pred_fallthru
      _
    %4732 = vsyncpa [#allocation3], 1

// kernel: mff_ft_forward.2
$region0: #{mff_ft_forward.2}
  #allocation0 [shape = 'u32[]', space=smem, size = 0x4, offset = 0x4, fixed_abs, tag = 'smem constant byte address 0x4 - core index']
  #allocation1 [shape = 'u32[144,128]{1,0:T(1,128)}', space=vmem, size = 0x12000, scoped, tag = 'internal scratch']
  %s0 = inlined_call_operand.vmem [shape: f32[16,4], index: 0, kind: input, shape index: {}]
  %s1 = inlined_call_operand.vmem [shape: f32[16,4], index: 1, kind: input, shape index: {}]
  %s2 = inlined_call_operand.vmem [shape: f32[4,64], index: 2, kind: input, shape index: {}]
  %s3 = inlined_call_operand.vmem [shape: f32[4,64], index: 3, kind: input, shape index: {}]
  %s4 = inlined_call_operand.vmem [shape: f32[4,32], index: 4, kind: input, shape index: {}]
  %s5 = inlined_call_operand.vmem [shape: f32[2,5,8], index: 5, kind: input, shape index: {}]
  %s6 = inlined_call_operand.hbm [shape: f32[1,1], index: 6, kind: output, shape index: {0}]
  %s7 = inlined_call_operand.vmem [shape: f32[2,5,32], index: 7, kind: output, shape index: {1}]
  %s8 = inlined_call_operand.vmem [shape: f32[2,5,32], index: 8, kind: output, shape index: {2}]
  %s9 = inlined_call_operand.vmem [shape: f32[2,5,32], index: 9, kind: output, shape index: {3}]
  %s10 = inlined_call_operand.vmem [shape: f32[2,5,32], index: 10, kind: output, shape index: {4}]
  %s11 = inlined_call_operand.vmem [shape: f32[2,5,32], index: 11, kind: output, shape index: {5}]
  %s12 = inlined_call_operand.vmem [shape: f32[2,5,32], index: 12, kind: output, shape index: {6}]
  %13 = xla_tuple %s6, %s7, %s8, %s9, %s10, %s11, %s12
  %s14 = sld [smem:[#allocation0]]
  $region82: #{mff_ft_forward.2} parent=0
    _
  %s16 = ssub.s32 1, %s14
  %s17 = scalar_select 0, %s16, %s14
  $region1: #{mff_ft_forward.2} parent=0
    #allocation2 [shape = 'u8[512]{0}', space=vmem, size = 0x400, scoped, tag = 'output window, operand 0, single buffered']
    #allocation3 [shape = 's32[1]{0}', space=sflag, size = 0x4, scoped, tag = 'scoped memory for mff_ft_forward.2']
    %18 = vsyncpa [#allocation3], 0
    // Predicated region
    $region2: #{mff_ft_forward.2} parent=1 // pred_check
      _
    $region3: #{mff_ft_forward.2} parent=1 // pred_check_branch
      %20 = sbr.rel (0) target = $region5
    $region4: #{mff_ft_forward.2} parent=1 // pred_region
      _
    $region5: #{mff_ft_forward.2} parent=1 // pred_fallthru
      _
    // Predicated region
    $region6: #{mff_ft_forward.2} parent=1 // pred_check
      _
    $region7: #{mff_ft_forward.2} parent=1 // pred_check_branch
      %22 = sbr.rel (0) target = $region9
    $region8: #{mff_ft_forward.2} parent=1 // pred_region
      _
    $region9: #{mff_ft_forward.2} parent=1 // pred_fallthru
      _
    // Predicated region
    $region10: #{mff_ft_forward.2} parent=1 // pred_check
      _
    $region11: #{mff_ft_forward.2} parent=1 // pred_check_branch
      %24 = sbr.rel (0) target = $region13
    $region12: #{mff_ft_forward.2} parent=1 // pred_region
      _
    $region13: #{mff_ft_forward.2} parent=1 // pred_fallthru
      _
    // Predicated region
    $region14: #{mff_ft_forward.2} parent=1 // pred_check
      _
    $region15: #{mff_ft_forward.2} parent=1 // pred_check_branch
      %26 = sbr.rel (0) target = $region17
    $region16: #{mff_ft_forward.2} parent=1 // pred_region
      _
    $region17: #{mff_ft_forward.2} parent=1 // pred_fallthru
      _
    // Predicated region
    $region18: #{mff_ft_forward.2} parent=1 // pred_check
      _
    $region19: #{mff_ft_forward.2} parent=1 // pred_check_branch
      %28 = sbr.rel (0) target = $region21
    $region20: #{mff_ft_forward.2} parent=1 // pred_region
      _
    $region21: #{mff_ft_forward.2} parent=1 // pred_fallthru
      _
    // Predicated region
    $region22: #{mff_ft_forward.2} parent=1 // pred_check
      _
    $region23: #{mff_ft_forward.2} parent=1 // pred_check_branch
      %30 = sbr.rel (0) target = $region25
    $region24: #{mff_ft_forward.2} parent=1 // pred_region
      _
    $region25: #{mff_ft_forward.2} parent=1 // pred_fallthru
      _
    %v31 = vld [vmem:[%s0] sm:$0xff]
    %v32 = vld [vmem:[%s0 + $0x8] sm:$0xff]
    %v33 = vld [vmem:[%s1] sm:$0xff]
    %v34 = vld [vmem:[%s1 + $0x8] sm:$0xff]
    %v35 = vld [vmem:[%s2] sm:$0xf]
    %vm36 = vcmask 31744
    %v38 = vsel %vm36, %v31, 0
    %v41 = vsel %vm36, %v32, 0
    %vm43 = vcmask 1043456
    %v45 = vsel %vm43, %v35, 0
    %47 = vmatprep.subr.mxu0 0.0
    %v48 = vand.u32 %v45, 4294901760
    %49 = vmatpush1.msra.mxu0 %v48
    %50 = vmatprep.subr.mxu0 0.0
    %51 = vmatpush1.msra.mxu0 0.0
    %52 = vmatprep.subr.mxu0 0.0
    %53 = vmatpush1.msra.mxu0 0.0
    %54 = vmatprep.subr.mxu0 0.0
    %55 = vmatpush1.msra.mxu0 0.0
    %56 = vmatprep.subr.mxu0 0.0
    %57 = vmatpush1.msra.mxu0 0.0
    %58 = vmatprep.subr.mxu0 0.0
    %59 = vmatpush1.msra.mxu0 0.0
    %60 = vmatprep.subr.mxu0 0.0
    %61 = vmatpush1.msra.mxu0 0.0
    %62 = vmatprep.subr.mxu0 0.0
    %63 = vmatpush1.msra.mxu0 0.0
    %64 = vmatprep.subr.mxu0 0.0
    %65 = vmatpush1.msra.mxu0 0.0
    %66 = vmatprep.subr.mxu0 0.0
    %67 = vmatpush1.msra.mxu0 0.0
    %68 = vmatprep.subr.mxu0 0.0
    %69 = vmatpush1.msra.mxu0 0.0
    %70 = vmatprep.subr.mxu0 0.0
    %71 = vmatpush1.msra.mxu0 0.0
    %72 = vmatprep.subr.mxu0 0.0
    %73 = vmatpush1.msra.mxu0 0.0
    %74 = vmatprep.subr.mxu0 0.0
    %75 = vmatpush1.msra.mxu0 0.0
    %76 = vmatprep.subr.mxu0 0.0
    %77 = vmatpush1.msra.mxu0 0.0
    %78 = vmatprep.subr.mxu0 0.0
    %79 = vmatpush1.msra.mxu0 0.0
    %80 = vmatprep.subr.mxu0 0.0
    %81 = vmatpush1.msra.mxu0 0.0
    %82 = vmatprep.subr.mxu0 0.0
    %83 = vmatpush1.msra.mxu0 0.0
    %84 = vmatprep.subr.mxu0 0.0
    %85 = vmatpush1.msra.mxu0 0.0
    %86 = vmatprep.subr.mxu0 0.0
    %87 = vmatpush1.msra.mxu0 0.0
    %88 = vmatprep.subr.mxu0 0.0
    %89 = vmatpush1.msra.mxu0 0.0
    %90 = vmatprep.subr.mxu0 0.0
    %91 = vmatpush1.msra.mxu0 0.0
    %92 = vmatprep.subr.mxu0 0.0
    %93 = vmatpush1.msra.mxu0 0.0
    %94 = vmatprep.subr.mxu0 0.0
    %95 = vmatpush1.msra.mxu0 0.0
    %96 = vmatprep.subr.mxu0 0.0
    %97 = vmatpush1.msra.mxu0 0.0
    %98 = vmatprep.subr.mxu0 0.0
    %99 = vmatpush1.msra.mxu0 0.0
    %100 = vmatprep.subr.mxu0 0.0
    %101 = vmatpush1.msra.mxu0 0.0
    %102 = vmatprep.subr.mxu0 0.0
    %103 = vmatpush1.msra.mxu0 0.0
    %104 = vmatprep.subr.mxu0 0.0
    %105 = vmatpush1.msra.mxu0 0.0
    %106 = vmatprep.subr.mxu0 0.0
    %107 = vmatpush1.msra.mxu0 0.0
    %108 = vmatprep.subr.mxu0 0.0
    %109 = vmatpush1.msra.mxu0 0.0
    %110 = vmatprep.subr.mxu0 0.0
    %111 = vmatpush1.msra.mxu0 0.0
    %112 = vmatprep.mubr.f32.mxu0 0.0
    %v113 = vand.u32 %v38, 4294901760
    %v114 = vsub.f32 %v38, %v113
    %v115 = vand.u32 %v114, 4294901760
    %v116 = vsub.f32 %v114, %v115
    %v117 = vand.u32 %v116, 4294901760
    %118 = vmatmul.mubr.f32.gmra.mrb[0].mxu0 %v117
    %v119 = vpop.f32.mrb[0].mxu0
    %v120 = vadd.f32 0.0, %v119
    %v121 = vpop.f32.mrb[0].mxu0
    %122 = vmatprep.mubr.f32.mxu0 0.0
    %v123 = vand.u32 %v41, 4294901760
    %v124 = vsub.f32 %v41, %v123
    %v125 = vand.u32 %v124, 4294901760
    %v126 = vsub.f32 %v124, %v125
    %v127 = vand.u32 %v126, 4294901760
    %128 = vmatmul.mubr.f32.gmra.mrb[0].mxu0 %v127
    %v129 = vpop.f32.mrb[0].mxu0
    %v130 = vadd.f32 0.0, %v129
    %v131 = vpop.f32.mrb[0].mxu0
    %132 = vdwg.mxu0
    %133 = vmatprep.subr.mxu0 0.0
    %v134 = vand.u32 %v45, 4294901760
    %v135 = vsub.f32 %v45, %v134
    %v136 = vand.u32 %v135, 4294901760
    %v137 = vsub.f32 %v135, %v136
    %v138 = vand.u32 %v137, 4294901760
    %139 = vmatpush1.msra.mxu0 %v138
    %140 = vmatprep.subr.mxu0 0.0
    %141 = vmatpush1.msra.mxu0 0.0
    %142 = vmatprep.subr.mxu0 0.0
    %143 = vmatpush1.msra.mxu0 0.0
    %144 = vmatprep.subr.mxu0 0.0
    %145 = vmatpush1.msra.mxu0 0.0
    %146 = vmatprep.subr.mxu0 0.0
    %147 = vmatpush1.msra.mxu0 0.0
    %148 = vmatprep.subr.mxu0 0.0
    %149 = vmatpush1.msra.mxu0 0.0
    %150 = vmatprep.subr.mxu0 0.0
    %151 = vmatpush1.msra.mxu0 0.0
    %152 = vmatprep.subr.mxu0 0.0
    %153 = vmatpush1.msra.mxu0 0.0
    %154 = vmatprep.subr.mxu0 0.0
    %155 = vmatpush1.msra.mxu0 0.0
    %156 = vmatprep.subr.mxu0 0.0
    %157 = vmatpush1.msra.mxu0 0.0
    %158 = vmatprep.subr.mxu0 0.0
    %159 = vmatpush1.msra.mxu0 0.0
    %160 = vmatprep.subr.mxu0 0.0
    %161 = vmatpush1.msra.mxu0 0.0
    %162 = vmatprep.subr.mxu0 0.0
    %163 = vmatpush1.msra.mxu0 0.0
    %164 = vmatprep.subr.mxu0 0.0
    %165 = vmatpush1.msra.mxu0 0.0
    %166 = vmatprep.subr.mxu0 0.0
    %167 = vmatpush1.msra.mxu0 0.0
    %168 = vmatprep.subr.mxu0 0.0
    %169 = vmatpush1.msra.mxu0 0.0
    %170 = vmatprep.subr.mxu0 0.0
    %171 = vmatpush1.msra.mxu0 0.0
    %172 = vmatprep.subr.mxu0 0.0
    %173 = vmatpush1.msra.mxu0 0.0
    %174 = vmatprep.subr.mxu0 0.0
    %175 = vmatpush1.msra.mxu0 0.0
    %176 = vmatprep.subr.mxu0 0.0
    %177 = vmatpush1.msra.mxu0 0.0
    %178 = vmatprep.subr.mxu0 0.0
    %179 = vmatpush1.msra.mxu0 0.0
    %180 = vmatprep.subr.mxu0 0.0
    %181 = vmatpush1.msra.mxu0 0.0
    %182 = vmatprep.subr.mxu0 0.0
    %183 = vmatpush1.msra.mxu0 0.0
    %184 = vmatprep.subr.mxu0 0.0
    %185 = vmatpush1.msra.mxu0 0.0
    %186 = vmatprep.subr.mxu0 0.0
    %187 = vmatpush1.msra.mxu0 0.0
    %188 = vmatprep.subr.mxu0 0.0
    %189 = vmatpush1.msra.mxu0 0.0
    %190 = vmatprep.subr.mxu0 0.0
    %191 = vmatpush1.msra.mxu0 0.0
    %192 = vmatprep.subr.mxu0 0.0
    %193 = vmatpush1.msra.mxu0 0.0
    %194 = vmatprep.subr.mxu0 0.0
    %195 = vmatpush1.msra.mxu0 0.0
    %196 = vmatprep.subr.mxu0 0.0
    %197 = vmatpush1.msra.mxu0 0.0
    %198 = vmatprep.subr.mxu0 0.0
    %199 = vmatpush1.msra.mxu0 0.0
    %200 = vmatprep.subr.mxu0 0.0
    %201 = vmatpush1.msra.mxu0 0.0
    %202 = vmatprep.mubr.f32.mxu0 0.0
    %v203 = vand.u32 %v38, 4294901760
    %204 = vmatmul.mubr.f32.gmra.mrb[0].mxu0 %v203
    %v205 = vpop.f32.mrb[0].mxu0
    %v206 = vadd.f32 %v120, %v205
    %v207 = vpop.f32.mrb[0].mxu0
    %208 = vmatprep.mubr.f32.mxu0 0.0
    %v209 = vand.u32 %v41, 4294901760
    %210 = vmatmul.mubr.f32.gmra.mrb[0].mxu0 %v209
    %v211 = vpop.f32.mrb[0].mxu0
    %v212 = vadd.f32 %v130, %v211
    %v213 = vpop.f32.mrb[0].mxu0
    %214 = vdwg.mxu0
    %215 = vmatprep.subr.mxu0 0.0
    %v216 = vand.u32 %v45, 4294901760
    %v217 = vsub.f32 %v45, %v216
    %218 = vmatpush1.msra.mxu0 %v217
    %219 = vmatprep.subr.mxu0 0.0
    %220 = vmatpush1.msra.mxu0 0.0
    %221 = vmatprep.subr.mxu0 0.0
    %222 = vmatpush1.msra.mxu0 0.0
    %223 = vmatprep.subr.mxu0 0.0
    %224 = vmatpush1.msra.mxu0 0.0
    %225 = vmatprep.subr.mxu0 0.0
    %226 = vmatpush1.msra.mxu0 0.0
    %227 = vmatprep.subr.mxu0 0.0
    %228 = vmatpush1.msra.mxu0 0.0
    %229 = vmatprep.subr.mxu0 0.0
    %230 = vmatpush1.msra.mxu0 0.0
    %231 = vmatprep.subr.mxu0 0.0
    %232 = vmatpush1.msra.mxu0 0.0
    %233 = vmatprep.subr.mxu0 0.0
    %234 = vmatpush1.msra.mxu0 0.0
    %235 = vmatprep.subr.mxu0 0.0
    %236 = vmatpush1.msra.mxu0 0.0
    %237 = vmatprep.subr.mxu0 0.0
    %238 = vmatpush1.msra.mxu0 0.0
    %239 = vmatprep.subr.mxu0 0.0
    %240 = vmatpush1.msra.mxu0 0.0
    %241 = vmatprep.subr.mxu0 0.0
    %242 = vmatpush1.msra.mxu0 0.0
    %243 = vmatprep.subr.mxu0 0.0
    %244 = vmatpush1.msra.mxu0 0.0
    %245 = vmatprep.subr.mxu0 0.0
    %246 = vmatpush1.msra.mxu0 0.0
    %247 = vmatprep.subr.mxu0 0.0
    %248 = vmatpush1.msra.mxu0 0.0
    %249 = vmatprep.subr.mxu0 0.0
    %250 = vmatpush1.msra.mxu0 0.0
    %251 = vmatprep.subr.mxu0 0.0
    %252 = vmatpush1.msra.mxu0 0.0
    %253 = vmatprep.subr.mxu0 0.0
    %254 = vmatpush1.msra.mxu0 0.0
    %255 = vmatprep.subr.mxu0 0.0
    %256 = vmatpush1.msra.mxu0 0.0
    %257 = vmatprep.subr.mxu0 0.0
    %258 = vmatpush1.msra.mxu0 0.0
    %259 = vmatprep.subr.mxu0 0.0
    %260 = vmatpush1.msra.mxu0 0.0
    %261 = vmatprep.subr.mxu0 0.0
    %262 = vmatpush1.msra.mxu0 0.0
    %263 = vmatprep.subr.mxu0 0.0
    %264 = vmatpush1.msra.mxu0 0.0
    %265 = vmatprep.subr.mxu0 0.0
    %266 = vmatpush1.msra.mxu0 0.0
    %267 = vmatprep.subr.mxu0 0.0
    %268 = vmatpush1.msra.mxu0 0.0
    %269 = vmatprep.subr.mxu0 0.0
    %270 = vmatpush1.msra.mxu0 0.0
    %271 = vmatprep.subr.mxu0 0.0
    %272 = vmatpush1.msra.mxu0 0.0
    %273 = vmatprep.subr.mxu0 0.0
    %274 = vmatpush1.msra.mxu0 0.0
    %275 = vmatprep.subr.mxu0 0.0
    %276 = vmatpush1.msra.mxu0 0.0
    %277 = vmatprep.subr.mxu0 0.0
    %278 = vmatpush1.msra.mxu0 0.0
    %279 = vmatprep.subr.mxu0 0.0
    %280 = vmatpush1.msra.mxu0 0.0
    %281 = vmatprep.mubr.f32.mxu0 0.0
    %v282 = vand.u32 %v38, 4294901760
    %v283 = vsub.f32 %v38, %v282
    %284 = vmatmul.mubr.f32.gmra.mrb[0].mxu0 %v283
    %v285 = vpop.f32.mrb[0].mxu0
    %v286 = vadd.f32 %v206, %v285
    %v287 = vpop.f32.mrb[0].mxu0
    %288 = vmatprep.mubr.f32.mxu0 0.0
    %v289 = vand.u32 %v41, 4294901760
    %v290 = vsub.f32 %v41, %v289
    %291 = vmatmul.mubr.f32.gmra.mrb[0].mxu0 %v290
    %v292 = vpop.f32.mrb[0].mxu0
    %v293 = vadd.f32 %v212, %v292
    %v294 = vpop.f32.mrb[0].mxu0
    %295 = vdwg.mxu0
    %296 = vmatprep.subr.mxu0 0.0
    %v297 = vand.u32 %v45, 4294901760
    %298 = vmatpush1.msra.mxu0 %v297
    %299 = vmatprep.subr.mxu0 0.0
    %300 = vmatpush1.msra.mxu0 0.0
    %301 = vmatprep.subr.mxu0 0.0
    %302 = vmatpush1.msra.mxu0 0.0
    %303 = vmatprep.subr.mxu0 0.0
    %304 = vmatpush1.msra.mxu0 0.0
    %305 = vmatprep.subr.mxu0 0.0
    %306 = vmatpush1.msra.mxu0 0.0
    %307 = vmatprep.subr.mxu0 0.0
    %308 = vmatpush1.msra.mxu0 0.0
    %309 = vmatprep.subr.mxu0 0.0
    %310 = vmatpush1.msra.mxu0 0.0
    %311 = vmatprep.subr.mxu0 0.0
    %312 = vmatpush1.msra.mxu0 0.0
    %313 = vmatprep.subr.mxu0 0.0
    %314 = vmatpush1.msra.mxu0 0.0
    %315 = vmatprep.subr.mxu0 0.0
    %316 = vmatpush1.msra.mxu0 0.0
    %317 = vmatprep.subr.mxu0 0.0
    %318 = vmatpush1.msra.mxu0 0.0
    %319 = vmatprep.subr.mxu0 0.0
    %320 = vmatpush1.msra.mxu0 0.0
    %321 = vmatprep.subr.mxu0 0.0
    %322 = vmatpush1.msra.mxu0 0.0
    %323 = vmatprep.subr.mxu0 0.0
    %324 = vmatpush1.msra.mxu0 0.0
    %325 = vmatprep.subr.mxu0 0.0
    %326 = vmatpush1.msra.mxu0 0.0
    %327 = vmatprep.subr.mxu0 0.0
    %328 = vmatpush1.msra.mxu0 0.0
    %329 = vmatprep.subr.mxu0 0.0
    %330 = vmatpush1.msra.mxu0 0.0
    %331 = vmatprep.subr.mxu0 0.0
    %332 = vmatpush1.msra.mxu0 0.0
    %333 = vmatprep.subr.mxu0 0.0
    %334 = vmatpush1.msra.mxu0 0.0
    %335 = vmatprep.subr.mxu0 0.0
    %336 = vmatpush1.msra.mxu0 0.0
    %337 = vmatprep.subr.mxu0 0.0
    %338 = vmatpush1.msra.mxu0 0.0
    %339 = vmatprep.subr.mxu0 0.0
    %340 = vmatpush1.msra.mxu0 0.0
    %341 = vmatprep.subr.mxu0 0.0
    %342 = vmatpush1.msra.mxu0 0.0
    %343 = vmatprep.subr.mxu0 0.0
    %344 = vmatpush1.msra.mxu0 0.0
    %345 = vmatprep.subr.mxu0 0.0
    %346 = vmatpush1.msra.mxu0 0.0
    %347 = vmatprep.subr.mxu0 0.0
    %348 = vmatpush1.msra.mxu0 0.0
    %349 = vmatprep.subr.mxu0 0.0
    %350 = vmatpush1.msra.mxu0 0.0
    %351 = vmatprep.subr.mxu0 0.0
    %352 = vmatpush1.msra.mxu0 0.0
    %353 = vmatprep.subr.mxu0 0.0
    %354 = vmatpush1.msra.mxu0 0.0
    %355 = vmatprep.subr.mxu0 0.0
    %356 = vmatpush1.msra.mxu0 0.0
    %357 = vmatprep.subr.mxu0 0.0
    %358 = vmatpush1.msra.mxu0 0.0
    %359 = vmatprep.subr.mxu0 0.0
    %360 = vmatpush1.msra.mxu0 0.0
    %361 = vmatprep.mubr.f32.mxu0 0.0
    %v362 = vand.u32 %v38, 4294901760
    %v363 = vsub.f32 %v38, %v362
    %v364 = vand.u32 %v363, 4294901760
    %365 = vmatmul.mubr.f32.gmra.mrb[0].mxu0 %v364
    %v366 = vpop.f32.mrb[0].mxu0
    %v367 = vadd.f32 %v286, %v366
    %v368 = vpop.f32.mrb[0].mxu0
    %369 = vmatprep.mubr.f32.mxu0 0.0
    %v370 = vand.u32 %v41, 4294901760
    %v371 = vsub.f32 %v41, %v370
    %v372 = vand.u32 %v371, 4294901760
    %373 = vmatmul.mubr.f32.gmra.mrb[0].mxu0 %v372
    %v374 = vpop.f32.mrb[0].mxu0
    %v375 = vadd.f32 %v293, %v374
    %v376 = vpop.f32.mrb[0].mxu0
    %377 = vdwg.mxu0
    %378 = vmatprep.subr.mxu0 0.0
    %v379 = vand.u32 %v45, 4294901760
    %v380 = vsub.f32 %v45, %v379
    %v381 = vand.u32 %v380, 4294901760
    %382 = vmatpush1.msra.mxu0 %v381
    %383 = vmatprep.subr.mxu0 0.0
    %384 = vmatpush1.msra.mxu0 0.0
    %385 = vmatprep.subr.mxu0 0.0
    %386 = vmatpush1.msra.mxu0 0.0
    %387 = vmatprep.subr.mxu0 0.0
    %388 = vmatpush1.msra.mxu0 0.0
    %389 = vmatprep.subr.mxu0 0.0
    %390 = vmatpush1.msra.mxu0 0.0
    %391 = vmatprep.subr.mxu0 0.0
    %392 = vmatpush1.msra.mxu0 0.0
    %393 = vmatprep.subr.mxu0 0.0
    %394 = vmatpush1.msra.mxu0 0.0
    %395 = vmatprep.subr.mxu0 0.0
    %396 = vmatpush1.msra.mxu0 0.0
    %397 = vmatprep.subr.mxu0 0.0
    %398 = vmatpush1.msra.mxu0 0.0
    %399 = vmatprep.subr.mxu0 0.0
    %400 = vmatpush1.msra.mxu0 0.0
    %401 = vmatprep.subr.mxu0 0.0
    %402 = vmatpush1.msra.mxu0 0.0
    %403 = vmatprep.subr.mxu0 0.0
    %404 = vmatpush1.msra.mxu0 0.0
    %405 = vmatprep.subr.mxu0 0.0
    %406 = vmatpush1.msra.mxu0 0.0
    %407 = vmatprep.subr.mxu0 0.0
    %408 = vmatpush1.msra.mxu0 0.0
    %409 = vmatprep.subr.mxu0 0.0
    %410 = vmatpush1.msra.mxu0 0.0
    %411 = vmatprep.subr.mxu0 0.0
    %412 = vmatpush1.msra.mxu0 0.0
    %413 = vmatprep.subr.mxu0 0.0
    %414 = vmatpush1.msra.mxu0 0.0
    %415 = vmatprep.subr.mxu0 0.0
    %416 = vmatpush1.msra.mxu0 0.0
    %417 = vmatprep.subr.mxu0 0.0
    %418 = vmatpush1.msra.mxu0 0.0
    %419 = vmatprep.subr.mxu0 0.0
    %420 = vmatpush1.msra.mxu0 0.0
    %421 = vmatprep.subr.mxu0 0.0
    %422 = vmatpush1.msra.mxu0 0.0
    %423 = vmatprep.subr.mxu0 0.0
    %424 = vmatpush1.msra.mxu0 0.0
    %425 = vmatprep.subr.mxu0 0.0
    %426 = vmatpush1.msra.mxu0 0.0
    %427 = vmatprep.subr.mxu0 0.0
    %428 = vmatpush1.msra.mxu0 0.0
    %429 = vmatprep.subr.mxu0 0.0
    %430 = vmatpush1.msra.mxu0 0.0
    %431 = vmatprep.subr.mxu0 0.0
    %432 = vmatpush1.msra.mxu0 0.0
    %433 = vmatprep.subr.mxu0 0.0
    %434 = vmatpush1.msra.mxu0 0.0
    %435 = vmatprep.subr.mxu0 0.0
    %436 = vmatpush1.msra.mxu0 0.0
    %437 = vmatprep.subr.mxu0 0.0
    %438 = vmatpush1.msra.mxu0 0.0
    %439 = vmatprep.subr.mxu0 0.0
    %440 = vmatpush1.msra.mxu0 0.0
    %441 = vmatprep.subr.mxu0 0.0
    %442 = vmatpush1.msra.mxu0 0.0
    %443 = vmatprep.subr.mxu0 0.0
    %444 = vmatpush1.msra.mxu0 0.0
    %445 = vmatprep.mubr.f32.mxu0 0.0
    %v446 = vand.u32 %v38, 4294901760
    %447 = vmatmul.mubr.f32.gmra.mrb[0].mxu0 %v446
    %v448 = vpop.f32.mrb[0].mxu0
    %v449 = vadd.f32 %v367, %v448
    %v450 = vpop.f32.mrb[0].mxu0
    %451 = vmatprep.mubr.f32.mxu0 0.0
    %v452 = vand.u32 %v41, 4294901760
    %453 = vmatmul.mubr.f32.gmra.mrb[0].mxu0 %v452
    %v454 = vpop.f32.mrb[0].mxu0
    %v455 = vadd.f32 %v375, %v454
    %v456 = vpop.f32.mrb[0].mxu0
    %457 = vdwg.mxu0
    %458 = vmatprep.subr.mxu0 0.0
    %v459 = vand.u32 %v45, 4294901760
    %460 = vmatpush1.msra.mxu0 %v459
    %461 = vmatprep.subr.mxu0 0.0
    %462 = vmatpush1.msra.mxu0 0.0
    %463 = vmatprep.subr.mxu0 0.0
    %464 = vmatpush1.msra.mxu0 0.0
    %465 = vmatprep.subr.mxu0 0.0
    %466 = vmatpush1.msra.mxu0 0.0
    %467 = vmatprep.subr.mxu0 0.0
    %468 = vmatpush1.msra.mxu0 0.0
    %469 = vmatprep.subr.mxu0 0.0
    %470 = vmatpush1.msra.mxu0 0.0
    %471 = vmatprep.subr.mxu0 0.0
    %472 = vmatpush1.msra.mxu0 0.0
    %473 = vmatprep.subr.mxu0 0.0
    %474 = vmatpush1.msra.mxu0 0.0
    %475 = vmatprep.subr.mxu0 0.0
    %476 = vmatpush1.msra.mxu0 0.0
    %477 = vmatprep.subr.mxu0 0.0
    %478 = vmatpush1.msra.mxu0 0.0
    %479 = vmatprep.subr.mxu0 0.0
    %480 = vmatpush1.msra.mxu0 0.0
    %481 = vmatprep.subr.mxu0 0.0
    %482 = vmatpush1.msra.mxu0 0.0
    %483 = vmatprep.subr.mxu0 0.0
    %484 = vmatpush1.msra.mxu0 0.0
    %485 = vmatprep.subr.mxu0 0.0
    %486 = vmatpush1.msra.mxu0 0.0
    %487 = vmatprep.subr.mxu0 0.0
    %488 = vmatpush1.msra.mxu0 0.0
    %489 = vmatprep.subr.mxu0 0.0
    %490 = vmatpush1.msra.mxu0 0.0
    %491 = vmatprep.subr.mxu0 0.0
    %492 = vmatpush1.msra.mxu0 0.0
    %493 = vmatprep.subr.mxu0 0.0
    %494 = vmatpush1.msra.mxu0 0.0
    %495 = vmatprep.subr.mxu0 0.0
    %496 = vmatpush1.msra.mxu0 0.0
    %497 = vmatprep.subr.mxu0 0.0
    %498 = vmatpush1.msra.mxu0 0.0
    %499 = vmatprep.subr.mxu0 0.0
    %500 = vmatpush1.msra.mxu0 0.0
    %501 = vmatprep.subr.mxu0 0.0
    %502 = vmatpush1.msra.mxu0 0.0
    %503 = vmatprep.subr.mxu0 0.0
    %504 = vmatpush1.msra.mxu0 0.0
    %505 = vmatprep.subr.mxu0 0.0
    %506 = vmatpush1.msra.mxu0 0.0
    %507 = vmatprep.subr.mxu0 0.0
    %508 = vmatpush1.msra.mxu0 0.0
    %509 = vmatprep.subr.mxu0 0.0
    %510 = vmatpush1.msra.mxu0 0.0
    %511 = vmatprep.subr.mxu0 0.0
    %512 = vmatpush1.msra.mxu0 0.0
    %513 = vmatprep.subr.mxu0 0.0
    %514 = vmatpush1.msra.mxu0 0.0
    %515 = vmatprep.subr.mxu0 0.0
    %516 = vmatpush1.msra.mxu0 0.0
    %517 = vmatprep.subr.mxu0 0.0
    %518 = vmatpush1.msra.mxu0 0.0
    %519 = vmatprep.subr.mxu0 0.0
    %520 = vmatpush1.msra.mxu0 0.0
    %521 = vmatprep.subr.mxu0 0.0
    %522 = vmatpush1.msra.mxu0 0.0
    %523 = vmatprep.mubr.f32.mxu0 0.0
    %v524 = vand.u32 %v38, 4294901760
    %525 = vmatmul.mubr.f32.gmra.mrb[0].mxu0 %v524
    %v526 = vpop.f32.mrb[0].mxu0
    %v527 = vadd.f32 %v449, %v526
    %v528 = vpop.f32.mrb[0].mxu0
    %529 = vmatprep.mubr.f32.mxu0 0.0
    %v530 = vand.u32 %v41, 4294901760
    %531 = vmatmul.mubr.f32.gmra.mrb[0].mxu0 %v530
    %v532 = vpop.f32.mrb[0].mxu0
    %v533 = vadd.f32 %v455, %v532
    %v534 = vpop.f32.mrb[0].mxu0
    %535 = vdwg.mxu0
    %v536 = vld [vmem:[%s3] sm:$0xf]
    %v538 = vsel %vm43, %v536, 0
    %540 = vmatprep.subr.mxu0 0.0
    %v541 = vand.u32 %v538, 4294901760
    %542 = vmatpush1.msra.mxu0 %v541
    %543 = vmatprep.subr.mxu0 0.0
    %544 = vmatpush1.msra.mxu0 0.0
    %545 = vmatprep.subr.mxu0 0.0
    %546 = vmatpush1.msra.mxu0 0.0
    %547 = vmatprep.subr.mxu0 0.0
    %548 = vmatpush1.msra.mxu0 0.0
    %549 = vmatprep.subr.mxu0 0.0
    %550 = vmatpush1.msra.mxu0 0.0
    %551 = vmatprep.subr.mxu0 0.0
    %552 = vmatpush1.msra.mxu0 0.0
    %553 = vmatprep.subr.mxu0 0.0
    %554 = vmatpush1.msra.mxu0 0.0
    %555 = vmatprep.subr.mxu0 0.0
    %556 = vmatpush1.msra.mxu0 0.0
    %557 = vmatprep.subr.mxu0 0.0
    %558 = vmatpush1.msra.mxu0 0.0
    %559 = vmatprep.subr.mxu0 0.0
    %560 = vmatpush1.msra.mxu0 0.0
    %561 = vmatprep.subr.mxu0 0.0
    %562 = vmatpush1.msra.mxu0 0.0
    %563 = vmatprep.subr.mxu0 0.0
    %564 = vmatpush1.msra.mxu0 0.0
    %565 = vmatprep.subr.mxu0 0.0
    %566 = vmatpush1.msra.mxu0 0.0
    %567 = vmatprep.subr.mxu0 0.0
    %568 = vmatpush1.msra.mxu0 0.0
    %569 = vmatprep.subr.mxu0 0.0
    %570 = vmatpush1.msra.mxu0 0.0
    %571 = vmatprep.subr.mxu0 0.0
    %572 = vmatpush1.msra.mxu0 0.0
    %573 = vmatprep.subr.mxu0 0.0
    %574 = vmatpush1.msra.mxu0 0.0
    %575 = vmatprep.subr.mxu0 0.0
    %576 = vmatpush1.msra.mxu0 0.0
    %577 = vmatprep.subr.mxu0 0.0
    %578 = vmatpush1.msra.mxu0 0.0
    %579 = vmatprep.subr.mxu0 0.0
    %580 = vmatpush1.msra.mxu0 0.0
    %581 = vmatprep.subr.mxu0 0.0
    %582 = vmatpush1.msra.mxu0 0.0
    %583 = vmatprep.subr.mxu0 0.0
    %584 = vmatpush1.msra.mxu0 0.0
    %585 = vmatprep.subr.mxu0 0.0
    %586 = vmatpush1.msra.mxu0 0.0
    %587 = vmatprep.subr.mxu0 0.0
    %588 = vmatpush1.msra.mxu0 0.0
    %589 = vmatprep.subr.mxu0 0.0
    %590 = vmatpush1.msra.mxu0 0.0
    %591 = vmatprep.subr.mxu0 0.0
    %592 = vmatpush1.msra.mxu0 0.0
    %593 = vmatprep.subr.mxu0 0.0
    %594 = vmatpush1.msra.mxu0 0.0
    %595 = vmatprep.subr.mxu0 0.0
    %596 = vmatpush1.msra.mxu0 0.0
    %597 = vmatprep.subr.mxu0 0.0
    %598 = vmatpush1.msra.mxu0 0.0
    %599 = vmatprep.subr.mxu0 0.0
    %600 = vmatpush1.msra.mxu0 0.0
    %601 = vmatprep.subr.mxu0 0.0
    %602 = vmatpush1.msra.mxu0 0.0
    %603 = vmatprep.subr.mxu0 0.0
    %604 = vmatpush1.msra.mxu0 0.0
    %605 = vmatprep.mubr.f32.mxu0 0.0
    %v606 = vand.u32 %v38, 4294901760
    %v607 = vsub.f32 %v38, %v606
    %v608 = vand.u32 %v607, 4294901760
    %v609 = vsub.f32 %v607, %v608
    %v610 = vand.u32 %v609, 4294901760
    %611 = vmatmul.mubr.f32.gmra.mrb[0].mxu0 %v610
    %v612 = vpop.f32.mrb[0].mxu0
    %v613 = vadd.f32 0.0, %v612
    %v614 = vpop.f32.mrb[0].mxu0
    %615 = vmatprep.mubr.f32.mxu0 0.0
    %v616 = vand.u32 %v41, 4294901760
    %v617 = vsub.f32 %v41, %v616
    %v618 = vand.u32 %v617, 4294901760
    %v619 = vsub.f32 %v617, %v618
    %v620 = vand.u32 %v619, 4294901760
    %621 = vmatmul.mubr.f32.gmra.mrb[0].mxu0 %v620
    %v622 = vpop.f32.mrb[0].mxu0
    %v623 = vadd.f32 0.0, %v622
    %v624 = vpop.f32.mrb[0].mxu0
    %625 = vdwg.mxu0
    %626 = vmatprep.subr.mxu0 0.0
    %v627 = vand.u32 %v538, 4294901760
    %v628 = vsub.f32 %v538, %v627
    %v629 = vand.u32 %v628, 4294901760
    %v630 = vsub.f32 %v628, %v629
    %v631 = vand.u32 %v630, 4294901760
    %632 = vmatpush1.msra.mxu0 %v631
    %633 = vmatprep.subr.mxu0 0.0
    %634 = vmatpush1.msra.mxu0 0.0
    %635 = vmatprep.subr.mxu0 0.0
    %636 = vmatpush1.msra.mxu0 0.0
    %637 = vmatprep.subr.mxu0 0.0
    %638 = vmatpush1.msra.mxu0 0.0
    %639 = vmatprep.subr.mxu0 0.0
    %640 = vmatpush1.msra.mxu0 0.0
    %641 = vmatprep.subr.mxu0 0.0
    %642 = vmatpush1.msra.mxu0 0.0
    %643 = vmatprep.subr.mxu0 0.0
    %644 = vmatpush1.msra.mxu0 0.0
    %645 = vmatprep.subr.mxu0 0.0
    %646 = vmatpush1.msra.mxu0 0.0
    %647 = vmatprep.subr.mxu0 0.0
    %648 = vmatpush1.msra.mxu0 0.0
    %649 = vmatprep.subr.mxu0 0.0
    %650 = vmatpush1.msra.mxu0 0.0
    %651 = vmatprep.subr.mxu0 0.0
    %652 = vmatpush1.msra.mxu0 0.0
    %653 = vmatprep.subr.mxu0 0.0
    %654 = vmatpush1.msra.mxu0 0.0
    %655 = vmatprep.subr.mxu0 0.0
    %656 = vmatpush1.msra.mxu0 0.0
    %657 = vmatprep.subr.mxu0 0.0
    %658 = vmatpush1.msra.mxu0 0.0
    %659 = vmatprep.subr.mxu0 0.0
    %660 = vmatpush1.msra.mxu0 0.0
    %661 = vmatprep.subr.mxu0 0.0
    %662 = vmatpush1.msra.mxu0 0.0
    %663 = vmatprep.subr.mxu0 0.0
    %664 = vmatpush1.msra.mxu0 0.0
    %665 = vmatprep.subr.mxu0 0.0
    %666 = vmatpush1.msra.mxu0 0.0
    %667 = vmatprep.subr.mxu0 0.0
    %668 = vmatpush1.msra.mxu0 0.0
    %669 = vmatprep.subr.mxu0 0.0
    %670 = vmatpush1.msra.mxu0 0.0
    %671 = vmatprep.subr.mxu0 0.0
    %672 = vmatpush1.msra.mxu0 0.0
    %673 = vmatprep.subr.mxu0 0.0
    %674 = vmatpush1.msra.mxu0 0.0
    %675 = vmatprep.subr.mxu0 0.0
    %676 = vmatpush1.msra.mxu0 0.0
    %677 = vmatprep.subr.mxu0 0.0
    %678 = vmatpush1.msra.mxu0 0.0
    %679 = vmatprep.subr.mxu0 0.0
    %680 = vmatpush1.msra.mxu0 0.0
    %681 = vmatprep.subr.mxu0 0.0
    %682 = vmatpush1.msra.mxu0 0.0
    %683 = vmatprep.subr.mxu0 0.0
    %684 = vmatpush1.msra.mxu0 0.0
    %685 = vmatprep.subr.mxu0 0.0
    %686 = vmatpush1.msra.mxu0 0.0
    %687 = vmatprep.subr.mxu0 0.0
    %688 = vmatpush1.msra.mxu0 0.0
    %689 = vmatprep.subr.mxu0 0.0
    %690 = vmatpush1.msra.mxu0 0.0
    %691 = vmatprep.subr.mxu0 0.0
    %692 = vmatpush1.msra.mxu0 0.0
    %693 = vmatprep.subr.mxu0 0.0
    %694 = vmatpush1.msra.mxu0 0.0
    %695 = vmatprep.mubr.f32.mxu0 0.0
    %v696 = vand.u32 %v38, 4294901760
    %697 = vmatmul.mubr.f32.gmra.mrb[0].mxu0 %v696
    %v698 = vpop.f32.mrb[0].mxu0
    %v699 = vadd.f32 %v613, %v698
    %v700 = vpop.f32.mrb[0].mxu0
    %701 = vmatprep.mubr.f32.mxu0 0.0
    %v702 = vand.u32 %v41, 4294901760
    %703 = vmatmul.mubr.f32.gmra.mrb[0].mxu0 %v702
    %v704 = vpop.f32.mrb[0].mxu0
    %v705 = vadd.f32 %v623, %v704
    %v706 = vpop.f32.mrb[0].mxu0
    %707 = vdwg.mxu0
    %708 = vmatprep.subr.mxu0 0.0
    %v709 = vand.u32 %v538, 4294901760
    %v710 = vsub.f32 %v538, %v709
    %711 = vmatpush1.msra.mxu0 %v710
    %712 = vmatprep.subr.mxu0 0.0
    %713 = vmatpush1.msra.mxu0 0.0
    %714 = vmatprep.subr.mxu0 0.0
    %715 = vmatpush1.msra.mxu0 0.0
    %716 = vmatprep.subr.mxu0 0.0
    %717 = vmatpush1.msra.mxu0 0.0
    %718 = vmatprep.subr.mxu0 0.0
    %719 = vmatpush1.msra.mxu0 0.0
    %720 = vmatprep.subr.mxu0 0.0
    %721 = vmatpush1.msra.mxu0 0.0
    %722 = vmatprep.subr.mxu0 0.0
    %723 = vmatpush1.msra.mxu0 0.0
    %724 = vmatprep.subr.mxu0 0.0
    %725 = vmatpush1.msra.mxu0 0.0
    %726 = vmatprep.subr.mxu0 0.0
    %727 = vmatpush1.msra.mxu0 0.0
    %728 = vmatprep.subr.mxu0 0.0
    %729 = vmatpush1.msra.mxu0 0.0
    %730 = vmatprep.subr.mxu0 0.0
    %731 = vmatpush1.msra.mxu0 0.0
    %732 = vmatprep.subr.mxu0 0.0
    %733 = vmatpush1.msra.mxu0 0.0
    %734 = vmatprep.subr.mxu0 0.0
    %735 = vmatpush1.msra.mxu0 0.0
    %736 = vmatprep.subr.mxu0 0.0
    %737 = vmatpush1.msra.mxu0 0.0
    %738 = vmatprep.subr.mxu0 0.0
    %739 = vmatpush1.msra.mxu0 0.0
    %740 = vmatprep.subr.mxu0 0.0
    %741 = vmatpush1.msra.mxu0 0.0
    %742 = vmatprep.subr.mxu0 0.0
    %743 = vmatpush1.msra.mxu0 0.0
    %744 = vmatprep.subr.mxu0 0.0
    %745 = vmatpush1.msra.mxu0 0.0
    %746 = vmatprep.subr.mxu0 0.0
    %747 = vmatpush1.msra.mxu0 0.0
    %748 = vmatprep.subr.mxu0 0.0
    %749 = vmatpush1.msra.mxu0 0.0
    %750 = vmatprep.subr.mxu0 0.0
    %751 = vmatpush1.msra.mxu0 0.0
    %752 = vmatprep.subr.mxu0 0.0
    %753 = vmatpush1.msra.mxu0 0.0
    %754 = vmatprep.subr.mxu0 0.0
    %755 = vmatpush1.msra.mxu0 0.0
    %756 = vmatprep.subr.mxu0 0.0
    %757 = vmatpush1.msra.mxu0 0.0
    %758 = vmatprep.subr.mxu0 0.0
    %759 = vmatpush1.msra.mxu0 0.0
    %760 = vmatprep.subr.mxu0 0.0
    %761 = vmatpush1.msra.mxu0 0.0
    %762 = vmatprep.subr.mxu0 0.0
    %763 = vmatpush1.msra.mxu0 0.0
    %764 = vmatprep.subr.mxu0 0.0
    %765 = vmatpush1.msra.mxu0 0.0
    %766 = vmatprep.subr.mxu0 0.0
    %767 = vmatpush1.msra.mxu0 0.0
    %768 = vmatprep.subr.mxu0 0.0
    %769 = vmatpush1.msra.mxu0 0.0
    %770 = vmatprep.subr.mxu0 0.0
    %771 = vmatpush1.msra.mxu0 0.0
    %772 = vmatprep.subr.mxu0 0.0
    %773 = vmatpush1.msra.mxu0 0.0
    %774 = vmatprep.mubr.f32.mxu0 0.0
    %v775 = vand.u32 %v38, 4294901760
    %v776 = vsub.f32 %v38, %v775
    %777 = vmatmul.mubr.f32.gmra.mrb[0].mxu0 %v776
    %v778 = vpop.f32.mrb[0].mxu0
    %v779 = vadd.f32 %v699, %v778
    %v780 = vpop.f32.mrb[0].mxu0
    %781 = vmatprep.mubr.f32.mxu0 0.0
    %v782 = vand.u32 %v41, 4294901760
    %v783 = vsub.f32 %v41, %v782
    %784 = vmatmul.mubr.f32.gmra.mrb[0].mxu0 %v783
    %v785 = vpop.f32.mrb[0].mxu0
    %v786 = vadd.f32 %v705, %v785
    %v787 = vpop.f32.mrb[0].mxu0
    %788 = vdwg.mxu0
    %789 = vmatprep.subr.mxu0 0.0
    %v790 = vand.u32 %v538, 4294901760
    %791 = vmatpush1.msra.mxu0 %v790
    %792 = vmatprep.subr.mxu0 0.0
    %793 = vmatpush1.msra.mxu0 0.0
    %794 = vmatprep.subr.mxu0 0.0
    %795 = vmatpush1.msra.mxu0 0.0
    %796 = vmatprep.subr.mxu0 0.0
    %797 = vmatpush1.msra.mxu0 0.0
    %798 = vmatprep.subr.mxu0 0.0
    %799 = vmatpush1.msra.mxu0 0.0
    %800 = vmatprep.subr.mxu0 0.0
    %801 = vmatpush1.msra.mxu0 0.0
    %802 = vmatprep.subr.mxu0 0.0
    %803 = vmatpush1.msra.mxu0 0.0
    %804 = vmatprep.subr.mxu0 0.0
    %805 = vmatpush1.msra.mxu0 0.0
    %806 = vmatprep.subr.mxu0 0.0
    %807 = vmatpush1.msra.mxu0 0.0
    %808 = vmatprep.subr.mxu0 0.0
    %809 = vmatpush1.msra.mxu0 0.0
    %810 = vmatprep.subr.mxu0 0.0
    %811 = vmatpush1.msra.mxu0 0.0
    %812 = vmatprep.subr.mxu0 0.0
    %813 = vmatpush1.msra.mxu0 0.0
    %814 = vmatprep.subr.mxu0 0.0
    %815 = vmatpush1.msra.mxu0 0.0
    %816 = vmatprep.subr.mxu0 0.0
    %817 = vmatpush1.msra.mxu0 0.0
    %818 = vmatprep.subr.mxu0 0.0
    %819 = vmatpush1.msra.mxu0 0.0
    %820 = vmatprep.subr.mxu0 0.0
    %821 = vmatpush1.msra.mxu0 0.0
    %822 = vmatprep.subr.mxu0 0.0
    %823 = vmatpush1.msra.mxu0 0.0
    %824 = vmatprep.subr.mxu0 0.0
    %825 = vmatpush1.msra.mxu0 0.0
    %826 = vmatprep.subr.mxu0 0.0
    %827 = vmatpush1.msra.mxu0 0.0
    %828 = vmatprep.subr.mxu0 0.0
    %829 = vmatpush1.msra.mxu0 0.0
    %830 = vmatprep.subr.mxu0 0.0
    %831 = vmatpush1.msra.mxu0 0.0
    %832 = vmatprep.subr.mxu0 0.0
    %833 = vmatpush1.msra.mxu0 0.0
    %834 = vmatprep.subr.mxu0 0.0
    %835 = vmatpush1.msra.mxu0 0.0
    %836 = vmatprep.subr.mxu0 0.0
    %837 = vmatpush1.msra.mxu0 0.0
    %838 = vmatprep.subr.mxu0 0.0
    %839 = vmatpush1.msra.mxu0 0.0
    %840 = vmatprep.subr.mxu0 0.0
    %841 = vmatpush1.msra.mxu0 0.0
    %842 = vmatprep.subr.mxu0 0.0
    %843 = vmatpush1.msra.mxu0 0.0
    %844 = vmatprep.subr.mxu0 0.0
    %845 = vmatpush1.msra.mxu0 0.0
    %846 = vmatprep.subr.mxu0 0.0
    %847 = vmatpush1.msra.mxu0 0.0
    %848 = vmatprep.subr.mxu0 0.0
    %849 = vmatpush1.msra.mxu0 0.0
    %850 = vmatprep.subr.mxu0 0.0
    %851 = vmatpush1.msra.mxu0 0.0
    %852 = vmatprep.subr.mxu0 0.0
    %853 = vmatpush1.msra.mxu0 0.0
    %854 = vmatprep.mubr.f32.mxu0 0.0
    %v855 = vand.u32 %v38, 4294901760
    %v856 = vsub.f32 %v38, %v855
    %v857 = vand.u32 %v856, 4294901760
    %858 = vmatmul.mubr.f32.gmra.mrb[0].mxu0 %v857
    %v859 = vpop.f32.mrb[0].mxu0
    %v860 = vadd.f32 %v779, %v859
    %v861 = vpop.f32.mrb[0].mxu0
    %862 = vmatprep.mubr.f32.mxu0 0.0
    %v863 = vand.u32 %v41, 4294901760
    %v864 = vsub.f32 %v41, %v863
    %v865 = vand.u32 %v864, 4294901760
    %866 = vmatmul.mubr.f32.gmra.mrb[0].mxu0 %v865
    %v867 = vpop.f32.mrb[0].mxu0
    %v868 = vadd.f32 %v786, %v867
    %v869 = vpop.f32.mrb[0].mxu0
    %870 = vdwg.mxu0
    %871 = vmatprep.subr.mxu0 0.0
    %v872 = vand.u32 %v538, 4294901760
    %v873 = vsub.f32 %v538, %v872
    %v874 = vand.u32 %v873, 4294901760
    %875 = vmatpush1.msra.mxu0 %v874
    %876 = vmatprep.subr.mxu0 0.0
    %877 = vmatpush1.msra.mxu0 0.0
    %878 = vmatprep.subr.mxu0 0.0
    %879 = vmatpush1.msra.mxu0 0.0
    %880 = vmatprep.subr.mxu0 0.0
    %881 = vmatpush1.msra.mxu0 0.0
    %882 = vmatprep.subr.mxu0 0.0
    %883 = vmatpush1.msra.mxu0 0.0
    %884 = vmatprep.subr.mxu0 0.0
    %885 = vmatpush1.msra.mxu0 0.0
    %886 = vmatprep.subr.mxu0 0.0
    %887 = vmatpush1.msra.mxu0 0.0
    %888 = vmatprep.subr.mxu0 0.0
    %889 = vmatpush1.msra.mxu0 0.0
    %890 = vmatprep.subr.mxu0 0.0
    %891 = vmatpush1.msra.mxu0 0.0
    %892 = vmatprep.subr.mxu0 0.0
    %893 = vmatpush1.msra.mxu0 0.0
    %894 = vmatprep.subr.mxu0 0.0
    %895 = vmatpush1.msra.mxu0 0.0
    %896 = vmatprep.subr.mxu0 0.0
    %897 = vmatpush1.msra.mxu0 0.0
    %898 = vmatprep.subr.mxu0 0.0
    %899 = vmatpush1.msra.mxu0 0.0
    %900 = vmatprep.subr.mxu0 0.0
    %901 = vmatpush1.msra.mxu0 0.0
    %902 = vmatprep.subr.mxu0 0.0
    %903 = vmatpush1.msra.mxu0 0.0
    %904 = vmatprep.subr.mxu0 0.0
    %905 = vmatpush1.msra.mxu0 0.0
    %906 = vmatprep.subr.mxu0 0.0
    %907 = vmatpush1.msra.mxu0 0.0
    %908 = vmatprep.subr.mxu0 0.0
    %909 = vmatpush1.msra.mxu0 0.0
    %910 = vmatprep.subr.mxu0 0.0
    %911 = vmatpush1.msra.mxu0 0.0
    %912 = vmatprep.subr.mxu0 0.0
    %913 = vmatpush1.msra.mxu0 0.0
    %914 = vmatprep.subr.mxu0 0.0
    %915 = vmatpush1.msra.mxu0 0.0
    %916 = vmatprep.subr.mxu0 0.0
    %917 = vmatpush1.msra.mxu0 0.0
    %918 = vmatprep.subr.mxu0 0.0
    %919 = vmatpush1.msra.mxu0 0.0
    %920 = vmatprep.subr.mxu0 0.0
    %921 = vmatpush1.msra.mxu0 0.0
    %922 = vmatprep.subr.mxu0 0.0
    %923 = vmatpush1.msra.mxu0 0.0
    %924 = vmatprep.subr.mxu0 0.0
    %925 = vmatpush1.msra.mxu0 0.0
    %926 = vmatprep.subr.mxu0 0.0
    %927 = vmatpush1.msra.mxu0 0.0
    %928 = vmatprep.subr.mxu0 0.0
    %929 = vmatpush1.msra.mxu0 0.0
    %930 = vmatprep.subr.mxu0 0.0
    %931 = vmatpush1.msra.mxu0 0.0
    %932 = vmatprep.subr.mxu0 0.0
    %933 = vmatpush1.msra.mxu0 0.0
    %934 = vmatprep.subr.mxu0 0.0
    %935 = vmatpush1.msra.mxu0 0.0
    %936 = vmatprep.subr.mxu0 0.0
    %937 = vmatpush1.msra.mxu0 0.0
    %938 = vmatprep.mubr.f32.mxu0 0.0
    %v939 = vand.u32 %v38, 4294901760
    %940 = vmatmul.mubr.f32.gmra.mrb[0].mxu0 %v939
    %v941 = vpop.f32.mrb[0].mxu0
    %v942 = vadd.f32 %v860, %v941
    %v943 = vpop.f32.mrb[0].mxu0
    %944 = vmatprep.mubr.f32.mxu0 0.0
    %v945 = vand.u32 %v41, 4294901760
    %946 = vmatmul.mubr.f32.gmra.mrb[0].mxu0 %v945
    %v947 = vpop.f32.mrb[0].mxu0
    %v948 = vadd.f32 %v868, %v947
    %v949 = vpop.f32.mrb[0].mxu0
    %950 = vdwg.mxu0
    %951 = vmatprep.subr.mxu0 0.0
    %v952 = vand.u32 %v538, 4294901760
    %953 = vmatpush1.msra.mxu0 %v952
    %954 = vmatprep.subr.mxu0 0.0
    %955 = vmatpush1.msra.mxu0 0.0
    %956 = vmatprep.subr.mxu0 0.0
    %957 = vmatpush1.msra.mxu0 0.0
    %958 = vmatprep.subr.mxu0 0.0
    %959 = vmatpush1.msra.mxu0 0.0
    %960 = vmatprep.subr.mxu0 0.0
    %961 = vmatpush1.msra.mxu0 0.0
    %962 = vmatprep.subr.mxu0 0.0
    %963 = vmatpush1.msra.mxu0 0.0
    %964 = vmatprep.subr.mxu0 0.0
    %965 = vmatpush1.msra.mxu0 0.0
    %966 = vmatprep.subr.mxu0 0.0
    %967 = vmatpush1.msra.mxu0 0.0
    %968 = vmatprep.subr.mxu0 0.0
    %969 = vmatpush1.msra.mxu0 0.0
    %970 = vmatprep.subr.mxu0 0.0
    %971 = vmatpush1.msra.mxu0 0.0
    %972 = vmatprep.subr.mxu0 0.0
    %973 = vmatpush1.msra.mxu0 0.0
    %974 = vmatprep.subr.mxu0 0.0
    %975 = vmatpush1.msra.mxu0 0.0
    %976 = vmatprep.subr.mxu0 0.0
    %977 = vmatpush1.msra.mxu0 0.0
    %978 = vmatprep.subr.mxu0 0.0
    %979 = vmatpush1.msra.mxu0 0.0
    %980 = vmatprep.subr.mxu0 0.0
    %981 = vmatpush1.msra.mxu0 0.0
    %982 = vmatprep.subr.mxu0 0.0
    %983 = vmatpush1.msra.mxu0 0.0
    %984 = vmatprep.subr.mxu0 0.0
    %985 = vmatpush1.msra.mxu0 0.0
    %986 = vmatprep.subr.mxu0 0.0
    %987 = vmatpush1.msra.mxu0 0.0
    %988 = vmatprep.subr.mxu0 0.0
    %989 = vmatpush1.msra.mxu0 0.0
    %990 = vmatprep.subr.mxu0 0.0
    %991 = vmatpush1.msra.mxu0 0.0
    %992 = vmatprep.subr.mxu0 0.0
    %993 = vmatpush1.msra.mxu0 0.0
    %994 = vmatprep.subr.mxu0 0.0
    %995 = vmatpush1.msra.mxu0 0.0
    %996 = vmatprep.subr.mxu0 0.0
    %997 = vmatpush1.msra.mxu0 0.0
    %998 = vmatprep.subr.mxu0 0.0
    %999 = vmatpush1.msra.mxu0 0.0
    %1000 = vmatprep.subr.mxu0 0.0
    %1001 = vmatpush1.msra.mxu0 0.0
    %1002 = vmatprep.subr.mxu0 0.0
    %1003 = vmatpush1.msra.mxu0 0.0
    %1004 = vmatprep.subr.mxu0 0.0
    %1005 = vmatpush1.msra.mxu0 0.0
    %1006 = vmatprep.subr.mxu0 0.0
    %1007 = vmatpush1.msra.mxu0 0.0
    %1008 = vmatprep.subr.mxu0 0.0
    %1009 = vmatpush1.msra.mxu0 0.0
    %1010 = vmatprep.subr.mxu0 0.0
    %1011 = vmatpush1.msra.mxu0 0.0
    %1012 = vmatprep.subr.mxu0 0.0
    %1013 = vmatpush1.msra.mxu0 0.0
    %1014 = vmatprep.subr.mxu0 0.0
    %1015 = vmatpush1.msra.mxu0 0.0
    %1016 = vmatprep.mubr.f32.mxu0 0.0
    %v1017 = vand.u32 %v38, 4294901760
    %1018 = vmatmul.mubr.f32.gmra.mrb[0].mxu0 %v1017
    %v1019 = vpop.f32.mrb[0].mxu0
    %v1020 = vadd.f32 %v942, %v1019
    %v1021 = vpop.f32.mrb[0].mxu0
    %1022 = vmatprep.mubr.f32.mxu0 0.0
    %v1023 = vand.u32 %v41, 4294901760
    %1024 = vmatmul.mubr.f32.gmra.mrb[0].mxu0 %v1023
    %v1025 = vpop.f32.mrb[0].mxu0
    %v1026 = vadd.f32 %v948, %v1025
    %v1027 = vpop.f32.mrb[0].mxu0
    %1028 = vdwg.mxu0
    %v1029 = vld [vmem:[%s4] sm:$0xf]
    %v1031 = vsel %vm43, %v1029, 0
    %1033 = vmatprep.subr.mxu0 0.0
    %v1034 = vand.u32 %v1031, 4294901760
    %1035 = vmatpush1.msra.mxu0 %v1034
    %1036 = vmatprep.subr.mxu0 0.0
    %1037 = vmatpush1.msra.mxu0 0.0
    %1038 = vmatprep.subr.mxu0 0.0
    %1039 = vmatpush1.msra.mxu0 0.0
    %1040 = vmatprep.subr.mxu0 0.0
    %1041 = vmatpush1.msra.mxu0 0.0
    %1042 = vmatprep.subr.mxu0 0.0
    %1043 = vmatpush1.msra.mxu0 0.0
    %1044 = vmatprep.subr.mxu0 0.0
    %1045 = vmatpush1.msra.mxu0 0.0
    %1046 = vmatprep.subr.mxu0 0.0
    %1047 = vmatpush1.msra.mxu0 0.0
    %1048 = vmatprep.subr.mxu0 0.0
    %1049 = vmatpush1.msra.mxu0 0.0
    %1050 = vmatprep.subr.mxu0 0.0
    %1051 = vmatpush1.msra.mxu0 0.0
    %1052 = vmatprep.subr.mxu0 0.0
    %1053 = vmatpush1.msra.mxu0 0.0
    %1054 = vmatprep.subr.mxu0 0.0
    %1055 = vmatpush1.msra.mxu0 0.0
    %1056 = vmatprep.subr.mxu0 0.0
    %1057 = vmatpush1.msra.mxu0 0.0
    %1058 = vmatprep.subr.mxu0 0.0
    %1059 = vmatpush1.msra.mxu0 0.0
    %1060 = vmatprep.subr.mxu0 0.0
    %1061 = vmatpush1.msra.mxu0 0.0
    %1062 = vmatprep.subr.mxu0 0.0
    %1063 = vmatpush1.msra.mxu0 0.0
    %1064 = vmatprep.subr.mxu0 0.0
    %1065 = vmatpush1.msra.mxu0 0.0
    %1066 = vmatprep.subr.mxu0 0.0
    %1067 = vmatpush1.msra.mxu0 0.0
    %1068 = vmatprep.subr.mxu0 0.0
    %1069 = vmatpush1.msra.mxu0 0.0
    %1070 = vmatprep.subr.mxu0 0.0
    %1071 = vmatpush1.msra.mxu0 0.0
    %1072 = vmatprep.subr.mxu0 0.0
    %1073 = vmatpush1.msra.mxu0 0.0
    %1074 = vmatprep.subr.mxu0 0.0
    %1075 = vmatpush1.msra.mxu0 0.0
    %1076 = vmatprep.subr.mxu0 0.0
    %1077 = vmatpush1.msra.mxu0 0.0
    %1078 = vmatprep.subr.mxu0 0.0
    %1079 = vmatpush1.msra.mxu0 0.0
    %1080 = vmatprep.subr.mxu0 0.0
    %1081 = vmatpush1.msra.mxu0 0.0
    %1082 = vmatprep.subr.mxu0 0.0
    %1083 = vmatpush1.msra.mxu0 0.0
    %1084 = vmatprep.subr.mxu0 0.0
    %1085 = vmatpush1.msra.mxu0 0.0
    %1086 = vmatprep.subr.mxu0 0.0
    %1087 = vmatpush1.msra.mxu0 0.0
    %1088 = vmatprep.subr.mxu0 0.0
    %1089 = vmatpush1.msra.mxu0 0.0
    %1090 = vmatprep.subr.mxu0 0.0
    %1091 = vmatpush1.msra.mxu0 0.0
    %1092 = vmatprep.subr.mxu0 0.0
    %1093 = vmatpush1.msra.mxu0 0.0
    %1094 = vmatprep.subr.mxu0 0.0
    %1095 = vmatpush1.msra.mxu0 0.0
    %1096 = vmatprep.subr.mxu0 0.0
    %1097 = vmatpush1.msra.mxu0 0.0
    %1098 = vmatprep.mubr.f32.mxu0 0.0
    %v1099 = vand.u32 %v38, 4294901760
    %v1100 = vsub.f32 %v38, %v1099
    %v1101 = vand.u32 %v1100, 4294901760
    %v1102 = vsub.f32 %v1100, %v1101
    %v1103 = vand.u32 %v1102, 4294901760
    %1104 = vmatmul.mubr.f32.gmra.mrb[0].mxu0 %v1103
    %v1105 = vpop.f32.mrb[0].mxu0
    %v1106 = vadd.f32 0.0, %v1105
    %v1107 = vpop.f32.mrb[0].mxu0
    %1108 = vmatprep.mubr.f32.mxu0 0.0
    %v1109 = vand.u32 %v41, 4294901760
    %v1110 = vsub.f32 %v41, %v1109
    %v1111 = vand.u32 %v1110, 4294901760
    %v1112 = vsub.f32 %v1110, %v1111
    %v1113 = vand.u32 %v1112, 4294901760
    %1114 = vmatmul.mubr.f32.gmra.mrb[0].mxu0 %v1113
    %v1115 = vpop.f32.mrb[0].mxu0
    %v1116 = vadd.f32 0.0, %v1115
    %v1117 = vpop.f32.mrb[0].mxu0
    %1118 = vdwg.mxu0
    %1119 = vmatprep.subr.mxu0 0.0
    %v1120 = vand.u32 %v1031, 4294901760
    %v1121 = vsub.f32 %v1031, %v1120
    %v1122 = vand.u32 %v1121, 4294901760
    %v1123 = vsub.f32 %v1121, %v1122
    %v1124 = vand.u32 %v1123, 4294901760
    %1125 = vmatpush1.msra.mxu0 %v1124
    %1126 = vmatprep.subr.mxu0 0.0
    %1127 = vmatpush1.msra.mxu0 0.0
    %1128 = vmatprep.subr.mxu0 0.0
    %1129 = vmatpush1.msra.mxu0 0.0
    %1130 = vmatprep.subr.mxu0 0.0
    %1131 = vmatpush1.msra.mxu0 0.0
    %1132 = vmatprep.subr.mxu0 0.0
    %1133 = vmatpush1.msra.mxu0 0.0
    %1134 = vmatprep.subr.mxu0 0.0
    %1135 = vmatpush1.msra.mxu0 0.0
    %1136 = vmatprep.subr.mxu0 0.0
    %1137 = vmatpush1.msra.mxu0 0.0
    %1138 = vmatprep.subr.mxu0 0.0
    %1139 = vmatpush1.msra.mxu0 0.0
    %1140 = vmatprep.subr.mxu0 0.0
    %1141 = vmatpush1.msra.mxu0 0.0
    %1142 = vmatprep.subr.mxu0 0.0
    %1143 = vmatpush1.msra.mxu0 0.0
    %1144 = vmatprep.subr.mxu0 0.0
    %1145 = vmatpush1.msra.mxu0 0.0
    %1146 = vmatprep.subr.mxu0 0.0
    %1147 = vmatpush1.msra.mxu0 0.0
    %1148 = vmatprep.subr.mxu0 0.0
    %1149 = vmatpush1.msra.mxu0 0.0
    %1150 = vmatprep.subr.mxu0 0.0
    %1151 = vmatpush1.msra.mxu0 0.0
    %1152 = vmatprep.subr.mxu0 0.0
    %1153 = vmatpush1.msra.mxu0 0.0
    %1154 = vmatprep.subr.mxu0 0.0
    %1155 = vmatpush1.msra.mxu0 0.0
    %1156 = vmatprep.subr.mxu0 0.0
    %1157 = vmatpush1.msra.mxu0 0.0
    %1158 = vmatprep.subr.mxu0 0.0
    %1159 = vmatpush1.msra.mxu0 0.0
    %1160 = vmatprep.subr.mxu0 0.0
    %1161 = vmatpush1.msra.mxu0 0.0
    %1162 = vmatprep.subr.mxu0 0.0
    %1163 = vmatpush1.msra.mxu0 0.0
    %1164 = vmatprep.subr.mxu0 0.0
    %1165 = vmatpush1.msra.mxu0 0.0
    %1166 = vmatprep.subr.mxu0 0.0
    %1167 = vmatpush1.msra.mxu0 0.0
    %1168 = vmatprep.subr.mxu0 0.0
    %1169 = vmatpush1.msra.mxu0 0.0
    %1170 = vmatprep.subr.mxu0 0.0
    %1171 = vmatpush1.msra.mxu0 0.0
    %1172 = vmatprep.subr.mxu0 0.0
    %1173 = vmatpush1.msra.mxu0 0.0
    %1174 = vmatprep.subr.mxu0 0.0
    %1175 = vmatpush1.msra.mxu0 0.0
    %1176 = vmatprep.subr.mxu0 0.0
    %1177 = vmatpush1.msra.mxu0 0.0
    %1178 = vmatprep.subr.mxu0 0.0
    %1179 = vmatpush1.msra.mxu0 0.0
    %1180 = vmatprep.subr.mxu0 0.0
    %1181 = vmatpush1.msra.mxu0 0.0
    %1182 = vmatprep.subr.mxu0 0.0
    %1183 = vmatpush1.msra.mxu0 0.0
    %1184 = vmatprep.subr.mxu0 0.0
    %1185 = vmatpush1.msra.mxu0 0.0
    %1186 = vmatprep.subr.mxu0 0.0
    %1187 = vmatpush1.msra.mxu0 0.0
    %1188 = vmatprep.mubr.f32.mxu0 0.0
    %v1189 = vand.u32 %v38, 4294901760
    %1190 = vmatmul.mubr.f32.gmra.mrb[0].mxu0 %v1189
    %v1191 = vpop.f32.mrb[0].mxu0
    %v1192 = vadd.f32 %v1106, %v1191
    %v1193 = vpop.f32.mrb[0].mxu0
    %1194 = vmatprep.mubr.f32.mxu0 0.0
    %v1195 = vand.u32 %v41, 4294901760
    %1196 = vmatmul.mubr.f32.gmra.mrb[0].mxu0 %v1195
    %v1197 = vpop.f32.mrb[0].mxu0
    %v1198 = vadd.f32 %v1116, %v1197
    %v1199 = vpop.f32.mrb[0].mxu0
    %1200 = vdwg.mxu0
    %1201 = vmatprep.subr.mxu0 0.0
    %v1202 = vand.u32 %v1031, 4294901760
    %v1203 = vsub.f32 %v1031, %v1202
    %1204 = vmatpush1.msra.mxu0 %v1203
    %1205 = vmatprep.subr.mxu0 0.0
    %1206 = vmatpush1.msra.mxu0 0.0
    %1207 = vmatprep.subr.mxu0 0.0
    %1208 = vmatpush1.msra.mxu0 0.0
    %1209 = vmatprep.subr.mxu0 0.0
    %1210 = vmatpush1.msra.mxu0 0.0
    %1211 = vmatprep.subr.mxu0 0.0
    %1212 = vmatpush1.msra.mxu0 0.0
    %1213 = vmatprep.subr.mxu0 0.0
    %1214 = vmatpush1.msra.mxu0 0.0
    %1215 = vmatprep.subr.mxu0 0.0
    %1216 = vmatpush1.msra.mxu0 0.0
    %1217 = vmatprep.subr.mxu0 0.0
    %1218 = vmatpush1.msra.mxu0 0.0
    %1219 = vmatprep.subr.mxu0 0.0
    %1220 = vmatpush1.msra.mxu0 0.0
    %1221 = vmatprep.subr.mxu0 0.0
    %1222 = vmatpush1.msra.mxu0 0.0
    %1223 = vmatprep.subr.mxu0 0.0
    %1224 = vmatpush1.msra.mxu0 0.0
    %1225 = vmatprep.subr.mxu0 0.0
    %1226 = vmatpush1.msra.mxu0 0.0
    %1227 = vmatprep.subr.mxu0 0.0
    %1228 = vmatpush1.msra.mxu0 0.0
    %1229 = vmatprep.subr.mxu0 0.0
    %1230 = vmatpush1.msra.mxu0 0.0
    %1231 = vmatprep.subr.mxu0 0.0
    %1232 = vmatpush1.msra.mxu0 0.0
    %1233 = vmatprep.subr.mxu0 0.0
    %1234 = vmatpush1.msra.mxu0 0.0
    %1235 = vmatprep.subr.mxu0 0.0
    %1236 = vmatpush1.msra.mxu0 0.0
    %1237 = vmatprep.subr.mxu0 0.0
    %1238 = vmatpush1.msra.mxu0 0.0
    %1239 = vmatprep.subr.mxu0 0.0
    %1240 = vmatpush1.msra.mxu0 0.0
    %1241 = vmatprep.subr.mxu0 0.0
    %1242 = vmatpush1.msra.mxu0 0.0
    %1243 = vmatprep.subr.mxu0 0.0
    %1244 = vmatpush1.msra.mxu0 0.0
    %1245 = vmatprep.subr.mxu0 0.0
    %1246 = vmatpush1.msra.mxu0 0.0
    %1247 = vmatprep.subr.mxu0 0.0
    %1248 = vmatpush1.msra.mxu0 0.0
    %1249 = vmatprep.subr.mxu0 0.0
    %1250 = vmatpush1.msra.mxu0 0.0
    %1251 = vmatprep.subr.mxu0 0.0
    %1252 = vmatpush1.msra.mxu0 0.0
    %1253 = vmatprep.subr.mxu0 0.0
    %1254 = vmatpush1.msra.mxu0 0.0
    %1255 = vmatprep.subr.mxu0 0.0
    %1256 = vmatpush1.msra.mxu0 0.0
    %1257 = vmatprep.subr.mxu0 0.0
    %1258 = vmatpush1.msra.mxu0 0.0
    %1259 = vmatprep.subr.mxu0 0.0
    %1260 = vmatpush1.msra.mxu0 0.0
    %1261 = vmatprep.subr.mxu0 0.0
    %1262 = vmatpush1.msra.mxu0 0.0
    %1263 = vmatprep.subr.mxu0 0.0
    %1264 = vmatpush1.msra.mxu0 0.0
    %1265 = vmatprep.subr.mxu0 0.0
    %1266 = vmatpush1.msra.mxu0 0.0
    %1267 = vmatprep.mubr.f32.mxu0 0.0
    %v1268 = vand.u32 %v38, 4294901760
    %v1269 = vsub.f32 %v38, %v1268
    %1270 = vmatmul.mubr.f32.gmra.mrb[0].mxu0 %v1269
    %v1271 = vpop.f32.mrb[0].mxu0
    %v1272 = vadd.f32 %v1192, %v1271
    %v1273 = vpop.f32.mrb[0].mxu0
    %1274 = vmatprep.mubr.f32.mxu0 0.0
    %v1275 = vand.u32 %v41, 4294901760
    %v1276 = vsub.f32 %v41, %v1275
    %1277 = vmatmul.mubr.f32.gmra.mrb[0].mxu0 %v1276
    %v1278 = vpop.f32.mrb[0].mxu0
    %v1279 = vadd.f32 %v1198, %v1278
    %v1280 = vpop.f32.mrb[0].mxu0
    %1281 = vdwg.mxu0
    %1282 = vmatprep.subr.mxu0 0.0
    %v1283 = vand.u32 %v1031, 4294901760
    %1284 = vmatpush1.msra.mxu0 %v1283
    %1285 = vmatprep.subr.mxu0 0.0
    %1286 = vmatpush1.msra.mxu0 0.0
    %1287 = vmatprep.subr.mxu0 0.0
    %1288 = vmatpush1.msra.mxu0 0.0
    %1289 = vmatprep.subr.mxu0 0.0
    %1290 = vmatpush1.msra.mxu0 0.0
    %1291 = vmatprep.subr.mxu0 0.0
    %1292 = vmatpush1.msra.mxu0 0.0
    %1293 = vmatprep.subr.mxu0 0.0
    %1294 = vmatpush1.msra.mxu0 0.0
    %1295 = vmatprep.subr.mxu0 0.0
    %1296 = vmatpush1.msra.mxu0 0.0
    %1297 = vmatprep.subr.mxu0 0.0
    %1298 = vmatpush1.msra.mxu0 0.0
    %1299 = vmatprep.subr.mxu0 0.0
    %1300 = vmatpush1.msra.mxu0 0.0
    %1301 = vmatprep.subr.mxu0 0.0
    %1302 = vmatpush1.msra.mxu0 0.0
    %1303 = vmatprep.subr.mxu0 0.0
    %1304 = vmatpush1.msra.mxu0 0.0
    %1305 = vmatprep.subr.mxu0 0.0
    %1306 = vmatpush1.msra.mxu0 0.0
    %1307 = vmatprep.subr.mxu0 0.0
    %1308 = vmatpush1.msra.mxu0 0.0
    %1309 = vmatprep.subr.mxu0 0.0
    %1310 = vmatpush1.msra.mxu0 0.0
    %1311 = vmatprep.subr.mxu0 0.0
    %1312 = vmatpush1.msra.mxu0 0.0
    %1313 = vmatprep.subr.mxu0 0.0
    %1314 = vmatpush1.msra.mxu0 0.0
    %1315 = vmatprep.subr.mxu0 0.0
    %1316 = vmatpush1.msra.mxu0 0.0
    %1317 = vmatprep.subr.mxu0 0.0
    %1318 = vmatpush1.msra.mxu0 0.0
    %1319 = vmatprep.subr.mxu0 0.0
    %1320 = vmatpush1.msra.mxu0 0.0
    %1321 = vmatprep.subr.mxu0 0.0
    %1322 = vmatpush1.msra.mxu0 0.0
    %1323 = vmatprep.subr.mxu0 0.0
    %1324 = vmatpush1.msra.mxu0 0.0
    %1325 = vmatprep.subr.mxu0 0.0
    %1326 = vmatpush1.msra.mxu0 0.0
    %1327 = vmatprep.subr.mxu0 0.0
    %1328 = vmatpush1.msra.mxu0 0.0
    %1329 = vmatprep.subr.mxu0 0.0
    %1330 = vmatpush1.msra.mxu0 0.0
    %1331 = vmatprep.subr.mxu0 0.0
    %1332 = vmatpush1.msra.mxu0 0.0
    %1333 = vmatprep.subr.mxu0 0.0
    %1334 = vmatpush1.msra.mxu0 0.0
    %1335 = vmatprep.subr.mxu0 0.0
    %1336 = vmatpush1.msra.mxu0 0.0
    %1337 = vmatprep.subr.mxu0 0.0
    %1338 = vmatpush1.msra.mxu0 0.0
    %1339 = vmatprep.subr.mxu0 0.0
    %1340 = vmatpush1.msra.mxu0 0.0
    %1341 = vmatprep.subr.mxu0 0.0
    %1342 = vmatpush1.msra.mxu0 0.0
    %1343 = vmatprep.subr.mxu0 0.0
    %1344 = vmatpush1.msra.mxu0 0.0
    %1345 = vmatprep.subr.mxu0 0.0
    %1346 = vmatpush1.msra.mxu0 0.0
    %1347 = vmatprep.mubr.f32.mxu0 0.0
    %v1348 = vand.u32 %v38, 4294901760
    %v1349 = vsub.f32 %v38, %v1348
    %v1350 = vand.u32 %v1349, 4294901760
    %1351 = vmatmul.mubr.f32.gmra.mrb[0].mxu0 %v1350
    %v1352 = vpop.f32.mrb[0].mxu0
    %v1353 = vadd.f32 %v1272, %v1352
    %v1354 = vpop.f32.mrb[0].mxu0
    %1355 = vmatprep.mubr.f32.mxu0 0.0
    %v1356 = vand.u32 %v41, 4294901760
    %v1357 = vsub.f32 %v41, %v1356
    %v1358 = vand.u32 %v1357, 4294901760
    %1359 = vmatmul.mubr.f32.gmra.mrb[0].mxu0 %v1358
    %v1360 = vpop.f32.mrb[0].mxu0
    %v1361 = vadd.f32 %v1279, %v1360
    %v1362 = vpop.f32.mrb[0].mxu0
    %1363 = vdwg.mxu0
    %1364 = vmatprep.subr.mxu0 0.0
    %v1365 = vand.u32 %v1031, 4294901760
    %v1366 = vsub.f32 %v1031, %v1365
    %v1367 = vand.u32 %v1366, 4294901760
    %1368 = vmatpush1.msra.mxu0 %v1367
    %1369 = vmatprep.subr.mxu0 0.0
    %1370 = vmatpush1.msra.mxu0 0.0
    %1371 = vmatprep.subr.mxu0 0.0
    %1372 = vmatpush1.msra.mxu0 0.0
    %1373 = vmatprep.subr.mxu0 0.0
    %1374 = vmatpush1.msra.mxu0 0.0
    %1375 = vmatprep.subr.mxu0 0.0
    %1376 = vmatpush1.msra.mxu0 0.0
    %1377 = vmatprep.subr.mxu0 0.0
    %1378 = vmatpush1.msra.mxu0 0.0
    %1379 = vmatprep.subr.mxu0 0.0
    %1380 = vmatpush1.msra.mxu0 0.0
    %1381 = vmatprep.subr.mxu0 0.0
    %1382 = vmatpush1.msra.mxu0 0.0
    %1383 = vmatprep.subr.mxu0 0.0
    %1384 = vmatpush1.msra.mxu0 0.0
    %1385 = vmatprep.subr.mxu0 0.0
    %1386 = vmatpush1.msra.mxu0 0.0
    %1387 = vmatprep.subr.mxu0 0.0
    %1388 = vmatpush1.msra.mxu0 0.0
    %1389 = vmatprep.subr.mxu0 0.0
    %1390 = vmatpush1.msra.mxu0 0.0
    %1391 = vmatprep.subr.mxu0 0.0
    %1392 = vmatpush1.msra.mxu0 0.0
    %1393 = vmatprep.subr.mxu0 0.0
    %1394 = vmatpush1.msra.mxu0 0.0
    %1395 = vmatprep.subr.mxu0 0.0
    %1396 = vmatpush1.msra.mxu0 0.0
    %1397 = vmatprep.subr.mxu0 0.0
    %1398 = vmatpush1.msra.mxu0 0.0
    %1399 = vmatprep.subr.mxu0 0.0
    %1400 = vmatpush1.msra.mxu0 0.0
    %1401 = vmatprep.subr.mxu0 0.0
    %1402 = vmatpush1.msra.mxu0 0.0
    %1403 = vmatprep.subr.mxu0 0.0
    %1404 = vmatpush1.msra.mxu0 0.0
    %1405 = vmatprep.subr.mxu0 0.0
    %1406 = vmatpush1.msra.mxu0 0.0
    %1407 = vmatprep.subr.mxu0 0.0
    %1408 = vmatpush1.msra.mxu0 0.0
    %1409 = vmatprep.subr.mxu0 0.0
    %1410 = vmatpush1.msra.mxu0 0.0
    %1411 = vmatprep.subr.mxu0 0.0
    %1412 = vmatpush1.msra.mxu0 0.0
    %1413 = vmatprep.subr.mxu0 0.0
    %1414 = vmatpush1.msra.mxu0 0.0
    %1415 = vmatprep.subr.mxu0 0.0
    %1416 = vmatpush1.msra.mxu0 0.0
    %1417 = vmatprep.subr.mxu0 0.0
    %1418 = vmatpush1.msra.mxu0 0.0
    %1419 = vmatprep.subr.mxu0 0.0
    %1420 = vmatpush1.msra.mxu0 0.0
    %1421 = vmatprep.subr.mxu0 0.0
    %1422 = vmatpush1.msra.mxu0 0.0
    %1423 = vmatprep.subr.mxu0 0.0
    %1424 = vmatpush1.msra.mxu0 0.0
    %1425 = vmatprep.subr.mxu0 0.0
    %1426 = vmatpush1.msra.mxu0 0.0
    %1427 = vmatprep.subr.mxu0 0.0
    %1428 = vmatpush1.msra.mxu0 0.0
    %1429 = vmatprep.subr.mxu0 0.0
    %1430 = vmatpush1.msra.mxu0 0.0
    %1431 = vmatprep.mubr.f32.mxu0 0.0
    %v1432 = vand.u32 %v38, 4294901760
    %1433 = vmatmul.mubr.f32.gmra.mrb[0].mxu0 %v1432
    %v1434 = vpop.f32.mrb[0].mxu0
    %v1435 = vadd.f32 %v1353, %v1434
    %v1436 = vpop.f32.mrb[0].mxu0
    %1437 = vmatprep.mubr.f32.mxu0 0.0
    %v1438 = vand.u32 %v41, 4294901760
    %1439 = vmatmul.mubr.f32.gmra.mrb[0].mxu0 %v1438
    %v1440 = vpop.f32.mrb[0].mxu0
    %v1441 = vadd.f32 %v1361, %v1440
    %v1442 = vpop.f32.mrb[0].mxu0
    %1443 = vdwg.mxu0
    %1444 = vmatprep.subr.mxu0 0.0
    %v1445 = vand.u32 %v1031, 4294901760
    %1446 = vmatpush1.msra.mxu0 %v1445
    %1447 = vmatprep.subr.mxu0 0.0
    %1448 = vmatpush1.msra.mxu0 0.0
    %1449 = vmatprep.subr.mxu0 0.0
    %1450 = vmatpush1.msra.mxu0 0.0
    %1451 = vmatprep.subr.mxu0 0.0
    %1452 = vmatpush1.msra.mxu0 0.0
    %1453 = vmatprep.subr.mxu0 0.0
    %1454 = vmatpush1.msra.mxu0 0.0
    %1455 = vmatprep.subr.mxu0 0.0
    %1456 = vmatpush1.msra.mxu0 0.0
    %1457 = vmatprep.subr.mxu0 0.0
    %1458 = vmatpush1.msra.mxu0 0.0
    %1459 = vmatprep.subr.mxu0 0.0
    %1460 = vmatpush1.msra.mxu0 0.0
    %1461 = vmatprep.subr.mxu0 0.0
    %1462 = vmatpush1.msra.mxu0 0.0
    %1463 = vmatprep.subr.mxu0 0.0
    %1464 = vmatpush1.msra.mxu0 0.0
    %1465 = vmatprep.subr.mxu0 0.0
    %1466 = vmatpush1.msra.mxu0 0.0
    %1467 = vmatprep.subr.mxu0 0.0
    %1468 = vmatpush1.msra.mxu0 0.0
    %1469 = vmatprep.subr.mxu0 0.0
    %1470 = vmatpush1.msra.mxu0 0.0
    %1471 = vmatprep.subr.mxu0 0.0
    %1472 = vmatpush1.msra.mxu0 0.0
    %1473 = vmatprep.subr.mxu0 0.0
    %1474 = vmatpush1.msra.mxu0 0.0
    %1475 = vmatprep.subr.mxu0 0.0
    %1476 = vmatpush1.msra.mxu0 0.0
    %1477 = vmatprep.subr.mxu0 0.0
    %1478 = vmatpush1.msra.mxu0 0.0
    %1479 = vmatprep.subr.mxu0 0.0
    %1480 = vmatpush1.msra.mxu0 0.0
    %1481 = vmatprep.subr.mxu0 0.0
    %1482 = vmatpush1.msra.mxu0 0.0
    %1483 = vmatprep.subr.mxu0 0.0
    %1484 = vmatpush1.msra.mxu0 0.0
    %1485 = vmatprep.subr.mxu0 0.0
    %1486 = vmatpush1.msra.mxu0 0.0
    %1487 = vmatprep.subr.mxu0 0.0
    %1488 = vmatpush1.msra.mxu0 0.0
    %1489 = vmatprep.subr.mxu0 0.0
    %1490 = vmatpush1.msra.mxu0 0.0
    %1491 = vmatprep.subr.mxu0 0.0
    %1492 = vmatpush1.msra.mxu0 0.0
    %1493 = vmatprep.subr.mxu0 0.0
    %1494 = vmatpush1.msra.mxu0 0.0
    %1495 = vmatprep.subr.mxu0 0.0
    %1496 = vmatpush1.msra.mxu0 0.0
    %1497 = vmatprep.subr.mxu0 0.0
    %1498 = vmatpush1.msra.mxu0 0.0
    %1499 = vmatprep.subr.mxu0 0.0
    %1500 = vmatpush1.msra.mxu0 0.0
    %1501 = vmatprep.subr.mxu0 0.0
    %1502 = vmatpush1.msra.mxu0 0.0
    %1503 = vmatprep.subr.mxu0 0.0
    %1504 = vmatpush1.msra.mxu0 0.0
    %1505 = vmatprep.subr.mxu0 0.0
    %1506 = vmatpush1.msra.mxu0 0.0
    %1507 = vmatprep.subr.mxu0 0.0
    %1508 = vmatpush1.msra.mxu0 0.0
    %1509 = vmatprep.mubr.f32.mxu0 0.0
    %v1510 = vand.u32 %v38, 4294901760
    %1511 = vmatmul.mubr.f32.gmra.mrb[0].mxu0 %v1510
    %v1512 = vpop.f32.mrb[0].mxu0
    %v1513 = vadd.f32 %v1435, %v1512
    %v1514 = vpop.f32.mrb[0].mxu0
    %1515 = vmatprep.mubr.f32.mxu0 0.0
    %v1516 = vand.u32 %v41, 4294901760
    %1517 = vmatmul.mubr.f32.gmra.mrb[0].mxu0 %v1516
    %v1518 = vpop.f32.mrb[0].mxu0
    %v1519 = vadd.f32 %v1441, %v1518
    %v1520 = vpop.f32.mrb[0].mxu0
    %1521 = vdwg.mxu0
    %v1523 = vsel %vm36, %v33, 0
    %v1526 = vsel %vm36, %v34, 0
    %1528 = vmatprep.subr.mxu0 0.0
    %v1529 = vand.u32 %v1031, 4294901760
    %1530 = vmatpush1.msra.mxu0 %v1529
    %1531 = vmatprep.subr.mxu0 0.0
    %1532 = vmatpush1.msra.mxu0 0.0
    %1533 = vmatprep.subr.mxu0 0.0
    %1534 = vmatpush1.msra.mxu0 0.0
    %1535 = vmatprep.subr.mxu0 0.0
    %1536 = vmatpush1.msra.mxu0 0.0
    %1537 = vmatprep.subr.mxu0 0.0
    %1538 = vmatpush1.msra.mxu0 0.0
    %1539 = vmatprep.subr.mxu0 0.0
    %1540 = vmatpush1.msra.mxu0 0.0
    %1541 = vmatprep.subr.mxu0 0.0
    %1542 = vmatpush1.msra.mxu0 0.0
    %1543 = vmatprep.subr.mxu0 0.0
    %1544 = vmatpush1.msra.mxu0 0.0
    %1545 = vmatprep.subr.mxu0 0.0
    %1546 = vmatpush1.msra.mxu0 0.0
    %1547 = vmatprep.subr.mxu0 0.0
    %1548 = vmatpush1.msra.mxu0 0.0
    %1549 = vmatprep.subr.mxu0 0.0
    %1550 = vmatpush1.msra.mxu0 0.0
    %1551 = vmatprep.subr.mxu0 0.0
    %1552 = vmatpush1.msra.mxu0 0.0
    %1553 = vmatprep.subr.mxu0 0.0
    %1554 = vmatpush1.msra.mxu0 0.0
    %1555 = vmatprep.subr.mxu0 0.0
    %1556 = vmatpush1.msra.mxu0 0.0
    %1557 = vmatprep.subr.mxu0 0.0
    %1558 = vmatpush1.msra.mxu0 0.0
    %1559 = vmatprep.subr.mxu0 0.0
    %1560 = vmatpush1.msra.mxu0 0.0
    %1561 = vmatprep.subr.mxu0 0.0
    %1562 = vmatpush1.msra.mxu0 0.0
    %1563 = vmatprep.subr.mxu0 0.0
    %1564 = vmatpush1.msra.mxu0 0.0
    %1565 = vmatprep.subr.mxu0 0.0
    %1566 = vmatpush1.msra.mxu0 0.0
    %1567 = vmatprep.subr.mxu0 0.0
    %1568 = vmatpush1.msra.mxu0 0.0
    %1569 = vmatprep.subr.mxu0 0.0
    %1570 = vmatpush1.msra.mxu0 0.0
    %1571 = vmatprep.subr.mxu0 0.0
    %1572 = vmatpush1.msra.mxu0 0.0
    %1573 = vmatprep.subr.mxu0 0.0
    %1574 = vmatpush1.msra.mxu0 0.0
    %1575 = vmatprep.subr.mxu0 0.0
    %1576 = vmatpush1.msra.mxu0 0.0
    %1577 = vmatprep.subr.mxu0 0.0
    %1578 = vmatpush1.msra.mxu0 0.0
    %1579 = vmatprep.subr.mxu0 0.0
    %1580 = vmatpush1.msra.mxu0 0.0
    %1581 = vmatprep.subr.mxu0 0.0
    %1582 = vmatpush1.msra.mxu0 0.0
    %1583 = vmatprep.subr.mxu0 0.0
    %1584 = vmatpush1.msra.mxu0 0.0
    %1585 = vmatprep.subr.mxu0 0.0
    %1586 = vmatpush1.msra.mxu0 0.0
    %1587 = vmatprep.subr.mxu0 0.0
    %1588 = vmatpush1.msra.mxu0 0.0
    %1589 = vmatprep.subr.mxu0 0.0
    %1590 = vmatpush1.msra.mxu0 0.0
    %1591 = vmatprep.subr.mxu0 0.0
    %1592 = vmatpush1.msra.mxu0 0.0
    %1593 = vmatprep.mubr.f32.mxu0 0.0
    %v1594 = vand.u32 %v1523, 4294901760
    %v1595 = vsub.f32 %v1523, %v1594
    %v1596 = vand.u32 %v1595, 4294901760
    %v1597 = vsub.f32 %v1595, %v1596
    %v1598 = vand.u32 %v1597, 4294901760
    %1599 = vmatmul.mubr.f32.gmra.mrb[0].mxu0 %v1598
    %v1600 = vpop.f32.mrb[0].mxu0
    %v1601 = vadd.f32 0.0, %v1600
    %v1602 = vpop.f32.mrb[0].mxu0
    %1603 = vmatprep.mubr.f32.mxu0 0.0
    %v1604 = vand.u32 %v1526, 4294901760
    %v1605 = vsub.f32 %v1526, %v1604
    %v1606 = vand.u32 %v1605, 4294901760
    %v1607 = vsub.f32 %v1605, %v1606
    %v1608 = vand.u32 %v1607, 4294901760
    %1609 = vmatmul.mubr.f32.gmra.mrb[0].mxu0 %v1608
    %v1610 = vpop.f32.mrb[0].mxu0
    %v1611 = vadd.f32 0.0, %v1610
    %v1612 = vpop.f32.mrb[0].mxu0
    %1613 = vdwg.mxu0
    %1614 = vmatprep.subr.mxu0 0.0
    %v1615 = vand.u32 %v1031, 4294901760
    %v1616 = vsub.f32 %v1031, %v1615
    %v1617 = vand.u32 %v1616, 4294901760
    %v1618 = vsub.f32 %v1616, %v1617
    %v1619 = vand.u32 %v1618, 4294901760
    %1620 = vmatpush1.msra.mxu0 %v1619
    %1621 = vmatprep.subr.mxu0 0.0
    %1622 = vmatpush1.msra.mxu0 0.0
    %1623 = vmatprep.subr.mxu0 0.0
    %1624 = vmatpush1.msra.mxu0 0.0
    %1625 = vmatprep.subr.mxu0 0.0
    %1626 = vmatpush1.msra.mxu0 0.0
    %1627 = vmatprep.subr.mxu0 0.0
    %1628 = vmatpush1.msra.mxu0 0.0
    %1629 = vmatprep.subr.mxu0 0.0
    %1630 = vmatpush1.msra.mxu0 0.0
    %1631 = vmatprep.subr.mxu0 0.0
    %1632 = vmatpush1.msra.mxu0 0.0
    %1633 = vmatprep.subr.mxu0 0.0
    %1634 = vmatpush1.msra.mxu0 0.0
    %1635 = vmatprep.subr.mxu0 0.0
    %1636 = vmatpush1.msra.mxu0 0.0
    %1637 = vmatprep.subr.mxu0 0.0
    %1638 = vmatpush1.msra.mxu0 0.0
    %1639 = vmatprep.subr.mxu0 0.0
    %1640 = vmatpush1.msra.mxu0 0.0
    %1641 = vmatprep.subr.mxu0 0.0
    %1642 = vmatpush1.msra.mxu0 0.0
    %1643 = vmatprep.subr.mxu0 0.0
    %1644 = vmatpush1.msra.mxu0 0.0
    %1645 = vmatprep.subr.mxu0 0.0
    %1646 = vmatpush1.msra.mxu0 0.0
    %1647 = vmatprep.subr.mxu0 0.0
    %1648 = vmatpush1.msra.mxu0 0.0
    %1649 = vmatprep.subr.mxu0 0.0
    %1650 = vmatpush1.msra.mxu0 0.0
    %1651 = vmatprep.subr.mxu0 0.0
    %1652 = vmatpush1.msra.mxu0 0.0
    %1653 = vmatprep.subr.mxu0 0.0
    %1654 = vmatpush1.msra.mxu0 0.0
    %1655 = vmatprep.subr.mxu0 0.0
    %1656 = vmatpush1.msra.mxu0 0.0
    %1657 = vmatprep.subr.mxu0 0.0
    %1658 = vmatpush1.msra.mxu0 0.0
    %1659 = vmatprep.subr.mxu0 0.0
    %1660 = vmatpush1.msra.mxu0 0.0
    %1661 = vmatprep.subr.mxu0 0.0
    %1662 = vmatpush1.msra.mxu0 0.0
    %1663 = vmatprep.subr.mxu0 0.0
    %1664 = vmatpush1.msra.mxu0 0.0
    %1665 = vmatprep.subr.mxu0 0.0
    %1666 = vmatpush1.msra.mxu0 0.0
    %1667 = vmatprep.subr.mxu0 0.0
    %1668 = vmatpush1.msra.mxu0 0.0
    %1669 = vmatprep.subr.mxu0 0.0
    %1670 = vmatpush1.msra.mxu0 0.0
    %1671 = vmatprep.subr.mxu0 0.0
    %1672 = vmatpush1.msra.mxu0 0.0
    %1673 = vmatprep.subr.mxu0 0.0
    %1674 = vmatpush1.msra.mxu0 0.0
    %1675 = vmatprep.subr.mxu0 0.0
    %1676 = vmatpush1.msra.mxu0 0.0
    %1677 = vmatprep.subr.mxu0 0.0
    %1678 = vmatpush1.msra.mxu0 0.0
    %1679 = vmatprep.subr.mxu0 0.0
    %1680 = vmatpush1.msra.mxu0 0.0
    %1681 = vmatprep.subr.mxu0 0.0
    %1682 = vmatpush1.msra.mxu0 0.0
    %1683 = vmatprep.mubr.f32.mxu0 0.0
    %v1684 = vand.u32 %v1523, 4294901760
    %1685 = vmatmul.mubr.f32.gmra.mrb[0].mxu0 %v1684
    %v1686 = vpop.f32.mrb[0].mxu0
    %v1687 = vadd.f32 %v1601, %v1686
    %v1688 = vpop.f32.mrb[0].mxu0
    %1689 = vmatprep.mubr.f32.mxu0 0.0
    %v1690 = vand.u32 %v1526, 4294901760
    %1691 = vmatmul.mubr.f32.gmra.mrb[0].mxu0 %v1690
    %v1692 = vpop.f32.mrb[0].mxu0
    %v1693 = vadd.f32 %v1611, %v1692
    %v1694 = vpop.f32.mrb[0].mxu0
    %1695 = vdwg.mxu0
    %1696 = vmatprep.subr.mxu0 0.0
    %v1697 = vand.u32 %v1031, 4294901760
    %v1698 = vsub.f32 %v1031, %v1697
    %1699 = vmatpush1.msra.mxu0 %v1698
    %1700 = vmatprep.subr.mxu0 0.0
    %1701 = vmatpush1.msra.mxu0 0.0
    %1702 = vmatprep.subr.mxu0 0.0
    %1703 = vmatpush1.msra.mxu0 0.0
    %1704 = vmatprep.subr.mxu0 0.0
    %1705 = vmatpush1.msra.mxu0 0.0
    %1706 = vmatprep.subr.mxu0 0.0
    %1707 = vmatpush1.msra.mxu0 0.0
    %1708 = vmatprep.subr.mxu0 0.0
    %1709 = vmatpush1.msra.mxu0 0.0
    %1710 = vmatprep.subr.mxu0 0.0
    %1711 = vmatpush1.msra.mxu0 0.0
    %1712 = vmatprep.subr.mxu0 0.0
    %1713 = vmatpush1.msra.mxu0 0.0
    %1714 = vmatprep.subr.mxu0 0.0
    %1715 = vmatpush1.msra.mxu0 0.0
    %1716 = vmatprep.subr.mxu0 0.0
    %1717 = vmatpush1.msra.mxu0 0.0
    %1718 = vmatprep.subr.mxu0 0.0
    %1719 = vmatpush1.msra.mxu0 0.0
    %1720 = vmatprep.subr.mxu0 0.0
    %1721 = vmatpush1.msra.mxu0 0.0
    %1722 = vmatprep.subr.mxu0 0.0
    %1723 = vmatpush1.msra.mxu0 0.0
    %1724 = vmatprep.subr.mxu0 0.0
    %1725 = vmatpush1.msra.mxu0 0.0
    %1726 = vmatprep.subr.mxu0 0.0
    %1727 = vmatpush1.msra.mxu0 0.0
    %1728 = vmatprep.subr.mxu0 0.0
    %1729 = vmatpush1.msra.mxu0 0.0
    %1730 = vmatprep.subr.mxu0 0.0
    %1731 = vmatpush1.msra.mxu0 0.0
    %1732 = vmatprep.subr.mxu0 0.0
    %1733 = vmatpush1.msra.mxu0 0.0
    %1734 = vmatprep.subr.mxu0 0.0
    %1735 = vmatpush1.msra.mxu0 0.0
    %1736 = vmatprep.subr.mxu0 0.0
    %1737 = vmatpush1.msra.mxu0 0.0
    %1738 = vmatprep.subr.mxu0 0.0
    %1739 = vmatpush1.msra.mxu0 0.0
    %1740 = vmatprep.subr.mxu0 0.0
    %1741 = vmatpush1.msra.mxu0 0.0
    %1742 = vmatprep.subr.mxu0 0.0
    %1743 = vmatpush1.msra.mxu0 0.0
    %1744 = vmatprep.subr.mxu0 0.0
    %1745 = vmatpush1.msra.mxu0 0.0
    %1746 = vmatprep.subr.mxu0 0.0
    %1747 = vmatpush1.msra.mxu0 0.0
    %1748 = vmatprep.subr.mxu0 0.0
    %1749 = vmatpush1.msra.mxu0 0.0
    %1750 = vmatprep.subr.mxu0 0.0
    %1751 = vmatpush1.msra.mxu0 0.0
    %1752 = vmatprep.subr.mxu0 0.0
    %1753 = vmatpush1.msra.mxu0 0.0
    %1754 = vmatprep.subr.mxu0 0.0
    %1755 = vmatpush1.msra.mxu0 0.0
    %1756 = vmatprep.subr.mxu0 0.0
    %1757 = vmatpush1.msra.mxu0 0.0
    %1758 = vmatprep.subr.mxu0 0.0
    %1759 = vmatpush1.msra.mxu0 0.0
    %1760 = vmatprep.subr.mxu0 0.0
    %1761 = vmatpush1.msra.mxu0 0.0
    %1762 = vmatprep.mubr.f32.mxu0 0.0
    %v1763 = vand.u32 %v1523, 4294901760
    %v1764 = vsub.f32 %v1523, %v1763
    %1765 = vmatmul.mubr.f32.gmra.mrb[0].mxu0 %v1764
    %v1766 = vpop.f32.mrb[0].mxu0
    %v1767 = vadd.f32 %v1687, %v1766
    %v1768 = vpop.f32.mrb[0].mxu0
    %1769 = vmatprep.mubr.f32.mxu0 0.0
    %v1770 = vand.u32 %v1526, 4294901760
    %v1771 = vsub.f32 %v1526, %v1770
    %1772 = vmatmul.mubr.f32.gmra.mrb[0].mxu0 %v1771
    %v1773 = vpop.f32.mrb[0].mxu0
    %v1774 = vadd.f32 %v1693, %v1773
    %v1775 = vpop.f32.mrb[0].mxu0
    %1776 = vdwg.mxu0
    %1777 = vmatprep.subr.mxu0 0.0
    %v1778 = vand.u32 %v1031, 4294901760
    %1779 = vmatpush1.msra.mxu0 %v1778
    %1780 = vmatprep.subr.mxu0 0.0
    %1781 = vmatpush1.msra.mxu0 0.0
    %1782 = vmatprep.subr.mxu0 0.0
    %1783 = vmatpush1.msra.mxu0 0.0
    %1784 = vmatprep.subr.mxu0 0.0
    %1785 = vmatpush1.msra.mxu0 0.0
    %1786 = vmatprep.subr.mxu0 0.0
    %1787 = vmatpush1.msra.mxu0 0.0
    %1788 = vmatprep.subr.mxu0 0.0
    %1789 = vmatpush1.msra.mxu0 0.0
    %1790 = vmatprep.subr.mxu0 0.0
    %1791 = vmatpush1.msra.mxu0 0.0
    %1792 = vmatprep.subr.mxu0 0.0
    %1793 = vmatpush1.msra.mxu0 0.0
    %1794 = vmatprep.subr.mxu0 0.0
    %1795 = vmatpush1.msra.mxu0 0.0
    %1796 = vmatprep.subr.mxu0 0.0
    %1797 = vmatpush1.msra.mxu0 0.0
    %1798 = vmatprep.subr.mxu0 0.0
    %1799 = vmatpush1.msra.mxu0 0.0
    %1800 = vmatprep.subr.mxu0 0.0
    %1801 = vmatpush1.msra.mxu0 0.0
    %1802 = vmatprep.subr.mxu0 0.0
    %1803 = vmatpush1.msra.mxu0 0.0
    %1804 = vmatprep.subr.mxu0 0.0
    %1805 = vmatpush1.msra.mxu0 0.0
    %1806 = vmatprep.subr.mxu0 0.0
    %1807 = vmatpush1.msra.mxu0 0.0
    %1808 = vmatprep.subr.mxu0 0.0
    %1809 = vmatpush1.msra.mxu0 0.0
    %1810 = vmatprep.subr.mxu0 0.0
    %1811 = vmatpush1.msra.mxu0 0.0
    %1812 = vmatprep.subr.mxu0 0.0
    %1813 = vmatpush1.msra.mxu0 0.0
    %1814 = vmatprep.subr.mxu0 0.0
    %1815 = vmatpush1.msra.mxu0 0.0
    %1816 = vmatprep.subr.mxu0 0.0
    %1817 = vmatpush1.msra.mxu0 0.0
    %1818 = vmatprep.subr.mxu0 0.0
    %1819 = vmatpush1.msra.mxu0 0.0
    %1820 = vmatprep.subr.mxu0 0.0
    %1821 = vmatpush1.msra.mxu0 0.0
    %1822 = vmatprep.subr.mxu0 0.0
    %1823 = vmatpush1.msra.mxu0 0.0
    %1824 = vmatprep.subr.mxu0 0.0
    %1825 = vmatpush1.msra.mxu0 0.0
    %1826 = vmatprep.subr.mxu0 0.0
    %1827 = vmatpush1.msra.mxu0 0.0
    %1828 = vmatprep.subr.mxu0 0.0
    %1829 = vmatpush1.msra.mxu0 0.0
    %1830 = vmatprep.subr.mxu0 0.0
    %1831 = vmatpush1.msra.mxu0 0.0
    %1832 = vmatprep.subr.mxu0 0.0
    %1833 = vmatpush1.msra.mxu0 0.0
    %1834 = vmatprep.subr.mxu0 0.0
    %1835 = vmatpush1.msra.mxu0 0.0
    %1836 = vmatprep.subr.mxu0 0.0
    %1837 = vmatpush1.msra.mxu0 0.0
    %1838 = vmatprep.subr.mxu0 0.0
    %1839 = vmatpush1.msra.mxu0 0.0
    %1840 = vmatprep.subr.mxu0 0.0
    %1841 = vmatpush1.msra.mxu0 0.0
    %1842 = vmatprep.mubr.f32.mxu0 0.0
    %v1843 = vand.u32 %v1523, 4294901760
    %v1844 = vsub.f32 %v1523, %v1843
    %v1845 = vand.u32 %v1844, 4294901760
    %1846 = vmatmul.mubr.f32.gmra.mrb[0].mxu0 %v1845
    %v1847 = vpop.f32.mrb[0].mxu0
    %v1848 = vadd.f32 %v1767, %v1847
    %v1849 = vpop.f32.mrb[0].mxu0
    %1850 = vmatprep.mubr.f32.mxu0 0.0
    %v1851 = vand.u32 %v1526, 4294901760
    %v1852 = vsub.f32 %v1526, %v1851
    %v1853 = vand.u32 %v1852, 4294901760
    %1854 = vmatmul.mubr.f32.gmra.mrb[0].mxu0 %v1853
    %v1855 = vpop.f32.mrb[0].mxu0
    %v1856 = vadd.f32 %v1774, %v1855
    %v1857 = vpop.f32.mrb[0].mxu0
    %1858 = vdwg.mxu0
    %1859 = vmatprep.subr.mxu0 0.0
    %v1860 = vand.u32 %v1031, 4294901760
    %v1861 = vsub.f32 %v1031, %v1860
    %v1862 = vand.u32 %v1861, 4294901760
    %1863 = vmatpush1.msra.mxu0 %v1862
    %1864 = vmatprep.subr.mxu0 0.0
    %1865 = vmatpush1.msra.mxu0 0.0
    %1866 = vmatprep.subr.mxu0 0.0
    %1867 = vmatpush1.msra.mxu0 0.0
    %1868 = vmatprep.subr.mxu0 0.0
    %1869 = vmatpush1.msra.mxu0 0.0
    %1870 = vmatprep.subr.mxu0 0.0
    %1871 = vmatpush1.msra.mxu0 0.0
    %1872 = vmatprep.subr.mxu0 0.0
    %1873 = vmatpush1.msra.mxu0 0.0
    %1874 = vmatprep.subr.mxu0 0.0
    %1875 = vmatpush1.msra.mxu0 0.0
    %1876 = vmatprep.subr.mxu0 0.0
    %1877 = vmatpush1.msra.mxu0 0.0
    %1878 = vmatprep.subr.mxu0 0.0
    %1879 = vmatpush1.msra.mxu0 0.0
    %1880 = vmatprep.subr.mxu0 0.0
    %1881 = vmatpush1.msra.mxu0 0.0
    %1882 = vmatprep.subr.mxu0 0.0
    %1883 = vmatpush1.msra.mxu0 0.0
    %1884 = vmatprep.subr.mxu0 0.0
    %1885 = vmatpush1.msra.mxu0 0.0
    %1886 = vmatprep.subr.mxu0 0.0
    %1887 = vmatpush1.msra.mxu0 0.0
    %1888 = vmatprep.subr.mxu0 0.0
    %1889 = vmatpush1.msra.mxu0 0.0
    %1890 = vmatprep.subr.mxu0 0.0
    %1891 = vmatpush1.msra.mxu0 0.0
    %1892 = vmatprep.subr.mxu0 0.0
    %1893 = vmatpush1.msra.mxu0 0.0
    %1894 = vmatprep.subr.mxu0 0.0
    %1895 = vmatpush1.msra.mxu0 0.0
    %1896 = vmatprep.subr.mxu0 0.0
    %1897 = vmatpush1.msra.mxu0 0.0
    %1898 = vmatprep.subr.mxu0 0.0
    %1899 = vmatpush1.msra.mxu0 0.0
    %1900 = vmatprep.subr.mxu0 0.0
    %1901 = vmatpush1.msra.mxu0 0.0
    %1902 = vmatprep.subr.mxu0 0.0
    %1903 = vmatpush1.msra.mxu0 0.0
    %1904 = vmatprep.subr.mxu0 0.0
    %1905 = vmatpush1.msra.mxu0 0.0
    %1906 = vmatprep.subr.mxu0 0.0
    %1907 = vmatpush1.msra.mxu0 0.0
    %1908 = vmatprep.subr.mxu0 0.0
    %1909 = vmatpush1.msra.mxu0 0.0
    %1910 = vmatprep.subr.mxu0 0.0
    %1911 = vmatpush1.msra.mxu0 0.0
    %1912 = vmatprep.subr.mxu0 0.0
    %1913 = vmatpush1.msra.mxu0 0.0
    %1914 = vmatprep.subr.mxu0 0.0
    %1915 = vmatpush1.msra.mxu0 0.0
    %1916 = vmatprep.subr.mxu0 0.0
    %1917 = vmatpush1.msra.mxu0 0.0
    %1918 = vmatprep.subr.mxu0 0.0
    %1919 = vmatpush1.msra.mxu0 0.0
    %1920 = vmatprep.subr.mxu0 0.0
    %1921 = vmatpush1.msra.mxu0 0.0
    %1922 = vmatprep.subr.mxu0 0.0
    %1923 = vmatpush1.msra.mxu0 0.0
    %1924 = vmatprep.subr.mxu0 0.0
    %1925 = vmatpush1.msra.mxu0 0.0
    %1926 = vmatprep.mubr.f32.mxu0 0.0
    %v1927 = vand.u32 %v1523, 4294901760
    %1928 = vmatmul.mubr.f32.gmra.mrb[0].mxu0 %v1927
    %v1929 = vpop.f32.mrb[0].mxu0
    %v1930 = vadd.f32 %v1848, %v1929
    %v1931 = vpop.f32.mrb[0].mxu0
    %1932 = vmatprep.mubr.f32.mxu0 0.0
    %v1933 = vand.u32 %v1526, 4294901760
    %1934 = vmatmul.mubr.f32.gmra.mrb[0].mxu0 %v1933
    %v1935 = vpop.f32.mrb[0].mxu0
    %v1936 = vadd.f32 %v1856, %v1935
    %v1937 = vpop.f32.mrb[0].mxu0
    %1938 = vdwg.mxu0
    %1939 = vmatprep.subr.mxu0 0.0
    %v1940 = vand.u32 %v1031, 4294901760
    %1941 = vmatpush1.msra.mxu0 %v1940
    %1942 = vmatprep.subr.mxu0 0.0
    %1943 = vmatpush1.msra.mxu0 0.0
    %1944 = vmatprep.subr.mxu0 0.0
    %1945 = vmatpush1.msra.mxu0 0.0
    %1946 = vmatprep.subr.mxu0 0.0
    %1947 = vmatpush1.msra.mxu0 0.0
    %1948 = vmatprep.subr.mxu0 0.0
    %1949 = vmatpush1.msra.mxu0 0.0
    %1950 = vmatprep.subr.mxu0 0.0
    %1951 = vmatpush1.msra.mxu0 0.0
    %1952 = vmatprep.subr.mxu0 0.0
    %1953 = vmatpush1.msra.mxu0 0.0
    %1954 = vmatprep.subr.mxu0 0.0
    %1955 = vmatpush1.msra.mxu0 0.0
    %1956 = vmatprep.subr.mxu0 0.0
    %1957 = vmatpush1.msra.mxu0 0.0
    %1958 = vmatprep.subr.mxu0 0.0
    %1959 = vmatpush1.msra.mxu0 0.0
    %1960 = vmatprep.subr.mxu0 0.0
    %1961 = vmatpush1.msra.mxu0 0.0
    %1962 = vmatprep.subr.mxu0 0.0
    %1963 = vmatpush1.msra.mxu0 0.0
    %1964 = vmatprep.subr.mxu0 0.0
    %1965 = vmatpush1.msra.mxu0 0.0
    %1966 = vmatprep.subr.mxu0 0.0
    %1967 = vmatpush1.msra.mxu0 0.0
    %1968 = vmatprep.subr.mxu0 0.0
    %1969 = vmatpush1.msra.mxu0 0.0
    %1970 = vmatprep.subr.mxu0 0.0
    %1971 = vmatpush1.msra.mxu0 0.0
    %1972 = vmatprep.subr.mxu0 0.0
    %1973 = vmatpush1.msra.mxu0 0.0
    %1974 = vmatprep.subr.mxu0 0.0
    %1975 = vmatpush1.msra.mxu0 0.0
    %1976 = vmatprep.subr.mxu0 0.0
    %1977 = vmatpush1.msra.mxu0 0.0
    %1978 = vmatprep.subr.mxu0 0.0
    %1979 = vmatpush1.msra.mxu0 0.0
    %1980 = vmatprep.subr.mxu0 0.0
    %1981 = vmatpush1.msra.mxu0 0.0
    %1982 = vmatprep.subr.mxu0 0.0
    %1983 = vmatpush1.msra.mxu0 0.0
    %1984 = vmatprep.subr.mxu0 0.0
    %1985 = vmatpush1.msra.mxu0 0.0
    %1986 = vmatprep.subr.mxu0 0.0
    %1987 = vmatpush1.msra.mxu0 0.0
    %1988 = vmatprep.subr.mxu0 0.0
    %1989 = vmatpush1.msra.mxu0 0.0
    %1990 = vmatprep.subr.mxu0 0.0
    %1991 = vmatpush1.msra.mxu0 0.0
    %1992 = vmatprep.subr.mxu0 0.0
    %1993 = vmatpush1.msra.mxu0 0.0
    %1994 = vmatprep.subr.mxu0 0.0
    %1995 = vmatpush1.msra.mxu0 0.0
    %1996 = vmatprep.subr.mxu0 0.0
    %1997 = vmatpush1.msra.mxu0 0.0
    %1998 = vmatprep.subr.mxu0 0.0
    %1999 = vmatpush1.msra.mxu0 0.0
    %2000 = vmatprep.subr.mxu0 0.0
    %2001 = vmatpush1.msra.mxu0 0.0
    %2002 = vmatprep.subr.mxu0 0.0
    %2003 = vmatpush1.msra.mxu0 0.0
    %2004 = vmatprep.mubr.f32.mxu0 0.0
    %v2005 = vand.u32 %v1523, 4294901760
    %2006 = vmatmul.mubr.f32.gmra.mrb[0].mxu0 %v2005
    %v2007 = vpop.f32.mrb[0].mxu0
    %v2008 = vadd.f32 %v1930, %v2007
    %v2009 = vpop.f32.mrb[0].mxu0
    %2010 = vmatprep.mubr.f32.mxu0 0.0
    %v2011 = vand.u32 %v1526, 4294901760
    %2012 = vmatmul.mubr.f32.gmra.mrb[0].mxu0 %v2011
    %v2013 = vpop.f32.mrb[0].mxu0
    %v2014 = vadd.f32 %v1936, %v2013
    %v2015 = vpop.f32.mrb[0].mxu0
    %2016 = vdwg.mxu0
    %v2017 = vmul.f32 %v527, %v1020
    %vm2018 = vcmask 523264
    %v2019 = vsel %vm2018, %v2017, 0.0
    %2020 = vadd.xlane.f32.xlu0 %v2019
    %v2021 = vpop.xlane.xlu0 %2020
    %v2022 = vmul.f32 %v2021, %v2021
    %vm2023 = vcmask 7168
    %v2024 = vsel %vm2023, %v2022, 0.0
    %2025 = vadd.xlane.f32.xlu0 %v2024
    %v2026 = vpop.xlane.xlu0 %2025
    %v2027 = vrot.slane %v2026, 4
    %v2028 = vadd.f32 %v2026, %v2027
    %v2029 = vrot.slane %v2028, 2
    %v2030 = vadd.f32 %v2028, %v2029
    %v2031 = vrot.slane %v2030, 1
    %v2032 = vadd.f32 %v2030, %v2031
    %s2033 = vtos %v2032
    %v2034 = vstv %s2033
    %v2035 = vrsqrt.pop %v2034
    %v2036 = vmul.f32 %v2034, %v2035
    %vm2037 = vcmp.eq.f32.partialorder %v2034, inf
    %v2038 = vsel %vm2037, %v2034, %v2036
    %vm2039 = vcmp.eq.f32.partialorder %v2034, 0.0
    %v2040 = vand.u32 %v2034, 2147483648
    %v2041 = vsel %vm2039, %v2040, %v2038
    %s2042 = vtos %v2041
    %s2043 = smax.f32 %s2042, 1e-12
    %v2044 = vstv %s2043
    %v2045 = vrcp.pop %v2044
    %v2046 = vmul.f32 %v2021, %v2045
    %v2047 = vmul.f32 %v2046, 1.442695
    %v2048 = vpow.pop %v2047
    %v2050 = vsel %vm2018, %v527, 0
    %v2053 = vsel %vm2018, %v1020, 0
    %2055 = vmatprep.subr.mxu0 0.0
    %v2056 = vand.u32 %v2053, 4294901760
    %2057 = vmatpush1.xpose.msra.mxu0 %v2056
    %2058 = vmatprep.subr.mxu0 0.0
    %2059 = vmatpush1.xpose.msra.mxu0 0.0
    %2060 = vmatprep.subr.mxu0 0.0
    %2061 = vmatpush1.xpose.msra.mxu0 0.0
    %2062 = vmatprep.subr.mxu0 0.0
    %2063 = vmatpush1.xpose.msra.mxu0 0.0
    %2064 = vmatprep.subr.mxu0 0.0
    %2065 = vmatpush1.xpose.msra.mxu0 0.0
    %2066 = vmatprep.subr.mxu0 0.0
    %2067 = vmatpush1.xpose.msra.mxu0 0.0
    %2068 = vmatprep.subr.mxu0 0.0
    %2069 = vmatpush1.xpose.msra.mxu0 0.0
    %2070 = vmatprep.subr.mxu0 0.0
    %2071 = vmatpush1.xpose.msra.mxu0 0.0
    %2072 = vmatprep.subr.mxu0 0.0
    %2073 = vmatpush1.xpose.msra.mxu0 0.0
    %2074 = vmatprep.subr.mxu0 0.0
    %2075 = vmatpush1.xpose.msra.mxu0 0.0
    %2076 = vmatprep.subr.mxu0 0.0
    %2077 = vmatpush1.xpose.msra.mxu0 0.0
    %2078 = vmatprep.subr.mxu0 0.0
    %2079 = vmatpush1.xpose.msra.mxu0 0.0
    %2080 = vmatprep.subr.mxu0 0.0
    %2081 = vmatpush1.xpose.msra.mxu0 0.0
    %2082 = vmatprep.subr.mxu0 0.0
    %2083 = vmatpush1.xpose.msra.mxu0 0.0
    %2084 = vmatprep.subr.mxu0 0.0
    %2085 = vmatpush1.xpose.msra.mxu0 0.0
    %2086 = vmatprep.subr.mxu0 0.0
    %2087 = vmatpush1.xpose.msra.mxu0 0.0
    %2088 = vmatprep.subr.mxu0 0.0
    %2089 = vmatpush1.xpose.msra.mxu0 0.0
    %2090 = vmatprep.subr.mxu0 0.0
    %2091 = vmatpush1.xpose.msra.mxu0 0.0
    %2092 = vmatprep.subr.mxu0 0.0
    %2093 = vmatpush1.xpose.msra.mxu0 0.0
    %2094 = vmatprep.subr.mxu0 0.0
    %2095 = vmatpush1.xpose.msra.mxu0 0.0
    %2096 = vmatprep.subr.mxu0 0.0
    %2097 = vmatpush1.xpose.msra.mxu0 0.0
    %2098 = vmatprep.subr.mxu0 0.0
    %2099 = vmatpush1.xpose.msra.mxu0 0.0
    %2100 = vmatprep.subr.mxu0 0.0
    %2101 = vmatpush1.xpose.msra.mxu0 0.0
    %2102 = vmatprep.subr.mxu0 0.0
    %2103 = vmatpush1.xpose.msra.mxu0 0.0
    %2104 = vmatprep.subr.mxu0 0.0
    %2105 = vmatpush1.xpose.msra.mxu0 0.0
    %2106 = vmatprep.subr.mxu0 0.0
    %2107 = vmatpush1.xpose.msra.mxu0 0.0
    %2108 = vmatprep.subr.mxu0 0.0
    %2109 = vmatpush1.xpose.msra.mxu0 0.0
    %2110 = vmatprep.subr.mxu0 0.0
    %2111 = vmatpush1.xpose.msra.mxu0 0.0
    %2112 = vmatprep.subr.mxu0 0.0
    %2113 = vmatpush1.xpose.msra.mxu0 0.0
    %2114 = vmatprep.subr.mxu0 0.0
    %2115 = vmatpush1.xpose.msra.mxu0 0.0
    %2116 = vmatprep.subr.mxu0 0.0
    %2117 = vmatpush1.xpose.msra.mxu0 0.0
    %2118 = vmatprep.subr.mxu0 0.0
    %2119 = vmatpush1.xpose.msra.mxu0 0.0
    %2120 = vmatprep.mubr.f32.mxu0 0.0
    %v2121 = vand.u32 %v2050, 4294901760
    %v2122 = vsub.f32 %v2050, %v2121
    %v2123 = vand.u32 %v2122, 4294901760
    %v2124 = vsub.f32 %v2122, %v2123
    %v2125 = vand.u32 %v2124, 4294901760
    %2126 = vmatmul.mubr.f32.gmra.mrb[0].mxu0 %v2125
    %v2127 = vpop.f32.mrb[0].mxu0
    %v2128 = vadd.f32 0.0, %v2127
    %v2129 = vpop.f32.mrb[0].mxu0
    %2130 = vdwg.mxu0
    %2131 = vmatprep.subr.mxu0 0.0
    %v2132 = vand.u32 %v2053, 4294901760
    %v2133 = vsub.f32 %v2053, %v2132
    %v2134 = vand.u32 %v2133, 4294901760
    %v2135 = vsub.f32 %v2133, %v2134
    %v2136 = vand.u32 %v2135, 4294901760
    %2137 = vmatpush1.xpose.msra.mxu0 %v2136
    %2138 = vmatprep.subr.mxu0 0.0
    %2139 = vmatpush1.xpose.msra.mxu0 0.0
    %2140 = vmatprep.subr.mxu0 0.0
    %2141 = vmatpush1.xpose.msra.mxu0 0.0
    %2142 = vmatprep.subr.mxu0 0.0
    %2143 = vmatpush1.xpose.msra.mxu0 0.0
    %2144 = vmatprep.subr.mxu0 0.0
    %2145 = vmatpush1.xpose.msra.mxu0 0.0
    %2146 = vmatprep.subr.mxu0 0.0
    %2147 = vmatpush1.xpose.msra.mxu0 0.0
    %2148 = vmatprep.subr.mxu0 0.0
    %2149 = vmatpush1.xpose.msra.mxu0 0.0
    %2150 = vmatprep.subr.mxu0 0.0
    %2151 = vmatpush1.xpose.msra.mxu0 0.0
    %2152 = vmatprep.subr.mxu0 0.0
    %2153 = vmatpush1.xpose.msra.mxu0 0.0
    %2154 = vmatprep.subr.mxu0 0.0
    %2155 = vmatpush1.xpose.msra.mxu0 0.0
    %2156 = vmatprep.subr.mxu0 0.0
    %2157 = vmatpush1.xpose.msra.mxu0 0.0
    %2158 = vmatprep.subr.mxu0 0.0
    %2159 = vmatpush1.xpose.msra.mxu0 0.0
    %2160 = vmatprep.subr.mxu0 0.0
    %2161 = vmatpush1.xpose.msra.mxu0 0.0
    %2162 = vmatprep.subr.mxu0 0.0
    %2163 = vmatpush1.xpose.msra.mxu0 0.0
    %2164 = vmatprep.subr.mxu0 0.0
    %2165 = vmatpush1.xpose.msra.mxu0 0.0
    %2166 = vmatprep.subr.mxu0 0.0
    %2167 = vmatpush1.xpose.msra.mxu0 0.0
    %2168 = vmatprep.subr.mxu0 0.0
    %2169 = vmatpush1.xpose.msra.mxu0 0.0
    %2170 = vmatprep.subr.mxu0 0.0
    %2171 = vmatpush1.xpose.msra.mxu0 0.0
    %2172 = vmatprep.subr.mxu0 0.0
    %2173 = vmatpush1.xpose.msra.mxu0 0.0
    %2174 = vmatprep.subr.mxu0 0.0
    %2175 = vmatpush1.xpose.msra.mxu0 0.0
    %2176 = vmatprep.subr.mxu0 0.0
    %2177 = vmatpush1.xpose.msra.mxu0 0.0
    %2178 = vmatprep.subr.mxu0 0.0
    %2179 = vmatpush1.xpose.msra.mxu0 0.0
    %2180 = vmatprep.subr.mxu0 0.0
    %2181 = vmatpush1.xpose.msra.mxu0 0.0
    %2182 = vmatprep.subr.mxu0 0.0
    %2183 = vmatpush1.xpose.msra.mxu0 0.0
    %2184 = vmatprep.subr.mxu0 0.0
    %2185 = vmatpush1.xpose.msra.mxu0 0.0
    %2186 = vmatprep.subr.mxu0 0.0
    %2187 = vmatpush1.xpose.msra.mxu0 0.0
    %2188 = vmatprep.subr.mxu0 0.0
    %2189 = vmatpush1.xpose.msra.mxu0 0.0
    %2190 = vmatprep.subr.mxu0 0.0
    %2191 = vmatpush1.xpose.msra.mxu0 0.0
    %2192 = vmatprep.subr.mxu0 0.0
    %2193 = vmatpush1.xpose.msra.mxu0 0.0
    %2194 = vmatprep.subr.mxu0 0.0
    %2195 = vmatpush1.xpose.msra.mxu0 0.0
    %2196 = vmatprep.subr.mxu0 0.0
    %2197 = vmatpush1.xpose.msra.mxu0 0.0
    %2198 = vmatprep.subr.mxu0 0.0
    %2199 = vmatpush1.xpose.msra.mxu0 0.0
    %2200 = vmatprep.mubr.f32.mxu0 0.0
    %v2201 = vand.u32 %v2050, 4294901760
    %2202 = vmatmul.mubr.f32.gmra.mrb[0].mxu0 %v2201
    %v2203 = vpop.f32.mrb[0].mxu0
    %v2204 = vadd.f32 %v2128, %v2203
    %v2205 = vpop.f32.mrb[0].mxu0
    %2206 = vdwg.mxu0
    %2207 = vmatprep.subr.mxu0 0.0
    %v2208 = vand.u32 %v2053, 4294901760
    %v2209 = vsub.f32 %v2053, %v2208
    %2210 = vmatpush1.xpose.msra.mxu0 %v2209
    %2211 = vmatprep.subr.mxu0 0.0
    %2212 = vmatpush1.xpose.msra.mxu0 0.0
    %2213 = vmatprep.subr.mxu0 0.0
    %2214 = vmatpush1.xpose.msra.mxu0 0.0
    %2215 = vmatprep.subr.mxu0 0.0
    %2216 = vmatpush1.xpose.msra.mxu0 0.0
    %2217 = vmatprep.subr.mxu0 0.0
    %2218 = vmatpush1.xpose.msra.mxu0 0.0
    %2219 = vmatprep.subr.mxu0 0.0
    %2220 = vmatpush1.xpose.msra.mxu0 0.0
    %2221 = vmatprep.subr.mxu0 0.0
    %2222 = vmatpush1.xpose.msra.mxu0 0.0
    %2223 = vmatprep.subr.mxu0 0.0
    %2224 = vmatpush1.xpose.msra.mxu0 0.0
    %2225 = vmatprep.subr.mxu0 0.0
    %2226 = vmatpush1.xpose.msra.mxu0 0.0
    %2227 = vmatprep.subr.mxu0 0.0
    %2228 = vmatpush1.xpose.msra.mxu0 0.0
    %2229 = vmatprep.subr.mxu0 0.0
    %2230 = vmatpush1.xpose.msra.mxu0 0.0
    %2231 = vmatprep.subr.mxu0 0.0
    %2232 = vmatpush1.xpose.msra.mxu0 0.0
    %2233 = vmatprep.subr.mxu0 0.0
    %2234 = vmatpush1.xpose.msra.mxu0 0.0
    %2235 = vmatprep.subr.mxu0 0.0
    %2236 = vmatpush1.xpose.msra.mxu0 0.0
    %2237 = vmatprep.subr.mxu0 0.0
    %2238 = vmatpush1.xpose.msra.mxu0 0.0
    %2239 = vmatprep.subr.mxu0 0.0
    %2240 = vmatpush1.xpose.msra.mxu0 0.0
    %2241 = vmatprep.subr.mxu0 0.0
    %2242 = vmatpush1.xpose.msra.mxu0 0.0
    %2243 = vmatprep.subr.mxu0 0.0
    %2244 = vmatpush1.xpose.msra.mxu0 0.0
    %2245 = vmatprep.subr.mxu0 0.0
    %2246 = vmatpush1.xpose.msra.mxu0 0.0
    %2247 = vmatprep.subr.mxu0 0.0
    %2248 = vmatpush1.xpose.msra.mxu0 0.0
    %2249 = vmatprep.subr.mxu0 0.0
    %2250 = vmatpush1.xpose.msra.mxu0 0.0
    %2251 = vmatprep.subr.mxu0 0.0
    %2252 = vmatpush1.xpose.msra.mxu0 0.0
    %2253 = vmatprep.subr.mxu0 0.0
    %2254 = vmatpush1.xpose.msra.mxu0 0.0
    %2255 = vmatprep.subr.mxu0 0.0
    %2256 = vmatpush1.xpose.msra.mxu0 0.0
    %2257 = vmatprep.subr.mxu0 0.0
    %2258 = vmatpush1.xpose.msra.mxu0 0.0
    %2259 = vmatprep.subr.mxu0 0.0
    %2260 = vmatpush1.xpose.msra.mxu0 0.0
    %2261 = vmatprep.subr.mxu0 0.0
    %2262 = vmatpush1.xpose.msra.mxu0 0.0
    %2263 = vmatprep.subr.mxu0 0.0
    %2264 = vmatpush1.xpose.msra.mxu0 0.0
    %2265 = vmatprep.subr.mxu0 0.0
    %2266 = vmatpush1.xpose.msra.mxu0 0.0
    %2267 = vmatprep.subr.mxu0 0.0
    %2268 = vmatpush1.xpose.msra.mxu0 0.0
    %2269 = vmatprep.subr.mxu0 0.0
    %2270 = vmatpush1.xpose.msra.mxu0 0.0
    %2271 = vmatprep.subr.mxu0 0.0
    %2272 = vmatpush1.xpose.msra.mxu0 0.0
    %2273 = vmatprep.mubr.f32.mxu0 0.0
    %v2274 = vand.u32 %v2050, 4294901760
    %v2275 = vsub.f32 %v2050, %v2274
    %2276 = vmatmul.mubr.f32.gmra.mrb[0].mxu0 %v2275
    %v2277 = vpop.f32.mrb[0].mxu0
    %v2278 = vadd.f32 %v2204, %v2277
    %v2279 = vpop.f32.mrb[0].mxu0
    %2280 = vdwg.mxu0
    %2281 = vmatprep.subr.mxu0 0.0
    %v2282 = vand.u32 %v2053, 4294901760
    %2283 = vmatpush1.xpose.msra.mxu0 %v2282
    %2284 = vmatprep.subr.mxu0 0.0
    %2285 = vmatpush1.xpose.msra.mxu0 0.0
    %2286 = vmatprep.subr.mxu0 0.0
    %2287 = vmatpush1.xpose.msra.mxu0 0.0
    %2288 = vmatprep.subr.mxu0 0.0
    %2289 = vmatpush1.xpose.msra.mxu0 0.0
    %2290 = vmatprep.subr.mxu0 0.0
    %2291 = vmatpush1.xpose.msra.mxu0 0.0
    %2292 = vmatprep.subr.mxu0 0.0
    %2293 = vmatpush1.xpose.msra.mxu0 0.0
    %2294 = vmatprep.subr.mxu0 0.0
    %2295 = vmatpush1.xpose.msra.mxu0 0.0
    %2296 = vmatprep.subr.mxu0 0.0
    %2297 = vmatpush1.xpose.msra.mxu0 0.0
    %2298 = vmatprep.subr.mxu0 0.0
    %2299 = vmatpush1.xpose.msra.mxu0 0.0
    %2300 = vmatprep.subr.mxu0 0.0
    %2301 = vmatpush1.xpose.msra.mxu0 0.0
    %2302 = vmatprep.subr.mxu0 0.0
    %2303 = vmatpush1.xpose.msra.mxu0 0.0
    %2304 = vmatprep.subr.mxu0 0.0
    %2305 = vmatpush1.xpose.msra.mxu0 0.0
    %2306 = vmatprep.subr.mxu0 0.0
    %2307 = vmatpush1.xpose.msra.mxu0 0.0
    %2308 = vmatprep.subr.mxu0 0.0
    %2309 = vmatpush1.xpose.msra.mxu0 0.0
    %2310 = vmatprep.subr.mxu0 0.0
    %2311 = vmatpush1.xpose.msra.mxu0 0.0
    %2312 = vmatprep.subr.mxu0 0.0
    %2313 = vmatpush1.xpose.msra.mxu0 0.0
    %2314 = vmatprep.subr.mxu0 0.0
    %2315 = vmatpush1.xpose.msra.mxu0 0.0
    %2316 = vmatprep.subr.mxu0 0.0
    %2317 = vmatpush1.xpose.msra.mxu0 0.0
    %2318 = vmatprep.subr.mxu0 0.0
    %2319 = vmatpush1.xpose.msra.mxu0 0.0
    %2320 = vmatprep.subr.mxu0 0.0
    %2321 = vmatpush1.xpose.msra.mxu0 0.0
    %2322 = vmatprep.subr.mxu0 0.0
    %2323 = vmatpush1.xpose.msra.mxu0 0.0
    %2324 = vmatprep.subr.mxu0 0.0
    %2325 = vmatpush1.xpose.msra.mxu0 0.0
    %2326 = vmatprep.subr.mxu0 0.0
    %2327 = vmatpush1.xpose.msra.mxu0 0.0
    %2328 = vmatprep.subr.mxu0 0.0
    %2329 = vmatpush1.xpose.msra.mxu0 0.0
    %2330 = vmatprep.subr.mxu0 0.0
    %2331 = vmatpush1.xpose.msra.mxu0 0.0
    %2332 = vmatprep.subr.mxu0 0.0
    %2333 = vmatpush1.xpose.msra.mxu0 0.0
    %2334 = vmatprep.subr.mxu0 0.0
    %2335 = vmatpush1.xpose.msra.mxu0 0.0
    %2336 = vmatprep.subr.mxu0 0.0
    %2337 = vmatpush1.xpose.msra.mxu0 0.0
    %2338 = vmatprep.subr.mxu0 0.0
    %2339 = vmatpush1.xpose.msra.mxu0 0.0
    %2340 = vmatprep.subr.mxu0 0.0
    %2341 = vmatpush1.xpose.msra.mxu0 0.0
    %2342 = vmatprep.subr.mxu0 0.0
    %2343 = vmatpush1.xpose.msra.mxu0 0.0
    %2344 = vmatprep.subr.mxu0 0.0
    %2345 = vmatpush1.xpose.msra.mxu0 0.0
    %2346 = vmatprep.mubr.f32.mxu0 0.0
    %v2347 = vand.u32 %v2050, 4294901760
    %v2348 = vsub.f32 %v2050, %v2347
    %v2349 = vand.u32 %v2348, 4294901760
    %2350 = vmatmul.mubr.f32.gmra.mrb[0].mxu0 %v2349
    %v2351 = vpop.f32.mrb[0].mxu0
    %v2352 = vadd.f32 %v2278, %v2351
    %v2353 = vpop.f32.mrb[0].mxu0
    %2354 = vdwg.mxu0
    %2355 = vmatprep.subr.mxu0 0.0
    %v2356 = vand.u32 %v2053, 4294901760
    %v2357 = vsub.f32 %v2053, %v2356
    %v2358 = vand.u32 %v2357, 4294901760
    %2359 = vmatpush1.xpose.msra.mxu0 %v2358
    %2360 = vmatprep.subr.mxu0 0.0
    %2361 = vmatpush1.xpose.msra.mxu0 0.0
    %2362 = vmatprep.subr.mxu0 0.0
    %2363 = vmatpush1.xpose.msra.mxu0 0.0
    %2364 = vmatprep.subr.mxu0 0.0
    %2365 = vmatpush1.xpose.msra.mxu0 0.0
    %2366 = vmatprep.subr.mxu0 0.0
    %2367 = vmatpush1.xpose.msra.mxu0 0.0
    %2368 = vmatprep.subr.mxu0 0.0
    %2369 = vmatpush1.xpose.msra.mxu0 0.0
    %2370 = vmatprep.subr.mxu0 0.0
    %2371 = vmatpush1.xpose.msra.mxu0 0.0
    %2372 = vmatprep.subr.mxu0 0.0
    %2373 = vmatpush1.xpose.msra.mxu0 0.0
    %2374 = vmatprep.subr.mxu0 0.0
    %2375 = vmatpush1.xpose.msra.mxu0 0.0
    %2376 = vmatprep.subr.mxu0 0.0
    %2377 = vmatpush1.xpose.msra.mxu0 0.0
    %2378 = vmatprep.subr.mxu0 0.0
    %2379 = vmatpush1.xpose.msra.mxu0 0.0
    %2380 = vmatprep.subr.mxu0 0.0
    %2381 = vmatpush1.xpose.msra.mxu0 0.0
    %2382 = vmatprep.subr.mxu0 0.0
    %2383 = vmatpush1.xpose.msra.mxu0 0.0
    %2384 = vmatprep.subr.mxu0 0.0
    %2385 = vmatpush1.xpose.msra.mxu0 0.0
    %2386 = vmatprep.subr.mxu0 0.0
    %2387 = vmatpush1.xpose.msra.mxu0 0.0
    %2388 = vmatprep.subr.mxu0 0.0
    %2389 = vmatpush1.xpose.msra.mxu0 0.0
    %2390 = vmatprep.subr.mxu0 0.0
    %2391 = vmatpush1.xpose.msra.mxu0 0.0
    %2392 = vmatprep.subr.mxu0 0.0
    %2393 = vmatpush1.xpose.msra.mxu0 0.0
    %2394 = vmatprep.subr.mxu0 0.0
    %2395 = vmatpush1.xpose.msra.mxu0 0.0
    %2396 = vmatprep.subr.mxu0 0.0
    %2397 = vmatpush1.xpose.msra.mxu0 0.0
    %2398 = vmatprep.subr.mxu0 0.0
    %2399 = vmatpush1.xpose.msra.mxu0 0.0
    %2400 = vmatprep.subr.mxu0 0.0
    %2401 = vmatpush1.xpose.msra.mxu0 0.0
    %2402 = vmatprep.subr.mxu0 0.0
    %2403 = vmatpush1.xpose.msra.mxu0 0.0
    %2404 = vmatprep.subr.mxu0 0.0
    %2405 = vmatpush1.xpose.msra.mxu0 0.0
    %2406 = vmatprep.subr.mxu0 0.0
    %2407 = vmatpush1.xpose.msra.mxu0 0.0
    %2408 = vmatprep.subr.mxu0 0.0
    %2409 = vmatpush1.xpose.msra.mxu0 0.0
    %2410 = vmatprep.subr.mxu0 0.0
    %2411 = vmatpush1.xpose.msra.mxu0 0.0
    %2412 = vmatprep.subr.mxu0 0.0
    %2413 = vmatpush1.xpose.msra.mxu0 0.0
    %2414 = vmatprep.subr.mxu0 0.0
    %2415 = vmatpush1.xpose.msra.mxu0 0.0
    %2416 = vmatprep.subr.mxu0 0.0
    %2417 = vmatpush1.xpose.msra.mxu0 0.0
    %2418 = vmatprep.subr.mxu0 0.0
    %2419 = vmatpush1.xpose.msra.mxu0 0.0
    %2420 = vmatprep.subr.mxu0 0.0
    %2421 = vmatpush1.xpose.msra.mxu0 0.0
    %2422 = vmatprep.mubr.f32.mxu0 0.0
    %v2423 = vand.u32 %v2050, 4294901760
    %2424 = vmatmul.mubr.f32.gmra.mrb[0].mxu0 %v2423
    %v2425 = vpop.f32.mrb[0].mxu0
    %v2426 = vadd.f32 %v2352, %v2425
    %v2427 = vpop.f32.mrb[0].mxu0
    %2428 = vdwg.mxu0
    %2429 = vmatprep.subr.mxu0 0.0
    %v2430 = vand.u32 %v2053, 4294901760
    %2431 = vmatpush1.xpose.msra.mxu0 %v2430
    %2432 = vmatprep.subr.mxu0 0.0
    %2433 = vmatpush1.xpose.msra.mxu0 0.0
    %2434 = vmatprep.subr.mxu0 0.0
    %2435 = vmatpush1.xpose.msra.mxu0 0.0
    %2436 = vmatprep.subr.mxu0 0.0
    %2437 = vmatpush1.xpose.msra.mxu0 0.0
    %2438 = vmatprep.subr.mxu0 0.0
    %2439 = vmatpush1.xpose.msra.mxu0 0.0
    %2440 = vmatprep.subr.mxu0 0.0
    %2441 = vmatpush1.xpose.msra.mxu0 0.0
    %2442 = vmatprep.subr.mxu0 0.0
    %2443 = vmatpush1.xpose.msra.mxu0 0.0
    %2444 = vmatprep.subr.mxu0 0.0
    %2445 = vmatpush1.xpose.msra.mxu0 0.0
    %2446 = vmatprep.subr.mxu0 0.0
    %2447 = vmatpush1.xpose.msra.mxu0 0.0
    %2448 = vmatprep.subr.mxu0 0.0
    %2449 = vmatpush1.xpose.msra.mxu0 0.0
    %2450 = vmatprep.subr.mxu0 0.0
    %2451 = vmatpush1.xpose.msra.mxu0 0.0
    %2452 = vmatprep.subr.mxu0 0.0
    %2453 = vmatpush1.xpose.msra.mxu0 0.0
    %2454 = vmatprep.subr.mxu0 0.0
    %2455 = vmatpush1.xpose.msra.mxu0 0.0
    %2456 = vmatprep.subr.mxu0 0.0
    %2457 = vmatpush1.xpose.msra.mxu0 0.0
    %2458 = vmatprep.subr.mxu0 0.0
    %2459 = vmatpush1.xpose.msra.mxu0 0.0
    %2460 = vmatprep.subr.mxu0 0.0
    %2461 = vmatpush1.xpose.msra.mxu0 0.0
    %2462 = vmatprep.subr.mxu0 0.0
    %2463 = vmatpush1.xpose.msra.mxu0 0.0
    %2464 = vmatprep.subr.mxu0 0.0
    %2465 = vmatpush1.xpose.msra.mxu0 0.0
    %2466 = vmatprep.subr.mxu0 0.0
    %2467 = vmatpush1.xpose.msra.mxu0 0.0
    %2468 = vmatprep.subr.mxu0 0.0
    %2469 = vmatpush1.xpose.msra.mxu0 0.0
    %2470 = vmatprep.subr.mxu0 0.0
    %2471 = vmatpush1.xpose.msra.mxu0 0.0
    %2472 = vmatprep.subr.mxu0 0.0
    %2473 = vmatpush1.xpose.msra.mxu0 0.0
    %2474 = vmatprep.subr.mxu0 0.0
    %2475 = vmatpush1.xpose.msra.mxu0 0.0
    %2476 = vmatprep.subr.mxu0 0.0
    %2477 = vmatpush1.xpose.msra.mxu0 0.0
    %2478 = vmatprep.subr.mxu0 0.0
    %2479 = vmatpush1.xpose.msra.mxu0 0.0
    %2480 = vmatprep.subr.mxu0 0.0
    %2481 = vmatpush1.xpose.msra.mxu0 0.0
    %2482 = vmatprep.subr.mxu0 0.0
    %2483 = vmatpush1.xpose.msra.mxu0 0.0
    %2484 = vmatprep.subr.mxu0 0.0
    %2485 = vmatpush1.xpose.msra.mxu0 0.0
    %2486 = vmatprep.subr.mxu0 0.0
    %2487 = vmatpush1.xpose.msra.mxu0 0.0
    %2488 = vmatprep.subr.mxu0 0.0
    %2489 = vmatpush1.xpose.msra.mxu0 0.0
    %2490 = vmatprep.subr.mxu0 0.0
    %2491 = vmatpush1.xpose.msra.mxu0 0.0
    %2492 = vmatprep.subr.mxu0 0.0
    %2493 = vmatpush1.xpose.msra.mxu0 0.0
    %2494 = vmatprep.mubr.f32.mxu0 0.0
    %v2495 = vand.u32 %v2050, 4294901760
    %2496 = vmatmul.mubr.f32.gmra.mrb[0].mxu0 %v2495
    %v2497 = vpop.f32.mrb[0].mxu0
    %v2498 = vadd.f32 %v2426, %v2497
    %v2499 = vpop.f32.mrb[0].mxu0
    %2500 = vdwg.mxu0
    %v2501 = vmul.f32 %v2498, %v2498
    %vm2502 = vcmask 64512
    %v2503 = vsel %vm2502, %v2501, 0.0
    %2504 = vadd.xlane.f32.xlu0 %v2503
    %v2505 = vpop.xlane.xlu0 %2504
    %v2506 = vrsqrt.pop %v2505
    %v2507 = vmul.f32 %v2505, %v2506
    %vm2508 = vcmp.eq.f32.partialorder %v2505, inf
    %v2509 = vsel %vm2508, %v2505, %v2507
    %vm2510 = vcmp.eq.f32.partialorder %v2505, 0.0
    %v2511 = vand.u32 %v2505, 2147483648
    %v2512 = vsel %vm2510, %v2511, %v2509
    %v2513 = vmax.f32 %v2512, 1e-12
    %v2514 = vrcp.pop %v2513
    %v2515 = vmul.f32 %v2498, %v2514
    %v2516 = vmul.f32 %v2515, 1.442695
    %v2517 = vpow.pop %v2516
    %v2518 = vsel %vm2502, %v2517, 0.0
    %2519 = vadd.xlane.f32.xlu0 %v2518
    %v2520 = vpop.xlane.xlu0 %2519
    %v2521 = vrcp.pop %v2520
    %v2522 = vmul.f32 %v2048, %v2521
    %v2523 = vlog2.pop %v2522
    %v2524 = vmul.f32 %v2523, 0.6931472
    %v2525 = vsel %vm2023, %v2524, 0.0
    %2526 = vadd.xlane.f32.xlu0 %v2525
    %v2527 = vpop.xlane.xlu0 %2526
    %v2528 = vrot.slane %v2527, 4
    %v2529 = vadd.f32 %v2527, %v2528
    %v2530 = vrot.slane %v2529, 2
    %v2531 = vadd.f32 %v2529, %v2530
    %v2532 = vrot.slane %v2531, 1
    %v2533 = vadd.f32 %v2531, %v2532
    %s2534 = vtos %v2533
    %s2535 = ssub.f32 0.0, %s2534
    %s2536 = sadd.f32 %s2535, 0.0
    %v2537 = vmul.f32 %v533, %v1026
    %v2538 = vsel %vm2018, %v2537, 0.0
    %2539 = vadd.xlane.f32.xlu0 %v2538
    %v2540 = vpop.xlane.xlu0 %2539
    %v2541 = vmul.f32 %v2540, %v2540
    %v2542 = vsel %vm2023, %v2541, 0.0
    %2543 = vadd.xlane.f32.xlu0 %v2542
    %v2544 = vpop.xlane.xlu0 %2543
    %v2545 = vrot.slane %v2544, 4
    %v2546 = vadd.f32 %v2544, %v2545
    %v2547 = vrot.slane %v2546, 2
    %v2548 = vadd.f32 %v2546, %v2547
    %v2549 = vrot.slane %v2548, 1
    %v2550 = vadd.f32 %v2548, %v2549
    %s2551 = vtos %v2550
    %v2552 = vstv %s2551
    %v2553 = vrsqrt.pop %v2552
    %v2554 = vmul.f32 %v2552, %v2553
    %vm2555 = vcmp.eq.f32.partialorder %v2552, inf
    %v2556 = vsel %vm2555, %v2552, %v2554
    %vm2557 = vcmp.eq.f32.partialorder %v2552, 0.0
    %v2558 = vand.u32 %v2552, 2147483648
    %v2559 = vsel %vm2557, %v2558, %v2556
    %s2560 = vtos %v2559
    %s2561 = smax.f32 %s2560, 1e-12
    %v2562 = vstv %s2561
    %v2563 = vrcp.pop %v2562
    %v2564 = vmul.f32 %v2540, %v2563
    %v2565 = vmul.f32 %v2564, 1.442695
    %v2566 = vpow.pop %v2565
    %v2568 = vsel %vm2018, %v533, 0
    %v2571 = vsel %vm2018, %v1026, 0
    %2573 = vmatprep.subr.mxu0 0.0
    %v2574 = vand.u32 %v2571, 4294901760
    %2575 = vmatpush1.xpose.msra.mxu0 %v2574
    %2576 = vmatprep.subr.mxu0 0.0
    %2577 = vmatpush1.xpose.msra.mxu0 0.0
    %2578 = vmatprep.subr.mxu0 0.0
    %2579 = vmatpush1.xpose.msra.mxu0 0.0
    %2580 = vmatprep.subr.mxu0 0.0
    %2581 = vmatpush1.xpose.msra.mxu0 0.0
    %2582 = vmatprep.subr.mxu0 0.0
    %2583 = vmatpush1.xpose.msra.mxu0 0.0
    %2584 = vmatprep.subr.mxu0 0.0
    %2585 = vmatpush1.xpose.msra.mxu0 0.0
    %2586 = vmatprep.subr.mxu0 0.0
    %2587 = vmatpush1.xpose.msra.mxu0 0.0
    %2588 = vmatprep.subr.mxu0 0.0
    %2589 = vmatpush1.xpose.msra.mxu0 0.0
    %2590 = vmatprep.subr.mxu0 0.0
    %2591 = vmatpush1.xpose.msra.mxu0 0.0
    %2592 = vmatprep.subr.mxu0 0.0
    %2593 = vmatpush1.xpose.msra.mxu0 0.0
    %2594 = vmatprep.subr.mxu0 0.0
    %2595 = vmatpush1.xpose.msra.mxu0 0.0
    %2596 = vmatprep.subr.mxu0 0.0
    %2597 = vmatpush1.xpose.msra.mxu0 0.0
    %2598 = vmatprep.subr.mxu0 0.0
    %2599 = vmatpush1.xpose.msra.mxu0 0.0
    %2600 = vmatprep.subr.mxu0 0.0
    %2601 = vmatpush1.xpose.msra.mxu0 0.0
    %2602 = vmatprep.subr.mxu0 0.0
    %2603 = vmatpush1.xpose.msra.mxu0 0.0
    %2604 = vmatprep.subr.mxu0 0.0
    %2605 = vmatpush1.xpose.msra.mxu0 0.0
    %2606 = vmatprep.subr.mxu0 0.0
    %2607 = vmatpush1.xpose.msra.mxu0 0.0
    %2608 = vmatprep.subr.mxu0 0.0
    %2609 = vmatpush1.xpose.msra.mxu0 0.0
    %2610 = vmatprep.subr.mxu0 0.0
    %2611 = vmatpush1.xpose.msra.mxu0 0.0
    %2612 = vmatprep.subr.mxu0 0.0
    %2613 = vmatpush1.xpose.msra.mxu0 0.0
    %2614 = vmatprep.subr.mxu0 0.0
    %2615 = vmatpush1.xpose.msra.mxu0 0.0
    %2616 = vmatprep.subr.mxu0 0.0
    %2617 = vmatpush1.xpose.msra.mxu0 0.0
    %2618 = vmatprep.subr.mxu0 0.0
    %2619 = vmatpush1.xpose.msra.mxu0 0.0
    %2620 = vmatprep.subr.mxu0 0.0
    %2621 = vmatpush1.xpose.msra.mxu0 0.0
    %2622 = vmatprep.subr.mxu0 0.0
    %2623 = vmatpush1.xpose.msra.mxu0 0.0
    %2624 = vmatprep.subr.mxu0 0.0
    %2625 = vmatpush1.xpose.msra.mxu0 0.0
    %2626 = vmatprep.subr.mxu0 0.0
    %2627 = vmatpush1.xpose.msra.mxu0 0.0
    %2628 = vmatprep.subr.mxu0 0.0
    %2629 = vmatpush1.xpose.msra.mxu0 0.0
    %2630 = vmatprep.subr.mxu0 0.0
    %2631 = vmatpush1.xpose.msra.mxu0 0.0
    %2632 = vmatprep.subr.mxu0 0.0
    %2633 = vmatpush1.xpose.msra.mxu0 0.0
    %2634 = vmatprep.subr.mxu0 0.0
    %2635 = vmatpush1.xpose.msra.mxu0 0.0
    %2636 = vmatprep.subr.mxu0 0.0
    %2637 = vmatpush1.xpose.msra.mxu0 0.0
    %2638 = vmatprep.mubr.f32.mxu0 0.0
    %v2639 = vand.u32 %v2568, 4294901760
    %v2640 = vsub.f32 %v2568, %v2639
    %v2641 = vand.u32 %v2640, 4294901760
    %v2642 = vsub.f32 %v2640, %v2641
    %v2643 = vand.u32 %v2642, 4294901760
    %2644 = vmatmul.mubr.f32.gmra.mrb[0].mxu0 %v2643
    %v2645 = vpop.f32.mrb[0].mxu0
    %v2646 = vadd.f32 0.0, %v2645
    %v2647 = vpop.f32.mrb[0].mxu0
    %2648 = vdwg.mxu0
    %2649 = vmatprep.subr.mxu0 0.0
    %v2650 = vand.u32 %v2571, 4294901760
    %v2651 = vsub.f32 %v2571, %v2650
    %v2652 = vand.u32 %v2651, 4294901760
    %v2653 = vsub.f32 %v2651, %v2652
    %v2654 = vand.u32 %v2653, 4294901760
    %2655 = vmatpush1.xpose.msra.mxu0 %v2654
    %2656 = vmatprep.subr.mxu0 0.0
    %2657 = vmatpush1.xpose.msra.mxu0 0.0
    %2658 = vmatprep.subr.mxu0 0.0
    %2659 = vmatpush1.xpose.msra.mxu0 0.0
    %2660 = vmatprep.subr.mxu0 0.0
    %2661 = vmatpush1.xpose.msra.mxu0 0.0
    %2662 = vmatprep.subr.mxu0 0.0
    %2663 = vmatpush1.xpose.msra.mxu0 0.0
    %2664 = vmatprep.subr.mxu0 0.0
    %2665 = vmatpush1.xpose.msra.mxu0 0.0
    %2666 = vmatprep.subr.mxu0 0.0
    %2667 = vmatpush1.xpose.msra.mxu0 0.0
    %2668 = vmatprep.subr.mxu0 0.0
    %2669 = vmatpush1.xpose.msra.mxu0 0.0
    %2670 = vmatprep.subr.mxu0 0.0
    %2671 = vmatpush1.xpose.msra.mxu0 0.0
    %2672 = vmatprep.subr.mxu0 0.0
    %2673 = vmatpush1.xpose.msra.mxu0 0.0
    %2674 = vmatprep.subr.mxu0 0.0
    %2675 = vmatpush1.xpose.msra.mxu0 0.0
    %2676 = vmatprep.subr.mxu0 0.0
    %2677 = vmatpush1.xpose.msra.mxu0 0.0
    %2678 = vmatprep.subr.mxu0 0.0
    %2679 = vmatpush1.xpose.msra.mxu0 0.0
    %2680 = vmatprep.subr.mxu0 0.0
    %2681 = vmatpush1.xpose.msra.mxu0 0.0
    %2682 = vmatprep.subr.mxu0 0.0
    %2683 = vmatpush1.xpose.msra.mxu0 0.0
    %2684 = vmatprep.subr.mxu0 0.0
    %2685 = vmatpush1.xpose.msra.mxu0 0.0
    %2686 = vmatprep.subr.mxu0 0.0
    %2687 = vmatpush1.xpose.msra.mxu0 0.0
    %2688 = vmatprep.subr.mxu0 0.0
    %2689 = vmatpush1.xpose.msra.mxu0 0.0
    %2690 = vmatprep.subr.mxu0 0.0
    %2691 = vmatpush1.xpose.msra.mxu0 0.0
    %2692 = vmatprep.subr.mxu0 0.0
    %2693 = vmatpush1.xpose.msra.mxu0 0.0
    %2694 = vmatprep.subr.mxu0 0.0
    %2695 = vmatpush1.xpose.msra.mxu0 0.0
    %2696 = vmatprep.subr.mxu0 0.0
    %2697 = vmatpush1.xpose.msra.mxu0 0.0
    %2698 = vmatprep.subr.mxu0 0.0
    %2699 = vmatpush1.xpose.msra.mxu0 0.0
    %2700 = vmatprep.subr.mxu0 0.0
    %2701 = vmatpush1.xpose.msra.mxu0 0.0
    %2702 = vmatprep.subr.mxu0 0.0
    %2703 = vmatpush1.xpose.msra.mxu0 0.0
    %2704 = vmatprep.subr.mxu0 0.0
    %2705 = vmatpush1.xpose.msra.mxu0 0.0
    %2706 = vmatprep.subr.mxu0 0.0
    %2707 = vmatpush1.xpose.msra.mxu0 0.0
    %2708 = vmatprep.subr.mxu0 0.0
    %2709 = vmatpush1.xpose.msra.mxu0 0.0
    %2710 = vmatprep.subr.mxu0 0.0
    %2711 = vmatpush1.xpose.msra.mxu0 0.0
    %2712 = vmatprep.subr.mxu0 0.0
    %2713 = vmatpush1.xpose.msra.mxu0 0.0
    %2714 = vmatprep.subr.mxu0 0.0
    %2715 = vmatpush1.xpose.msra.mxu0 0.0
    %2716 = vmatprep.subr.mxu0 0.0
    %2717 = vmatpush1.xpose.msra.mxu0 0.0
    %2718 = vmatprep.mubr.f32.mxu0 0.0
    %v2719 = vand.u32 %v2568, 4294901760
    %2720 = vmatmul.mubr.f32.gmra.mrb[0].mxu0 %v2719
    %v2721 = vpop.f32.mrb[0].mxu0
    %v2722 = vadd.f32 %v2646, %v2721
    %v2723 = vpop.f32.mrb[0].mxu0
    %2724 = vdwg.mxu0
    %2725 = vmatprep.subr.mxu0 0.0
    %v2726 = vand.u32 %v2571, 4294901760
    %v2727 = vsub.f32 %v2571, %v2726
    %2728 = vmatpush1.xpose.msra.mxu0 %v2727
    %2729 = vmatprep.subr.mxu0 0.0
    %2730 = vmatpush1.xpose.msra.mxu0 0.0
    %2731 = vmatprep.subr.mxu0 0.0
    %2732 = vmatpush1.xpose.msra.mxu0 0.0
    %2733 = vmatprep.subr.mxu0 0.0
    %2734 = vmatpush1.xpose.msra.mxu0 0.0
    %2735 = vmatprep.subr.mxu0 0.0
    %2736 = vmatpush1.xpose.msra.mxu0 0.0
    %2737 = vmatprep.subr.mxu0 0.0
    %2738 = vmatpush1.xpose.msra.mxu0 0.0
    %2739 = vmatprep.subr.mxu0 0.0
    %2740 = vmatpush1.xpose.msra.mxu0 0.0
    %2741 = vmatprep.subr.mxu0 0.0
    %2742 = vmatpush1.xpose.msra.mxu0 0.0
    %2743 = vmatprep.subr.mxu0 0.0
    %2744 = vmatpush1.xpose.msra.mxu0 0.0
    %2745 = vmatprep.subr.mxu0 0.0
    %2746 = vmatpush1.xpose.msra.mxu0 0.0
    %2747 = vmatprep.subr.mxu0 0.0
    %2748 = vmatpush1.xpose.msra.mxu0 0.0
    %2749 = vmatprep.subr.mxu0 0.0
    %2750 = vmatpush1.xpose.msra.mxu0 0.0
    %2751 = vmatprep.subr.mxu0 0.0
    %2752 = vmatpush1.xpose.msra.mxu0 0.0
    %2753 = vmatprep.subr.mxu0 0.0
    %2754 = vmatpush1.xpose.msra.mxu0 0.0
    %2755 = vmatprep.subr.mxu0 0.0
    %2756 = vmatpush1.xpose.msra.mxu0 0.0
    %2757 = vmatprep.subr.mxu0 0.0
    %2758 = vmatpush1.xpose.msra.mxu0 0.0
    %2759 = vmatprep.subr.mxu0 0.0
    %2760 = vmatpush1.xpose.msra.mxu0 0.0
    %2761 = vmatprep.subr.mxu0 0.0
    %2762 = vmatpush1.xpose.msra.mxu0 0.0
    %2763 = vmatprep.subr.mxu0 0.0
    %2764 = vmatpush1.xpose.msra.mxu0 0.0
    %2765 = vmatprep.subr.mxu0 0.0
    %2766 = vmatpush1.xpose.msra.mxu0 0.0
    %2767 = vmatprep.subr.mxu0 0.0
    %2768 = vmatpush1.xpose.msra.mxu0 0.0
    %2769 = vmatprep.subr.mxu0 0.0
    %2770 = vmatpush1.xpose.msra.mxu0 0.0
    %2771 = vmatprep.subr.mxu0 0.0
    %2772 = vmatpush1.xpose.msra.mxu0 0.0
    %2773 = vmatprep.subr.mxu0 0.0
    %2774 = vmatpush1.xpose.msra.mxu0 0.0
    %2775 = vmatprep.subr.mxu0 0.0
    %2776 = vmatpush1.xpose.msra.mxu0 0.0
    %2777 = vmatprep.subr.mxu0 0.0
    %2778 = vmatpush1.xpose.msra.mxu0 0.0
    %2779 = vmatprep.subr.mxu0 0.0
    %2780 = vmatpush1.xpose.msra.mxu0 0.0
    %2781 = vmatprep.subr.mxu0 0.0
    %2782 = vmatpush1.xpose.msra.mxu0 0.0
    %2783 = vmatprep.subr.mxu0 0.0
    %2784 = vmatpush1.xpose.msra.mxu0 0.0
    %2785 = vmatprep.subr.mxu0 0.0
    %2786 = vmatpush1.xpose.msra.mxu0 0.0
    %2787 = vmatprep.subr.mxu0 0.0
    %2788 = vmatpush1.xpose.msra.mxu0 0.0
    %2789 = vmatprep.subr.mxu0 0.0
    %2790 = vmatpush1.xpose.msra.mxu0 0.0
    %2791 = vmatprep.mubr.f32.mxu0 0.0
    %v2792 = vand.u32 %v2568, 4294901760
    %v2793 = vsub.f32 %v2568, %v2792
    %2794 = vmatmul.mubr.f32.gmra.mrb[0].mxu0 %v2793
    %v2795 = vpop.f32.mrb[0].mxu0
    %v2796 = vadd.f32 %v2722, %v2795
    %v2797 = vpop.f32.mrb[0].mxu0
    %2798 = vdwg.mxu0
    %2799 = vmatprep.subr.mxu0 0.0
    %v2800 = vand.u32 %v2571, 4294901760
    %2801 = vmatpush1.xpose.msra.mxu0 %v2800
    %2802 = vmatprep.subr.mxu0 0.0
    %2803 = vmatpush1.xpose.msra.mxu0 0.0
    %2804 = vmatprep.subr.mxu0 0.0
    %2805 = vmatpush1.xpose.msra.mxu0 0.0
    %2806 = vmatprep.subr.mxu0 0.0
    %2807 = vmatpush1.xpose.msra.mxu0 0.0
    %2808 = vmatprep.subr.mxu0 0.0
    %2809 = vmatpush1.xpose.msra.mxu0 0.0
    %2810 = vmatprep.subr.mxu0 0.0
    %2811 = vmatpush1.xpose.msra.mxu0 0.0
    %2812 = vmatprep.subr.mxu0 0.0
    %2813 = vmatpush1.xpose.msra.mxu0 0.0
    %2814 = vmatprep.subr.mxu0 0.0
    %2815 = vmatpush1.xpose.msra.mxu0 0.0
    %2816 = vmatprep.subr.mxu0 0.0
    %2817 = vmatpush1.xpose.msra.mxu0 0.0
    %2818 = vmatprep.subr.mxu0 0.0
    %2819 = vmatpush1.xpose.msra.mxu0 0.0
    %2820 = vmatprep.subr.mxu0 0.0
    %2821 = vmatpush1.xpose.msra.mxu0 0.0
    %2822 = vmatprep.subr.mxu0 0.0
    %2823 = vmatpush1.xpose.msra.mxu0 0.0
    %2824 = vmatprep.subr.mxu0 0.0
    %2825 = vmatpush1.xpose.msra.mxu0 0.0
    %2826 = vmatprep.subr.mxu0 0.0
    %2827 = vmatpush1.xpose.msra.mxu0 0.0
    %2828 = vmatprep.subr.mxu0 0.0
    %2829 = vmatpush1.xpose.msra.mxu0 0.0
    %2830 = vmatprep.subr.mxu0 0.0
    %2831 = vmatpush1.xpose.msra.mxu0 0.0
    %2832 = vmatprep.subr.mxu0 0.0
    %2833 = vmatpush1.xpose.msra.mxu0 0.0
    %2834 = vmatprep.subr.mxu0 0.0
    %2835 = vmatpush1.xpose.msra.mxu0 0.0
    %2836 = vmatprep.subr.mxu0 0.0
    %2837 = vmatpush1.xpose.msra.mxu0 0.0
    %2838 = vmatprep.subr.mxu0 0.0
    %2839 = vmatpush1.xpose.msra.mxu0 0.0
    %2840 = vmatprep.subr.mxu0 0.0
    %2841 = vmatpush1.xpose.msra.mxu0 0.0
    %2842 = vmatprep.subr.mxu0 0.0
    %2843 = vmatpush1.xpose.msra.mxu0 0.0
    %2844 = vmatprep.subr.mxu0 0.0
    %2845 = vmatpush1.xpose.msra.mxu0 0.0
    %2846 = vmatprep.subr.mxu0 0.0
    %2847 = vmatpush1.xpose.msra.mxu0 0.0
    %2848 = vmatprep.subr.mxu0 0.0
    %2849 = vmatpush1.xpose.msra.mxu0 0.0
    %2850 = vmatprep.subr.mxu0 0.0
    %2851 = vmatpush1.xpose.msra.mxu0 0.0
    %2852 = vmatprep.subr.mxu0 0.0
    %2853 = vmatpush1.xpose.msra.mxu0 0.0
    %2854 = vmatprep.subr.mxu0 0.0
    %2855 = vmatpush1.xpose.msra.mxu0 0.0
    %2856 = vmatprep.subr.mxu0 0.0
    %2857 = vmatpush1.xpose.msra.mxu0 0.0
    %2858 = vmatprep.subr.mxu0 0.0
    %2859 = vmatpush1.xpose.msra.mxu0 0.0
    %2860 = vmatprep.subr.mxu0 0.0
    %2861 = vmatpush1.xpose.msra.mxu0 0.0
    %2862 = vmatprep.subr.mxu0 0.0
    %2863 = vmatpush1.xpose.msra.mxu0 0.0
    %2864 = vmatprep.mubr.f32.mxu0 0.0
    %v2865 = vand.u32 %v2568, 4294901760
    %v2866 = vsub.f32 %v2568, %v2865
    %v2867 = vand.u32 %v2866, 4294901760
    %2868 = vmatmul.mubr.f32.gmra.mrb[0].mxu0 %v2867
    %v2869 = vpop.f32.mrb[0].mxu0
    %v2870 = vadd.f32 %v2796, %v2869
    %v2871 = vpop.f32.mrb[0].mxu0
    %2872 = vdwg.mxu0
    %2873 = vmatprep.subr.mxu0 0.0
    %v2874 = vand.u32 %v2571, 4294901760
    %v2875 = vsub.f32 %v2571, %v2874
    %v2876 = vand.u32 %v2875, 4294901760
    %2877 = vmatpush1.xpose.msra.mxu0 %v2876
    %2878 = vmatprep.subr.mxu0 0.0
    %2879 = vmatpush1.xpose.msra.mxu0 0.0
    %2880 = vmatprep.subr.mxu0 0.0
    %2881 = vmatpush1.xpose.msra.mxu0 0.0
    %2882 = vmatprep.subr.mxu0 0.0
    %2883 = vmatpush1.xpose.msra.mxu0 0.0
    %2884 = vmatprep.subr.mxu0 0.0
    %2885 = vmatpush1.xpose.msra.mxu0 0.0
    %2886 = vmatprep.subr.mxu0 0.0
    %2887 = vmatpush1.xpose.msra.mxu0 0.0
    %2888 = vmatprep.subr.mxu0 0.0
    %2889 = vmatpush1.xpose.msra.mxu0 0.0
    %2890 = vmatprep.subr.mxu0 0.0
    %2891 = vmatpush1.xpose.msra.mxu0 0.0
    %2892 = vmatprep.subr.mxu0 0.0
    %2893 = vmatpush1.xpose.msra.mxu0 0.0
    %2894 = vmatprep.subr.mxu0 0.0
    %2895 = vmatpush1.xpose.msra.mxu0 0.0
    %2896 = vmatprep.subr.mxu0 0.0
    %2897 = vmatpush1.xpose.msra.mxu0 0.0
    %2898 = vmatprep.subr.mxu0 0.0
    %2899 = vmatpush1.xpose.msra.mxu0 0.0
    %2900 = vmatprep.subr.mxu0 0.0
    %2901 = vmatpush1.xpose.msra.mxu0 0.0
    %2902 = vmatprep.subr.mxu0 0.0
    %2903 = vmatpush1.xpose.msra.mxu0 0.0
    %2904 = vmatprep.subr.mxu0 0.0
    %2905 = vmatpush1.xpose.msra.mxu0 0.0
    %2906 = vmatprep.subr.mxu0 0.0
    %2907 = vmatpush1.xpose.msra.mxu0 0.0
    %2908 = vmatprep.subr.mxu0 0.0
    %2909 = vmatpush1.xpose.msra.mxu0 0.0
    %2910 = vmatprep.subr.mxu0 0.0
    %2911 = vmatpush1.xpose.msra.mxu0 0.0
    %2912 = vmatprep.subr.mxu0 0.0
    %2913 = vmatpush1.xpose.msra.mxu0 0.0
    %2914 = vmatprep.subr.mxu0 0.0
    %2915 = vmatpush1.xpose.msra.mxu0 0.0
    %2916 = vmatprep.subr.mxu0 0.0
    %2917 = vmatpush1.xpose.msra.mxu0 0.0
    %2918 = vmatprep.subr.mxu0 0.0
    %2919 = vmatpush1.xpose.msra.mxu0 0.0
    %2920 = vmatprep.subr.mxu0 0.0
    %2921 = vmatpush1.xpose.msra.mxu0 0.0
    %2922 = vmatprep.subr.mxu0 0.0
    %2923 = vmatpush1.xpose.msra.mxu0 0.0
    %2924 = vmatprep.subr.mxu0 0.0
    %2925 = vmatpush1.xpose.msra.mxu0 0.0
    %2926 = vmatprep.subr.mxu0 0.0
    %2927 = vmatpush1.xpose.msra.mxu0 0.0
    %2928 = vmatprep.subr.mxu0 0.0
    %2929 = vmatpush1.xpose.msra.mxu0 0.0
    %2930 = vmatprep.subr.mxu0 0.0
    %2931 = vmatpush1.xpose.msra.mxu0 0.0
    %2932 = vmatprep.subr.mxu0 0.0
    %2933 = vmatpush1.xpose.msra.mxu0 0.0
    %2934 = vmatprep.subr.mxu0 0.0
    %2935 = vmatpush1.xpose.msra.mxu0 0.0
    %2936 = vmatprep.subr.mxu0 0.0
    %2937 = vmatpush1.xpose.msra.mxu0 0.0
    %2938 = vmatprep.subr.mxu0 0.0
    %2939 = vmatpush1.xpose.msra.mxu0 0.0
    %2940 = vmatprep.mubr.f32.mxu0 0.0
    %v2941 = vand.u32 %v2568, 4294901760
    %2942 = vmatmul.mubr.f32.gmra.mrb[0].mxu0 %v2941
    %v2943 = vpop.f32.mrb[0].mxu0
    %v2944 = vadd.f32 %v2870, %v2943
    %v2945 = vpop.f32.mrb[0].mxu0
    %2946 = vdwg.mxu0
    %2947 = vmatprep.subr.mxu0 0.0
    %v2948 = vand.u32 %v2571, 4294901760
    %2949 = vmatpush1.xpose.msra.mxu0 %v2948
    %2950 = vmatprep.subr.mxu0 0.0
    %2951 = vmatpush1.xpose.msra.mxu0 0.0
    %2952 = vmatprep.subr.mxu0 0.0
    %2953 = vmatpush1.xpose.msra.mxu0 0.0
    %2954 = vmatprep.subr.mxu0 0.0
    %2955 = vmatpush1.xpose.msra.mxu0 0.0
    %2956 = vmatprep.subr.mxu0 0.0
    %2957 = vmatpush1.xpose.msra.mxu0 0.0
    %2958 = vmatprep.subr.mxu0 0.0
    %2959 = vmatpush1.xpose.msra.mxu0 0.0
    %2960 = vmatprep.subr.mxu0 0.0
    %2961 = vmatpush1.xpose.msra.mxu0 0.0
    %2962 = vmatprep.subr.mxu0 0.0
    %2963 = vmatpush1.xpose.msra.mxu0 0.0
    %2964 = vmatprep.subr.mxu0 0.0
    %2965 = vmatpush1.xpose.msra.mxu0 0.0
    %2966 = vmatprep.subr.mxu0 0.0
    %2967 = vmatpush1.xpose.msra.mxu0 0.0
    %2968 = vmatprep.subr.mxu0 0.0
    %2969 = vmatpush1.xpose.msra.mxu0 0.0
    %2970 = vmatprep.subr.mxu0 0.0
    %2971 = vmatpush1.xpose.msra.mxu0 0.0
    %2972 = vmatprep.subr.mxu0 0.0
    %2973 = vmatpush1.xpose.msra.mxu0 0.0
    %2974 = vmatprep.subr.mxu0 0.0
    %2975 = vmatpush1.xpose.msra.mxu0 0.0
    %2976 = vmatprep.subr.mxu0 0.0
    %2977 = vmatpush1.xpose.msra.mxu0 0.0
    %2978 = vmatprep.subr.mxu0 0.0
    %2979 = vmatpush1.xpose.msra.mxu0 0.0
    %2980 = vmatprep.subr.mxu0 0.0
    %2981 = vmatpush1.xpose.msra.mxu0 0.0
    %2982 = vmatprep.subr.mxu0 0.0
    %2983 = vmatpush1.xpose.msra.mxu0 0.0
    %2984 = vmatprep.subr.mxu0 0.0
    %2985 = vmatpush1.xpose.msra.mxu0 0.0
    %2986 = vmatprep.subr.mxu0 0.0
    %2987 = vmatpush1.xpose.msra.mxu0 0.0
    %2988 = vmatprep.subr.mxu0 0.0
    %2989 = vmatpush1.xpose.msra.mxu0 0.0
    %2990 = vmatprep.subr.mxu0 0.0
    %2991 = vmatpush1.xpose.msra.mxu0 0.0
    %2992 = vmatprep.subr.mxu0 0.0
    %2993 = vmatpush1.xpose.msra.mxu0 0.0
    %2994 = vmatprep.subr.mxu0 0.0
    %2995 = vmatpush1.xpose.msra.mxu0 0.0
    %2996 = vmatprep.subr.mxu0 0.0
    %2997 = vmatpush1.xpose.msra.mxu0 0.0
    %2998 = vmatprep.subr.mxu0 0.0
    %2999 = vmatpush1.xpose.msra.mxu0 0.0
    %3000 = vmatprep.subr.mxu0 0.0
    %3001 = vmatpush1.xpose.msra.mxu0 0.0
    %3002 = vmatprep.subr.mxu0 0.0
    %3003 = vmatpush1.xpose.msra.mxu0 0.0
    %3004 = vmatprep.subr.mxu0 0.0
    %3005 = vmatpush1.xpose.msra.mxu0 0.0
    %3006 = vmatprep.subr.mxu0 0.0
    %3007 = vmatpush1.xpose.msra.mxu0 0.0
    %3008 = vmatprep.subr.mxu0 0.0
    %3009 = vmatpush1.xpose.msra.mxu0 0.0
    %3010 = vmatprep.subr.mxu0 0.0
    %3011 = vmatpush1.xpose.msra.mxu0 0.0
    %3012 = vmatprep.mubr.f32.mxu0 0.0
    %v3013 = vand.u32 %v2568, 4294901760
    %3014 = vmatmul.mubr.f32.gmra.mrb[0].mxu0 %v3013
    %v3015 = vpop.f32.mrb[0].mxu0
    %v3016 = vadd.f32 %v2944, %v3015
    %v3017 = vpop.f32.mrb[0].mxu0
    %3018 = vdwg.mxu0
    %v3019 = vmul.f32 %v3016, %v3016
    %v3020 = vsel %vm2502, %v3019, 0.0
    %3021 = vadd.xlane.f32.xlu0 %v3020
    %v3022 = vpop.xlane.xlu0 %3021
    %v3023 = vrsqrt.pop %v3022
    %v3024 = vmul.f32 %v3022, %v3023
    %vm3025 = vcmp.eq.f32.partialorder %v3022, inf
    %v3026 = vsel %vm3025, %v3022, %v3024
    %vm3027 = vcmp.eq.f32.partialorder %v3022, 0.0
    %v3028 = vand.u32 %v3022, 2147483648
    %v3029 = vsel %vm3027, %v3028, %v3026
    %v3030 = vmax.f32 %v3029, 1e-12
    %v3031 = vrcp.pop %v3030
    %v3032 = vmul.f32 %v3016, %v3031
    %v3033 = vmul.f32 %v3032, 1.442695
    %v3034 = vpow.pop %v3033
    %v3035 = vsel %vm2502, %v3034, 0.0
    %3036 = vadd.xlane.f32.xlu0 %v3035
    %v3037 = vpop.xlane.xlu0 %3036
    %v3038 = vrcp.pop %v3037
    %v3039 = vmul.f32 %v2566, %v3038
    %v3040 = vlog2.pop %v3039
    %v3041 = vmul.f32 %v3040, 0.6931472
    %v3042 = vsel %vm2023, %v3041, 0.0
    %3043 = vadd.xlane.f32.xlu0 %v3042
    %v3044 = vpop.xlane.xlu0 %3043
    %v3045 = vrot.slane %v3044, 4
    %v3046 = vadd.f32 %v3044, %v3045
    %v3047 = vrot.slane %v3046, 2
    %v3048 = vadd.f32 %v3046, %v3047
    %v3049 = vrot.slane %v3048, 1
    %v3050 = vadd.f32 %v3048, %v3049
    %s3051 = vtos %v3050
    %s3052 = ssub.f32 0.0, %s3051
    %s3053 = sadd.f32 %s2536, %s3052
    %v3054 = vstv %s3053
    %vm3055 = vcmask 0
    %3056 = vst.msk [vmem:[#allocation2] sm:$0x1] %vm3055, %v3054
    %v3057 = vld [vmem:[%s5] sm:$0x1f]
    %s3058 = scalar_lea.vmem %s5, 8
    %v3059 = vld [vmem:[%s3058] sm:$0x1f]
    %v3060 = vlaneseq
    %v3061 = vshrl.u32 %v3060, 7
    %vm3062 = vcmp.eq.s32.totalorder %v3061, 0
    %vm3063 = vcmp.eq.s32.totalorder %v3061, 4
    %vm3064 = vmor %vm3062, %vm3063
    %v3065 = vmul.f32 %v1513, %v1513
    %vm3066 = vcmask 261120
    %v3067 = vsel %vm3066, %v3065, 0.0
    %3068 = vadd.xlane.f32.xlu0 %v3067
    %v3069 = vpop.xlane.xlu0 %3068
    %v3070 = vrsqrt.pop %v3069
    %v3071 = vmul.f32 %v3069, %v3070
    %vm3072 = vcmp.eq.f32.partialorder %v3069, inf
    %v3073 = vsel %vm3072, %v3069, %v3071
    %vm3074 = vcmp.eq.f32.partialorder %v3069, 0.0
    %v3075 = vand.u32 %v3069, 2147483648
    %v3076 = vsel %vm3074, %v3075, %v3073
    %v3077 = vmax.f32 %v3076, 1e-12
    %v3078 = vrcp.pop %v3077
    %v3079 = vmul.f32 %v1513, %v3078
    %v3081 = vsel %vm2502, %v3057, 0
    %3083 = vmatprep.subr.mxu0 0.0
    %v3084 = vand.u32 %v3079, 4294901760
    %3085 = vmatpush1.msra.mxu0 %v3084
    %3086 = vmatprep.subr.mxu0 0.0
    %3087 = vmatpush1.msra.mxu0 0.0
    %3088 = vmatprep.subr.mxu0 0.0
    %3089 = vmatpush1.msra.mxu0 0.0
    %3090 = vmatprep.subr.mxu0 0.0
    %3091 = vmatpush1.msra.mxu0 0.0
    %3092 = vmatprep.subr.mxu0 0.0
    %3093 = vmatpush1.msra.mxu0 0.0
    %3094 = vmatprep.subr.mxu0 0.0
    %3095 = vmatpush1.msra.mxu0 0.0
    %3096 = vmatprep.subr.mxu0 0.0
    %3097 = vmatpush1.msra.mxu0 0.0
    %3098 = vmatprep.subr.mxu0 0.0
    %3099 = vmatpush1.msra.mxu0 0.0
    %3100 = vmatprep.subr.mxu0 0.0
    %3101 = vmatpush1.msra.mxu0 0.0
    %3102 = vmatprep.subr.mxu0 0.0
    %3103 = vmatpush1.msra.mxu0 0.0
    %3104 = vmatprep.subr.mxu0 0.0
    %3105 = vmatpush1.msra.mxu0 0.0
    %3106 = vmatprep.subr.mxu0 0.0
    %3107 = vmatpush1.msra.mxu0 0.0
    %3108 = vmatprep.subr.mxu0 0.0
    %3109 = vmatpush1.msra.mxu0 0.0
    %3110 = vmatprep.subr.mxu0 0.0
    %3111 = vmatpush1.msra.mxu0 0.0
    %3112 = vmatprep.subr.mxu0 0.0
    %3113 = vmatpush1.msra.mxu0 0.0
    %3114 = vmatprep.subr.mxu0 0.0
    %3115 = vmatpush1.msra.mxu0 0.0
    %3116 = vmatprep.subr.mxu0 0.0
    %3117 = vmatpush1.msra.mxu0 0.0
    %3118 = vmatprep.subr.mxu0 0.0
    %3119 = vmatpush1.msra.mxu0 0.0
    %3120 = vmatprep.subr.mxu0 0.0
    %3121 = vmatpush1.msra.mxu0 0.0
    %3122 = vmatprep.subr.mxu0 0.0
    %3123 = vmatpush1.msra.mxu0 0.0
    %3124 = vmatprep.subr.mxu0 0.0
    %3125 = vmatpush1.msra.mxu0 0.0
    %3126 = vmatprep.subr.mxu0 0.0
    %3127 = vmatpush1.msra.mxu0 0.0
    %3128 = vmatprep.subr.mxu0 0.0
    %3129 = vmatpush1.msra.mxu0 0.0
    %3130 = vmatprep.subr.mxu0 0.0
    %3131 = vmatpush1.msra.mxu0 0.0
    %3132 = vmatprep.subr.mxu0 0.0
    %3133 = vmatpush1.msra.mxu0 0.0
    %3134 = vmatprep.subr.mxu0 0.0
    %3135 = vmatpush1.msra.mxu0 0.0
    %3136 = vmatprep.subr.mxu0 0.0
    %3137 = vmatpush1.msra.mxu0 0.0
    %3138 = vmatprep.subr.mxu0 0.0
    %3139 = vmatpush1.msra.mxu0 0.0
    %3140 = vmatprep.subr.mxu0 0.0
    %3141 = vmatpush1.msra.mxu0 0.0
    %3142 = vmatprep.subr.mxu0 0.0
    %3143 = vmatpush1.msra.mxu0 0.0
    %3144 = vmatprep.subr.mxu0 0.0
    %3145 = vmatpush1.msra.mxu0 0.0
    %3146 = vmatprep.subr.mxu0 0.0
    %3147 = vmatpush1.msra.mxu0 0.0
    %3148 = vmatprep.mubr.f32.mxu0 0.0
    %v3149 = vand.u32 %v3081, 4294901760
    %v3150 = vsub.f32 %v3081, %v3149
    %v3151 = vand.u32 %v3150, 4294901760
    %v3152 = vsub.f32 %v3150, %v3151
    %v3153 = vand.u32 %v3152, 4294901760
    %3154 = vmatmul.mubr.f32.gmra.mrb[0].mxu0 %v3153
    %v3155 = vpop.f32.mrb[0].mxu0
    %v3156 = vadd.f32 0.0, %v3155
    %v3157 = vpop.f32.mrb[0].mxu0
    %3158 = vdwg.mxu0
    %3159 = vmatprep.subr.mxu0 0.0
    %v3160 = vand.u32 %v3079, 4294901760
    %v3161 = vsub.f32 %v3079, %v3160
    %v3162 = vand.u32 %v3161, 4294901760
    %v3163 = vsub.f32 %v3161, %v3162
    %v3164 = vand.u32 %v3163, 4294901760
    %3165 = vmatpush1.msra.mxu0 %v3164
    %3166 = vmatprep.subr.mxu0 0.0
    %3167 = vmatpush1.msra.mxu0 0.0
    %3168 = vmatprep.subr.mxu0 0.0
    %3169 = vmatpush1.msra.mxu0 0.0
    %3170 = vmatprep.subr.mxu0 0.0
    %3171 = vmatpush1.msra.mxu0 0.0
    %3172 = vmatprep.subr.mxu0 0.0
    %3173 = vmatpush1.msra.mxu0 0.0
    %3174 = vmatprep.subr.mxu0 0.0
    %3175 = vmatpush1.msra.mxu0 0.0
    %3176 = vmatprep.subr.mxu0 0.0
    %3177 = vmatpush1.msra.mxu0 0.0
    %3178 = vmatprep.subr.mxu0 0.0
    %3179 = vmatpush1.msra.mxu0 0.0
    %3180 = vmatprep.subr.mxu0 0.0
    %3181 = vmatpush1.msra.mxu0 0.0
    %3182 = vmatprep.subr.mxu0 0.0
    %3183 = vmatpush1.msra.mxu0 0.0
    %3184 = vmatprep.subr.mxu0 0.0
    %3185 = vmatpush1.msra.mxu0 0.0
    %3186 = vmatprep.subr.mxu0 0.0
    %3187 = vmatpush1.msra.mxu0 0.0
    %3188 = vmatprep.subr.mxu0 0.0
    %3189 = vmatpush1.msra.mxu0 0.0
    %3190 = vmatprep.subr.mxu0 0.0
    %3191 = vmatpush1.msra.mxu0 0.0
    %3192 = vmatprep.subr.mxu0 0.0
    %3193 = vmatpush1.msra.mxu0 0.0
    %3194 = vmatprep.subr.mxu0 0.0
    %3195 = vmatpush1.msra.mxu0 0.0
    %3196 = vmatprep.subr.mxu0 0.0
    %3197 = vmatpush1.msra.mxu0 0.0
    %3198 = vmatprep.subr.mxu0 0.0
    %3199 = vmatpush1.msra.mxu0 0.0
    %3200 = vmatprep.subr.mxu0 0.0
    %3201 = vmatpush1.msra.mxu0 0.0
    %3202 = vmatprep.subr.mxu0 0.0
    %3203 = vmatpush1.msra.mxu0 0.0
    %3204 = vmatprep.subr.mxu0 0.0
    %3205 = vmatpush1.msra.mxu0 0.0
    %3206 = vmatprep.subr.mxu0 0.0
    %3207 = vmatpush1.msra.mxu0 0.0
    %3208 = vmatprep.subr.mxu0 0.0
    %3209 = vmatpush1.msra.mxu0 0.0
    %3210 = vmatprep.subr.mxu0 0.0
    %3211 = vmatpush1.msra.mxu0 0.0
    %3212 = vmatprep.subr.mxu0 0.0
    %3213 = vmatpush1.msra.mxu0 0.0
    %3214 = vmatprep.subr.mxu0 0.0
    %3215 = vmatpush1.msra.mxu0 0.0
    %3216 = vmatprep.subr.mxu0 0.0
    %3217 = vmatpush1.msra.mxu0 0.0
    %3218 = vmatprep.subr.mxu0 0.0
    %3219 = vmatpush1.msra.mxu0 0.0
    %3220 = vmatprep.subr.mxu0 0.0
    %3221 = vmatpush1.msra.mxu0 0.0
    %3222 = vmatprep.subr.mxu0 0.0
    %3223 = vmatpush1.msra.mxu0 0.0
    %3224 = vmatprep.subr.mxu0 0.0
    %3225 = vmatpush1.msra.mxu0 0.0
    %3226 = vmatprep.subr.mxu0 0.0
    %3227 = vmatpush1.msra.mxu0 0.0
    %3228 = vmatprep.mubr.f32.mxu0 0.0
    %v3229 = vand.u32 %v3081, 4294901760
    %3230 = vmatmul.mubr.f32.gmra.mrb[0].mxu0 %v3229
    %v3231 = vpop.f32.mrb[0].mxu0
    %v3232 = vadd.f32 %v3156, %v3231
    %v3233 = vpop.f32.mrb[0].mxu0
    %3234 = vdwg.mxu0
    %3235 = vmatprep.subr.mxu0 0.0
    %v3236 = vand.u32 %v3079, 4294901760
    %v3237 = vsub.f32 %v3079, %v3236
    %3238 = vmatpush1.msra.mxu0 %v3237
    %3239 = vmatprep.subr.mxu0 0.0
    %3240 = vmatpush1.msra.mxu0 0.0
    %3241 = vmatprep.subr.mxu0 0.0
    %3242 = vmatpush1.msra.mxu0 0.0
    %3243 = vmatprep.subr.mxu0 0.0
    %3244 = vmatpush1.msra.mxu0 0.0
    %3245 = vmatprep.subr.mxu0 0.0
    %3246 = vmatpush1.msra.mxu0 0.0
    %3247 = vmatprep.subr.mxu0 0.0
    %3248 = vmatpush1.msra.mxu0 0.0
    %3249 = vmatprep.subr.mxu0 0.0
    %3250 = vmatpush1.msra.mxu0 0.0
    %3251 = vmatprep.subr.mxu0 0.0
    %3252 = vmatpush1.msra.mxu0 0.0
    %3253 = vmatprep.subr.mxu0 0.0
    %3254 = vmatpush1.msra.mxu0 0.0
    %3255 = vmatprep.subr.mxu0 0.0
    %3256 = vmatpush1.msra.mxu0 0.0
    %3257 = vmatprep.subr.mxu0 0.0
    %3258 = vmatpush1.msra.mxu0 0.0
    %3259 = vmatprep.subr.mxu0 0.0
    %3260 = vmatpush1.msra.mxu0 0.0
    %3261 = vmatprep.subr.mxu0 0.0
    %3262 = vmatpush1.msra.mxu0 0.0
    %3263 = vmatprep.subr.mxu0 0.0
    %3264 = vmatpush1.msra.mxu0 0.0
    %3265 = vmatprep.subr.mxu0 0.0
    %3266 = vmatpush1.msra.mxu0 0.0
    %3267 = vmatprep.subr.mxu0 0.0
    %3268 = vmatpush1.msra.mxu0 0.0
    %3269 = vmatprep.subr.mxu0 0.0
    %3270 = vmatpush1.msra.mxu0 0.0
    %3271 = vmatprep.subr.mxu0 0.0
    %3272 = vmatpush1.msra.mxu0 0.0
    %3273 = vmatprep.subr.mxu0 0.0
    %3274 = vmatpush1.msra.mxu0 0.0
    %3275 = vmatprep.subr.mxu0 0.0
    %3276 = vmatpush1.msra.mxu0 0.0
    %3277 = vmatprep.subr.mxu0 0.0
    %3278 = vmatpush1.msra.mxu0 0.0
    %3279 = vmatprep.subr.mxu0 0.0
    %3280 = vmatpush1.msra.mxu0 0.0
    %3281 = vmatprep.subr.mxu0 0.0
    %3282 = vmatpush1.msra.mxu0 0.0
    %3283 = vmatprep.subr.mxu0 0.0
    %3284 = vmatpush1.msra.mxu0 0.0
    %3285 = vmatprep.subr.mxu0 0.0
    %3286 = vmatpush1.msra.mxu0 0.0
    %3287 = vmatprep.subr.mxu0 0.0
    %3288 = vmatpush1.msra.mxu0 0.0
    %3289 = vmatprep.subr.mxu0 0.0
    %3290 = vmatpush1.msra.mxu0 0.0
    %3291 = vmatprep.subr.mxu0 0.0
    %3292 = vmatpush1.msra.mxu0 0.0
    %3293 = vmatprep.subr.mxu0 0.0
    %3294 = vmatpush1.msra.mxu0 0.0
    %3295 = vmatprep.subr.mxu0 0.0
    %3296 = vmatpush1.msra.mxu0 0.0
    %3297 = vmatprep.subr.mxu0 0.0
    %3298 = vmatpush1.msra.mxu0 0.0
    %3299 = vmatprep.subr.mxu0 0.0
    %3300 = vmatpush1.msra.mxu0 0.0
    %3301 = vmatprep.mubr.f32.mxu0 0.0
    %v3302 = vand.u32 %v3081, 4294901760
    %v3303 = vsub.f32 %v3081, %v3302
    %3304 = vmatmul.mubr.f32.gmra.mrb[0].mxu0 %v3303
    %v3305 = vpop.f32.mrb[0].mxu0
    %v3306 = vadd.f32 %v3232, %v3305
    %v3307 = vpop.f32.mrb[0].mxu0
    %3308 = vdwg.mxu0
    %3309 = vmatprep.subr.mxu0 0.0
    %v3310 = vand.u32 %v3079, 4294901760
    %3311 = vmatpush1.msra.mxu0 %v3310
    %3312 = vmatprep.subr.mxu0 0.0
    %3313 = vmatpush1.msra.mxu0 0.0
    %3314 = vmatprep.subr.mxu0 0.0
    %3315 = vmatpush1.msra.mxu0 0.0
    %3316 = vmatprep.subr.mxu0 0.0
    %3317 = vmatpush1.msra.mxu0 0.0
    %3318 = vmatprep.subr.mxu0 0.0
    %3319 = vmatpush1.msra.mxu0 0.0
    %3320 = vmatprep.subr.mxu0 0.0
    %3321 = vmatpush1.msra.mxu0 0.0
    %3322 = vmatprep.subr.mxu0 0.0
    %3323 = vmatpush1.msra.mxu0 0.0
    %3324 = vmatprep.subr.mxu0 0.0
    %3325 = vmatpush1.msra.mxu0 0.0
    %3326 = vmatprep.subr.mxu0 0.0
    %3327 = vmatpush1.msra.mxu0 0.0
    %3328 = vmatprep.subr.mxu0 0.0
    %3329 = vmatpush1.msra.mxu0 0.0
    %3330 = vmatprep.subr.mxu0 0.0
    %3331 = vmatpush1.msra.mxu0 0.0
    %3332 = vmatprep.subr.mxu0 0.0
    %3333 = vmatpush1.msra.mxu0 0.0
    %3334 = vmatprep.subr.mxu0 0.0
    %3335 = vmatpush1.msra.mxu0 0.0
    %3336 = vmatprep.subr.mxu0 0.0
    %3337 = vmatpush1.msra.mxu0 0.0
    %3338 = vmatprep.subr.mxu0 0.0
    %3339 = vmatpush1.msra.mxu0 0.0
    %3340 = vmatprep.subr.mxu0 0.0
    %3341 = vmatpush1.msra.mxu0 0.0
    %3342 = vmatprep.subr.mxu0 0.0
    %3343 = vmatpush1.msra.mxu0 0.0
    %3344 = vmatprep.subr.mxu0 0.0
    %3345 = vmatpush1.msra.mxu0 0.0
    %3346 = vmatprep.subr.mxu0 0.0
    %3347 = vmatpush1.msra.mxu0 0.0
    %3348 = vmatprep.subr.mxu0 0.0
    %3349 = vmatpush1.msra.mxu0 0.0
    %3350 = vmatprep.subr.mxu0 0.0
    %3351 = vmatpush1.msra.mxu0 0.0
    %3352 = vmatprep.subr.mxu0 0.0
    %3353 = vmatpush1.msra.mxu0 0.0
    %3354 = vmatprep.subr.mxu0 0.0
    %3355 = vmatpush1.msra.mxu0 0.0
    %3356 = vmatprep.subr.mxu0 0.0
    %3357 = vmatpush1.msra.mxu0 0.0
    %3358 = vmatprep.subr.mxu0 0.0
    %3359 = vmatpush1.msra.mxu0 0.0
    %3360 = vmatprep.subr.mxu0 0.0
    %3361 = vmatpush1.msra.mxu0 0.0
    %3362 = vmatprep.subr.mxu0 0.0
    %3363 = vmatpush1.msra.mxu0 0.0
    %3364 = vmatprep.subr.mxu0 0.0
    %3365 = vmatpush1.msra.mxu0 0.0
    %3366 = vmatprep.subr.mxu0 0.0
    %3367 = vmatpush1.msra.mxu0 0.0
    %3368 = vmatprep.subr.mxu0 0.0
    %3369 = vmatpush1.msra.mxu0 0.0
    %3370 = vmatprep.subr.mxu0 0.0
    %3371 = vmatpush1.msra.mxu0 0.0
    %3372 = vmatprep.subr.mxu0 0.0
    %3373 = vmatpush1.msra.mxu0 0.0
    %3374 = vmatprep.mubr.f32.mxu0 0.0
    %v3375 = vand.u32 %v3081, 4294901760
    %v3376 = vsub.f32 %v3081, %v3375
    %v3377 = vand.u32 %v3376, 4294901760
    %3378 = vmatmul.mubr.f32.gmra.mrb[0].mxu0 %v3377
    %v3379 = vpop.f32.mrb[0].mxu0
    %v3380 = vadd.f32 %v3306, %v3379
    %v3381 = vpop.f32.mrb[0].mxu0
    %3382 = vdwg.mxu0
    %3383 = vmatprep.subr.mxu0 0.0
    %v3384 = vand.u32 %v3079, 4294901760
    %v3385 = vsub.f32 %v3079, %v3384
    %v3386 = vand.u32 %v3385, 4294901760
    %3387 = vmatpush1.msra.mxu0 %v3386
    %3388 = vmatprep.subr.mxu0 0.0
    %3389 = vmatpush1.msra.mxu0 0.0
    %3390 = vmatprep.subr.mxu0 0.0
    %3391 = vmatpush1.msra.mxu0 0.0
    %3392 = vmatprep.subr.mxu0 0.0
    %3393 = vmatpush1.msra.mxu0 0.0
    %3394 = vmatprep.subr.mxu0 0.0
    %3395 = vmatpush1.msra.mxu0 0.0
    %3396 = vmatprep.subr.mxu0 0.0
    %3397 = vmatpush1.msra.mxu0 0.0
    %3398 = vmatprep.subr.mxu0 0.0
    %3399 = vmatpush1.msra.mxu0 0.0
    %3400 = vmatprep.subr.mxu0 0.0
    %3401 = vmatpush1.msra.mxu0 0.0
    %3402 = vmatprep.subr.mxu0 0.0
    %3403 = vmatpush1.msra.mxu0 0.0
    %3404 = vmatprep.subr.mxu0 0.0
    %3405 = vmatpush1.msra.mxu0 0.0
    %3406 = vmatprep.subr.mxu0 0.0
    %3407 = vmatpush1.msra.mxu0 0.0
    %3408 = vmatprep.subr.mxu0 0.0
    %3409 = vmatpush1.msra.mxu0 0.0
    %3410 = vmatprep.subr.mxu0 0.0
    %3411 = vmatpush1.msra.mxu0 0.0
    %3412 = vmatprep.subr.mxu0 0.0
    %3413 = vmatpush1.msra.mxu0 0.0
    %3414 = vmatprep.subr.mxu0 0.0
    %3415 = vmatpush1.msra.mxu0 0.0
    %3416 = vmatprep.subr.mxu0 0.0
    %3417 = vmatpush1.msra.mxu0 0.0
    %3418 = vmatprep.subr.mxu0 0.0
    %3419 = vmatpush1.msra.mxu0 0.0
    %3420 = vmatprep.subr.mxu0 0.0
    %3421 = vmatpush1.msra.mxu0 0.0
    %3422 = vmatprep.subr.mxu0 0.0
    %3423 = vmatpush1.msra.mxu0 0.0
    %3424 = vmatprep.subr.mxu0 0.0
    %3425 = vmatpush1.msra.mxu0 0.0
    %3426 = vmatprep.subr.mxu0 0.0
    %3427 = vmatpush1.msra.mxu0 0.0
    %3428 = vmatprep.subr.mxu0 0.0
    %3429 = vmatpush1.msra.mxu0 0.0
    %3430 = vmatprep.subr.mxu0 0.0
    %3431 = vmatpush1.msra.mxu0 0.0
    %3432 = vmatprep.subr.mxu0 0.0
    %3433 = vmatpush1.msra.mxu0 0.0
    %3434 = vmatprep.subr.mxu0 0.0
    %3435 = vmatpush1.msra.mxu0 0.0
    %3436 = vmatprep.subr.mxu0 0.0
    %3437 = vmatpush1.msra.mxu0 0.0
    %3438 = vmatprep.subr.mxu0 0.0
    %3439 = vmatpush1.msra.mxu0 0.0
    %3440 = vmatprep.subr.mxu0 0.0
    %3441 = vmatpush1.msra.mxu0 0.0
    %3442 = vmatprep.subr.mxu0 0.0
    %3443 = vmatpush1.msra.mxu0 0.0
    %3444 = vmatprep.subr.mxu0 0.0
    %3445 = vmatpush1.msra.mxu0 0.0
    %3446 = vmatprep.subr.mxu0 0.0
    %3447 = vmatpush1.msra.mxu0 0.0
    %3448 = vmatprep.subr.mxu0 0.0
    %3449 = vmatpush1.msra.mxu0 0.0
    %3450 = vmatprep.mubr.f32.mxu0 0.0
    %v3451 = vand.u32 %v3081, 4294901760
    %3452 = vmatmul.mubr.f32.gmra.mrb[0].mxu0 %v3451
    %v3453 = vpop.f32.mrb[0].mxu0
    %v3454 = vadd.f32 %v3380, %v3453
    %v3455 = vpop.f32.mrb[0].mxu0
    %3456 = vdwg.mxu0
    %3457 = vmatprep.subr.mxu0 0.0
    %v3458 = vand.u32 %v3079, 4294901760
    %3459 = vmatpush1.msra.mxu0 %v3458
    %3460 = vmatprep.subr.mxu0 0.0
    %3461 = vmatpush1.msra.mxu0 0.0
    %3462 = vmatprep.subr.mxu0 0.0
    %3463 = vmatpush1.msra.mxu0 0.0
    %3464 = vmatprep.subr.mxu0 0.0
    %3465 = vmatpush1.msra.mxu0 0.0
    %3466 = vmatprep.subr.mxu0 0.0
    %3467 = vmatpush1.msra.mxu0 0.0
    %3468 = vmatprep.subr.mxu0 0.0
    %3469 = vmatpush1.msra.mxu0 0.0
    %3470 = vmatprep.subr.mxu0 0.0
    %3471 = vmatpush1.msra.mxu0 0.0
    %3472 = vmatprep.subr.mxu0 0.0
    %3473 = vmatpush1.msra.mxu0 0.0
    %3474 = vmatprep.subr.mxu0 0.0
    %3475 = vmatpush1.msra.mxu0 0.0
    %3476 = vmatprep.subr.mxu0 0.0
    %3477 = vmatpush1.msra.mxu0 0.0
    %3478 = vmatprep.subr.mxu0 0.0
    %3479 = vmatpush1.msra.mxu0 0.0
    %3480 = vmatprep.subr.mxu0 0.0
    %3481 = vmatpush1.msra.mxu0 0.0
    %3482 = vmatprep.subr.mxu0 0.0
    %3483 = vmatpush1.msra.mxu0 0.0
    %3484 = vmatprep.subr.mxu0 0.0
    %3485 = vmatpush1.msra.mxu0 0.0
    %3486 = vmatprep.subr.mxu0 0.0
    %3487 = vmatpush1.msra.mxu0 0.0
    %3488 = vmatprep.subr.mxu0 0.0
    %3489 = vmatpush1.msra.mxu0 0.0
    %3490 = vmatprep.subr.mxu0 0.0
    %3491 = vmatpush1.msra.mxu0 0.0
    %3492 = vmatprep.subr.mxu0 0.0
    %3493 = vmatpush1.msra.mxu0 0.0
    %3494 = vmatprep.subr.mxu0 0.0
    %3495 = vmatpush1.msra.mxu0 0.0
    %3496 = vmatprep.subr.mxu0 0.0
    %3497 = vmatpush1.msra.mxu0 0.0
    %3498 = vmatprep.subr.mxu0 0.0
    %3499 = vmatpush1.msra.mxu0 0.0
    %3500 = vmatprep.subr.mxu0 0.0
    %3501 = vmatpush1.msra.mxu0 0.0
    %3502 = vmatprep.subr.mxu0 0.0
    %3503 = vmatpush1.msra.mxu0 0.0
    %3504 = vmatprep.subr.mxu0 0.0
    %3505 = vmatpush1.msra.mxu0 0.0
    %3506 = vmatprep.subr.mxu0 0.0
    %3507 = vmatpush1.msra.mxu0 0.0
    %3508 = vmatprep.subr.mxu0 0.0
    %3509 = vmatpush1.msra.mxu0 0.0
    %3510 = vmatprep.subr.mxu0 0.0
    %3511 = vmatpush1.msra.mxu0 0.0
    %3512 = vmatprep.subr.mxu0 0.0
    %3513 = vmatpush1.msra.mxu0 0.0
    %3514 = vmatprep.subr.mxu0 0.0
    %3515 = vmatpush1.msra.mxu0 0.0
    %3516 = vmatprep.subr.mxu0 0.0
    %3517 = vmatpush1.msra.mxu0 0.0
    %3518 = vmatprep.subr.mxu0 0.0
    %3519 = vmatpush1.msra.mxu0 0.0
    %3520 = vmatprep.subr.mxu0 0.0
    %3521 = vmatpush1.msra.mxu0 0.0
    %3522 = vmatprep.mubr.f32.mxu0 0.0
    %v3523 = vand.u32 %v3081, 4294901760
    %3524 = vmatmul.mubr.f32.gmra.mrb[0].mxu0 %v3523
    %v3525 = vpop.f32.mrb[0].mxu0
    %v3526 = vadd.f32 %v3454, %v3525
    %v3527 = vpop.f32.mrb[0].mxu0
    %3528 = vdwg.mxu0
    %v3530 = vsel %vm2502, %v3059, 0
    %3532 = vmatprep.subr.mxu0 0.0
    %v3533 = vand.u32 %v3079, 4294901760
    %3534 = vmatpush1.msra.mxu0 %v3533
    %3535 = vmatprep.subr.mxu0 0.0
    %3536 = vmatpush1.msra.mxu0 0.0
    %3537 = vmatprep.subr.mxu0 0.0
    %3538 = vmatpush1.msra.mxu0 0.0
    %3539 = vmatprep.subr.mxu0 0.0
    %3540 = vmatpush1.msra.mxu0 0.0
    %3541 = vmatprep.subr.mxu0 0.0
    %3542 = vmatpush1.msra.mxu0 0.0
    %3543 = vmatprep.subr.mxu0 0.0
    %3544 = vmatpush1.msra.mxu0 0.0
    %3545 = vmatprep.subr.mxu0 0.0
    %3546 = vmatpush1.msra.mxu0 0.0
    %3547 = vmatprep.subr.mxu0 0.0
    %3548 = vmatpush1.msra.mxu0 0.0
    %3549 = vmatprep.subr.mxu0 0.0
    %3550 = vmatpush1.msra.mxu0 0.0
    %3551 = vmatprep.subr.mxu0 0.0
    %3552 = vmatpush1.msra.mxu0 0.0
    %3553 = vmatprep.subr.mxu0 0.0
    %3554 = vmatpush1.msra.mxu0 0.0
    %3555 = vmatprep.subr.mxu0 0.0
    %3556 = vmatpush1.msra.mxu0 0.0
    %3557 = vmatprep.subr.mxu0 0.0
    %3558 = vmatpush1.msra.mxu0 0.0
    %3559 = vmatprep.subr.mxu0 0.0
    %3560 = vmatpush1.msra.mxu0 0.0
    %3561 = vmatprep.subr.mxu0 0.0
    %3562 = vmatpush1.msra.mxu0 0.0
    %3563 = vmatprep.subr.mxu0 0.0
    %3564 = vmatpush1.msra.mxu0 0.0
    %3565 = vmatprep.subr.mxu0 0.0
    %3566 = vmatpush1.msra.mxu0 0.0
    %3567 = vmatprep.subr.mxu0 0.0
    %3568 = vmatpush1.msra.mxu0 0.0
    %3569 = vmatprep.subr.mxu0 0.0
    %3570 = vmatpush1.msra.mxu0 0.0
    %3571 = vmatprep.subr.mxu0 0.0
    %3572 = vmatpush1.msra.mxu0 0.0
    %3573 = vmatprep.subr.mxu0 0.0
    %3574 = vmatpush1.msra.mxu0 0.0
    %3575 = vmatprep.subr.mxu0 0.0
    %3576 = vmatpush1.msra.mxu0 0.0
    %3577 = vmatprep.subr.mxu0 0.0
    %3578 = vmatpush1.msra.mxu0 0.0
    %3579 = vmatprep.subr.mxu0 0.0
    %3580 = vmatpush1.msra.mxu0 0.0
    %3581 = vmatprep.subr.mxu0 0.0
    %3582 = vmatpush1.msra.mxu0 0.0
    %3583 = vmatprep.subr.mxu0 0.0
    %3584 = vmatpush1.msra.mxu0 0.0
    %3585 = vmatprep.subr.mxu0 0.0
    %3586 = vmatpush1.msra.mxu0 0.0
    %3587 = vmatprep.subr.mxu0 0.0
    %3588 = vmatpush1.msra.mxu0 0.0
    %3589 = vmatprep.subr.mxu0 0.0
    %3590 = vmatpush1.msra.mxu0 0.0
    %3591 = vmatprep.subr.mxu0 0.0
    %3592 = vmatpush1.msra.mxu0 0.0
    %3593 = vmatprep.subr.mxu0 0.0
    %3594 = vmatpush1.msra.mxu0 0.0
    %3595 = vmatprep.subr.mxu0 0.0
    %3596 = vmatpush1.msra.mxu0 0.0
    %3597 = vmatprep.mubr.f32.mxu0 0.0
    %v3598 = vand.u32 %v3530, 4294901760
    %v3599 = vsub.f32 %v3530, %v3598
    %v3600 = vand.u32 %v3599, 4294901760
    %v3601 = vsub.f32 %v3599, %v3600
    %v3602 = vand.u32 %v3601, 4294901760
    %3603 = vmatmul.mubr.f32.gmra.mrb[0].mxu0 %v3602
    %v3604 = vpop.f32.mrb[0].mxu0
    %v3605 = vadd.f32 0.0, %v3604
    %v3606 = vpop.f32.mrb[0].mxu0
    %3607 = vdwg.mxu0
    %3608 = vmatprep.subr.mxu0 0.0
    %v3609 = vand.u32 %v3079, 4294901760
    %v3610 = vsub.f32 %v3079, %v3609
    %v3611 = vand.u32 %v3610, 4294901760
    %v3612 = vsub.f32 %v3610, %v3611
    %v3613 = vand.u32 %v3612, 4294901760
    %3614 = vmatpush1.msra.mxu0 %v3613
    %3615 = vmatprep.subr.mxu0 0.0
    %3616 = vmatpush1.msra.mxu0 0.0
    %3617 = vmatprep.subr.mxu0 0.0
    %3618 = vmatpush1.msra.mxu0 0.0
    %3619 = vmatprep.subr.mxu0 0.0
    %3620 = vmatpush1.msra.mxu0 0.0
    %3621 = vmatprep.subr.mxu0 0.0
    %3622 = vmatpush1.msra.mxu0 0.0
    %3623 = vmatprep.subr.mxu0 0.0
    %3624 = vmatpush1.msra.mxu0 0.0
    %3625 = vmatprep.subr.mxu0 0.0
    %3626 = vmatpush1.msra.mxu0 0.0
    %3627 = vmatprep.subr.mxu0 0.0
    %3628 = vmatpush1.msra.mxu0 0.0
    %3629 = vmatprep.subr.mxu0 0.0
    %3630 = vmatpush1.msra.mxu0 0.0
    %3631 = vmatprep.subr.mxu0 0.0
    %3632 = vmatpush1.msra.mxu0 0.0
    %3633 = vmatprep.subr.mxu0 0.0
    %3634 = vmatpush1.msra.mxu0 0.0
    %3635 = vmatprep.subr.mxu0 0.0
    %3636 = vmatpush1.msra.mxu0 0.0
    %3637 = vmatprep.subr.mxu0 0.0
    %3638 = vmatpush1.msra.mxu0 0.0
    %3639 = vmatprep.subr.mxu0 0.0
    %3640 = vmatpush1.msra.mxu0 0.0
    %3641 = vmatprep.subr.mxu0 0.0
    %3642 = vmatpush1.msra.mxu0 0.0
    %3643 = vmatprep.subr.mxu0 0.0
    %3644 = vmatpush1.msra.mxu0 0.0
    %3645 = vmatprep.subr.mxu0 0.0
    %3646 = vmatpush1.msra.mxu0 0.0
    %3647 = vmatprep.subr.mxu0 0.0
    %3648 = vmatpush1.msra.mxu0 0.0
    %3649 = vmatprep.subr.mxu0 0.0
    %3650 = vmatpush1.msra.mxu0 0.0
    %3651 = vmatprep.subr.mxu0 0.0
    %3652 = vmatpush1.msra.mxu0 0.0
    %3653 = vmatprep.subr.mxu0 0.0
    %3654 = vmatpush1.msra.mxu0 0.0
    %3655 = vmatprep.subr.mxu0 0.0
    %3656 = vmatpush1.msra.mxu0 0.0
    %3657 = vmatprep.subr.mxu0 0.0
    %3658 = vmatpush1.msra.mxu0 0.0
    %3659 = vmatprep.subr.mxu0 0.0
    %3660 = vmatpush1.msra.mxu0 0.0
    %3661 = vmatprep.subr.mxu0 0.0
    %3662 = vmatpush1.msra.mxu0 0.0
    %3663 = vmatprep.subr.mxu0 0.0
    %3664 = vmatpush1.msra.mxu0 0.0
    %3665 = vmatprep.subr.mxu0 0.0
    %3666 = vmatpush1.msra.mxu0 0.0
    %3667 = vmatprep.subr.mxu0 0.0
    %3668 = vmatpush1.msra.mxu0 0.0
    %3669 = vmatprep.subr.mxu0 0.0
    %3670 = vmatpush1.msra.mxu0 0.0
    %3671 = vmatprep.subr.mxu0 0.0
    %3672 = vmatpush1.msra.mxu0 0.0
    %3673 = vmatprep.subr.mxu0 0.0
    %3674 = vmatpush1.msra.mxu0 0.0
    %3675 = vmatprep.subr.mxu0 0.0
    %3676 = vmatpush1.msra.mxu0 0.0
    %3677 = vmatprep.mubr.f32.mxu0 0.0
    %v3678 = vand.u32 %v3530, 4294901760
    %3679 = vmatmul.mubr.f32.gmra.mrb[0].mxu0 %v3678
    %v3680 = vpop.f32.mrb[0].mxu0
    %v3681 = vadd.f32 %v3605, %v3680
    %v3682 = vpop.f32.mrb[0].mxu0
    %3683 = vdwg.mxu0
    %3684 = vmatprep.subr.mxu0 0.0
    %v3685 = vand.u32 %v3079, 4294901760
    %v3686 = vsub.f32 %v3079, %v3685
    %3687 = vmatpush1.msra.mxu0 %v3686
    %3688 = vmatprep.subr.mxu0 0.0
    %3689 = vmatpush1.msra.mxu0 0.0
    %3690 = vmatprep.subr.mxu0 0.0
    %3691 = vmatpush1.msra.mxu0 0.0
    %3692 = vmatprep.subr.mxu0 0.0
    %3693 = vmatpush1.msra.mxu0 0.0
    %3694 = vmatprep.subr.mxu0 0.0
    %3695 = vmatpush1.msra.mxu0 0.0
    %3696 = vmatprep.subr.mxu0 0.0
    %3697 = vmatpush1.msra.mxu0 0.0
    %3698 = vmatprep.subr.mxu0 0.0
    %3699 = vmatpush1.msra.mxu0 0.0
    %3700 = vmatprep.subr.mxu0 0.0
    %3701 = vmatpush1.msra.mxu0 0.0
    %3702 = vmatprep.subr.mxu0 0.0
    %3703 = vmatpush1.msra.mxu0 0.0
    %3704 = vmatprep.subr.mxu0 0.0
    %3705 = vmatpush1.msra.mxu0 0.0
    %3706 = vmatprep.subr.mxu0 0.0
    %3707 = vmatpush1.msra.mxu0 0.0
    %3708 = vmatprep.subr.mxu0 0.0
    %3709 = vmatpush1.msra.mxu0 0.0
    %3710 = vmatprep.subr.mxu0 0.0
    %3711 = vmatpush1.msra.mxu0 0.0
    %3712 = vmatprep.subr.mxu0 0.0
    %3713 = vmatpush1.msra.mxu0 0.0
    %3714 = vmatprep.subr.mxu0 0.0
    %3715 = vmatpush1.msra.mxu0 0.0
    %3716 = vmatprep.subr.mxu0 0.0
    %3717 = vmatpush1.msra.mxu0 0.0
    %3718 = vmatprep.subr.mxu0 0.0
    %3719 = vmatpush1.msra.mxu0 0.0
    %3720 = vmatprep.subr.mxu0 0.0
    %3721 = vmatpush1.msra.mxu0 0.0
    %3722 = vmatprep.subr.mxu0 0.0
    %3723 = vmatpush1.msra.mxu0 0.0
    %3724 = vmatprep.subr.mxu0 0.0
    %3725 = vmatpush1.msra.mxu0 0.0
    %3726 = vmatprep.subr.mxu0 0.0
    %3727 = vmatpush1.msra.mxu0 0.0
    %3728 = vmatprep.subr.mxu0 0.0
    %3729 = vmatpush1.msra.mxu0 0.0
    %3730 = vmatprep.subr.mxu0 0.0
    %3731 = vmatpush1.msra.mxu0 0.0
    %3732 = vmatprep.subr.mxu0 0.0
    %3733 = vmatpush1.msra.mxu0 0.0
    %3734 = vmatprep.subr.mxu0 0.0
    %3735 = vmatpush1.msra.mxu0 0.0
    %3736 = vmatprep.subr.mxu0 0.0
    %3737 = vmatpush1.msra.mxu0 0.0
    %3738 = vmatprep.subr.mxu0 0.0
    %3739 = vmatpush1.msra.mxu0 0.0
    %3740 = vmatprep.subr.mxu0 0.0
    %3741 = vmatpush1.msra.mxu0 0.0
    %3742 = vmatprep.subr.mxu0 0.0
    %3743 = vmatpush1.msra.mxu0 0.0
    %3744 = vmatprep.subr.mxu0 0.0
    %3745 = vmatpush1.msra.mxu0 0.0
    %3746 = vmatprep.subr.mxu0 0.0
    %3747 = vmatpush1.msra.mxu0 0.0
    %3748 = vmatprep.subr.mxu0 0.0
    %3749 = vmatpush1.msra.mxu0 0.0
    %3750 = vmatprep.mubr.f32.mxu0 0.0
    %v3751 = vand.u32 %v3530, 4294901760
    %v3752 = vsub.f32 %v3530, %v3751
    %3753 = vmatmul.mubr.f32.gmra.mrb[0].mxu0 %v3752
    %v3754 = vpop.f32.mrb[0].mxu0
    %v3755 = vadd.f32 %v3681, %v3754
    %v3756 = vpop.f32.mrb[0].mxu0
    %3757 = vdwg.mxu0
    %3758 = vmatprep.subr.mxu0 0.0
    %v3759 = vand.u32 %v3079, 4294901760
    %3760 = vmatpush1.msra.mxu0 %v3759
    %3761 = vmatprep.subr.mxu0 0.0
    %3762 = vmatpush1.msra.mxu0 0.0
    %3763 = vmatprep.subr.mxu0 0.0
    %3764 = vmatpush1.msra.mxu0 0.0
    %3765 = vmatprep.subr.mxu0 0.0
    %3766 = vmatpush1.msra.mxu0 0.0
    %3767 = vmatprep.subr.mxu0 0.0
    %3768 = vmatpush1.msra.mxu0 0.0
    %3769 = vmatprep.subr.mxu0 0.0
    %3770 = vmatpush1.msra.mxu0 0.0
    %3771 = vmatprep.subr.mxu0 0.0
    %3772 = vmatpush1.msra.mxu0 0.0
    %3773 = vmatprep.subr.mxu0 0.0
    %3774 = vmatpush1.msra.mxu0 0.0
    %3775 = vmatprep.subr.mxu0 0.0
    %3776 = vmatpush1.msra.mxu0 0.0
    %3777 = vmatprep.subr.mxu0 0.0
    %3778 = vmatpush1.msra.mxu0 0.0
    %3779 = vmatprep.subr.mxu0 0.0
    %3780 = vmatpush1.msra.mxu0 0.0
    %3781 = vmatprep.subr.mxu0 0.0
    %3782 = vmatpush1.msra.mxu0 0.0
    %3783 = vmatprep.subr.mxu0 0.0
    %3784 = vmatpush1.msra.mxu0 0.0
    %3785 = vmatprep.subr.mxu0 0.0
    %3786 = vmatpush1.msra.mxu0 0.0
    %3787 = vmatprep.subr.mxu0 0.0
    %3788 = vmatpush1.msra.mxu0 0.0
    %3789 = vmatprep.subr.mxu0 0.0
    %3790 = vmatpush1.msra.mxu0 0.0
    %3791 = vmatprep.subr.mxu0 0.0
    %3792 = vmatpush1.msra.mxu0 0.0
    %3793 = vmatprep.subr.mxu0 0.0
    %3794 = vmatpush1.msra.mxu0 0.0
    %3795 = vmatprep.subr.mxu0 0.0
    %3796 = vmatpush1.msra.mxu0 0.0
    %3797 = vmatprep.subr.mxu0 0.0
    %3798 = vmatpush1.msra.mxu0 0.0
    %3799 = vmatprep.subr.mxu0 0.0
    %3800 = vmatpush1.msra.mxu0 0.0
    %3801 = vmatprep.subr.mxu0 0.0
    %3802 = vmatpush1.msra.mxu0 0.0
    %3803 = vmatprep.subr.mxu0 0.0
    %3804 = vmatpush1.msra.mxu0 0.0
    %3805 = vmatprep.subr.mxu0 0.0
    %3806 = vmatpush1.msra.mxu0 0.0
    %3807 = vmatprep.subr.mxu0 0.0
    %3808 = vmatpush1.msra.mxu0 0.0
    %3809 = vmatprep.subr.mxu0 0.0
    %3810 = vmatpush1.msra.mxu0 0.0
    %3811 = vmatprep.subr.mxu0 0.0
    %3812 = vmatpush1.msra.mxu0 0.0
    %3813 = vmatprep.subr.mxu0 0.0
    %3814 = vmatpush1.msra.mxu0 0.0
    %3815 = vmatprep.subr.mxu0 0.0
    %3816 = vmatpush1.msra.mxu0 0.0
    %3817 = vmatprep.subr.mxu0 0.0
    %3818 = vmatpush1.msra.mxu0 0.0
    %3819 = vmatprep.subr.mxu0 0.0
    %3820 = vmatpush1.msra.mxu0 0.0
    %3821 = vmatprep.subr.mxu0 0.0
    %3822 = vmatpush1.msra.mxu0 0.0
    %3823 = vmatprep.mubr.f32.mxu0 0.0
    %v3824 = vand.u32 %v3530, 4294901760
    %v3825 = vsub.f32 %v3530, %v3824
    %v3826 = vand.u32 %v3825, 4294901760
    %3827 = vmatmul.mubr.f32.gmra.mrb[0].mxu0 %v3826
    %v3828 = vpop.f32.mrb[0].mxu0
    %v3829 = vadd.f32 %v3755, %v3828
    %v3830 = vpop.f32.mrb[0].mxu0
    %3831 = vdwg.mxu0
    %3832 = vmatprep.subr.mxu0 0.0
    %v3833 = vand.u32 %v3079, 4294901760
    %v3834 = vsub.f32 %v3079, %v3833
    %v3835 = vand.u32 %v3834, 4294901760
    %3836 = vmatpush1.msra.mxu0 %v3835
    %3837 = vmatprep.subr.mxu0 0.0
    %3838 = vmatpush1.msra.mxu0 0.0
    %3839 = vmatprep.subr.mxu0 0.0
    %3840 = vmatpush1.msra.mxu0 0.0
    %3841 = vmatprep.subr.mxu0 0.0
    %3842 = vmatpush1.msra.mxu0 0.0
    %3843 = vmatprep.subr.mxu0 0.0
    %3844 = vmatpush1.msra.mxu0 0.0
    %3845 = vmatprep.subr.mxu0 0.0
    %3846 = vmatpush1.msra.mxu0 0.0
    %3847 = vmatprep.subr.mxu0 0.0
    %3848 = vmatpush1.msra.mxu0 0.0
    %3849 = vmatprep.subr.mxu0 0.0
    %3850 = vmatpush1.msra.mxu0 0.0
    %3851 = vmatprep.subr.mxu0 0.0
    %3852 = vmatpush1.msra.mxu0 0.0
    %3853 = vmatprep.subr.mxu0 0.0
    %3854 = vmatpush1.msra.mxu0 0.0
    %3855 = vmatprep.subr.mxu0 0.0
    %3856 = vmatpush1.msra.mxu0 0.0
    %3857 = vmatprep.subr.mxu0 0.0
    %3858 = vmatpush1.msra.mxu0 0.0
    %3859 = vmatprep.subr.mxu0 0.0
    %3860 = vmatpush1.msra.mxu0 0.0
    %3861 = vmatprep.subr.mxu0 0.0
    %3862 = vmatpush1.msra.mxu0 0.0
    %3863 = vmatprep.subr.mxu0 0.0
    %3864 = vmatpush1.msra.mxu0 0.0
    %3865 = vmatprep.subr.mxu0 0.0
    %3866 = vmatpush1.msra.mxu0 0.0
    %3867 = vmatprep.subr.mxu0 0.0
    %3868 = vmatpush1.msra.mxu0 0.0
    %3869 = vmatprep.subr.mxu0 0.0
    %3870 = vmatpush1.msra.mxu0 0.0
    %3871 = vmatprep.subr.mxu0 0.0
    %3872 = vmatpush1.msra.mxu0 0.0
    %3873 = vmatprep.subr.mxu0 0.0
    %3874 = vmatpush1.msra.mxu0 0.0
    %3875 = vmatprep.subr.mxu0 0.0
    %3876 = vmatpush1.msra.mxu0 0.0
    %3877 = vmatprep.subr.mxu0 0.0
    %3878 = vmatpush1.msra.mxu0 0.0
    %3879 = vmatprep.subr.mxu0 0.0
    %3880 = vmatpush1.msra.mxu0 0.0
    %3881 = vmatprep.subr.mxu0 0.0
    %3882 = vmatpush1.msra.mxu0 0.0
    %3883 = vmatprep.subr.mxu0 0.0
    %3884 = vmatpush1.msra.mxu0 0.0
    %3885 = vmatprep.subr.mxu0 0.0
    %3886 = vmatpush1.msra.mxu0 0.0
    %3887 = vmatprep.subr.mxu0 0.0
    %3888 = vmatpush1.msra.mxu0 0.0
    %3889 = vmatprep.subr.mxu0 0.0
    %3890 = vmatpush1.msra.mxu0 0.0
    %3891 = vmatprep.subr.mxu0 0.0
    %3892 = vmatpush1.msra.mxu0 0.0
    %3893 = vmatprep.subr.mxu0 0.0
    %3894 = vmatpush1.msra.mxu0 0.0
    %3895 = vmatprep.subr.mxu0 0.0
    %3896 = vmatpush1.msra.mxu0 0.0
    %3897 = vmatprep.subr.mxu0 0.0
    %3898 = vmatpush1.msra.mxu0 0.0
    %3899 = vmatprep.mubr.f32.mxu0 0.0
    %v3900 = vand.u32 %v3530, 4294901760
    %3901 = vmatmul.mubr.f32.gmra.mrb[0].mxu0 %v3900
    %v3902 = vpop.f32.mrb[0].mxu0
    %v3903 = vadd.f32 %v3829, %v3902
    %v3904 = vpop.f32.mrb[0].mxu0
    %3905 = vdwg.mxu0
    %3906 = vmatprep.subr.mxu0 0.0
    %v3907 = vand.u32 %v3079, 4294901760
    %3908 = vmatpush1.msra.mxu0 %v3907
    %3909 = vmatprep.subr.mxu0 0.0
    %3910 = vmatpush1.msra.mxu0 0.0
    %3911 = vmatprep.subr.mxu0 0.0
    %3912 = vmatpush1.msra.mxu0 0.0
    %3913 = vmatprep.subr.mxu0 0.0
    %3914 = vmatpush1.msra.mxu0 0.0
    %3915 = vmatprep.subr.mxu0 0.0
    %3916 = vmatpush1.msra.mxu0 0.0
    %3917 = vmatprep.subr.mxu0 0.0
    %3918 = vmatpush1.msra.mxu0 0.0
    %3919 = vmatprep.subr.mxu0 0.0
    %3920 = vmatpush1.msra.mxu0 0.0
    %3921 = vmatprep.subr.mxu0 0.0
    %3922 = vmatpush1.msra.mxu0 0.0
    %3923 = vmatprep.subr.mxu0 0.0
    %3924 = vmatpush1.msra.mxu0 0.0
    %3925 = vmatprep.subr.mxu0 0.0
    %3926 = vmatpush1.msra.mxu0 0.0
    %3927 = vmatprep.subr.mxu0 0.0
    %3928 = vmatpush1.msra.mxu0 0.0
    %3929 = vmatprep.subr.mxu0 0.0
    %3930 = vmatpush1.msra.mxu0 0.0
    %3931 = vmatprep.subr.mxu0 0.0
    %3932 = vmatpush1.msra.mxu0 0.0
    %3933 = vmatprep.subr.mxu0 0.0
    %3934 = vmatpush1.msra.mxu0 0.0
    %3935 = vmatprep.subr.mxu0 0.0
    %3936 = vmatpush1.msra.mxu0 0.0
    %3937 = vmatprep.subr.mxu0 0.0
    %3938 = vmatpush1.msra.mxu0 0.0
    %3939 = vmatprep.subr.mxu0 0.0
    %3940 = vmatpush1.msra.mxu0 0.0
    %3941 = vmatprep.subr.mxu0 0.0
    %3942 = vmatpush1.msra.mxu0 0.0
    %3943 = vmatprep.subr.mxu0 0.0
    %3944 = vmatpush1.msra.mxu0 0.0
    %3945 = vmatprep.subr.mxu0 0.0
    %3946 = vmatpush1.msra.mxu0 0.0
    %3947 = vmatprep.subr.mxu0 0.0
    %3948 = vmatpush1.msra.mxu0 0.0
    %3949 = vmatprep.subr.mxu0 0.0
    %3950 = vmatpush1.msra.mxu0 0.0
    %3951 = vmatprep.subr.mxu0 0.0
    %3952 = vmatpush1.msra.mxu0 0.0
    %3953 = vmatprep.subr.mxu0 0.0
    %3954 = vmatpush1.msra.mxu0 0.0
    %3955 = vmatprep.subr.mxu0 0.0
    %3956 = vmatpush1.msra.mxu0 0.0
    %3957 = vmatprep.subr.mxu0 0.0
    %3958 = vmatpush1.msra.mxu0 0.0
    %3959 = vmatprep.subr.mxu0 0.0
    %3960 = vmatpush1.msra.mxu0 0.0
    %3961 = vmatprep.subr.mxu0 0.0
    %3962 = vmatpush1.msra.mxu0 0.0
    %3963 = vmatprep.subr.mxu0 0.0
    %3964 = vmatpush1.msra.mxu0 0.0
    %3965 = vmatprep.subr.mxu0 0.0
    %3966 = vmatpush1.msra.mxu0 0.0
    %3967 = vmatprep.subr.mxu0 0.0
    %3968 = vmatpush1.msra.mxu0 0.0
    %3969 = vmatprep.subr.mxu0 0.0
    %3970 = vmatpush1.msra.mxu0 0.0
    %3971 = vmatprep.mubr.f32.mxu0 0.0
    %v3972 = vand.u32 %v3530, 4294901760
    %3973 = vmatmul.mubr.f32.gmra.mrb[0].mxu0 %v3972
    %v3974 = vpop.f32.mrb[0].mxu0
    %v3975 = vadd.f32 %v3903, %v3974
    %v3976 = vpop.f32.mrb[0].mxu0
    %3977 = vdwg.mxu0
    %v3978 = vsel %vm3064, 0.0, %v3975
    %v3979 = vadd.f32 %v3526, 1e-06
    %v3980 = vadd.f32 %v3978, 1e-06
    %v3981 = vmul.f32 %v3979, %v3979
    %v3982 = vmul.f32 %v3980, %v3980
    %v3983 = vadd.f32 %v3981, %v3982
    %v3984 = vrsqrt.pop %v3983
    %v3985 = vmul.f32 %v3983, %v3984
    %vm3986 = vcmp.eq.f32.partialorder %v3983, inf
    %v3987 = vsel %vm3986, %v3983, %v3985
    %vm3988 = vcmp.eq.f32.partialorder %v3983, 0.0
    %v3989 = vand.u32 %v3983, 2147483648
    %v3990 = vsel %vm3988, %v3989, %v3987
    %vm3991 = vcmask 258048
    %3992 = vst.msk [vmem:[%s7] sm:$0x1f] %vm3991, %v3990
    %3993 = vst.msk [vmem:[%s8] sm:$0x1f] %vm3991, %v3526
    %3994 = vst.msk [vmem:[%s9] sm:$0x1f] %vm3991, %v3978
    %v3995 = vmul.f32 %v1519, %v1519
    %v3996 = vsel %vm3066, %v3995, 0.0
    %3997 = vadd.xlane.f32.xlu0 %v3996
    %v3998 = vpop.xlane.xlu0 %3997
    %v3999 = vrsqrt.pop %v3998
    %v4000 = vmul.f32 %v3998, %v3999
    %vm4001 = vcmp.eq.f32.partialorder %v3998, inf
    %v4002 = vsel %vm4001, %v3998, %v4000
    %vm4003 = vcmp.eq.f32.partialorder %v3998, 0.0
    %v4004 = vand.u32 %v3998, 2147483648
    %v4005 = vsel %vm4003, %v4004, %v4002
    %v4006 = vmax.f32 %v4005, 1e-12
    %v4007 = vrcp.pop %v4006
    %v4008 = vmul.f32 %v1519, %v4007
    %4009 = vmatprep.subr.mxu0 0.0
    %v4010 = vand.u32 %v4008, 4294901760
    %4011 = vmatpush1.msra.mxu0 %v4010
    %4012 = vmatprep.subr.mxu0 0.0
    %4013 = vmatpush1.msra.mxu0 0.0
    %4014 = vmatprep.subr.mxu0 0.0
    %4015 = vmatpush1.msra.mxu0 0.0
    %4016 = vmatprep.subr.mxu0 0.0
    %4017 = vmatpush1.msra.mxu0 0.0
    %4018 = vmatprep.subr.mxu0 0.0
    %4019 = vmatpush1.msra.mxu0 0.0
    %4020 = vmatprep.subr.mxu0 0.0
    %4021 = vmatpush1.msra.mxu0 0.0
    %4022 = vmatprep.subr.mxu0 0.0
    %4023 = vmatpush1.msra.mxu0 0.0
    %4024 = vmatprep.subr.mxu0 0.0
    %4025 = vmatpush1.msra.mxu0 0.0
    %4026 = vmatprep.subr.mxu0 0.0
    %4027 = vmatpush1.msra.mxu0 0.0
    %4028 = vmatprep.subr.mxu0 0.0
    %4029 = vmatpush1.msra.mxu0 0.0
    %4030 = vmatprep.subr.mxu0 0.0
    %4031 = vmatpush1.msra.mxu0 0.0
    %4032 = vmatprep.subr.mxu0 0.0
    %4033 = vmatpush1.msra.mxu0 0.0
    %4034 = vmatprep.subr.mxu0 0.0
    %4035 = vmatpush1.msra.mxu0 0.0
    %4036 = vmatprep.subr.mxu0 0.0
    %4037 = vmatpush1.msra.mxu0 0.0
    %4038 = vmatprep.subr.mxu0 0.0
    %4039 = vmatpush1.msra.mxu0 0.0
    %4040 = vmatprep.subr.mxu0 0.0
    %4041 = vmatpush1.msra.mxu0 0.0
    %4042 = vmatprep.subr.mxu0 0.0
    %4043 = vmatpush1.msra.mxu0 0.0
    %4044 = vmatprep.subr.mxu0 0.0
    %4045 = vmatpush1.msra.mxu0 0.0
    %4046 = vmatprep.subr.mxu0 0.0
    %4047 = vmatpush1.msra.mxu0 0.0
    %4048 = vmatprep.subr.mxu0 0.0
    %4049 = vmatpush1.msra.mxu0 0.0
    %4050 = vmatprep.subr.mxu0 0.0
    %4051 = vmatpush1.msra.mxu0 0.0
    %4052 = vmatprep.subr.mxu0 0.0
    %4053 = vmatpush1.msra.mxu0 0.0
    %4054 = vmatprep.subr.mxu0 0.0
    %4055 = vmatpush1.msra.mxu0 0.0
    %4056 = vmatprep.subr.mxu0 0.0
    %4057 = vmatpush1.msra.mxu0 0.0
    %4058 = vmatprep.subr.mxu0 0.0
    %4059 = vmatpush1.msra.mxu0 0.0
    %4060 = vmatprep.subr.mxu0 0.0
    %4061 = vmatpush1.msra.mxu0 0.0
    %4062 = vmatprep.subr.mxu0 0.0
    %4063 = vmatpush1.msra.mxu0 0.0
    %4064 = vmatprep.subr.mxu0 0.0
    %4065 = vmatpush1.msra.mxu0 0.0
    %4066 = vmatprep.subr.mxu0 0.0
    %4067 = vmatpush1.msra.mxu0 0.0
    %4068 = vmatprep.subr.mxu0 0.0
    %4069 = vmatpush1.msra.mxu0 0.0
    %4070 = vmatprep.subr.mxu0 0.0
    %4071 = vmatpush1.msra.mxu0 0.0
    %4072 = vmatprep.subr.mxu0 0.0
    %4073 = vmatpush1.msra.mxu0 0.0
    %4074 = vmatprep.mubr.f32.mxu0 0.0
    %v4075 = vand.u32 %v3081, 4294901760
    %v4076 = vsub.f32 %v3081, %v4075
    %v4077 = vand.u32 %v4076, 4294901760
    %v4078 = vsub.f32 %v4076, %v4077
    %v4079 = vand.u32 %v4078, 4294901760
    %4080 = vmatmul.mubr.f32.gmra.mrb[0].mxu0 %v4079
    %v4081 = vpop.f32.mrb[0].mxu0
    %v4082 = vadd.f32 0.0, %v4081
    %v4083 = vpop.f32.mrb[0].mxu0
    %4084 = vdwg.mxu0
    %4085 = vmatprep.subr.mxu0 0.0
    %v4086 = vand.u32 %v4008, 4294901760
    %v4087 = vsub.f32 %v4008, %v4086
    %v4088 = vand.u32 %v4087, 4294901760
    %v4089 = vsub.f32 %v4087, %v4088
    %v4090 = vand.u32 %v4089, 4294901760
    %4091 = vmatpush1.msra.mxu0 %v4090
    %4092 = vmatprep.subr.mxu0 0.0
    %4093 = vmatpush1.msra.mxu0 0.0
    %4094 = vmatprep.subr.mxu0 0.0
    %4095 = vmatpush1.msra.mxu0 0.0
    %4096 = vmatprep.subr.mxu0 0.0
    %4097 = vmatpush1.msra.mxu0 0.0
    %4098 = vmatprep.subr.mxu0 0.0
    %4099 = vmatpush1.msra.mxu0 0.0
    %4100 = vmatprep.subr.mxu0 0.0
    %4101 = vmatpush1.msra.mxu0 0.0
    %4102 = vmatprep.subr.mxu0 0.0
    %4103 = vmatpush1.msra.mxu0 0.0
    %4104 = vmatprep.subr.mxu0 0.0
    %4105 = vmatpush1.msra.mxu0 0.0
    %4106 = vmatprep.subr.mxu0 0.0
    %4107 = vmatpush1.msra.mxu0 0.0
    %4108 = vmatprep.subr.mxu0 0.0
    %4109 = vmatpush1.msra.mxu0 0.0
    %4110 = vmatprep.subr.mxu0 0.0
    %4111 = vmatpush1.msra.mxu0 0.0
    %4112 = vmatprep.subr.mxu0 0.0
    %4113 = vmatpush1.msra.mxu0 0.0
    %4114 = vmatprep.subr.mxu0 0.0
    %4115 = vmatpush1.msra.mxu0 0.0
    %4116 = vmatprep.subr.mxu0 0.0
    %4117 = vmatpush1.msra.mxu0 0.0
    %4118 = vmatprep.subr.mxu0 0.0
    %4119 = vmatpush1.msra.mxu0 0.0
    %4120 = vmatprep.subr.mxu0 0.0
    %4121 = vmatpush1.msra.mxu0 0.0
    %4122 = vmatprep.subr.mxu0 0.0
    %4123 = vmatpush1.msra.mxu0 0.0
    %4124 = vmatprep.subr.mxu0 0.0
    %4125 = vmatpush1.msra.mxu0 0.0
    %4126 = vmatprep.subr.mxu0 0.0
    %4127 = vmatpush1.msra.mxu0 0.0
    %4128 = vmatprep.subr.mxu0 0.0
    %4129 = vmatpush1.msra.mxu0 0.0
    %4130 = vmatprep.subr.mxu0 0.0
    %4131 = vmatpush1.msra.mxu0 0.0
    %4132 = vmatprep.subr.mxu0 0.0
    %4133 = vmatpush1.msra.mxu0 0.0
    %4134 = vmatprep.subr.mxu0 0.0
    %4135 = vmatpush1.msra.mxu0 0.0
    %4136 = vmatprep.subr.mxu0 0.0
    %4137 = vmatpush1.msra.mxu0 0.0
    %4138 = vmatprep.subr.mxu0 0.0
    %4139 = vmatpush1.msra.mxu0 0.0
    %4140 = vmatprep.subr.mxu0 0.0
    %4141 = vmatpush1.msra.mxu0 0.0
    %4142 = vmatprep.subr.mxu0 0.0
    %4143 = vmatpush1.msra.mxu0 0.0
    %4144 = vmatprep.subr.mxu0 0.0
    %4145 = vmatpush1.msra.mxu0 0.0
    %4146 = vmatprep.subr.mxu0 0.0
    %4147 = vmatpush1.msra.mxu0 0.0
    %4148 = vmatprep.subr.mxu0 0.0
    %4149 = vmatpush1.msra.mxu0 0.0
    %4150 = vmatprep.subr.mxu0 0.0
    %4151 = vmatpush1.msra.mxu0 0.0
    %4152 = vmatprep.subr.mxu0 0.0
    %4153 = vmatpush1.msra.mxu0 0.0
    %4154 = vmatprep.mubr.f32.mxu0 0.0
    %v4155 = vand.u32 %v3081, 4294901760
    %4156 = vmatmul.mubr.f32.gmra.mrb[0].mxu0 %v4155
    %v4157 = vpop.f32.mrb[0].mxu0
    %v4158 = vadd.f32 %v4082, %v4157
    %v4159 = vpop.f32.mrb[0].mxu0
    %4160 = vdwg.mxu0
    %4161 = vmatprep.subr.mxu0 0.0
    %v4162 = vand.u32 %v4008, 4294901760
    %v4163 = vsub.f32 %v4008, %v4162
    %4164 = vmatpush1.msra.mxu0 %v4163
    %4165 = vmatprep.subr.mxu0 0.0
    %4166 = vmatpush1.msra.mxu0 0.0
    %4167 = vmatprep.subr.mxu0 0.0
    %4168 = vmatpush1.msra.mxu0 0.0
    %4169 = vmatprep.subr.mxu0 0.0
    %4170 = vmatpush1.msra.mxu0 0.0
    %4171 = vmatprep.subr.mxu0 0.0
    %4172 = vmatpush1.msra.mxu0 0.0
    %4173 = vmatprep.subr.mxu0 0.0
    %4174 = vmatpush1.msra.mxu0 0.0
    %4175 = vmatprep.subr.mxu0 0.0
    %4176 = vmatpush1.msra.mxu0 0.0
    %4177 = vmatprep.subr.mxu0 0.0
    %4178 = vmatpush1.msra.mxu0 0.0
    %4179 = vmatprep.subr.mxu0 0.0
    %4180 = vmatpush1.msra.mxu0 0.0
    %4181 = vmatprep.subr.mxu0 0.0
    %4182 = vmatpush1.msra.mxu0 0.0
    %4183 = vmatprep.subr.mxu0 0.0
    %4184 = vmatpush1.msra.mxu0 0.0
    %4185 = vmatprep.subr.mxu0 0.0
    %4186 = vmatpush1.msra.mxu0 0.0
    %4187 = vmatprep.subr.mxu0 0.0
    %4188 = vmatpush1.msra.mxu0 0.0
    %4189 = vmatprep.subr.mxu0 0.0
    %4190 = vmatpush1.msra.mxu0 0.0
    %4191 = vmatprep.subr.mxu0 0.0
    %4192 = vmatpush1.msra.mxu0 0.0
    %4193 = vmatprep.subr.mxu0 0.0
    %4194 = vmatpush1.msra.mxu0 0.0
    %4195 = vmatprep.subr.mxu0 0.0
    %4196 = vmatpush1.msra.mxu0 0.0
    %4197 = vmatprep.subr.mxu0 0.0
    %4198 = vmatpush1.msra.mxu0 0.0
    %4199 = vmatprep.subr.mxu0 0.0
    %4200 = vmatpush1.msra.mxu0 0.0
    %4201 = vmatprep.subr.mxu0 0.0
    %4202 = vmatpush1.msra.mxu0 0.0
    %4203 = vmatprep.subr.mxu0 0.0
    %4204 = vmatpush1.msra.mxu0 0.0
    %4205 = vmatprep.subr.mxu0 0.0
    %4206 = vmatpush1.msra.mxu0 0.0
    %4207 = vmatprep.subr.mxu0 0.0
    %4208 = vmatpush1.msra.mxu0 0.0
    %4209 = vmatprep.subr.mxu0 0.0
    %4210 = vmatpush1.msra.mxu0 0.0
    %4211 = vmatprep.subr.mxu0 0.0
    %4212 = vmatpush1.msra.mxu0 0.0
    %4213 = vmatprep.subr.mxu0 0.0
    %4214 = vmatpush1.msra.mxu0 0.0
    %4215 = vmatprep.subr.mxu0 0.0
    %4216 = vmatpush1.msra.mxu0 0.0
    %4217 = vmatprep.subr.mxu0 0.0
    %4218 = vmatpush1.msra.mxu0 0.0
    %4219 = vmatprep.subr.mxu0 0.0
    %4220 = vmatpush1.msra.mxu0 0.0
    %4221 = vmatprep.subr.mxu0 0.0
    %4222 = vmatpush1.msra.mxu0 0.0
    %4223 = vmatprep.subr.mxu0 0.0
    %4224 = vmatpush1.msra.mxu0 0.0
    %4225 = vmatprep.subr.mxu0 0.0
    %4226 = vmatpush1.msra.mxu0 0.0
    %4227 = vmatprep.mubr.f32.mxu0 0.0
    %v4228 = vand.u32 %v3081, 4294901760
    %v4229 = vsub.f32 %v3081, %v4228
    %4230 = vmatmul.mubr.f32.gmra.mrb[0].mxu0 %v4229
    %v4231 = vpop.f32.mrb[0].mxu0
    %v4232 = vadd.f32 %v4158, %v4231
    %v4233 = vpop.f32.mrb[0].mxu0
    %4234 = vdwg.mxu0
    %4235 = vmatprep.subr.mxu0 0.0
    %v4236 = vand.u32 %v4008, 4294901760
    %4237 = vmatpush1.msra.mxu0 %v4236
    %4238 = vmatprep.subr.mxu0 0.0
    %4239 = vmatpush1.msra.mxu0 0.0
    %4240 = vmatprep.subr.mxu0 0.0
    %4241 = vmatpush1.msra.mxu0 0.0
    %4242 = vmatprep.subr.mxu0 0.0
    %4243 = vmatpush1.msra.mxu0 0.0
    %4244 = vmatprep.subr.mxu0 0.0
    %4245 = vmatpush1.msra.mxu0 0.0
    %4246 = vmatprep.subr.mxu0 0.0
    %4247 = vmatpush1.msra.mxu0 0.0
    %4248 = vmatprep.subr.mxu0 0.0
    %4249 = vmatpush1.msra.mxu0 0.0
    %4250 = vmatprep.subr.mxu0 0.0
    %4251 = vmatpush1.msra.mxu0 0.0
    %4252 = vmatprep.subr.mxu0 0.0
    %4253 = vmatpush1.msra.mxu0 0.0
    %4254 = vmatprep.subr.mxu0 0.0
    %4255 = vmatpush1.msra.mxu0 0.0
    %4256 = vmatprep.subr.mxu0 0.0
    %4257 = vmatpush1.msra.mxu0 0.0
    %4258 = vmatprep.subr.mxu0 0.0
    %4259 = vmatpush1.msra.mxu0 0.0
    %4260 = vmatprep.subr.mxu0 0.0
    %4261 = vmatpush1.msra.mxu0 0.0
    %4262 = vmatprep.subr.mxu0 0.0
    %4263 = vmatpush1.msra.mxu0 0.0
    %4264 = vmatprep.subr.mxu0 0.0
    %4265 = vmatpush1.msra.mxu0 0.0
    %4266 = vmatprep.subr.mxu0 0.0
    %4267 = vmatpush1.msra.mxu0 0.0
    %4268 = vmatprep.subr.mxu0 0.0
    %4269 = vmatpush1.msra.mxu0 0.0
    %4270 = vmatprep.subr.mxu0 0.0
    %4271 = vmatpush1.msra.mxu0 0.0
    %4272 = vmatprep.subr.mxu0 0.0
    %4273 = vmatpush1.msra.mxu0 0.0
    %4274 = vmatprep.subr.mxu0 0.0
    %4275 = vmatpush1.msra.mxu0 0.0
    %4276 = vmatprep.subr.mxu0 0.0
    %4277 = vmatpush1.msra.mxu0 0.0
    %4278 = vmatprep.subr.mxu0 0.0
    %4279 = vmatpush1.msra.mxu0 0.0
    %4280 = vmatprep.subr.mxu0 0.0
    %4281 = vmatpush1.msra.mxu0 0.0
    %4282 = vmatprep.subr.mxu0 0.0
    %4283 = vmatpush1.msra.mxu0 0.0
    %4284 = vmatprep.subr.mxu0 0.0
    %4285 = vmatpush1.msra.mxu0 0.0
    %4286 = vmatprep.subr.mxu0 0.0
    %4287 = vmatpush1.msra.mxu0 0.0
    %4288 = vmatprep.subr.mxu0 0.0
    %4289 = vmatpush1.msra.mxu0 0.0
    %4290 = vmatprep.subr.mxu0 0.0
    %4291 = vmatpush1.msra.mxu0 0.0
    %4292 = vmatprep.subr.mxu0 0.0
    %4293 = vmatpush1.msra.mxu0 0.0
    %4294 = vmatprep.subr.mxu0 0.0
    %4295 = vmatpush1.msra.mxu0 0.0
    %4296 = vmatprep.subr.mxu0 0.0
    %4297 = vmatpush1.msra.mxu0 0.0
    %4298 = vmatprep.subr.mxu0 0.0
    %4299 = vmatpush1.msra.mxu0 0.0
    %4300 = vmatprep.mubr.f32.mxu0 0.0
    %v4301 = vand.u32 %v3081, 4294901760
    %v4302 = vsub.f32 %v3081, %v4301
    %v4303 = vand.u32 %v4302, 4294901760
    %4304 = vmatmul.mubr.f32.gmra.mrb[0].mxu0 %v4303
    %v4305 = vpop.f32.mrb[0].mxu0
    %v4306 = vadd.f32 %v4232, %v4305
    %v4307 = vpop.f32.mrb[0].mxu0
    %4308 = vdwg.mxu0
    %4309 = vmatprep.subr.mxu0 0.0
    %v4310 = vand.u32 %v4008, 4294901760
    %v4311 = vsub.f32 %v4008, %v4310
    %v4312 = vand.u32 %v4311, 4294901760
    %4313 = vmatpush1.msra.mxu0 %v4312
    %4314 = vmatprep.subr.mxu0 0.0
    %4315 = vmatpush1.msra.mxu0 0.0
    %4316 = vmatprep.subr.mxu0 0.0
    %4317 = vmatpush1.msra.mxu0 0.0
    %4318 = vmatprep.subr.mxu0 0.0
    %4319 = vmatpush1.msra.mxu0 0.0
    %4320 = vmatprep.subr.mxu0 0.0
    %4321 = vmatpush1.msra.mxu0 0.0
    %4322 = vmatprep.subr.mxu0 0.0
    %4323 = vmatpush1.msra.mxu0 0.0
    %4324 = vmatprep.subr.mxu0 0.0
    %4325 = vmatpush1.msra.mxu0 0.0
    %4326 = vmatprep.subr.mxu0 0.0
    %4327 = vmatpush1.msra.mxu0 0.0
    %4328 = vmatprep.subr.mxu0 0.0
    %4329 = vmatpush1.msra.mxu0 0.0
    %4330 = vmatprep.subr.mxu0 0.0
    %4331 = vmatpush1.msra.mxu0 0.0
    %4332 = vmatprep.subr.mxu0 0.0
    %4333 = vmatpush1.msra.mxu0 0.0
    %4334 = vmatprep.subr.mxu0 0.0
    %4335 = vmatpush1.msra.mxu0 0.0
    %4336 = vmatprep.subr.mxu0 0.0
    %4337 = vmatpush1.msra.mxu0 0.0
    %4338 = vmatprep.subr.mxu0 0.0
    %4339 = vmatpush1.msra.mxu0 0.0
    %4340 = vmatprep.subr.mxu0 0.0
    %4341 = vmatpush1.msra.mxu0 0.0
    %4342 = vmatprep.subr.mxu0 0.0
    %4343 = vmatpush1.msra.mxu0 0.0
    %4344 = vmatprep.subr.mxu0 0.0
    %4345 = vmatpush1.msra.mxu0 0.0
    %4346 = vmatprep.subr.mxu0 0.0
    %4347 = vmatpush1.msra.mxu0 0.0
    %4348 = vmatprep.subr.mxu0 0.0
    %4349 = vmatpush1.msra.mxu0 0.0
    %4350 = vmatprep.subr.mxu0 0.0
    %4351 = vmatpush1.msra.mxu0 0.0
    %4352 = vmatprep.subr.mxu0 0.0
    %4353 = vmatpush1.msra.mxu0 0.0
    %4354 = vmatprep.subr.mxu0 0.0
    %4355 = vmatpush1.msra.mxu0 0.0
    %4356 = vmatprep.subr.mxu0 0.0
    %4357 = vmatpush1.msra.mxu0 0.0
    %4358 = vmatprep.subr.mxu0 0.0
    %4359 = vmatpush1.msra.mxu0 0.0
    %4360 = vmatprep.subr.mxu0 0.0
    %4361 = vmatpush1.msra.mxu0 0.0
    %4362 = vmatprep.subr.mxu0 0.0
    %4363 = vmatpush1.msra.mxu0 0.0
    %4364 = vmatprep.subr.mxu0 0.0
    %4365 = vmatpush1.msra.mxu0 0.0
    %4366 = vmatprep.subr.mxu0 0.0
    %4367 = vmatpush1.msra.mxu0 0.0
    %4368 = vmatprep.subr.mxu0 0.0
    %4369 = vmatpush1.msra.mxu0 0.0
    %4370 = vmatprep.subr.mxu0 0.0
    %4371 = vmatpush1.msra.mxu0 0.0
    %4372 = vmatprep.subr.mxu0 0.0
    %4373 = vmatpush1.msra.mxu0 0.0
    %4374 = vmatprep.subr.mxu0 0.0
    %4375 = vmatpush1.msra.mxu0 0.0
    %4376 = vmatprep.mubr.f32.mxu0 0.0
    %v4377 = vand.u32 %v3081, 4294901760
    %4378 = vmatmul.mubr.f32.gmra.mrb[0].mxu0 %v4377
    %v4379 = vpop.f32.mrb[0].mxu0
    %v4380 = vadd.f32 %v4306, %v4379
    %v4381 = vpop.f32.mrb[0].mxu0
    %4382 = vdwg.mxu0
    %4383 = vmatprep.subr.mxu0 0.0
    %v4384 = vand.u32 %v4008, 4294901760
    %4385 = vmatpush1.msra.mxu0 %v4384
    %4386 = vmatprep.subr.mxu0 0.0
    %4387 = vmatpush1.msra.mxu0 0.0
    %4388 = vmatprep.subr.mxu0 0.0
    %4389 = vmatpush1.msra.mxu0 0.0
    %4390 = vmatprep.subr.mxu0 0.0
    %4391 = vmatpush1.msra.mxu0 0.0
    %4392 = vmatprep.subr.mxu0 0.0
    %4393 = vmatpush1.msra.mxu0 0.0
    %4394 = vmatprep.subr.mxu0 0.0
    %4395 = vmatpush1.msra.mxu0 0.0
    %4396 = vmatprep.subr.mxu0 0.0
    %4397 = vmatpush1.msra.mxu0 0.0
    %4398 = vmatprep.subr.mxu0 0.0
    %4399 = vmatpush1.msra.mxu0 0.0
    %4400 = vmatprep.subr.mxu0 0.0
    %4401 = vmatpush1.msra.mxu0 0.0
    %4402 = vmatprep.subr.mxu0 0.0
    %4403 = vmatpush1.msra.mxu0 0.0
    %4404 = vmatprep.subr.mxu0 0.0
    %4405 = vmatpush1.msra.mxu0 0.0
    %4406 = vmatprep.subr.mxu0 0.0
    %4407 = vmatpush1.msra.mxu0 0.0
    %4408 = vmatprep.subr.mxu0 0.0
    %4409 = vmatpush1.msra.mxu0 0.0
    %4410 = vmatprep.subr.mxu0 0.0
    %4411 = vmatpush1.msra.mxu0 0.0
    %4412 = vmatprep.subr.mxu0 0.0
    %4413 = vmatpush1.msra.mxu0 0.0
    %4414 = vmatprep.subr.mxu0 0.0
    %4415 = vmatpush1.msra.mxu0 0.0
    %4416 = vmatprep.subr.mxu0 0.0
    %4417 = vmatpush1.msra.mxu0 0.0
    %4418 = vmatprep.subr.mxu0 0.0
    %4419 = vmatpush1.msra.mxu0 0.0
    %4420 = vmatprep.subr.mxu0 0.0
    %4421 = vmatpush1.msra.mxu0 0.0
    %4422 = vmatprep.subr.mxu0 0.0
    %4423 = vmatpush1.msra.mxu0 0.0
    %4424 = vmatprep.subr.mxu0 0.0
    %4425 = vmatpush1.msra.mxu0 0.0
    %4426 = vmatprep.subr.mxu0 0.0
    %4427 = vmatpush1.msra.mxu0 0.0
    %4428 = vmatprep.subr.mxu0 0.0
    %4429 = vmatpush1.msra.mxu0 0.0
    %4430 = vmatprep.subr.mxu0 0.0
    %4431 = vmatpush1.msra.mxu0 0.0
    %4432 = vmatprep.subr.mxu0 0.0
    %4433 = vmatpush1.msra.mxu0 0.0
    %4434 = vmatprep.subr.mxu0 0.0
    %4435 = vmatpush1.msra.mxu0 0.0
    %4436 = vmatprep.subr.mxu0 0.0
    %4437 = vmatpush1.msra.mxu0 0.0
    %4438 = vmatprep.subr.mxu0 0.0
    %4439 = vmatpush1.msra.mxu0 0.0
    %4440 = vmatprep.subr.mxu0 0.0
    %4441 = vmatpush1.msra.mxu0 0.0
    %4442 = vmatprep.subr.mxu0 0.0
    %4443 = vmatpush1.msra.mxu0 0.0
    %4444 = vmatprep.subr.mxu0 0.0
    %4445 = vmatpush1.msra.mxu0 0.0
    %4446 = vmatprep.subr.mxu0 0.0
    %4447 = vmatpush1.msra.mxu0 0.0
    %4448 = vmatprep.mubr.f32.mxu0 0.0
    %v4449 = vand.u32 %v3081, 4294901760
    %4450 = vmatmul.mubr.f32.gmra.mrb[0].mxu0 %v4449
    %v4451 = vpop.f32.mrb[0].mxu0
    %v4452 = vadd.f32 %v4380, %v4451
    %v4453 = vpop.f32.mrb[0].mxu0
    %4454 = vdwg.mxu0
    %4455 = vmatprep.subr.mxu0 0.0
    %v4456 = vand.u32 %v4008, 4294901760
    %4457 = vmatpush1.msra.mxu0 %v4456
    %4458 = vmatprep.subr.mxu0 0.0
    %4459 = vmatpush1.msra.mxu0 0.0
    %4460 = vmatprep.subr.mxu0 0.0
    %4461 = vmatpush1.msra.mxu0 0.0
    %4462 = vmatprep.subr.mxu0 0.0
    %4463 = vmatpush1.msra.mxu0 0.0
    %4464 = vmatprep.subr.mxu0 0.0
    %4465 = vmatpush1.msra.mxu0 0.0
    %4466 = vmatprep.subr.mxu0 0.0
    %4467 = vmatpush1.msra.mxu0 0.0
    %4468 = vmatprep.subr.mxu0 0.0
    %4469 = vmatpush1.msra.mxu0 0.0
    %4470 = vmatprep.subr.mxu0 0.0
    %4471 = vmatpush1.msra.mxu0 0.0
    %4472 = vmatprep.subr.mxu0 0.0
    %4473 = vmatpush1.msra.mxu0 0.0
    %4474 = vmatprep.subr.mxu0 0.0
    %4475 = vmatpush1.msra.mxu0 0.0
    %4476 = vmatprep.subr.mxu0 0.0
    %4477 = vmatpush1.msra.mxu0 0.0
    %4478 = vmatprep.subr.mxu0 0.0
    %4479 = vmatpush1.msra.mxu0 0.0
    %4480 = vmatprep.subr.mxu0 0.0
    %4481 = vmatpush1.msra.mxu0 0.0
    %4482 = vmatprep.subr.mxu0 0.0
    %4483 = vmatpush1.msra.mxu0 0.0
    %4484 = vmatprep.subr.mxu0 0.0
    %4485 = vmatpush1.msra.mxu0 0.0
    %4486 = vmatprep.subr.mxu0 0.0
    %4487 = vmatpush1.msra.mxu0 0.0
    %4488 = vmatprep.subr.mxu0 0.0
    %4489 = vmatpush1.msra.mxu0 0.0
    %4490 = vmatprep.subr.mxu0 0.0
    %4491 = vmatpush1.msra.mxu0 0.0
    %4492 = vmatprep.subr.mxu0 0.0
    %4493 = vmatpush1.msra.mxu0 0.0
    %4494 = vmatprep.subr.mxu0 0.0
    %4495 = vmatpush1.msra.mxu0 0.0
    %4496 = vmatprep.subr.mxu0 0.0
    %4497 = vmatpush1.msra.mxu0 0.0
    %4498 = vmatprep.subr.mxu0 0.0
    %4499 = vmatpush1.msra.mxu0 0.0
    %4500 = vmatprep.subr.mxu0 0.0
    %4501 = vmatpush1.msra.mxu0 0.0
    %4502 = vmatprep.subr.mxu0 0.0
    %4503 = vmatpush1.msra.mxu0 0.0
    %4504 = vmatprep.subr.mxu0 0.0
    %4505 = vmatpush1.msra.mxu0 0.0
    %4506 = vmatprep.subr.mxu0 0.0
    %4507 = vmatpush1.msra.mxu0 0.0
    %4508 = vmatprep.subr.mxu0 0.0
    %4509 = vmatpush1.msra.mxu0 0.0
    %4510 = vmatprep.subr.mxu0 0.0
    %4511 = vmatpush1.msra.mxu0 0.0
    %4512 = vmatprep.subr.mxu0 0.0
    %4513 = vmatpush1.msra.mxu0 0.0
    %4514 = vmatprep.subr.mxu0 0.0
    %4515 = vmatpush1.msra.mxu0 0.0
    %4516 = vmatprep.subr.mxu0 0.0
    %4517 = vmatpush1.msra.mxu0 0.0
    %4518 = vmatprep.subr.mxu0 0.0
    %4519 = vmatpush1.msra.mxu0 0.0
    %4520 = vmatprep.mubr.f32.mxu0 0.0
    %v4521 = vand.u32 %v3530, 4294901760
    %v4522 = vsub.f32 %v3530, %v4521
    %v4523 = vand.u32 %v4522, 4294901760
    %v4524 = vsub.f32 %v4522, %v4523
    %v4525 = vand.u32 %v4524, 4294901760
    %4526 = vmatmul.mubr.f32.gmra.mrb[0].mxu0 %v4525
    %v4527 = vpop.f32.mrb[0].mxu0
    %v4528 = vadd.f32 0.0, %v4527
    %v4529 = vpop.f32.mrb[0].mxu0
    %4530 = vdwg.mxu0
    %4531 = vmatprep.subr.mxu0 0.0
    %v4532 = vand.u32 %v4008, 4294901760
    %v4533 = vsub.f32 %v4008, %v4532
    %v4534 = vand.u32 %v4533, 4294901760
    %v4535 = vsub.f32 %v4533, %v4534
    %v4536 = vand.u32 %v4535, 4294901760
    %4537 = vmatpush1.msra.mxu0 %v4536
    %4538 = vmatprep.subr.mxu0 0.0
    %4539 = vmatpush1.msra.mxu0 0.0
    %4540 = vmatprep.subr.mxu0 0.0
    %4541 = vmatpush1.msra.mxu0 0.0
    %4542 = vmatprep.subr.mxu0 0.0
    %4543 = vmatpush1.msra.mxu0 0.0
    %4544 = vmatprep.subr.mxu0 0.0
    %4545 = vmatpush1.msra.mxu0 0.0
    %4546 = vmatprep.subr.mxu0 0.0
    %4547 = vmatpush1.msra.mxu0 0.0
    %4548 = vmatprep.subr.mxu0 0.0
    %4549 = vmatpush1.msra.mxu0 0.0
    %4550 = vmatprep.subr.mxu0 0.0
    %4551 = vmatpush1.msra.mxu0 0.0
    %4552 = vmatprep.subr.mxu0 0.0
    %4553 = vmatpush1.msra.mxu0 0.0
    %4554 = vmatprep.subr.mxu0 0.0
    %4555 = vmatpush1.msra.mxu0 0.0
    %4556 = vmatprep.subr.mxu0 0.0
    %4557 = vmatpush1.msra.mxu0 0.0
    %4558 = vmatprep.subr.mxu0 0.0
    %4559 = vmatpush1.msra.mxu0 0.0
    %4560 = vmatprep.subr.mxu0 0.0
    %4561 = vmatpush1.msra.mxu0 0.0
    %4562 = vmatprep.subr.mxu0 0.0
    %4563 = vmatpush1.msra.mxu0 0.0
    %4564 = vmatprep.subr.mxu0 0.0
    %4565 = vmatpush1.msra.mxu0 0.0
    %4566 = vmatprep.subr.mxu0 0.0
    %4567 = vmatpush1.msra.mxu0 0.0
    %4568 = vmatprep.subr.mxu0 0.0
    %4569 = vmatpush1.msra.mxu0 0.0
    %4570 = vmatprep.subr.mxu0 0.0
    %4571 = vmatpush1.msra.mxu0 0.0
    %4572 = vmatprep.subr.mxu0 0.0
    %4573 = vmatpush1.msra.mxu0 0.0
    %4574 = vmatprep.subr.mxu0 0.0
    %4575 = vmatpush1.msra.mxu0 0.0
    %4576 = vmatprep.subr.mxu0 0.0
    %4577 = vmatpush1.msra.mxu0 0.0
    %4578 = vmatprep.subr.mxu0 0.0
    %4579 = vmatpush1.msra.mxu0 0.0
    %4580 = vmatprep.subr.mxu0 0.0
    %4581 = vmatpush1.msra.mxu0 0.0
    %4582 = vmatprep.subr.mxu0 0.0
    %4583 = vmatpush1.msra.mxu0 0.0
    %4584 = vmatprep.subr.mxu0 0.0
    %4585 = vmatpush1.msra.mxu0 0.0
    %4586 = vmatprep.subr.mxu0 0.0
    %4587 = vmatpush1.msra.mxu0 0.0
    %4588 = vmatprep.subr.mxu0 0.0
    %4589 = vmatpush1.msra.mxu0 0.0
    %4590 = vmatprep.subr.mxu0 0.0
    %4591 = vmatpush1.msra.mxu0 0.0
    %4592 = vmatprep.subr.mxu0 0.0
    %4593 = vmatpush1.msra.mxu0 0.0
    %4594 = vmatprep.subr.mxu0 0.0
    %4595 = vmatpush1.msra.mxu0 0.0
    %4596 = vmatprep.subr.mxu0 0.0
    %4597 = vmatpush1.msra.mxu0 0.0
    %4598 = vmatprep.subr.mxu0 0.0
    %4599 = vmatpush1.msra.mxu0 0.0
    %4600 = vmatprep.mubr.f32.mxu0 0.0
    %v4601 = vand.u32 %v3530, 4294901760
    %4602 = vmatmul.mubr.f32.gmra.mrb[0].mxu0 %v4601
    %v4603 = vpop.f32.mrb[0].mxu0
    %v4604 = vadd.f32 %v4528, %v4603
    %v4605 = vpop.f32.mrb[0].mxu0
    %4606 = vdwg.mxu0
    %4607 = vmatprep.subr.mxu0 0.0
    %v4608 = vand.u32 %v4008, 4294901760
    %v4609 = vsub.f32 %v4008, %v4608
    %4610 = vmatpush1.msra.mxu0 %v4609
    %4611 = vmatprep.subr.mxu0 0.0
    %4612 = vmatpush1.msra.mxu0 0.0
    %4613 = vmatprep.subr.mxu0 0.0
    %4614 = vmatpush1.msra.mxu0 0.0
    %4615 = vmatprep.subr.mxu0 0.0
    %4616 = vmatpush1.msra.mxu0 0.0
    %4617 = vmatprep.subr.mxu0 0.0
    %4618 = vmatpush1.msra.mxu0 0.0
    %4619 = vmatprep.subr.mxu0 0.0
    %4620 = vmatpush1.msra.mxu0 0.0
    %4621 = vmatprep.subr.mxu0 0.0
    %4622 = vmatpush1.msra.mxu0 0.0
    %4623 = vmatprep.subr.mxu0 0.0
    %4624 = vmatpush1.msra.mxu0 0.0
    %4625 = vmatprep.subr.mxu0 0.0
    %4626 = vmatpush1.msra.mxu0 0.0
    %4627 = vmatprep.subr.mxu0 0.0
    %4628 = vmatpush1.msra.mxu0 0.0
    %4629 = vmatprep.subr.mxu0 0.0
    %4630 = vmatpush1.msra.mxu0 0.0
    %4631 = vmatprep.subr.mxu0 0.0
    %4632 = vmatpush1.msra.mxu0 0.0
    %4633 = vmatprep.subr.mxu0 0.0
    %4634 = vmatpush1.msra.mxu0 0.0
    %4635 = vmatprep.subr.mxu0 0.0
    %4636 = vmatpush1.msra.mxu0 0.0
    %4637 = vmatprep.subr.mxu0 0.0
    %4638 = vmatpush1.msra.mxu0 0.0
    %4639 = vmatprep.subr.mxu0 0.0
    %4640 = vmatpush1.msra.mxu0 0.0
    %4641 = vmatprep.subr.mxu0 0.0
    %4642 = vmatpush1.msra.mxu0 0.0
    %4643 = vmatprep.subr.mxu0 0.0
    %4644 = vmatpush1.msra.mxu0 0.0
    %4645 = vmatprep.subr.mxu0 0.0
    %4646 = vmatpush1.msra.mxu0 0.0
    %4647 = vmatprep.subr.mxu0 0.0
    %4648 = vmatpush1.msra.mxu0 0.0
    %4649 = vmatprep.subr.mxu0 0.0
    %4650 = vmatpush1.msra.mxu0 0.0
    %4651 = vmatprep.subr.mxu0 0.0
    %4652 = vmatpush1.msra.mxu0 0.0
    %4653 = vmatprep.subr.mxu0 0.0
    %4654 = vmatpush1.msra.mxu0 0.0
    %4655 = vmatprep.subr.mxu0 0.0
    %4656 = vmatpush1.msra.mxu0 0.0
    %4657 = vmatprep.subr.mxu0 0.0
    %4658 = vmatpush1.msra.mxu0 0.0
    %4659 = vmatprep.subr.mxu0 0.0
    %4660 = vmatpush1.msra.mxu0 0.0
    %4661 = vmatprep.subr.mxu0 0.0
    %4662 = vmatpush1.msra.mxu0 0.0
    %4663 = vmatprep.subr.mxu0 0.0
    %4664 = vmatpush1.msra.mxu0 0.0
    %4665 = vmatprep.subr.mxu0 0.0
    %4666 = vmatpush1.msra.mxu0 0.0
    %4667 = vmatprep.subr.mxu0 0.0
    %4668 = vmatpush1.msra.mxu0 0.0
    %4669 = vmatprep.subr.mxu0 0.0
    %4670 = vmatpush1.msra.mxu0 0.0
    %4671 = vmatprep.subr.mxu0 0.0
    %4672 = vmatpush1.msra.mxu0 0.0
    %4673 = vmatprep.mubr.f32.mxu0 0.0
    %v4674 = vand.u32 %v3530, 4294901760
    %v4675 = vsub.f32 %v3530, %v4674
    %4676 = vmatmul.mubr.f32.gmra.mrb[0].mxu0 %v4675
    %v4677 = vpop.f32.mrb[0].mxu0
    %v4678 = vadd.f32 %v4604, %v4677
    %v4679 = vpop.f32.mrb[0].mxu0
    %4680 = vdwg.mxu0
    %4681 = vmatprep.subr.mxu0 0.0
    %v4682 = vand.u32 %v4008, 4294901760
    %4683 = vmatpush1.msra.mxu0 %v4682
    %4684 = vmatprep.subr.mxu0 0.0
    %4685 = vmatpush1.msra.mxu0 0.0
    %4686 = vmatprep.subr.mxu0 0.0
    %4687 = vmatpush1.msra.mxu0 0.0
    %4688 = vmatprep.subr.mxu0 0.0
    %4689 = vmatpush1.msra.mxu0 0.0
    %4690 = vmatprep.subr.mxu0 0.0
    %4691 = vmatpush1.msra.mxu0 0.0
    %4692 = vmatprep.subr.mxu0 0.0
    %4693 = vmatpush1.msra.mxu0 0.0
    %4694 = vmatprep.subr.mxu0 0.0
    %4695 = vmatpush1.msra.mxu0 0.0
    %4696 = vmatprep.subr.mxu0 0.0
    %4697 = vmatpush1.msra.mxu0 0.0
    %4698 = vmatprep.subr.mxu0 0.0
    %4699 = vmatpush1.msra.mxu0 0.0
    %4700 = vmatprep.subr.mxu0 0.0
    %4701 = vmatpush1.msra.mxu0 0.0
    %4702 = vmatprep.subr.mxu0 0.0
    %4703 = vmatpush1.msra.mxu0 0.0
    %4704 = vmatprep.subr.mxu0 0.0
    %4705 = vmatpush1.msra.mxu0 0.0
    %4706 = vmatprep.subr.mxu0 0.0
    %4707 = vmatpush1.msra.mxu0 0.0
    %4708 = vmatprep.subr.mxu0 0.0
    %4709 = vmatpush1.msra.mxu0 0.0
    %4710 = vmatprep.subr.mxu0 0.0
    %4711 = vmatpush1.msra.mxu0 0.0
    %4712 = vmatprep.subr.mxu0 0.0
    %4713 = vmatpush1.msra.mxu0 0.0
    %4714 = vmatprep.subr.mxu0 0.0
    %4715 = vmatpush1.msra.mxu0 0.0
    %4716 = vmatprep.subr.mxu0 0.0
    %4717 = vmatpush1.msra.mxu0 0.0
    %4718 = vmatprep.subr.mxu0 0.0
    %4719 = vmatpush1.msra.mxu0 0.0
    %4720 = vmatprep.subr.mxu0 0.0
    %4721 = vmatpush1.msra.mxu0 0.0
    %4722 = vmatprep.subr.mxu0 0.0
    %4723 = vmatpush1.msra.mxu0 0.0
    %4724 = vmatprep.subr.mxu0 0.0
    %4725 = vmatpush1.msra.mxu0 0.0
    %4726 = vmatprep.subr.mxu0 0.0
    %4727 = vmatpush1.msra.mxu0 0.0
    %4728 = vmatprep.subr.mxu0 0.0
    %4729 = vmatpush1.msra.mxu0 0.0
    %4730 = vmatprep.subr.mxu0 0.0
    %4731 = vmatpush1.msra.mxu0 0.0
    %4732 = vmatprep.subr.mxu0 0.0
    %4733 = vmatpush1.msra.mxu0 0.0
    %4734 = vmatprep.subr.mxu0 0.0
    %4735 = vmatpush1.msra.mxu0 0.0
    %4736 = vmatprep.subr.mxu0 0.0
    %4737 = vmatpush1.msra.mxu0 0.0
    %4738 = vmatprep.subr.mxu0 0.0
    %4739 = vmatpush1.msra.mxu0 0.0
    %4740 = vmatprep.subr.mxu0 0.0
    %4741 = vmatpush1.msra.mxu0 0.0
    %4742 = vmatprep.subr.mxu0 0.0
    %4743 = vmatpush1.msra.mxu0 0.0
    %4744 = vmatprep.subr.mxu0 0.0
    %4745 = vmatpush1.msra.mxu0 0.0
    %4746 = vmatprep.mubr.f32.mxu0 0.0
    %v4747 = vand.u32 %v3530, 4294901760
    %v4748 = vsub.f32 %v3530, %v4747
    %v4749 = vand.u32 %v4748, 4294901760
    %4750 = vmatmul.mubr.f32.gmra.mrb[0].mxu0 %v4749
    %v4751 = vpop.f32.mrb[0].mxu0
    %v4752 = vadd.f32 %v4678, %v4751
    %v4753 = vpop.f32.mrb[0].mxu0
    %4754 = vdwg.mxu0
    %4755 = vmatprep.subr.mxu0 0.0
    %v4756 = vand.u32 %v4008, 4294901760
    %v4757 = vsub.f32 %v4008, %v4756
    %v4758 = vand.u32 %v4757, 4294901760
    %4759 = vmatpush1.msra.mxu0 %v4758
    %4760 = vmatprep.subr.mxu0 0.0
    %4761 = vmatpush1.msra.mxu0 0.0
    %4762 = vmatprep.subr.mxu0 0.0
    %4763 = vmatpush1.msra.mxu0 0.0
    %4764 = vmatprep.subr.mxu0 0.0
    %4765 = vmatpush1.msra.mxu0 0.0
    %4766 = vmatprep.subr.mxu0 0.0
    %4767 = vmatpush1.msra.mxu0 0.0
    %4768 = vmatprep.subr.mxu0 0.0
    %4769 = vmatpush1.msra.mxu0 0.0
    %4770 = vmatprep.subr.mxu0 0.0
    %4771 = vmatpush1.msra.mxu0 0.0
    %4772 = vmatprep.subr.mxu0 0.0
    %4773 = vmatpush1.msra.mxu0 0.0
    %4774 = vmatprep.subr.mxu0 0.0
    %4775 = vmatpush1.msra.mxu0 0.0
    %4776 = vmatprep.subr.mxu0 0.0
    %4777 = vmatpush1.msra.mxu0 0.0
    %4778 = vmatprep.subr.mxu0 0.0
    %4779 = vmatpush1.msra.mxu0 0.0
    %4780 = vmatprep.subr.mxu0 0.0
    %4781 = vmatpush1.msra.mxu0 0.0
    %4782 = vmatprep.subr.mxu0 0.0
    %4783 = vmatpush1.msra.mxu0 0.0
    %4784 = vmatprep.subr.mxu0 0.0
    %4785 = vmatpush1.msra.mxu0 0.0
    %4786 = vmatprep.subr.mxu0 0.0
    %4787 = vmatpush1.msra.mxu0 0.0
    %4788 = vmatprep.subr.mxu0 0.0
    %4789 = vmatpush1.msra.mxu0 0.0
    %4790 = vmatprep.subr.mxu0 0.0
    %4791 = vmatpush1.msra.mxu0 0.0
    %4792 = vmatprep.subr.mxu0 0.0
    %4793 = vmatpush1.msra.mxu0 0.0
    %4794 = vmatprep.subr.mxu0 0.0
    %4795 = vmatpush1.msra.mxu0 0.0
    %4796 = vmatprep.subr.mxu0 0.0
    %4797 = vmatpush1.msra.mxu0 0.0
    %4798 = vmatprep.subr.mxu0 0.0
    %4799 = vmatpush1.msra.mxu0 0.0
    %4800 = vmatprep.subr.mxu0 0.0
    %4801 = vmatpush1.msra.mxu0 0.0
    %4802 = vmatprep.subr.mxu0 0.0
    %4803 = vmatpush1.msra.mxu0 0.0
    %4804 = vmatprep.subr.mxu0 0.0
    %4805 = vmatpush1.msra.mxu0 0.0
    %4806 = vmatprep.subr.mxu0 0.0
    %4807 = vmatpush1.msra.mxu0 0.0
    %4808 = vmatprep.subr.mxu0 0.0
    %4809 = vmatpush1.msra.mxu0 0.0
    %4810 = vmatprep.subr.mxu0 0.0
    %4811 = vmatpush1.msra.mxu0 0.0
    %4812 = vmatprep.subr.mxu0 0.0
    %4813 = vmatpush1.msra.mxu0 0.0
    %4814 = vmatprep.subr.mxu0 0.0
    %4815 = vmatpush1.msra.mxu0 0.0
    %4816 = vmatprep.subr.mxu0 0.0
    %4817 = vmatpush1.msra.mxu0 0.0
    %4818 = vmatprep.subr.mxu0 0.0
    %4819 = vmatpush1.msra.mxu0 0.0
    %4820 = vmatprep.subr.mxu0 0.0
    %4821 = vmatpush1.msra.mxu0 0.0
    %4822 = vmatprep.mubr.f32.mxu0 0.0
    %v4823 = vand.u32 %v3530, 4294901760
    %4824 = vmatmul.mubr.f32.gmra.mrb[0].mxu0 %v4823
    %v4825 = vpop.f32.mrb[0].mxu0
    %v4826 = vadd.f32 %v4752, %v4825
    %v4827 = vpop.f32.mrb[0].mxu0
    %4828 = vdwg.mxu0
    %4829 = vmatprep.subr.mxu0 0.0
    %v4830 = vand.u32 %v4008, 4294901760
    %4831 = vmatpush1.msra.mxu0 %v4830
    %4832 = vmatprep.subr.mxu0 0.0
    %4833 = vmatpush1.msra.mxu0 0.0
    %4834 = vmatprep.subr.mxu0 0.0
    %4835 = vmatpush1.msra.mxu0 0.0
    %4836 = vmatprep.subr.mxu0 0.0
    %4837 = vmatpush1.msra.mxu0 0.0
    %4838 = vmatprep.subr.mxu0 0.0
    %4839 = vmatpush1.msra.mxu0 0.0
    %4840 = vmatprep.subr.mxu0 0.0
    %4841 = vmatpush1.msra.mxu0 0.0
    %4842 = vmatprep.subr.mxu0 0.0
    %4843 = vmatpush1.msra.mxu0 0.0
    %4844 = vmatprep.subr.mxu0 0.0
    %4845 = vmatpush1.msra.mxu0 0.0
    %4846 = vmatprep.subr.mxu0 0.0
    %4847 = vmatpush1.msra.mxu0 0.0
    %4848 = vmatprep.subr.mxu0 0.0
    %4849 = vmatpush1.msra.mxu0 0.0
    %4850 = vmatprep.subr.mxu0 0.0
    %4851 = vmatpush1.msra.mxu0 0.0
    %4852 = vmatprep.subr.mxu0 0.0
    %4853 = vmatpush1.msra.mxu0 0.0
    %4854 = vmatprep.subr.mxu0 0.0
    %4855 = vmatpush1.msra.mxu0 0.0
    %4856 = vmatprep.subr.mxu0 0.0
    %4857 = vmatpush1.msra.mxu0 0.0
    %4858 = vmatprep.subr.mxu0 0.0
    %4859 = vmatpush1.msra.mxu0 0.0
    %4860 = vmatprep.subr.mxu0 0.0
    %4861 = vmatpush1.msra.mxu0 0.0
    %4862 = vmatprep.subr.mxu0 0.0
    %4863 = vmatpush1.msra.mxu0 0.0
    %4864 = vmatprep.subr.mxu0 0.0
    %4865 = vmatpush1.msra.mxu0 0.0
    %4866 = vmatprep.subr.mxu0 0.0
    %4867 = vmatpush1.msra.mxu0 0.0
    %4868 = vmatprep.subr.mxu0 0.0
    %4869 = vmatpush1.msra.mxu0 0.0
    %4870 = vmatprep.subr.mxu0 0.0
    %4871 = vmatpush1.msra.mxu0 0.0
    %4872 = vmatprep.subr.mxu0 0.0
    %4873 = vmatpush1.msra.mxu0 0.0
    %4874 = vmatprep.subr.mxu0 0.0
    %4875 = vmatpush1.msra.mxu0 0.0
    %4876 = vmatprep.subr.mxu0 0.0
    %4877 = vmatpush1.msra.mxu0 0.0
    %4878 = vmatprep.subr.mxu0 0.0
    %4879 = vmatpush1.msra.mxu0 0.0
    %4880 = vmatprep.subr.mxu0 0.0
    %4881 = vmatpush1.msra.mxu0 0.0
    %4882 = vmatprep.subr.mxu0 0.0
    %4883 = vmatpush1.msra.mxu0 0.0
    %4884 = vmatprep.subr.mxu0 0.0
    %4885 = vmatpush1.msra.mxu0 0.0
    %4886 = vmatprep.subr.mxu0 0.0
    %4887 = vmatpush1.msra.mxu0 0.0
    %4888 = vmatprep.subr.mxu0 0.0
    %4889 = vmatpush1.msra.mxu0 0.0
    %4890 = vmatprep.subr.mxu0 0.0
    %4891 = vmatpush1.msra.mxu0 0.0
    %4892 = vmatprep.subr.mxu0 0.0
    %4893 = vmatpush1.msra.mxu0 0.0
    %4894 = vmatprep.mubr.f32.mxu0 0.0
    %v4895 = vand.u32 %v3530, 4294901760
    %4896 = vmatmul.mubr.f32.gmra.mrb[0].mxu0 %v4895
    %v4897 = vpop.f32.mrb[0].mxu0
    %v4898 = vadd.f32 %v4826, %v4897
    %v4899 = vpop.f32.mrb[0].mxu0
    %4900 = vdwg.mxu0
    %v4901 = vsel %vm3064, 0.0, %v4898
    %v4902 = vadd.f32 %v4452, 1e-06
    %v4903 = vadd.f32 %v4901, 1e-06
    %v4904 = vmul.f32 %v4902, %v4902
    %v4905 = vmul.f32 %v4903, %v4903
    %v4906 = vadd.f32 %v4904, %v4905
    %v4907 = vrsqrt.pop %v4906
    %v4908 = vmul.f32 %v4906, %v4907
    %vm4909 = vcmp.eq.f32.partialorder %v4906, inf
    %v4910 = vsel %vm4909, %v4906, %v4908
    %vm4911 = vcmp.eq.f32.partialorder %v4906, 0.0
    %v4912 = vand.u32 %v4906, 2147483648
    %v4913 = vsel %vm4911, %v4912, %v4910
    %s4914 = scalar_lea.vmem %s7, 8
    %4915 = vst.msk [vmem:[%s4914] sm:$0x1f] %vm3991, %v4913
    %s4916 = scalar_lea.vmem %s8, 8
    %4917 = vst.msk [vmem:[%s4916] sm:$0x1f] %vm3991, %v4452
    %s4918 = scalar_lea.vmem %s9, 8
    %4919 = vst.msk [vmem:[%s4918] sm:$0x1f] %vm3991, %v4901
    %v4920 = vmul.f32 %v2008, %v2008
    %v4921 = vsel %vm3066, %v4920, 0.0
    %4922 = vadd.xlane.f32.xlu0 %v4921
    %v4923 = vpop.xlane.xlu0 %4922
    %v4924 = vrsqrt.pop %v4923
    %v4925 = vmul.f32 %v4923, %v4924
    %vm4926 = vcmp.eq.f32.partialorder %v4923, inf
    %v4927 = vsel %vm4926, %v4923, %v4925
    %vm4928 = vcmp.eq.f32.partialorder %v4923, 0.0
    %v4929 = vand.u32 %v4923, 2147483648
    %v4930 = vsel %vm4928, %v4929, %v4927
    %v4931 = vmax.f32 %v4930, 1e-12
    %v4932 = vrcp.pop %v4931
    %v4933 = vmul.f32 %v2008, %v4932
    %4934 = vmatprep.subr.mxu0 0.0
    %v4935 = vand.u32 %v4933, 4294901760
    %4936 = vmatpush1.msra.mxu0 %v4935
    %4937 = vmatprep.subr.mxu0 0.0
    %4938 = vmatpush1.msra.mxu0 0.0
    %4939 = vmatprep.subr.mxu0 0.0
    %4940 = vmatpush1.msra.mxu0 0.0
    %4941 = vmatprep.subr.mxu0 0.0
    %4942 = vmatpush1.msra.mxu0 0.0
    %4943 = vmatprep.subr.mxu0 0.0
    %4944 = vmatpush1.msra.mxu0 0.0
    %4945 = vmatprep.subr.mxu0 0.0
    %4946 = vmatpush1.msra.mxu0 0.0
    %4947 = vmatprep.subr.mxu0 0.0
    %4948 = vmatpush1.msra.mxu0 0.0
    %4949 = vmatprep.subr.mxu0 0.0
    %4950 = vmatpush1.msra.mxu0 0.0
    %4951 = vmatprep.subr.mxu0 0.0
    %4952 = vmatpush1.msra.mxu0 0.0
    %4953 = vmatprep.subr.mxu0 0.0
    %4954 = vmatpush1.msra.mxu0 0.0
    %4955 = vmatprep.subr.mxu0 0.0
    %4956 = vmatpush1.msra.mxu0 0.0
    %4957 = vmatprep.subr.mxu0 0.0
    %4958 = vmatpush1.msra.mxu0 0.0
    %4959 = vmatprep.subr.mxu0 0.0
    %4960 = vmatpush1.msra.mxu0 0.0
    %4961 = vmatprep.subr.mxu0 0.0
    %4962 = vmatpush1.msra.mxu0 0.0
    %4963 = vmatprep.subr.mxu0 0.0
    %4964 = vmatpush1.msra.mxu0 0.0
    %4965 = vmatprep.subr.mxu0 0.0
    %4966 = vmatpush1.msra.mxu0 0.0
    %4967 = vmatprep.subr.mxu0 0.0
    %4968 = vmatpush1.msra.mxu0 0.0
    %4969 = vmatprep.subr.mxu0 0.0
    %4970 = vmatpush1.msra.mxu0 0.0
    %4971 = vmatprep.subr.mxu0 0.0
    %4972 = vmatpush1.msra.mxu0 0.0
    %4973 = vmatprep.subr.mxu0 0.0
    %4974 = vmatpush1.msra.mxu0 0.0
    %4975 = vmatprep.subr.mxu0 0.0
    %4976 = vmatpush1.msra.mxu0 0.0
    %4977 = vmatprep.subr.mxu0 0.0
    %4978 = vmatpush1.msra.mxu0 0.0
    %4979 = vmatprep.subr.mxu0 0.0
    %4980 = vmatpush1.msra.mxu0 0.0
    %4981 = vmatprep.subr.mxu0 0.0
    %4982 = vmatpush1.msra.mxu0 0.0
    %4983 = vmatprep.subr.mxu0 0.0
    %4984 = vmatpush1.msra.mxu0 0.0
    %4985 = vmatprep.subr.mxu0 0.0
    %4986 = vmatpush1.msra.mxu0 0.0
    %4987 = vmatprep.subr.mxu0 0.0
    %4988 = vmatpush1.msra.mxu0 0.0
    %4989 = vmatprep.subr.mxu0 0.0
    %4990 = vmatpush1.msra.mxu0 0.0
    %4991 = vmatprep.subr.mxu0 0.0
    %4992 = vmatpush1.msra.mxu0 0.0
    %4993 = vmatprep.subr.mxu0 0.0
    %4994 = vmatpush1.msra.mxu0 0.0
    %4995 = vmatprep.subr.mxu0 0.0
    %4996 = vmatpush1.msra.mxu0 0.0
    %4997 = vmatprep.subr.mxu0 0.0
    %4998 = vmatpush1.msra.mxu0 0.0
    %4999 = vmatprep.mubr.f32.mxu0 0.0
    %v5000 = vand.u32 %v3081, 4294901760
    %v5001 = vsub.f32 %v3081, %v5000
    %v5002 = vand.u32 %v5001, 4294901760
    %v5003 = vsub.f32 %v5001, %v5002
    %v5004 = vand.u32 %v5003, 4294901760
    %5005 = vmatmul.mubr.f32.gmra.mrb[0].mxu0 %v5004
    %v5006 = vpop.f32.mrb[0].mxu0
    %v5007 = vadd.f32 0.0, %v5006
    %v5008 = vpop.f32.mrb[0].mxu0
    %5009 = vdwg.mxu0
    %5010 = vmatprep.subr.mxu0 0.0
    %v5011 = vand.u32 %v4933, 4294901760
    %v5012 = vsub.f32 %v4933, %v5011
    %v5013 = vand.u32 %v5012, 4294901760
    %v5014 = vsub.f32 %v5012, %v5013
    %v5015 = vand.u32 %v5014, 4294901760
    %5016 = vmatpush1.msra.mxu0 %v5015
    %5017 = vmatprep.subr.mxu0 0.0
    %5018 = vmatpush1.msra.mxu0 0.0
    %5019 = vmatprep.subr.mxu0 0.0
    %5020 = vmatpush1.msra.mxu0 0.0
    %5021 = vmatprep.subr.mxu0 0.0
    %5022 = vmatpush1.msra.mxu0 0.0
    %5023 = vmatprep.subr.mxu0 0.0
    %5024 = vmatpush1.msra.mxu0 0.0
    %5025 = vmatprep.subr.mxu0 0.0
    %5026 = vmatpush1.msra.mxu0 0.0
    %5027 = vmatprep.subr.mxu0 0.0
    %5028 = vmatpush1.msra.mxu0 0.0
    %5029 = vmatprep.subr.mxu0 0.0
    %5030 = vmatpush1.msra.mxu0 0.0
    %5031 = vmatprep.subr.mxu0 0.0
    %5032 = vmatpush1.msra.mxu0 0.0
    %5033 = vmatprep.subr.mxu0 0.0
    %5034 = vmatpush1.msra.mxu0 0.0
    %5035 = vmatprep.subr.mxu0 0.0
    %5036 = vmatpush1.msra.mxu0 0.0
    %5037 = vmatprep.subr.mxu0 0.0
    %5038 = vmatpush1.msra.mxu0 0.0
    %5039 = vmatprep.subr.mxu0 0.0
    %5040 = vmatpush1.msra.mxu0 0.0
    %5041 = vmatprep.subr.mxu0 0.0
    %5042 = vmatpush1.msra.mxu0 0.0
    %5043 = vmatprep.subr.mxu0 0.0
    %5044 = vmatpush1.msra.mxu0 0.0
    %5045 = vmatprep.subr.mxu0 0.0
    %5046 = vmatpush1.msra.mxu0 0.0
    %5047 = vmatprep.subr.mxu0 0.0
    %5048 = vmatpush1.msra.mxu0 0.0
    %5049 = vmatprep.subr.mxu0 0.0
    %5050 = vmatpush1.msra.mxu0 0.0
    %5051 = vmatprep.subr.mxu0 0.0
    %5052 = vmatpush1.msra.mxu0 0.0
    %5053 = vmatprep.subr.mxu0 0.0
    %5054 = vmatpush1.msra.mxu0 0.0
    %5055 = vmatprep.subr.mxu0 0.0
    %5056 = vmatpush1.msra.mxu0 0.0
    %5057 = vmatprep.subr.mxu0 0.0
    %5058 = vmatpush1.msra.mxu0 0.0
    %5059 = vmatprep.subr.mxu0 0.0
    %5060 = vmatpush1.msra.mxu0 0.0
    %5061 = vmatprep.subr.mxu0 0.0
    %5062 = vmatpush1.msra.mxu0 0.0
    %5063 = vmatprep.subr.mxu0 0.0
    %5064 = vmatpush1.msra.mxu0 0.0
    %5065 = vmatprep.subr.mxu0 0.0
    %5066 = vmatpush1.msra.mxu0 0.0
    %5067 = vmatprep.subr.mxu0 0.0
    %5068 = vmatpush1.msra.mxu0 0.0
    %5069 = vmatprep.subr.mxu0 0.0
    %5070 = vmatpush1.msra.mxu0 0.0
    %5071 = vmatprep.subr.mxu0 0.0
    %5072 = vmatpush1.msra.mxu0 0.0
    %5073 = vmatprep.subr.mxu0 0.0
    %5074 = vmatpush1.msra.mxu0 0.0
    %5075 = vmatprep.subr.mxu0 0.0
    %5076 = vmatpush1.msra.mxu0 0.0
    %5077 = vmatprep.subr.mxu0 0.0
    %5078 = vmatpush1.msra.mxu0 0.0
    %5079 = vmatprep.mubr.f32.mxu0 0.0
    %v5080 = vand.u32 %v3081, 4294901760
    %5081 = vmatmul.mubr.f32.gmra.mrb[0].mxu0 %v5080
    %v5082 = vpop.f32.mrb[0].mxu0
    %v5083 = vadd.f32 %v5007, %v5082
    %v5084 = vpop.f32.mrb[0].mxu0
    %5085 = vdwg.mxu0
    %5086 = vmatprep.subr.mxu0 0.0
    %v5087 = vand.u32 %v4933, 4294901760
    %v5088 = vsub.f32 %v4933, %v5087
    %5089 = vmatpush1.msra.mxu0 %v5088
    %5090 = vmatprep.subr.mxu0 0.0
    %5091 = vmatpush1.msra.mxu0 0.0
    %5092 = vmatprep.subr.mxu0 0.0
    %5093 = vmatpush1.msra.mxu0 0.0
    %5094 = vmatprep.subr.mxu0 0.0
    %5095 = vmatpush1.msra.mxu0 0.0
    %5096 = vmatprep.subr.mxu0 0.0
    %5097 = vmatpush1.msra.mxu0 0.0
    %5098 = vmatprep.subr.mxu0 0.0
    %5099 = vmatpush1.msra.mxu0 0.0
    %5100 = vmatprep.subr.mxu0 0.0
    %5101 = vmatpush1.msra.mxu0 0.0
    %5102 = vmatprep.subr.mxu0 0.0
    %5103 = vmatpush1.msra.mxu0 0.0
    %5104 = vmatprep.subr.mxu0 0.0
    %5105 = vmatpush1.msra.mxu0 0.0
    %5106 = vmatprep.subr.mxu0 0.0
    %5107 = vmatpush1.msra.mxu0 0.0
    %5108 = vmatprep.subr.mxu0 0.0
    %5109 = vmatpush1.msra.mxu0 0.0
    %5110 = vmatprep.subr.mxu0 0.0
    %5111 = vmatpush1.msra.mxu0 0.0
    %5112 = vmatprep.subr.mxu0 0.0
    %5113 = vmatpush1.msra.mxu0 0.0
    %5114 = vmatprep.subr.mxu0 0.0
    %5115 = vmatpush1.msra.mxu0 0.0
    %5116 = vmatprep.subr.mxu0 0.0
    %5117 = vmatpush1.msra.mxu0 0.0
    %5118 = vmatprep.subr.mxu0 0.0
    %5119 = vmatpush1.msra.mxu0 0.0
    %5120 = vmatprep.subr.mxu0 0.0
    %5121 = vmatpush1.msra.mxu0 0.0
    %5122 = vmatprep.subr.mxu0 0.0
    %5123 = vmatpush1.msra.mxu0 0.0
    %5124 = vmatprep.subr.mxu0 0.0
    %5125 = vmatpush1.msra.mxu0 0.0
    %5126 = vmatprep.subr.mxu0 0.0
    %5127 = vmatpush1.msra.mxu0 0.0
    %5128 = vmatprep.subr.mxu0 0.0
    %5129 = vmatpush1.msra.mxu0 0.0
    %5130 = vmatprep.subr.mxu0 0.0
    %5131 = vmatpush1.msra.mxu0 0.0
    %5132 = vmatprep.subr.mxu0 0.0
    %5133 = vmatpush1.msra.mxu0 0.0
    %5134 = vmatprep.subr.mxu0 0.0
    %5135 = vmatpush1.msra.mxu0 0.0
    %5136 = vmatprep.subr.mxu0 0.0
    %5137 = vmatpush1.msra.mxu0 0.0
    %5138 = vmatprep.subr.mxu0 0.0
    %5139 = vmatpush1.msra.mxu0 0.0
    %5140 = vmatprep.subr.mxu0 0.0
    %5141 = vmatpush1.msra.mxu0 0.0
    %5142 = vmatprep.subr.mxu0 0.0
    %5143 = vmatpush1.msra.mxu0 0.0
    %5144 = vmatprep.subr.mxu0 0.0
    %5145 = vmatpush1.msra.mxu0 0.0
    %5146 = vmatprep.subr.mxu0 0.0
    %5147 = vmatpush1.msra.mxu0 0.0
    %5148 = vmatprep.subr.mxu0 0.0
    %5149 = vmatpush1.msra.mxu0 0.0
    %5150 = vmatprep.subr.mxu0 0.0
    %5151 = vmatpush1.msra.mxu0 0.0
    %5152 = vmatprep.mubr.f32.mxu0 0.0
    %v5153 = vand.u32 %v3081, 4294901760
    %v5154 = vsub.f32 %v3081, %v5153
    %5155 = vmatmul.mubr.f32.gmra.mrb[0].mxu0 %v5154
    %v5156 = vpop.f32.mrb[0].mxu0
    %v5157 = vadd.f32 %v5083, %v5156
    %v5158 = vpop.f32.mrb[0].mxu0
    %5159 = vdwg.mxu0
    %5160 = vmatprep.subr.mxu0 0.0
    %v5161 = vand.u32 %v4933, 4294901760
    %5162 = vmatpush1.msra.mxu0 %v5161
    %5163 = vmatprep.subr.mxu0 0.0
    %5164 = vmatpush1.msra.mxu0 0.0
    %5165 = vmatprep.subr.mxu0 0.0
    %5166 = vmatpush1.msra.mxu0 0.0
    %5167 = vmatprep.subr.mxu0 0.0
    %5168 = vmatpush1.msra.mxu0 0.0
    %5169 = vmatprep.subr.mxu0 0.0
    %5170 = vmatpush1.msra.mxu0 0.0
    %5171 = vmatprep.subr.mxu0 0.0
    %5172 = vmatpush1.msra.mxu0 0.0
    %5173 = vmatprep.subr.mxu0 0.0
    %5174 = vmatpush1.msra.mxu0 0.0
    %5175 = vmatprep.subr.mxu0 0.0
    %5176 = vmatpush1.msra.mxu0 0.0
    %5177 = vmatprep.subr.mxu0 0.0
    %5178 = vmatpush1.msra.mxu0 0.0
    %5179 = vmatprep.subr.mxu0 0.0
    %5180 = vmatpush1.msra.mxu0 0.0
    %5181 = vmatprep.subr.mxu0 0.0
    %5182 = vmatpush1.msra.mxu0 0.0
    %5183 = vmatprep.subr.mxu0 0.0
    %5184 = vmatpush1.msra.mxu0 0.0
    %5185 = vmatprep.subr.mxu0 0.0
    %5186 = vmatpush1.msra.mxu0 0.0
    %5187 = vmatprep.subr.mxu0 0.0
    %5188 = vmatpush1.msra.mxu0 0.0
    %5189 = vmatprep.subr.mxu0 0.0
    %5190 = vmatpush1.msra.mxu0 0.0
    %5191 = vmatprep.subr.mxu0 0.0
    %5192 = vmatpush1.msra.mxu0 0.0
    %5193 = vmatprep.subr.mxu0 0.0
    %5194 = vmatpush1.msra.mxu0 0.0
    %5195 = vmatprep.subr.mxu0 0.0
    %5196 = vmatpush1.msra.mxu0 0.0
    %5197 = vmatprep.subr.mxu0 0.0
    %5198 = vmatpush1.msra.mxu0 0.0
    %5199 = vmatprep.subr.mxu0 0.0
    %5200 = vmatpush1.msra.mxu0 0.0
    %5201 = vmatprep.subr.mxu0 0.0
    %5202 = vmatpush1.msra.mxu0 0.0
    %5203 = vmatprep.subr.mxu0 0.0
    %5204 = vmatpush1.msra.mxu0 0.0
    %5205 = vmatprep.subr.mxu0 0.0
    %5206 = vmatpush1.msra.mxu0 0.0
    %5207 = vmatprep.subr.mxu0 0.0
    %5208 = vmatpush1.msra.mxu0 0.0
    %5209 = vmatprep.subr.mxu0 0.0
    %5210 = vmatpush1.msra.mxu0 0.0
    %5211 = vmatprep.subr.mxu0 0.0
    %5212 = vmatpush1.msra.mxu0 0.0
    %5213 = vmatprep.subr.mxu0 0.0
    %5214 = vmatpush1.msra.mxu0 0.0
    %5215 = vmatprep.subr.mxu0 0.0
    %5216 = vmatpush1.msra.mxu0 0.0
    %5217 = vmatprep.subr.mxu0 0.0
    %5218 = vmatpush1.msra.mxu0 0.0
    %5219 = vmatprep.subr.mxu0 0.0
    %5220 = vmatpush1.msra.mxu0 0.0
    %5221 = vmatprep.subr.mxu0 0.0
    %5222 = vmatpush1.msra.mxu0 0.0
    %5223 = vmatprep.subr.mxu0 0.0
    %5224 = vmatpush1.msra.mxu0 0.0
    %5225 = vmatprep.mubr.f32.mxu0 0.0
    %v5226 = vand.u32 %v3081, 4294901760
    %v5227 = vsub.f32 %v3081, %v5226
    %v5228 = vand.u32 %v5227, 4294901760
    %5229 = vmatmul.mubr.f32.gmra.mrb[0].mxu0 %v5228
    %v5230 = vpop.f32.mrb[0].mxu0
    %v5231 = vadd.f32 %v5157, %v5230
    %v5232 = vpop.f32.mrb[0].mxu0
    %5233 = vdwg.mxu0
    %5234 = vmatprep.subr.mxu0 0.0
    %v5235 = vand.u32 %v4933, 4294901760
    %v5236 = vsub.f32 %v4933, %v5235
    %v5237 = vand.u32 %v5236, 4294901760
    %5238 = vmatpush1.msra.mxu0 %v5237
    %5239 = vmatprep.subr.mxu0 0.0
    %5240 = vmatpush1.msra.mxu0 0.0
    %5241 = vmatprep.subr.mxu0 0.0
    %5242 = vmatpush1.msra.mxu0 0.0
    %5243 = vmatprep.subr.mxu0 0.0
    %5244 = vmatpush1.msra.mxu0 0.0
    %5245 = vmatprep.subr.mxu0 0.0
    %5246 = vmatpush1.msra.mxu0 0.0
    %5247 = vmatprep.subr.mxu0 0.0
    %5248 = vmatpush1.msra.mxu0 0.0
    %5249 = vmatprep.subr.mxu0 0.0
    %5250 = vmatpush1.msra.mxu0 0.0
    %5251 = vmatprep.subr.mxu0 0.0
    %5252 = vmatpush1.msra.mxu0 0.0
    %5253 = vmatprep.subr.mxu0 0.0
    %5254 = vmatpush1.msra.mxu0 0.0
    %5255 = vmatprep.subr.mxu0 0.0
    %5256 = vmatpush1.msra.mxu0 0.0
    %5257 = vmatprep.subr.mxu0 0.0
    %5258 = vmatpush1.msra.mxu0 0.0
    %5259 = vmatprep.subr.mxu0 0.0
    %5260 = vmatpush1.msra.mxu0 0.0
    %5261 = vmatprep.subr.mxu0 0.0
    %5262 = vmatpush1.msra.mxu0 0.0
    %5263 = vmatprep.subr.mxu0 0.0
    %5264 = vmatpush1.msra.mxu0 0.0
    %5265 = vmatprep.subr.mxu0 0.0
    %5266 = vmatpush1.msra.mxu0 0.0
    %5267 = vmatprep.subr.mxu0 0.0
    %5268 = vmatpush1.msra.mxu0 0.0
    %5269 = vmatprep.subr.mxu0 0.0
    %5270 = vmatpush1.msra.mxu0 0.0
    %5271 = vmatprep.subr.mxu0 0.0
    %5272 = vmatpush1.msra.mxu0 0.0
    %5273 = vmatprep.subr.mxu0 0.0
    %5274 = vmatpush1.msra.mxu0 0.0
    %5275 = vmatprep.subr.mxu0 0.0
    %5276 = vmatpush1.msra.mxu0 0.0
    %5277 = vmatprep.subr.mxu0 0.0
    %5278 = vmatpush1.msra.mxu0 0.0
    %5279 = vmatprep.subr.mxu0 0.0
    %5280 = vmatpush1.msra.mxu0 0.0
    %5281 = vmatprep.subr.mxu0 0.0
    %5282 = vmatpush1.msra.mxu0 0.0
    %5283 = vmatprep.subr.mxu0 0.0
    %5284 = vmatpush1.msra.mxu0 0.0
    %5285 = vmatprep.subr.mxu0 0.0
    %5286 = vmatpush1.msra.mxu0 0.0
    %5287 = vmatprep.subr.mxu0 0.0
    %5288 = vmatpush1.msra.mxu0 0.0
    %5289 = vmatprep.subr.mxu0 0.0
    %5290 = vmatpush1.msra.mxu0 0.0
    %5291 = vmatprep.subr.mxu0 0.0
    %5292 = vmatpush1.msra.mxu0 0.0
    %5293 = vmatprep.subr.mxu0 0.0
    %5294 = vmatpush1.msra.mxu0 0.0
    %5295 = vmatprep.subr.mxu0 0.0
    %5296 = vmatpush1.msra.mxu0 0.0
    %5297 = vmatprep.subr.mxu0 0.0
    %5298 = vmatpush1.msra.mxu0 0.0
    %5299 = vmatprep.subr.mxu0 0.0
    %5300 = vmatpush1.msra.mxu0 0.0
    %5301 = vmatprep.mubr.f32.mxu0 0.0
    %v5302 = vand.u32 %v3081, 4294901760
    %5303 = vmatmul.mubr.f32.gmra.mrb[0].mxu0 %v5302
    %v5304 = vpop.f32.mrb[0].mxu0
    %v5305 = vadd.f32 %v5231, %v5304
    %v5306 = vpop.f32.mrb[0].mxu0
    %5307 = vdwg.mxu0
    %5308 = vmatprep.subr.mxu0 0.0
    %v5309 = vand.u32 %v4933, 4294901760
    %5310 = vmatpush1.msra.mxu0 %v5309
    %5311 = vmatprep.subr.mxu0 0.0
    %5312 = vmatpush1.msra.mxu0 0.0
    %5313 = vmatprep.subr.mxu0 0.0
    %5314 = vmatpush1.msra.mxu0 0.0
    %5315 = vmatprep.subr.mxu0 0.0
    %5316 = vmatpush1.msra.mxu0 0.0
    %5317 = vmatprep.subr.mxu0 0.0
    %5318 = vmatpush1.msra.mxu0 0.0
    %5319 = vmatprep.subr.mxu0 0.0
    %5320 = vmatpush1.msra.mxu0 0.0
    %5321 = vmatprep.subr.mxu0 0.0
    %5322 = vmatpush1.msra.mxu0 0.0
    %5323 = vmatprep.subr.mxu0 0.0
    %5324 = vmatpush1.msra.mxu0 0.0
    %5325 = vmatprep.subr.mxu0 0.0
    %5326 = vmatpush1.msra.mxu0 0.0
    %5327 = vmatprep.subr.mxu0 0.0
    %5328 = vmatpush1.msra.mxu0 0.0
    %5329 = vmatprep.subr.mxu0 0.0
    %5330 = vmatpush1.msra.mxu0 0.0
    %5331 = vmatprep.subr.mxu0 0.0
    %5332 = vmatpush1.msra.mxu0 0.0
    %5333 = vmatprep.subr.mxu0 0.0
    %5334 = vmatpush1.msra.mxu0 0.0
    %5335 = vmatprep.subr.mxu0 0.0
    %5336 = vmatpush1.msra.mxu0 0.0
    %5337 = vmatprep.subr.mxu0 0.0
    %5338 = vmatpush1.msra.mxu0 0.0
    %5339 = vmatprep.subr.mxu0 0.0
    %5340 = vmatpush1.msra.mxu0 0.0
    %5341 = vmatprep.subr.mxu0 0.0
    %5342 = vmatpush1.msra.mxu0 0.0
    %5343 = vmatprep.subr.mxu0 0.0
    %5344 = vmatpush1.msra.mxu0 0.0
    %5345 = vmatprep.subr.mxu0 0.0
    %5346 = vmatpush1.msra.mxu0 0.0
    %5347 = vmatprep.subr.mxu0 0.0
    %5348 = vmatpush1.msra.mxu0 0.0
    %5349 = vmatprep.subr.mxu0 0.0
    %5350 = vmatpush1.msra.mxu0 0.0
    %5351 = vmatprep.subr.mxu0 0.0
    %5352 = vmatpush1.msra.mxu0 0.0
    %5353 = vmatprep.subr.mxu0 0.0
    %5354 = vmatpush1.msra.mxu0 0.0
    %5355 = vmatprep.subr.mxu0 0.0
    %5356 = vmatpush1.msra.mxu0 0.0
    %5357 = vmatprep.subr.mxu0 0.0
    %5358 = vmatpush1.msra.mxu0 0.0
    %5359 = vmatprep.subr.mxu0 0.0
    %5360 = vmatpush1.msra.mxu0 0.0
    %5361 = vmatprep.subr.mxu0 0.0
    %5362 = vmatpush1.msra.mxu0 0.0
    %5363 = vmatprep.subr.mxu0 0.0
    %5364 = vmatpush1.msra.mxu0 0.0
    %5365 = vmatprep.subr.mxu0 0.0
    %5366 = vmatpush1.msra.mxu0 0.0
    %5367 = vmatprep.subr.mxu0 0.0
    %5368 = vmatpush1.msra.mxu0 0.0
    %5369 = vmatprep.subr.mxu0 0.0
    %5370 = vmatpush1.msra.mxu0 0.0
    %5371 = vmatprep.subr.mxu0 0.0
    %5372 = vmatpush1.msra.mxu0 0.0
    %5373 = vmatprep.mubr.f32.mxu0 0.0
    %v5374 = vand.u32 %v3081, 4294901760
    %5375 = vmatmul.mubr.f32.gmra.mrb[0].mxu0 %v5374
    %v5376 = vpop.f32.mrb[0].mxu0
    %v5377 = vadd.f32 %v5305, %v5376
    %v5378 = vpop.f32.mrb[0].mxu0
    %5379 = vdwg.mxu0
    %5380 = vmatprep.subr.mxu0 0.0
    %v5381 = vand.u32 %v4933, 4294901760
    %5382 = vmatpush1.msra.mxu0 %v5381
    %5383 = vmatprep.subr.mxu0 0.0
    %5384 = vmatpush1.msra.mxu0 0.0
    %5385 = vmatprep.subr.mxu0 0.0
    %5386 = vmatpush1.msra.mxu0 0.0
    %5387 = vmatprep.subr.mxu0 0.0
    %5388 = vmatpush1.msra.mxu0 0.0
    %5389 = vmatprep.subr.mxu0 0.0
    %5390 = vmatpush1.msra.mxu0 0.0
    %5391 = vmatprep.subr.mxu0 0.0
    %5392 = vmatpush1.msra.mxu0 0.0
    %5393 = vmatprep.subr.mxu0 0.0
    %5394 = vmatpush1.msra.mxu0 0.0
    %5395 = vmatprep.subr.mxu0 0.0
    %5396 = vmatpush1.msra.mxu0 0.0
    %5397 = vmatprep.subr.mxu0 0.0
    %5398 = vmatpush1.msra.mxu0 0.0
    %5399 = vmatprep.subr.mxu0 0.0
    %5400 = vmatpush1.msra.mxu0 0.0
    %5401 = vmatprep.subr.mxu0 0.0
    %5402 = vmatpush1.msra.mxu0 0.0
    %5403 = vmatprep.subr.mxu0 0.0
    %5404 = vmatpush1.msra.mxu0 0.0
    %5405 = vmatprep.subr.mxu0 0.0
    %5406 = vmatpush1.msra.mxu0 0.0
    %5407 = vmatprep.subr.mxu0 0.0
    %5408 = vmatpush1.msra.mxu0 0.0
    %5409 = vmatprep.subr.mxu0 0.0
    %5410 = vmatpush1.msra.mxu0 0.0
    %5411 = vmatprep.subr.mxu0 0.0
    %5412 = vmatpush1.msra.mxu0 0.0
    %5413 = vmatprep.subr.mxu0 0.0
    %5414 = vmatpush1.msra.mxu0 0.0
    %5415 = vmatprep.subr.mxu0 0.0
    %5416 = vmatpush1.msra.mxu0 0.0
    %5417 = vmatprep.subr.mxu0 0.0
    %5418 = vmatpush1.msra.mxu0 0.0
    %5419 = vmatprep.subr.mxu0 0.0
    %5420 = vmatpush1.msra.mxu0 0.0
    %5421 = vmatprep.subr.mxu0 0.0
    %5422 = vmatpush1.msra.mxu0 0.0
    %5423 = vmatprep.subr.mxu0 0.0
    %5424 = vmatpush1.msra.mxu0 0.0
    %5425 = vmatprep.subr.mxu0 0.0
    %5426 = vmatpush1.msra.mxu0 0.0
    %5427 = vmatprep.subr.mxu0 0.0
    %5428 = vmatpush1.msra.mxu0 0.0
    %5429 = vmatprep.subr.mxu0 0.0
    %5430 = vmatpush1.msra.mxu0 0.0
    %5431 = vmatprep.subr.mxu0 0.0
    %5432 = vmatpush1.msra.mxu0 0.0
    %5433 = vmatprep.subr.mxu0 0.0
    %5434 = vmatpush1.msra.mxu0 0.0
    %5435 = vmatprep.subr.mxu0 0.0
    %5436 = vmatpush1.msra.mxu0 0.0
    %5437 = vmatprep.subr.mxu0 0.0
    %5438 = vmatpush1.msra.mxu0 0.0
    %5439 = vmatprep.subr.mxu0 0.0
    %5440 = vmatpush1.msra.mxu0 0.0
    %5441 = vmatprep.subr.mxu0 0.0
    %5442 = vmatpush1.msra.mxu0 0.0
    %5443 = vmatprep.subr.mxu0 0.0
    %5444 = vmatpush1.msra.mxu0 0.0
    %5445 = vmatprep.mubr.f32.mxu0 0.0
    %v5446 = vand.u32 %v3530, 4294901760
    %v5447 = vsub.f32 %v3530, %v5446
    %v5448 = vand.u32 %v5447, 4294901760
    %v5449 = vsub.f32 %v5447, %v5448
    %v5450 = vand.u32 %v5449, 4294901760
    %5451 = vmatmul.mubr.f32.gmra.mrb[0].mxu0 %v5450
    %v5452 = vpop.f32.mrb[0].mxu0
    %v5453 = vadd.f32 0.0, %v5452
    %v5454 = vpop.f32.mrb[0].mxu0
    %5455 = vdwg.mxu0
    %5456 = vmatprep.subr.mxu0 0.0
    %v5457 = vand.u32 %v4933, 4294901760
    %v5458 = vsub.f32 %v4933, %v5457
    %v5459 = vand.u32 %v5458, 4294901760
    %v5460 = vsub.f32 %v5458, %v5459
    %v5461 = vand.u32 %v5460, 4294901760
    %5462 = vmatpush1.msra.mxu0 %v5461
    %5463 = vmatprep.subr.mxu0 0.0
    %5464 = vmatpush1.msra.mxu0 0.0
    %5465 = vmatprep.subr.mxu0 0.0
    %5466 = vmatpush1.msra.mxu0 0.0
    %5467 = vmatprep.subr.mxu0 0.0
    %5468 = vmatpush1.msra.mxu0 0.0
    %5469 = vmatprep.subr.mxu0 0.0
    %5470 = vmatpush1.msra.mxu0 0.0
    %5471 = vmatprep.subr.mxu0 0.0
    %5472 = vmatpush1.msra.mxu0 0.0
    %5473 = vmatprep.subr.mxu0 0.0
    %5474 = vmatpush1.msra.mxu0 0.0
    %5475 = vmatprep.subr.mxu0 0.0
    %5476 = vmatpush1.msra.mxu0 0.0
    %5477 = vmatprep.subr.mxu0 0.0
    %5478 = vmatpush1.msra.mxu0 0.0
    %5479 = vmatprep.subr.mxu0 0.0
    %5480 = vmatpush1.msra.mxu0 0.0
    %5481 = vmatprep.subr.mxu0 0.0
    %5482 = vmatpush1.msra.mxu0 0.0
    %5483 = vmatprep.subr.mxu0 0.0
    %5484 = vmatpush1.msra.mxu0 0.0
    %5485 = vmatprep.subr.mxu0 0.0
    %5486 = vmatpush1.msra.mxu0 0.0
    %5487 = vmatprep.subr.mxu0 0.0
    %5488 = vmatpush1.msra.mxu0 0.0
    %5489 = vmatprep.subr.mxu0 0.0
    %5490 = vmatpush1.msra.mxu0 0.0
    %5491 = vmatprep.subr.mxu0 0.0
    %5492 = vmatpush1.msra.mxu0 0.0
    %5493 = vmatprep.subr.mxu0 0.0
    %5494 = vmatpush1.msra.mxu0 0.0
    %5495 = vmatprep.subr.mxu0 0.0
    %5496 = vmatpush1.msra.mxu0 0.0
    %5497 = vmatprep.subr.mxu0 0.0
    %5498 = vmatpush1.msra.mxu0 0.0
    %5499 = vmatprep.subr.mxu0 0.0
    %5500 = vmatpush1.msra.mxu0 0.0
    %5501 = vmatprep.subr.mxu0 0.0
    %5502 = vmatpush1.msra.mxu0 0.0
    %5503 = vmatprep.subr.mxu0 0.0
    %5504 = vmatpush1.msra.mxu0 0.0
    %5505 = vmatprep.subr.mxu0 0.0
    %5506 = vmatpush1.msra.mxu0 0.0
    %5507 = vmatprep.subr.mxu0 0.0
    %5508 = vmatpush1.msra.mxu0 0.0
    %5509 = vmatprep.subr.mxu0 0.0
    %5510 = vmatpush1.msra.mxu0 0.0
    %5511 = vmatprep.subr.mxu0 0.0
    %5512 = vmatpush1.msra.mxu0 0.0
    %5513 = vmatprep.subr.mxu0 0.0
    %5514 = vmatpush1.msra.mxu0 0.0
    %5515 = vmatprep.subr.mxu0 0.0
    %5516 = vmatpush1.msra.mxu0 0.0
    %5517 = vmatprep.subr.mxu0 0.0
    %5518 = vmatpush1.msra.mxu0 0.0
    %5519 = vmatprep.subr.mxu0 0.0
    %5520 = vmatpush1.msra.mxu0 0.0
    %5521 = vmatprep.subr.mxu0 0.0
    %5522 = vmatpush1.msra.mxu0 0.0
    %5523 = vmatprep.subr.mxu0 0.0
    %5524 = vmatpush1.msra.mxu0 0.0
    %5525 = vmatprep.mubr.f32.mxu0 0.0
    %v5526 = vand.u32 %v3530, 4294901760
    %5527 = vmatmul.mubr.f32.gmra.mrb[0].mxu0 %v5526
    %v5528 = vpop.f32.mrb[0].mxu0
    %v5529 = vadd.f32 %v5453, %v5528
    %v5530 = vpop.f32.mrb[0].mxu0
    %5531 = vdwg.mxu0
    %5532 = vmatprep.subr.mxu0 0.0
    %v5533 = vand.u32 %v4933, 4294901760
    %v5534 = vsub.f32 %v4933, %v5533
    %5535 = vmatpush1.msra.mxu0 %v5534
    %5536 = vmatprep.subr.mxu0 0.0
    %5537 = vmatpush1.msra.mxu0 0.0
    %5538 = vmatprep.subr.mxu0 0.0
    %5539 = vmatpush1.msra.mxu0 0.0
    %5540 = vmatprep.subr.mxu0 0.0
    %5541 = vmatpush1.msra.mxu0 0.0
    %5542 = vmatprep.subr.mxu0 0.0
    %5543 = vmatpush1.msra.mxu0 0.0
    %5544 = vmatprep.subr.mxu0 0.0
    %5545 = vmatpush1.msra.mxu0 0.0
    %5546 = vmatprep.subr.mxu0 0.0
    %5547 = vmatpush1.msra.mxu0 0.0
    %5548 = vmatprep.subr.mxu0 0.0
    %5549 = vmatpush1.msra.mxu0 0.0
    %5550 = vmatprep.subr.mxu0 0.0
    %5551 = vmatpush1.msra.mxu0 0.0
    %5552 = vmatprep.subr.mxu0 0.0
    %5553 = vmatpush1.msra.mxu0 0.0
    %5554 = vmatprep.subr.mxu0 0.0
    %5555 = vmatpush1.msra.mxu0 0.0
    %5556 = vmatprep.subr.mxu0 0.0
    %5557 = vmatpush1.msra.mxu0 0.0
    %5558 = vmatprep.subr.mxu0 0.0
    %5559 = vmatpush1.msra.mxu0 0.0
    %5560 = vmatprep.subr.mxu0 0.0
    %5561 = vmatpush1.msra.mxu0 0.0
    %5562 = vmatprep.subr.mxu0 0.0
    %5563 = vmatpush1.msra.mxu0 0.0
    %5564 = vmatprep.subr.mxu0 0.0
    %5565 = vmatpush1.msra.mxu0 0.0
    %5566 = vmatprep.subr.mxu0 0.0
    %5567 = vmatpush1.msra.mxu0 0.0
    %5568 = vmatprep.subr.mxu0 0.0
    %5569 = vmatpush1.msra.mxu0 0.0
    %5570 = vmatprep.subr.mxu0 0.0
    %5571 = vmatpush1.msra.mxu0 0.0
    %5572 = vmatprep.subr.mxu0 0.0
    %5573 = vmatpush1.msra.mxu0 0.0
    %5574 = vmatprep.subr.mxu0 0.0
    %5575 = vmatpush1.msra.mxu0 0.0
    %5576 = vmatprep.subr.mxu0 0.0
    %5577 = vmatpush1.msra.mxu0 0.0
    %5578 = vmatprep.subr.mxu0 0.0
    %5579 = vmatpush1.msra.mxu0 0.0
    %5580 = vmatprep.subr.mxu0 0.0
    %5581 = vmatpush1.msra.mxu0 0.0
    %5582 = vmatprep.subr.mxu0 0.0
    %5583 = vmatpush1.msra.mxu0 0.0
    %5584 = vmatprep.subr.mxu0 0.0
    %5585 = vmatpush1.msra.mxu0 0.0
    %5586 = vmatprep.subr.mxu0 0.0
    %5587 = vmatpush1.msra.mxu0 0.0
    %5588 = vmatprep.subr.mxu0 0.0
    %5589 = vmatpush1.msra.mxu0 0.0
    %5590 = vmatprep.subr.mxu0 0.0
    %5591 = vmatpush1.msra.mxu0 0.0
    %5592 = vmatprep.subr.mxu0 0.0
    %5593 = vmatpush1.msra.mxu0 0.0
    %5594 = vmatprep.subr.mxu0 0.0
    %5595 = vmatpush1.msra.mxu0 0.0
    %5596 = vmatprep.subr.mxu0 0.0
    %5597 = vmatpush1.msra.mxu0 0.0
    %5598 = vmatprep.mubr.f32.mxu0 0.0
    %v5599 = vand.u32 %v3530, 4294901760
    %v5600 = vsub.f32 %v3530, %v5599
    %5601 = vmatmul.mubr.f32.gmra.mrb[0].mxu0 %v5600
    %v5602 = vpop.f32.mrb[0].mxu0
    %v5603 = vadd.f32 %v5529, %v5602
    %v5604 = vpop.f32.mrb[0].mxu0
    %5605 = vdwg.mxu0
    %5606 = vmatprep.subr.mxu0 0.0
    %v5607 = vand.u32 %v4933, 4294901760
    %5608 = vmatpush1.msra.mxu0 %v5607
    %5609 = vmatprep.subr.mxu0 0.0
    %5610 = vmatpush1.msra.mxu0 0.0
    %5611 = vmatprep.subr.mxu0 0.0
    %5612 = vmatpush1.msra.mxu0 0.0
    %5613 = vmatprep.subr.mxu0 0.0
    %5614 = vmatpush1.msra.mxu0 0.0
    %5615 = vmatprep.subr.mxu0 0.0
    %5616 = vmatpush1.msra.mxu0 0.0
    %5617 = vmatprep.subr.mxu0 0.0
    %5618 = vmatpush1.msra.mxu0 0.0
    %5619 = vmatprep.subr.mxu0 0.0
    %5620 = vmatpush1.msra.mxu0 0.0
    %5621 = vmatprep.subr.mxu0 0.0
    %5622 = vmatpush1.msra.mxu0 0.0
    %5623 = vmatprep.subr.mxu0 0.0
    %5624 = vmatpush1.msra.mxu0 0.0
    %5625 = vmatprep.subr.mxu0 0.0
    %5626 = vmatpush1.msra.mxu0 0.0
    %5627 = vmatprep.subr.mxu0 0.0
    %5628 = vmatpush1.msra.mxu0 0.0
    %5629 = vmatprep.subr.mxu0 0.0
    %5630 = vmatpush1.msra.mxu0 0.0
    %5631 = vmatprep.subr.mxu0 0.0
    %5632 = vmatpush1.msra.mxu0 0.0
    %5633 = vmatprep.subr.mxu0 0.0
    %5634 = vmatpush1.msra.mxu0 0.0
    %5635 = vmatprep.subr.mxu0 0.0
    %5636 = vmatpush1.msra.mxu0 0.0
    %5637 = vmatprep.subr.mxu0 0.0
    %5638 = vmatpush1.msra.mxu0 0.0
    %5639 = vmatprep.subr.mxu0 0.0
    %5640 = vmatpush1.msra.mxu0 0.0
    %5641 = vmatprep.subr.mxu0 0.0
    %5642 = vmatpush1.msra.mxu0 0.0
    %5643 = vmatprep.subr.mxu0 0.0
    %5644 = vmatpush1.msra.mxu0 0.0
    %5645 = vmatprep.subr.mxu0 0.0
    %5646 = vmatpush1.msra.mxu0 0.0
    %5647 = vmatprep.subr.mxu0 0.0
    %5648 = vmatpush1.msra.mxu0 0.0
    %5649 = vmatprep.subr.mxu0 0.0
    %5650 = vmatpush1.msra.mxu0 0.0
    %5651 = vmatprep.subr.mxu0 0.0
    %5652 = vmatpush1.msra.mxu0 0.0
    %5653 = vmatprep.subr.mxu0 0.0
    %5654 = vmatpush1.msra.mxu0 0.0
    %5655 = vmatprep.subr.mxu0 0.0
    %5656 = vmatpush1.msra.mxu0 0.0
    %5657 = vmatprep.subr.mxu0 0.0
    %5658 = vmatpush1.msra.mxu0 0.0
    %5659 = vmatprep.subr.mxu0 0.0
    %5660 = vmatpush1.msra.mxu0 0.0
    %5661 = vmatprep.subr.mxu0 0.0
    %5662 = vmatpush1.msra.mxu0 0.0
    %5663 = vmatprep.subr.mxu0 0.0
    %5664 = vmatpush1.msra.mxu0 0.0
    %5665 = vmatprep.subr.mxu0 0.0
    %5666 = vmatpush1.msra.mxu0 0.0
    %5667 = vmatprep.subr.mxu0 0.0
    %5668 = vmatpush1.msra.mxu0 0.0
    %5669 = vmatprep.subr.mxu0 0.0
    %5670 = vmatpush1.msra.mxu0 0.0
    %5671 = vmatprep.mubr.f32.mxu0 0.0
    %v5672 = vand.u32 %v3530, 4294901760
    %v5673 = vsub.f32 %v3530, %v5672
    %v5674 = vand.u32 %v5673, 4294901760
    %5675 = vmatmul.mubr.f32.gmra.mrb[0].mxu0 %v5674
    %v5676 = vpop.f32.mrb[0].mxu0
    %v5677 = vadd.f32 %v5603, %v5676
    %v5678 = vpop.f32.mrb[0].mxu0
    %5679 = vdwg.mxu0
    %5680 = vmatprep.subr.mxu0 0.0
    %v5681 = vand.u32 %v4933, 4294901760
    %v5682 = vsub.f32 %v4933, %v5681
    %v5683 = vand.u32 %v5682, 4294901760
    %5684 = vmatpush1.msra.mxu0 %v5683
    %5685 = vmatprep.subr.mxu0 0.0
    %5686 = vmatpush1.msra.mxu0 0.0
    %5687 = vmatprep.subr.mxu0 0.0
    %5688 = vmatpush1.msra.mxu0 0.0
    %5689 = vmatprep.subr.mxu0 0.0
    %5690 = vmatpush1.msra.mxu0 0.0
    %5691 = vmatprep.subr.mxu0 0.0
    %5692 = vmatpush1.msra.mxu0 0.0
    %5693 = vmatprep.subr.mxu0 0.0
    %5694 = vmatpush1.msra.mxu0 0.0
    %5695 = vmatprep.subr.mxu0 0.0
    %5696 = vmatpush1.msra.mxu0 0.0
    %5697 = vmatprep.subr.mxu0 0.0
    %5698 = vmatpush1.msra.mxu0 0.0
    %5699 = vmatprep.subr.mxu0 0.0
    %5700 = vmatpush1.msra.mxu0 0.0
    %5701 = vmatprep.subr.mxu0 0.0
    %5702 = vmatpush1.msra.mxu0 0.0
    %5703 = vmatprep.subr.mxu0 0.0
    %5704 = vmatpush1.msra.mxu0 0.0
    %5705 = vmatprep.subr.mxu0 0.0
    %5706 = vmatpush1.msra.mxu0 0.0
    %5707 = vmatprep.subr.mxu0 0.0
    %5708 = vmatpush1.msra.mxu0 0.0
    %5709 = vmatprep.subr.mxu0 0.0
    %5710 = vmatpush1.msra.mxu0 0.0
    %5711 = vmatprep.subr.mxu0 0.0
    %5712 = vmatpush1.msra.mxu0 0.0
    %5713 = vmatprep.subr.mxu0 0.0
    %5714 = vmatpush1.msra.mxu0 0.0
    %5715 = vmatprep.subr.mxu0 0.0
    %5716 = vmatpush1.msra.mxu0 0.0
    %5717 = vmatprep.subr.mxu0 0.0
    %5718 = vmatpush1.msra.mxu0 0.0
    %5719 = vmatprep.subr.mxu0 0.0
    %5720 = vmatpush1.msra.mxu0 0.0
    %5721 = vmatprep.subr.mxu0 0.0
    %5722 = vmatpush1.msra.mxu0 0.0
    %5723 = vmatprep.subr.mxu0 0.0
    %5724 = vmatpush1.msra.mxu0 0.0
    %5725 = vmatprep.subr.mxu0 0.0
    %5726 = vmatpush1.msra.mxu0 0.0
    %5727 = vmatprep.subr.mxu0 0.0
    %5728 = vmatpush1.msra.mxu0 0.0
    %5729 = vmatprep.subr.mxu0 0.0
    %5730 = vmatpush1.msra.mxu0 0.0
    %5731 = vmatprep.subr.mxu0 0.0
    %5732 = vmatpush1.msra.mxu0 0.0
    %5733 = vmatprep.subr.mxu0 0.0
    %5734 = vmatpush1.msra.mxu0 0.0
    %5735 = vmatprep.subr.mxu0 0.0
    %5736 = vmatpush1.msra.mxu0 0.0
    %5737 = vmatprep.subr.mxu0 0.0
    %5738 = vmatpush1.msra.mxu0 0.0
    %5739 = vmatprep.subr.mxu0 0.0
    %5740 = vmatpush1.msra.mxu0 0.0
    %5741 = vmatprep.subr.mxu0 0.0
    %5742 = vmatpush1.msra.mxu0 0.0
    %5743 = vmatprep.subr.mxu0 0.0
    %5744 = vmatpush1.msra.mxu0 0.0
    %5745 = vmatprep.subr.mxu0 0.0
    %5746 = vmatpush1.msra.mxu0 0.0
    %5747 = vmatprep.mubr.f32.mxu0 0.0
    %v5748 = vand.u32 %v3530, 4294901760
    %5749 = vmatmul.mubr.f32.gmra.mrb[0].mxu0 %v5748
    %v5750 = vpop.f32.mrb[0].mxu0
    %v5751 = vadd.f32 %v5677, %v5750
    %v5752 = vpop.f32.mrb[0].mxu0
    %5753 = vdwg.mxu0
    %5754 = vmatprep.subr.mxu0 0.0
    %v5755 = vand.u32 %v4933, 4294901760
    %5756 = vmatpush1.msra.mxu0 %v5755
    %5757 = vmatprep.subr.mxu0 0.0
    %5758 = vmatpush1.msra.mxu0 0.0
    %5759 = vmatprep.subr.mxu0 0.0
    %5760 = vmatpush1.msra.mxu0 0.0
    %5761 = vmatprep.subr.mxu0 0.0
    %5762 = vmatpush1.msra.mxu0 0.0
    %5763 = vmatprep.subr.mxu0 0.0
    %5764 = vmatpush1.msra.mxu0 0.0
    %5765 = vmatprep.subr.mxu0 0.0
    %5766 = vmatpush1.msra.mxu0 0.0
    %5767 = vmatprep.subr.mxu0 0.0
    %5768 = vmatpush1.msra.mxu0 0.0
    %5769 = vmatprep.subr.mxu0 0.0
    %5770 = vmatpush1.msra.mxu0 0.0
    %5771 = vmatprep.subr.mxu0 0.0
    %5772 = vmatpush1.msra.mxu0 0.0
    %5773 = vmatprep.subr.mxu0 0.0
    %5774 = vmatpush1.msra.mxu0 0.0
    %5775 = vmatprep.subr.mxu0 0.0
    %5776 = vmatpush1.msra.mxu0 0.0
    %5777 = vmatprep.subr.mxu0 0.0
    %5778 = vmatpush1.msra.mxu0 0.0
    %5779 = vmatprep.subr.mxu0 0.0
    %5780 = vmatpush1.msra.mxu0 0.0
    %5781 = vmatprep.subr.mxu0 0.0
    %5782 = vmatpush1.msra.mxu0 0.0
    %5783 = vmatprep.subr.mxu0 0.0
    %5784 = vmatpush1.msra.mxu0 0.0
    %5785 = vmatprep.subr.mxu0 0.0
    %5786 = vmatpush1.msra.mxu0 0.0
    %5787 = vmatprep.subr.mxu0 0.0
    %5788 = vmatpush1.msra.mxu0 0.0
    %5789 = vmatprep.subr.mxu0 0.0
    %5790 = vmatpush1.msra.mxu0 0.0
    %5791 = vmatprep.subr.mxu0 0.0
    %5792 = vmatpush1.msra.mxu0 0.0
    %5793 = vmatprep.subr.mxu0 0.0
    %5794 = vmatpush1.msra.mxu0 0.0
    %5795 = vmatprep.subr.mxu0 0.0
    %5796 = vmatpush1.msra.mxu0 0.0
    %5797 = vmatprep.subr.mxu0 0.0
    %5798 = vmatpush1.msra.mxu0 0.0
    %5799 = vmatprep.subr.mxu0 0.0
    %5800 = vmatpush1.msra.mxu0 0.0
    %5801 = vmatprep.subr.mxu0 0.0
    %5802 = vmatpush1.msra.mxu0 0.0
    %5803 = vmatprep.subr.mxu0 0.0
    %5804 = vmatpush1.msra.mxu0 0.0
    %5805 = vmatprep.subr.mxu0 0.0
    %5806 = vmatpush1.msra.mxu0 0.0
    %5807 = vmatprep.subr.mxu0 0.0
    %5808 = vmatpush1.msra.mxu0 0.0
    %5809 = vmatprep.subr.mxu0 0.0
    %5810 = vmatpush1.msra.mxu0 0.0
    %5811 = vmatprep.subr.mxu0 0.0
    %5812 = vmatpush1.msra.mxu0 0.0
    %5813 = vmatprep.subr.mxu0 0.0
    %5814 = vmatpush1.msra.mxu0 0.0
    %5815 = vmatprep.subr.mxu0 0.0
    %5816 = vmatpush1.msra.mxu0 0.0
    %5817 = vmatprep.subr.mxu0 0.0
    %5818 = vmatpush1.msra.mxu0 0.0
    %5819 = vmatprep.mubr.f32.mxu0 0.0
    %v5820 = vand.u32 %v3530, 4294901760
    %5821 = vmatmul.mubr.f32.gmra.mrb[0].mxu0 %v5820
    %v5822 = vpop.f32.mrb[0].mxu0
    %v5823 = vadd.f32 %v5751, %v5822
    %v5824 = vpop.f32.mrb[0].mxu0
    %5825 = vdwg.mxu0
    %v5826 = vsel %vm3064, 0.0, %v5823
    %v5827 = vadd.f32 %v5377, 1e-06
    %v5828 = vadd.f32 %v5826, 1e-06
    %v5829 = vmul.f32 %v5827, %v5827
    %v5830 = vmul.f32 %v5828, %v5828
    %v5831 = vadd.f32 %v5829, %v5830
    %v5832 = vrsqrt.pop %v5831
    %v5833 = vmul.f32 %v5831, %v5832
    %vm5834 = vcmp.eq.f32.partialorder %v5831, inf
    %v5835 = vsel %vm5834, %v5831, %v5833
    %vm5836 = vcmp.eq.f32.partialorder %v5831, 0.0
    %v5837 = vand.u32 %v5831, 2147483648
    %v5838 = vsel %vm5836, %v5837, %v5835
    %5839 = vst.msk [vmem:[%s10] sm:$0x1f] %vm3991, %v5838
    %5840 = vst.msk [vmem:[%s11] sm:$0x1f] %vm3991, %v5377
    %5841 = vst.msk [vmem:[%s12] sm:$0x1f] %vm3991, %v5826
    %v5842 = vmul.f32 %v2014, %v2014
    %v5843 = vsel %vm3066, %v5842, 0.0
    %5844 = vadd.xlane.f32.xlu0 %v5843
    %v5845 = vpop.xlane.xlu0 %5844
    %v5846 = vrsqrt.pop %v5845
    %v5847 = vmul.f32 %v5845, %v5846
    %vm5848 = vcmp.eq.f32.partialorder %v5845, inf
    %v5849 = vsel %vm5848, %v5845, %v5847
    %vm5850 = vcmp.eq.f32.partialorder %v5845, 0.0
    %v5851 = vand.u32 %v5845, 2147483648
    %v5852 = vsel %vm5850, %v5851, %v5849
    %v5853 = vmax.f32 %v5852, 1e-12
    %v5854 = vrcp.pop %v5853
    %v5855 = vmul.f32 %v2014, %v5854
    %5856 = vmatprep.subr.mxu0 0.0
    %v5857 = vand.u32 %v5855, 4294901760
    %5858 = vmatpush1.msra.mxu0 %v5857
    %5859 = vmatprep.subr.mxu0 0.0
    %5860 = vmatpush1.msra.mxu0 0.0
    %5861 = vmatprep.subr.mxu0 0.0
    %5862 = vmatpush1.msra.mxu0 0.0
    %5863 = vmatprep.subr.mxu0 0.0
    %5864 = vmatpush1.msra.mxu0 0.0
    %5865 = vmatprep.subr.mxu0 0.0
    %5866 = vmatpush1.msra.mxu0 0.0
    %5867 = vmatprep.subr.mxu0 0.0
    %5868 = vmatpush1.msra.mxu0 0.0
    %5869 = vmatprep.subr.mxu0 0.0
    %5870 = vmatpush1.msra.mxu0 0.0
    %5871 = vmatprep.subr.mxu0 0.0
    %5872 = vmatpush1.msra.mxu0 0.0
    %5873 = vmatprep.subr.mxu0 0.0
    %5874 = vmatpush1.msra.mxu0 0.0
    %5875 = vmatprep.subr.mxu0 0.0
    %5876 = vmatpush1.msra.mxu0 0.0
    %5877 = vmatprep.subr.mxu0 0.0
    %5878 = vmatpush1.msra.mxu0 0.0
    %5879 = vmatprep.subr.mxu0 0.0
    %5880 = vmatpush1.msra.mxu0 0.0
    %5881 = vmatprep.subr.mxu0 0.0
    %5882 = vmatpush1.msra.mxu0 0.0
    %5883 = vmatprep.subr.mxu0 0.0
    %5884 = vmatpush1.msra.mxu0 0.0
    %5885 = vmatprep.subr.mxu0 0.0
    %5886 = vmatpush1.msra.mxu0 0.0
    %5887 = vmatprep.subr.mxu0 0.0
    %5888 = vmatpush1.msra.mxu0 0.0
    %5889 = vmatprep.subr.mxu0 0.0
    %5890 = vmatpush1.msra.mxu0 0.0
    %5891 = vmatprep.subr.mxu0 0.0
    %5892 = vmatpush1.msra.mxu0 0.0
    %5893 = vmatprep.subr.mxu0 0.0
    %5894 = vmatpush1.msra.mxu0 0.0
    %5895 = vmatprep.subr.mxu0 0.0
    %5896 = vmatpush1.msra.mxu0 0.0
    %5897 = vmatprep.subr.mxu0 0.0
    %5898 = vmatpush1.msra.mxu0 0.0
    %5899 = vmatprep.subr.mxu0 0.0
    %5900 = vmatpush1.msra.mxu0 0.0
    %5901 = vmatprep.subr.mxu0 0.0
    %5902 = vmatpush1.msra.mxu0 0.0
    %5903 = vmatprep.subr.mxu0 0.0
    %5904 = vmatpush1.msra.mxu0 0.0
    %5905 = vmatprep.subr.mxu0 0.0
    %5906 = vmatpush1.msra.mxu0 0.0
    %5907 = vmatprep.subr.mxu0 0.0
    %5908 = vmatpush1.msra.mxu0 0.0
    %5909 = vmatprep.subr.mxu0 0.0
    %5910 = vmatpush1.msra.mxu0 0.0
    %5911 = vmatprep.subr.mxu0 0.0
    %5912 = vmatpush1.msra.mxu0 0.0
    %5913 = vmatprep.subr.mxu0 0.0
    %5914 = vmatpush1.msra.mxu0 0.0
    %5915 = vmatprep.subr.mxu0 0.0
    %5916 = vmatpush1.msra.mxu0 0.0
    %5917 = vmatprep.subr.mxu0 0.0
    %5918 = vmatpush1.msra.mxu0 0.0
    %5919 = vmatprep.subr.mxu0 0.0
    %5920 = vmatpush1.msra.mxu0 0.0
    %5921 = vmatprep.mubr.f32.mxu0 0.0
    %v5922 = vand.u32 %v3081, 4294901760
    %v5923 = vsub.f32 %v3081, %v5922
    %v5924 = vand.u32 %v5923, 4294901760
    %v5925 = vsub.f32 %v5923, %v5924
    %v5926 = vand.u32 %v5925, 4294901760
    %5927 = vmatmul.mubr.f32.gmra.mrb[0].mxu0 %v5926
    %v5928 = vpop.f32.mrb[0].mxu0
    %v5929 = vadd.f32 0.0, %v5928
    %v5930 = vpop.f32.mrb[0].mxu0
    %5931 = vdwg.mxu0
    %5932 = vmatprep.subr.mxu0 0.0
    %v5933 = vand.u32 %v5855, 4294901760
    %v5934 = vsub.f32 %v5855, %v5933
    %v5935 = vand.u32 %v5934, 4294901760
    %v5936 = vsub.f32 %v5934, %v5935
    %v5937 = vand.u32 %v5936, 4294901760
    %5938 = vmatpush1.msra.mxu0 %v5937
    %5939 = vmatprep.subr.mxu0 0.0
    %5940 = vmatpush1.msra.mxu0 0.0
    %5941 = vmatprep.subr.mxu0 0.0
    %5942 = vmatpush1.msra.mxu0 0.0
    %5943 = vmatprep.subr.mxu0 0.0
    %5944 = vmatpush1.msra.mxu0 0.0
    %5945 = vmatprep.subr.mxu0 0.0
    %5946 = vmatpush1.msra.mxu0 0.0
    %5947 = vmatprep.subr.mxu0 0.0
    %5948 = vmatpush1.msra.mxu0 0.0
    %5949 = vmatprep.subr.mxu0 0.0
    %5950 = vmatpush1.msra.mxu0 0.0
    %5951 = vmatprep.subr.mxu0 0.0
    %5952 = vmatpush1.msra.mxu0 0.0
    %5953 = vmatprep.subr.mxu0 0.0
    %5954 = vmatpush1.msra.mxu0 0.0
    %5955 = vmatprep.subr.mxu0 0.0
    %5956 = vmatpush1.msra.mxu0 0.0
    %5957 = vmatprep.subr.mxu0 0.0
    %5958 = vmatpush1.msra.mxu0 0.0
    %5959 = vmatprep.subr.mxu0 0.0
    %5960 = vmatpush1.msra.mxu0 0.0
    %5961 = vmatprep.subr.mxu0 0.0
    %5962 = vmatpush1.msra.mxu0 0.0
    %5963 = vmatprep.subr.mxu0 0.0
    %5964 = vmatpush1.msra.mxu0 0.0
    %5965 = vmatprep.subr.mxu0 0.0
    %5966 = vmatpush1.msra.mxu0 0.0
    %5967 = vmatprep.subr.mxu0 0.0
    %5968 = vmatpush1.msra.mxu0 0.0
    %5969 = vmatprep.subr.mxu0 0.0
    %5970 = vmatpush1.msra.mxu0 0.0
    %5971 = vmatprep.subr.mxu0 0.0
    %5972 = vmatpush1.msra.mxu0 0.0
    %5973 = vmatprep.subr.mxu0 0.0
    %5974 = vmatpush1.msra.mxu0 0.0
    %5975 = vmatprep.subr.mxu0 0.0
    %5976 = vmatpush1.msra.mxu0 0.0
    %5977 = vmatprep.subr.mxu0 0.0
    %5978 = vmatpush1.msra.mxu0 0.0
    %5979 = vmatprep.subr.mxu0 0.0
    %5980 = vmatpush1.msra.mxu0 0.0
    %5981 = vmatprep.subr.mxu0 0.0
    %5982 = vmatpush1.msra.mxu0 0.0
    %5983 = vmatprep.subr.mxu0 0.0
    %5984 = vmatpush1.msra.mxu0 0.0
    %5985 = vmatprep.subr.mxu0 0.0
    %5986 = vmatpush1.msra.mxu0 0.0
    %5987 = vmatprep.subr.mxu0 0.0
    %5988 = vmatpush1.msra.mxu0 0.0
    %5989 = vmatprep.subr.mxu0 0.0
    %5990 = vmatpush1.msra.mxu0 0.0
    %5991 = vmatprep.subr.mxu0 0.0
    %5992 = vmatpush1.msra.mxu0 0.0
    %5993 = vmatprep.subr.mxu0 0.0
    %5994 = vmatpush1.msra.mxu0 0.0
    %5995 = vmatprep.subr.mxu0 0.0
    %5996 = vmatpush1.msra.mxu0 0.0
    %5997 = vmatprep.subr.mxu0 0.0
    %5998 = vmatpush1.msra.mxu0 0.0
    %5999 = vmatprep.subr.mxu0 0.0
    %6000 = vmatpush1.msra.mxu0 0.0
    %6001 = vmatprep.mubr.f32.mxu0 0.0
    %v6002 = vand.u32 %v3081, 4294901760
    %6003 = vmatmul.mubr.f32.gmra.mrb[0].mxu0 %v6002
    %v6004 = vpop.f32.mrb[0].mxu0
    %v6005 = vadd.f32 %v5929, %v6004
    %v6006 = vpop.f32.mrb[0].mxu0
    %6007 = vdwg.mxu0
    %6008 = vmatprep.subr.mxu0 0.0
    %v6009 = vand.u32 %v5855, 4294901760
    %v6010 = vsub.f32 %v5855, %v6009
    %6011 = vmatpush1.msra.mxu0 %v6010
    %6012 = vmatprep.subr.mxu0 0.0
    %6013 = vmatpush1.msra.mxu0 0.0
    %6014 = vmatprep.subr.mxu0 0.0
    %6015 = vmatpush1.msra.mxu0 0.0
    %6016 = vmatprep.subr.mxu0 0.0
    %6017 = vmatpush1.msra.mxu0 0.0
    %6018 = vmatprep.subr.mxu0 0.0
    %6019 = vmatpush1.msra.mxu0 0.0
    %6020 = vmatprep.subr.mxu0 0.0
    %6021 = vmatpush1.msra.mxu0 0.0
    %6022 = vmatprep.subr.mxu0 0.0
    %6023 = vmatpush1.msra.mxu0 0.0
    %6024 = vmatprep.subr.mxu0 0.0
    %6025 = vmatpush1.msra.mxu0 0.0
    %6026 = vmatprep.subr.mxu0 0.0
    %6027 = vmatpush1.msra.mxu0 0.0
    %6028 = vmatprep.subr.mxu0 0.0
    %6029 = vmatpush1.msra.mxu0 0.0
    %6030 = vmatprep.subr.mxu0 0.0
    %6031 = vmatpush1.msra.mxu0 0.0
    %6032 = vmatprep.subr.mxu0 0.0
    %6033 = vmatpush1.msra.mxu0 0.0
    %6034 = vmatprep.subr.mxu0 0.0
    %6035 = vmatpush1.msra.mxu0 0.0
    %6036 = vmatprep.subr.mxu0 0.0
    %6037 = vmatpush1.msra.mxu0 0.0
    %6038 = vmatprep.subr.mxu0 0.0
    %6039 = vmatpush1.msra.mxu0 0.0
    %6040 = vmatprep.subr.mxu0 0.0
    %6041 = vmatpush1.msra.mxu0 0.0
    %6042 = vmatprep.subr.mxu0 0.0
    %6043 = vmatpush1.msra.mxu0 0.0
    %6044 = vmatprep.subr.mxu0 0.0
    %6045 = vmatpush1.msra.mxu0 0.0
    %6046 = vmatprep.subr.mxu0 0.0
    %6047 = vmatpush1.msra.mxu0 0.0
    %6048 = vmatprep.subr.mxu0 0.0
    %6049 = vmatpush1.msra.mxu0 0.0
    %6050 = vmatprep.subr.mxu0 0.0
    %6051 = vmatpush1.msra.mxu0 0.0
    %6052 = vmatprep.subr.mxu0 0.0
    %6053 = vmatpush1.msra.mxu0 0.0
    %6054 = vmatprep.subr.mxu0 0.0
    %6055 = vmatpush1.msra.mxu0 0.0
    %6056 = vmatprep.subr.mxu0 0.0
    %6057 = vmatpush1.msra.mxu0 0.0
    %6058 = vmatprep.subr.mxu0 0.0
    %6059 = vmatpush1.msra.mxu0 0.0
    %6060 = vmatprep.subr.mxu0 0.0
    %6061 = vmatpush1.msra.mxu0 0.0
    %6062 = vmatprep.subr.mxu0 0.0
    %6063 = vmatpush1.msra.mxu0 0.0
    %6064 = vmatprep.subr.mxu0 0.0
    %6065 = vmatpush1.msra.mxu0 0.0
    %6066 = vmatprep.subr.mxu0 0.0
    %6067 = vmatpush1.msra.mxu0 0.0
    %6068 = vmatprep.subr.mxu0 0.0
    %6069 = vmatpush1.msra.mxu0 0.0
    %6070 = vmatprep.subr.mxu0 0.0
    %6071 = vmatpush1.msra.mxu0 0.0
    %6072 = vmatprep.subr.mxu0 0.0
    %6073 = vmatpush1.msra.mxu0 0.0
    %6074 = vmatprep.mubr.f32.mxu0 0.0
    %v6075 = vand.u32 %v3081, 4294901760
    %v6076 = vsub.f32 %v3081, %v6075
    %6077 = vmatmul.mubr.f32.gmra.mrb[0].mxu0 %v6076
    %v6078 = vpop.f32.mrb[0].mxu0
    %v6079 = vadd.f32 %v6005, %v6078
    %v6080 = vpop.f32.mrb[0].mxu0
    %6081 = vdwg.mxu0
    %6082 = vmatprep.subr.mxu0 0.0
    %v6083 = vand.u32 %v5855, 4294901760
    %6084 = vmatpush1.msra.mxu0 %v6083
    %6085 = vmatprep.subr.mxu0 0.0
    %6086 = vmatpush1.msra.mxu0 0.0
    %6087 = vmatprep.subr.mxu0 0.0
    %6088 = vmatpush1.msra.mxu0 0.0
    %6089 = vmatprep.subr.mxu0 0.0
    %6090 = vmatpush1.msra.mxu0 0.0
    %6091 = vmatprep.subr.mxu0 0.0
    %6092 = vmatpush1.msra.mxu0 0.0
    %6093 = vmatprep.subr.mxu0 0.0
    %6094 = vmatpush1.msra.mxu0 0.0
    %6095 = vmatprep.subr.mxu0 0.0
    %6096 = vmatpush1.msra.mxu0 0.0
    %6097 = vmatprep.subr.mxu0 0.0
    %6098 = vmatpush1.msra.mxu0 0.0
    %6099 = vmatprep.subr.mxu0 0.0
    %6100 = vmatpush1.msra.mxu0 0.0
    %6101 = vmatprep.subr.mxu0 0.0
    %6102 = vmatpush1.msra.mxu0 0.0
    %6103 = vmatprep.subr.mxu0 0.0
    %6104 = vmatpush1.msra.mxu0 0.0
    %6105 = vmatprep.subr.mxu0 0.0
    %6106 = vmatpush1.msra.mxu0 0.0
    %6107 = vmatprep.subr.mxu0 0.0
    %6108 = vmatpush1.msra.mxu0 0.0
    %6109 = vmatprep.subr.mxu0 0.0
    %6110 = vmatpush1.msra.mxu0 0.0
    %6111 = vmatprep.subr.mxu0 0.0
    %6112 = vmatpush1.msra.mxu0 0.0
    %6113 = vmatprep.subr.mxu0 0.0
    %6114 = vmatpush1.msra.mxu0 0.0
    %6115 = vmatprep.subr.mxu0 0.0
    %6116 = vmatpush1.msra.mxu0 0.0
    %6117 = vmatprep.subr.mxu0 0.0
    %6118 = vmatpush1.msra.mxu0 0.0
    %6119 = vmatprep.subr.mxu0 0.0
    %6120 = vmatpush1.msra.mxu0 0.0
    %6121 = vmatprep.subr.mxu0 0.0
    %6122 = vmatpush1.msra.mxu0 0.0
    %6123 = vmatprep.subr.mxu0 0.0
    %6124 = vmatpush1.msra.mxu0 0.0
    %6125 = vmatprep.subr.mxu0 0.0
    %6126 = vmatpush1.msra.mxu0 0.0
    %6127 = vmatprep.subr.mxu0 0.0
    %6128 = vmatpush1.msra.mxu0 0.0
    %6129 = vmatprep.subr.mxu0 0.0
    %6130 = vmatpush1.msra.mxu0 0.0
    %6131 = vmatprep.subr.mxu0 0.0
    %6132 = vmatpush1.msra.mxu0 0.0
    %6133 = vmatprep.subr.mxu0 0.0
    %6134 = vmatpush1.msra.mxu0 0.0
    %6135 = vmatprep.subr.mxu0 0.0
    %6136 = vmatpush1.msra.mxu0 0.0
    %6137 = vmatprep.subr.mxu0 0.0
    %6138 = vmatpush1.msra.mxu0 0.0
    %6139 = vmatprep.subr.mxu0 0.0
    %6140 = vmatpush1.msra.mxu0 0.0
    %6141 = vmatprep.subr.mxu0 0.0
    %6142 = vmatpush1.msra.mxu0 0.0
    %6143 = vmatprep.subr.mxu0 0.0
    %6144 = vmatpush1.msra.mxu0 0.0
    %6145 = vmatprep.subr.mxu0 0.0
    %6146 = vmatpush1.msra.mxu0 0.0
    %6147 = vmatprep.mubr.f32.mxu0 0.0
    %v6148 = vand.u32 %v3081, 4294901760
    %v6149 = vsub.f32 %v3081, %v6148
    %v6150 = vand.u32 %v6149, 4294901760
    %6151 = vmatmul.mubr.f32.gmra.mrb[0].mxu0 %v6150
    %v6152 = vpop.f32.mrb[0].mxu0
    %v6153 = vadd.f32 %v6079, %v6152
    %v6154 = vpop.f32.mrb[0].mxu0
    %6155 = vdwg.mxu0
    %6156 = vmatprep.subr.mxu0 0.0
    %v6157 = vand.u32 %v5855, 4294901760
    %v6158 = vsub.f32 %v5855, %v6157
    %v6159 = vand.u32 %v6158, 4294901760
    %6160 = vmatpush1.msra.mxu0 %v6159
    %6161 = vmatprep.subr.mxu0 0.0
    %6162 = vmatpush1.msra.mxu0 0.0
    %6163 = vmatprep.subr.mxu0 0.0
    %6164 = vmatpush1.msra.mxu0 0.0
    %6165 = vmatprep.subr.mxu0 0.0
    %6166 = vmatpush1.msra.mxu0 0.0
    %6167 = vmatprep.subr.mxu0 0.0
    %6168 = vmatpush1.msra.mxu0 0.0
    %6169 = vmatprep.subr.mxu0 0.0
    %6170 = vmatpush1.msra.mxu0 0.0
    %6171 = vmatprep.subr.mxu0 0.0
    %6172 = vmatpush1.msra.mxu0 0.0
    %6173 = vmatprep.subr.mxu0 0.0
    %6174 = vmatpush1.msra.mxu0 0.0
    %6175 = vmatprep.subr.mxu0 0.0
    %6176 = vmatpush1.msra.mxu0 0.0
    %6177 = vmatprep.subr.mxu0 0.0
    %6178 = vmatpush1.msra.mxu0 0.0
    %6179 = vmatprep.subr.mxu0 0.0
    %6180 = vmatpush1.msra.mxu0 0.0
    %6181 = vmatprep.subr.mxu0 0.0
    %6182 = vmatpush1.msra.mxu0 0.0
    %6183 = vmatprep.subr.mxu0 0.0
    %6184 = vmatpush1.msra.mxu0 0.0
    %6185 = vmatprep.subr.mxu0 0.0
    %6186 = vmatpush1.msra.mxu0 0.0
    %6187 = vmatprep.subr.mxu0 0.0
    %6188 = vmatpush1.msra.mxu0 0.0
    %6189 = vmatprep.subr.mxu0 0.0
    %6190 = vmatpush1.msra.mxu0 0.0
    %6191 = vmatprep.subr.mxu0 0.0
    %6192 = vmatpush1.msra.mxu0 0.0
    %6193 = vmatprep.subr.mxu0 0.0
    %6194 = vmatpush1.msra.mxu0 0.0
    %6195 = vmatprep.subr.mxu0 0.0
    %6196 = vmatpush1.msra.mxu0 0.0
    %6197 = vmatprep.subr.mxu0 0.0
    %6198 = vmatpush1.msra.mxu0 0.0
    %6199 = vmatprep.subr.mxu0 0.0
    %6200 = vmatpush1.msra.mxu0 0.0
    %6201 = vmatprep.subr.mxu0 0.0
    %6202 = vmatpush1.msra.mxu0 0.0
    %6203 = vmatprep.subr.mxu0 0.0
    %6204 = vmatpush1.msra.mxu0 0.0
    %6205 = vmatprep.subr.mxu0 0.0
    %6206 = vmatpush1.msra.mxu0 0.0
    %6207 = vmatprep.subr.mxu0 0.0
    %6208 = vmatpush1.msra.mxu0 0.0
    %6209 = vmatprep.subr.mxu0 0.0
    %6210 = vmatpush1.msra.mxu0 0.0
    %6211 = vmatprep.subr.mxu0 0.0
    %6212 = vmatpush1.msra.mxu0 0.0
    %6213 = vmatprep.subr.mxu0 0.0
    %6214 = vmatpush1.msra.mxu0 0.0
    %6215 = vmatprep.subr.mxu0 0.0
    %6216 = vmatpush1.msra.mxu0 0.0
    %6217 = vmatprep.subr.mxu0 0.0
    %6218 = vmatpush1.msra.mxu0 0.0
    %6219 = vmatprep.subr.mxu0 0.0
    %6220 = vmatpush1.msra.mxu0 0.0
    %6221 = vmatprep.subr.mxu0 0.0
    %6222 = vmatpush1.msra.mxu0 0.0
    %6223 = vmatprep.mubr.f32.mxu0 0.0
    %v6224 = vand.u32 %v3081, 4294901760
    %6225 = vmatmul.mubr.f32.gmra.mrb[0].mxu0 %v6224
    %v6226 = vpop.f32.mrb[0].mxu0
    %v6227 = vadd.f32 %v6153, %v6226
    %v6228 = vpop.f32.mrb[0].mxu0
    %6229 = vdwg.mxu0
    %6230 = vmatprep.subr.mxu0 0.0
    %v6231 = vand.u32 %v5855, 4294901760
    %6232 = vmatpush1.msra.mxu0 %v6231
    %6233 = vmatprep.subr.mxu0 0.0
    %6234 = vmatpush1.msra.mxu0 0.0
    %6235 = vmatprep.subr.mxu0 0.0
    %6236 = vmatpush1.msra.mxu0 0.0
    %6237 = vmatprep.subr.mxu0 0.0
    %6238 = vmatpush1.msra.mxu0 0.0
    %6239 = vmatprep.subr.mxu0 0.0
    %6240 = vmatpush1.msra.mxu0 0.0
    %6241 = vmatprep.subr.mxu0 0.0
    %6242 = vmatpush1.msra.mxu0 0.0
    %6243 = vmatprep.subr.mxu0 0.0
    %6244 = vmatpush1.msra.mxu0 0.0
    %6245 = vmatprep.subr.mxu0 0.0
    %6246 = vmatpush1.msra.mxu0 0.0
    %6247 = vmatprep.subr.mxu0 0.0
    %6248 = vmatpush1.msra.mxu0 0.0
    %6249 = vmatprep.subr.mxu0 0.0
    %6250 = vmatpush1.msra.mxu0 0.0
    %6251 = vmatprep.subr.mxu0 0.0
    %6252 = vmatpush1.msra.mxu0 0.0
    %6253 = vmatprep.subr.mxu0 0.0
    %6254 = vmatpush1.msra.mxu0 0.0
    %6255 = vmatprep.subr.mxu0 0.0
    %6256 = vmatpush1.msra.mxu0 0.0
    %6257 = vmatprep.subr.mxu0 0.0
    %6258 = vmatpush1.msra.mxu0 0.0
    %6259 = vmatprep.subr.mxu0 0.0
    %6260 = vmatpush1.msra.mxu0 0.0
    %6261 = vmatprep.subr.mxu0 0.0
    %6262 = vmatpush1.msra.mxu0 0.0
    %6263 = vmatprep.subr.mxu0 0.0
    %6264 = vmatpush1.msra.mxu0 0.0
    %6265 = vmatprep.subr.mxu0 0.0
    %6266 = vmatpush1.msra.mxu0 0.0
    %6267 = vmatprep.subr.mxu0 0.0
    %6268 = vmatpush1.msra.mxu0 0.0
    %6269 = vmatprep.subr.mxu0 0.0
    %6270 = vmatpush1.msra.mxu0 0.0
    %6271 = vmatprep.subr.mxu0 0.0
    %6272 = vmatpush1.msra.mxu0 0.0
    %6273 = vmatprep.subr.mxu0 0.0
    %6274 = vmatpush1.msra.mxu0 0.0
    %6275 = vmatprep.subr.mxu0 0.0
    %6276 = vmatpush1.msra.mxu0 0.0
    %6277 = vmatprep.subr.mxu0 0.0
    %6278 = vmatpush1.msra.mxu0 0.0
    %6279 = vmatprep.subr.mxu0 0.0
    %6280 = vmatpush1.msra.mxu0 0.0
    %6281 = vmatprep.subr.mxu0 0.0
    %6282 = vmatpush1.msra.mxu0 0.0
    %6283 = vmatprep.subr.mxu0 0.0
    %6284 = vmatpush1.msra.mxu0 0.0
    %6285 = vmatprep.subr.mxu0 0.0
    %6286 = vmatpush1.msra.mxu0 0.0
    %6287 = vmatprep.subr.mxu0 0.0
    %6288 = vmatpush1.msra.mxu0 0.0
    %6289 = vmatprep.subr.mxu0 0.0
    %6290 = vmatpush1.msra.mxu0 0.0
    %6291 = vmatprep.subr.mxu0 0.0
    %6292 = vmatpush1.msra.mxu0 0.0
    %6293 = vmatprep.subr.mxu0 0.0
    %6294 = vmatpush1.msra.mxu0 0.0
    %6295 = vmatprep.mubr.f32.mxu0 0.0
    %v6296 = vand.u32 %v3081, 4294901760
    %6297 = vmatmul.mubr.f32.gmra.mrb[0].mxu0 %v6296
    %v6298 = vpop.f32.mrb[0].mxu0
    %v6299 = vadd.f32 %v6227, %v6298
    %v6300 = vpop.f32.mrb[0].mxu0
    %6301 = vdwg.mxu0
    %6302 = vmatprep.subr.mxu0 0.0
    %v6303 = vand.u32 %v5855, 4294901760
    %6304 = vmatpush1.msra.mxu0 %v6303
    %6305 = vmatprep.subr.mxu0 0.0
    %6306 = vmatpush1.msra.mxu0 0.0
    %6307 = vmatprep.subr.mxu0 0.0
    %6308 = vmatpush1.msra.mxu0 0.0
    %6309 = vmatprep.subr.mxu0 0.0
    %6310 = vmatpush1.msra.mxu0 0.0
    %6311 = vmatprep.subr.mxu0 0.0
    %6312 = vmatpush1.msra.mxu0 0.0
    %6313 = vmatprep.subr.mxu0 0.0
    %6314 = vmatpush1.msra.mxu0 0.0
    %6315 = vmatprep.subr.mxu0 0.0
    %6316 = vmatpush1.msra.mxu0 0.0
    %6317 = vmatprep.subr.mxu0 0.0
    %6318 = vmatpush1.msra.mxu0 0.0
    %6319 = vmatprep.subr.mxu0 0.0
    %6320 = vmatpush1.msra.mxu0 0.0
    %6321 = vmatprep.subr.mxu0 0.0
    %6322 = vmatpush1.msra.mxu0 0.0
    %6323 = vmatprep.subr.mxu0 0.0
    %6324 = vmatpush1.msra.mxu0 0.0
    %6325 = vmatprep.subr.mxu0 0.0
    %6326 = vmatpush1.msra.mxu0 0.0
    %6327 = vmatprep.subr.mxu0 0.0
    %6328 = vmatpush1.msra.mxu0 0.0
    %6329 = vmatprep.subr.mxu0 0.0
    %6330 = vmatpush1.msra.mxu0 0.0
    %6331 = vmatprep.subr.mxu0 0.0
    %6332 = vmatpush1.msra.mxu0 0.0
    %6333 = vmatprep.subr.mxu0 0.0
    %6334 = vmatpush1.msra.mxu0 0.0
    %6335 = vmatprep.subr.mxu0 0.0
    %6336 = vmatpush1.msra.mxu0 0.0
    %6337 = vmatprep.subr.mxu0 0.0
    %6338 = vmatpush1.msra.mxu0 0.0
    %6339 = vmatprep.subr.mxu0 0.0
    %6340 = vmatpush1.msra.mxu0 0.0
    %6341 = vmatprep.subr.mxu0 0.0
    %6342 = vmatpush1.msra.mxu0 0.0
    %6343 = vmatprep.subr.mxu0 0.0
    %6344 = vmatpush1.msra.mxu0 0.0
    %6345 = vmatprep.subr.mxu0 0.0
    %6346 = vmatpush1.msra.mxu0 0.0
    %6347 = vmatprep.subr.mxu0 0.0
    %6348 = vmatpush1.msra.mxu0 0.0
    %6349 = vmatprep.subr.mxu0 0.0
    %6350 = vmatpush1.msra.mxu0 0.0
    %6351 = vmatprep.subr.mxu0 0.0
    %6352 = vmatpush1.msra.mxu0 0.0
    %6353 = vmatprep.subr.mxu0 0.0
    %6354 = vmatpush1.msra.mxu0 0.0
    %6355 = vmatprep.subr.mxu0 0.0
    %6356 = vmatpush1.msra.mxu0 0.0
    %6357 = vmatprep.subr.mxu0 0.0
    %6358 = vmatpush1.msra.mxu0 0.0
    %6359 = vmatprep.subr.mxu0 0.0
    %6360 = vmatpush1.msra.mxu0 0.0
    %6361 = vmatprep.subr.mxu0 0.0
    %6362 = vmatpush1.msra.mxu0 0.0
    %6363 = vmatprep.subr.mxu0 0.0
    %6364 = vmatpush1.msra.mxu0 0.0
    %6365 = vmatprep.subr.mxu0 0.0
    %6366 = vmatpush1.msra.mxu0 0.0
    %6367 = vmatprep.mubr.f32.mxu0 0.0
    %v6368 = vand.u32 %v3530, 4294901760
    %v6369 = vsub.f32 %v3530, %v6368
    %v6370 = vand.u32 %v6369, 4294901760
    %v6371 = vsub.f32 %v6369, %v6370
    %v6372 = vand.u32 %v6371, 4294901760
    %6373 = vmatmul.mubr.f32.gmra.mrb[0].mxu0 %v6372
    %v6374 = vpop.f32.mrb[0].mxu0
    %v6375 = vadd.f32 0.0, %v6374
    %v6376 = vpop.f32.mrb[0].mxu0
    %6377 = vdwg.mxu0
    %6378 = vmatprep.subr.mxu0 0.0
    %v6379 = vand.u32 %v5855, 4294901760
    %v6380 = vsub.f32 %v5855, %v6379
    %v6381 = vand.u32 %v6380, 4294901760
    %v6382 = vsub.f32 %v6380, %v6381
    %v6383 = vand.u32 %v6382, 4294901760
    %6384 = vmatpush1.msra.mxu0 %v6383
    %6385 = vmatprep.subr.mxu0 0.0
    %6386 = vmatpush1.msra.mxu0 0.0
    %6387 = vmatprep.subr.mxu0 0.0
    %6388 = vmatpush1.msra.mxu0 0.0
    %6389 = vmatprep.subr.mxu0 0.0
    %6390 = vmatpush1.msra.mxu0 0.0
    %6391 = vmatprep.subr.mxu0 0.0
    %6392 = vmatpush1.msra.mxu0 0.0
    %6393 = vmatprep.subr.mxu0 0.0
    %6394 = vmatpush1.msra.mxu0 0.0
    %6395 = vmatprep.subr.mxu0 0.0
    %6396 = vmatpush1.msra.mxu0 0.0
    %6397 = vmatprep.subr.mxu0 0.0
    %6398 = vmatpush1.msra.mxu0 0.0
    %6399 = vmatprep.subr.mxu0 0.0
    %6400 = vmatpush1.msra.mxu0 0.0
    %6401 = vmatprep.subr.mxu0 0.0
    %6402 = vmatpush1.msra.mxu0 0.0
    %6403 = vmatprep.subr.mxu0 0.0
    %6404 = vmatpush1.msra.mxu0 0.0
    %6405 = vmatprep.subr.mxu0 0.0
    %6406 = vmatpush1.msra.mxu0 0.0
    %6407 = vmatprep.subr.mxu0 0.0
    %6408 = vmatpush1.msra.mxu0 0.0
    %6409 = vmatprep.subr.mxu0 0.0
    %6410 = vmatpush1.msra.mxu0 0.0
    %6411 = vmatprep.subr.mxu0 0.0
    %6412 = vmatpush1.msra.mxu0 0.0
    %6413 = vmatprep.subr.mxu0 0.0
    %6414 = vmatpush1.msra.mxu0 0.0
    %6415 = vmatprep.subr.mxu0 0.0
    %6416 = vmatpush1.msra.mxu0 0.0
    %6417 = vmatprep.subr.mxu0 0.0
    %6418 = vmatpush1.msra.mxu0 0.0
    %6419 = vmatprep.subr.mxu0 0.0
    %6420 = vmatpush1.msra.mxu0 0.0
    %6421 = vmatprep.subr.mxu0 0.0
    %6422 = vmatpush1.msra.mxu0 0.0
    %6423 = vmatprep.subr.mxu0 0.0
    %6424 = vmatpush1.msra.mxu0 0.0
    %6425 = vmatprep.subr.mxu0 0.0
    %6426 = vmatpush1.msra.mxu0 0.0
    %6427 = vmatprep.subr.mxu0 0.0
    %6428 = vmatpush1.msra.mxu0 0.0
    %6429 = vmatprep.subr.mxu0 0.0
    %6430 = vmatpush1.msra.mxu0 0.0
    %6431 = vmatprep.subr.mxu0 0.0
    %6432 = vmatpush1.msra.mxu0 0.0
    %6433 = vmatprep.subr.mxu0 0.0
    %6434 = vmatpush1.msra.mxu0 0.0
    %6435 = vmatprep.subr.mxu0 0.0
    %6436 = vmatpush1.msra.mxu0 0.0
    %6437 = vmatprep.subr.mxu0 0.0
    %6438 = vmatpush1.msra.mxu0 0.0
    %6439 = vmatprep.subr.mxu0 0.0
    %6440 = vmatpush1.msra.mxu0 0.0
    %6441 = vmatprep.subr.mxu0 0.0
    %6442 = vmatpush1.msra.mxu0 0.0
    %6443 = vmatprep.subr.mxu0 0.0
    %6444 = vmatpush1.msra.mxu0 0.0
    %6445 = vmatprep.subr.mxu0 0.0
    %6446 = vmatpush1.msra.mxu0 0.0
    %6447 = vmatprep.mubr.f32.mxu0 0.0
    %v6448 = vand.u32 %v3530, 4294901760
    %6449 = vmatmul.mubr.f32.gmra.mrb[0].mxu0 %v6448
    %v6450 = vpop.f32.mrb[0].mxu0
    %v6451 = vadd.f32 %v6375, %v6450
    %v6452 = vpop.f32.mrb[0].mxu0
    %6453 = vdwg.mxu0
    %6454 = vmatprep.subr.mxu0 0.0
    %v6455 = vand.u32 %v5855, 4294901760
    %v6456 = vsub.f32 %v5855, %v6455
    %6457 = vmatpush1.msra.mxu0 %v6456
    %6458 = vmatprep.subr.mxu0 0.0
    %6459 = vmatpush1.msra.mxu0 0.0
    %6460 = vmatprep.subr.mxu0 0.0
    %6461 = vmatpush1.msra.mxu0 0.0
    %6462 = vmatprep.subr.mxu0 0.0
    %6463 = vmatpush1.msra.mxu0 0.0
    %6464 = vmatprep.subr.mxu0 0.0
    %6465 = vmatpush1.msra.mxu0 0.0
    %6466 = vmatprep.subr.mxu0 0.0
    %6467 = vmatpush1.msra.mxu0 0.0
    %6468 = vmatprep.subr.mxu0 0.0
    %6469 = vmatpush1.msra.mxu0 0.0
    %6470 = vmatprep.subr.mxu0 0.0
    %6471 = vmatpush1.msra.mxu0 0.0
    %6472 = vmatprep.subr.mxu0 0.0
    %6473 = vmatpush1.msra.mxu0 0.0
    %6474 = vmatprep.subr.mxu0 0.0
    %6475 = vmatpush1.msra.mxu0 0.0
    %6476 = vmatprep.subr.mxu0 0.0
    %6477 = vmatpush1.msra.mxu0 0.0
    %6478 = vmatprep.subr.mxu0 0.0
    %6479 = vmatpush1.msra.mxu0 0.0
    %6480 = vmatprep.subr.mxu0 0.0
    %6481 = vmatpush1.msra.mxu0 0.0
    %6482 = vmatprep.subr.mxu0 0.0
    %6483 = vmatpush1.msra.mxu0 0.0
    %6484 = vmatprep.subr.mxu0 0.0
    %6485 = vmatpush1.msra.mxu0 0.0
    %6486 = vmatprep.subr.mxu0 0.0
    %6487 = vmatpush1.msra.mxu0 0.0
    %6488 = vmatprep.subr.mxu0 0.0
    %6489 = vmatpush1.msra.mxu0 0.0
    %6490 = vmatprep.subr.mxu0 0.0
    %6491 = vmatpush1.msra.mxu0 0.0
    %6492 = vmatprep.subr.mxu0 0.0
    %6493 = vmatpush1.msra.mxu0 0.0
    %6494 = vmatprep.subr.mxu0 0.0
    %6495 = vmatpush1.msra.mxu0 0.0
    %6496 = vmatprep.subr.mxu0 0.0
    %6497 = vmatpush1.msra.mxu0 0.0
    %6498 = vmatprep.subr.mxu0 0.0
    %6499 = vmatpush1.msra.mxu0 0.0
    %6500 = vmatprep.subr.mxu0 0.0
    %6501 = vmatpush1.msra.mxu0 0.0
    %6502 = vmatprep.subr.mxu0 0.0
    %6503 = vmatpush1.msra.mxu0 0.0
    %6504 = vmatprep.subr.mxu0 0.0
    %6505 = vmatpush1.msra.mxu0 0.0
    %6506 = vmatprep.subr.mxu0 0.0
    %6507 = vmatpush1.msra.mxu0 0.0
    %6508 = vmatprep.subr.mxu0 0.0
    %6509 = vmatpush1.msra.mxu0 0.0
    %6510 = vmatprep.subr.mxu0 0.0
    %6511 = vmatpush1.msra.mxu0 0.0
    %6512 = vmatprep.subr.mxu0 0.0
    %6513 = vmatpush1.msra.mxu0 0.0
    %6514 = vmatprep.subr.mxu0 0.0
    %6515 = vmatpush1.msra.mxu0 0.0
    %6516 = vmatprep.subr.mxu0 0.0
    %6517 = vmatpush1.msra.mxu0 0.0
    %6518 = vmatprep.subr.mxu0 0.0
    %6519 = vmatpush1.msra.mxu0 0.0
    %6520 = vmatprep.mubr.f32.mxu0 0.0
    %v6521 = vand.u32 %v3530, 4294901760
    %v6522 = vsub.f32 %v3530, %v6521
    %6523 = vmatmul.mubr.f32.gmra.mrb[0].mxu0 %v6522
    %v6524 = vpop.f32.mrb[0].mxu0
    %v6525 = vadd.f32 %v6451, %v6524
    %v6526 = vpop.f32.mrb[0].mxu0
    %6527 = vdwg.mxu0
    %6528 = vmatprep.subr.mxu0 0.0
    %v6529 = vand.u32 %v5855, 4294901760
    %6530 = vmatpush1.msra.mxu0 %v6529
    %6531 = vmatprep.subr.mxu0 0.0
    %6532 = vmatpush1.msra.mxu0 0.0
    %6533 = vmatprep.subr.mxu0 0.0
    %6534 = vmatpush1.msra.mxu0 0.0
    %6535 = vmatprep.subr.mxu0 0.0
    %6536 = vmatpush1.msra.mxu0 0.0
    %6537 = vmatprep.subr.mxu0 0.0
    %6538 = vmatpush1.msra.mxu0 0.0
    %6539 = vmatprep.subr.mxu0 0.0
    %6540 = vmatpush1.msra.mxu0 0.0
    %6541 = vmatprep.subr.mxu0 0.0
    %6542 = vmatpush1.msra.mxu0 0.0
    %6543 = vmatprep.subr.mxu0 0.0
    %6544 = vmatpush1.msra.mxu0 0.0
    %6545 = vmatprep.subr.mxu0 0.0
    %6546 = vmatpush1.msra.mxu0 0.0
    %6547 = vmatprep.subr.mxu0 0.0
    %6548 = vmatpush1.msra.mxu0 0.0
    %6549 = vmatprep.subr.mxu0 0.0
    %6550 = vmatpush1.msra.mxu0 0.0
    %6551 = vmatprep.subr.mxu0 0.0
    %6552 = vmatpush1.msra.mxu0 0.0
    %6553 = vmatprep.subr.mxu0 0.0
    %6554 = vmatpush1.msra.mxu0 0.0
    %6555 = vmatprep.subr.mxu0 0.0
    %6556 = vmatpush1.msra.mxu0 0.0
    %6557 = vmatprep.subr.mxu0 0.0
    %6558 = vmatpush1.msra.mxu0 0.0
    %6559 = vmatprep.subr.mxu0 0.0
    %6560 = vmatpush1.msra.mxu0 0.0
    %6561 = vmatprep.subr.mxu0 0.0
    %6562 = vmatpush1.msra.mxu0 0.0
    %6563 = vmatprep.subr.mxu0 0.0
    %6564 = vmatpush1.msra.mxu0 0.0
    %6565 = vmatprep.subr.mxu0 0.0
    %6566 = vmatpush1.msra.mxu0 0.0
    %6567 = vmatprep.subr.mxu0 0.0
    %6568 = vmatpush1.msra.mxu0 0.0
    %6569 = vmatprep.subr.mxu0 0.0
    %6570 = vmatpush1.msra.mxu0 0.0
    %6571 = vmatprep.subr.mxu0 0.0
    %6572 = vmatpush1.msra.mxu0 0.0
    %6573 = vmatprep.subr.mxu0 0.0
    %6574 = vmatpush1.msra.mxu0 0.0
    %6575 = vmatprep.subr.mxu0 0.0
    %6576 = vmatpush1.msra.mxu0 0.0
    %6577 = vmatprep.subr.mxu0 0.0
    %6578 = vmatpush1.msra.mxu0 0.0
    %6579 = vmatprep.subr.mxu0 0.0
    %6580 = vmatpush1.msra.mxu0 0.0
    %6581 = vmatprep.subr.mxu0 0.0
    %6582 = vmatpush1.msra.mxu0 0.0
    %6583 = vmatprep.subr.mxu0 0.0
    %6584 = vmatpush1.msra.mxu0 0.0
    %6585 = vmatprep.subr.mxu0 0.0
    %6586 = vmatpush1.msra.mxu0 0.0
    %6587 = vmatprep.subr.mxu0 0.0
    %6588 = vmatpush1.msra.mxu0 0.0
    %6589 = vmatprep.subr.mxu0 0.0
    %6590 = vmatpush1.msra.mxu0 0.0
    %6591 = vmatprep.subr.mxu0 0.0
    %6592 = vmatpush1.msra.mxu0 0.0
    %6593 = vmatprep.mubr.f32.mxu0 0.0
    %v6594 = vand.u32 %v3530, 4294901760
    %v6595 = vsub.f32 %v3530, %v6594
    %v6596 = vand.u32 %v6595, 4294901760
    %6597 = vmatmul.mubr.f32.gmra.mrb[0].mxu0 %v6596
    %v6598 = vpop.f32.mrb[0].mxu0
    %v6599 = vadd.f32 %v6525, %v6598
    %v6600 = vpop.f32.mrb[0].mxu0
    %6601 = vdwg.mxu0
    %6602 = vmatprep.subr.mxu0 0.0
    %v6603 = vand.u32 %v5855, 4294901760
    %v6604 = vsub.f32 %v5855, %v6603
    %v6605 = vand.u32 %v6604, 4294901760
    %6606 = vmatpush1.msra.mxu0 %v6605
    %6607 = vmatprep.subr.mxu0 0.0
    %6608 = vmatpush1.msra.mxu0 0.0
    %6609 = vmatprep.subr.mxu0 0.0
    %6610 = vmatpush1.msra.mxu0 0.0
    %6611 = vmatprep.subr.mxu0 0.0
    %6612 = vmatpush1.msra.mxu0 0.0
    %6613 = vmatprep.subr.mxu0 0.0
    %6614 = vmatpush1.msra.mxu0 0.0
    %6615 = vmatprep.subr.mxu0 0.0
    %6616 = vmatpush1.msra.mxu0 0.0
    %6617 = vmatprep.subr.mxu0 0.0
    %6618 = vmatpush1.msra.mxu0 0.0
    %6619 = vmatprep.subr.mxu0 0.0
    %6620 = vmatpush1.msra.mxu0 0.0
    %6621 = vmatprep.subr.mxu0 0.0
    %6622 = vmatpush1.msra.mxu0 0.0
    %6623 = vmatprep.subr.mxu0 0.0
    %6624 = vmatpush1.msra.mxu0 0.0
    %6625 = vmatprep.subr.mxu0 0.0
    %6626 = vmatpush1.msra.mxu0 0.0
    %6627 = vmatprep.subr.mxu0 0.0
    %6628 = vmatpush1.msra.mxu0 0.0
    %6629 = vmatprep.subr.mxu0 0.0
    %6630 = vmatpush1.msra.mxu0 0.0
    %6631 = vmatprep.subr.mxu0 0.0
    %6632 = vmatpush1.msra.mxu0 0.0
    %6633 = vmatprep.subr.mxu0 0.0
    %6634 = vmatpush1.msra.mxu0 0.0
    %6635 = vmatprep.subr.mxu0 0.0
    %6636 = vmatpush1.msra.mxu0 0.0
    %6637 = vmatprep.subr.mxu0 0.0
    %6638 = vmatpush1.msra.mxu0 0.0
    %6639 = vmatprep.subr.mxu0 0.0
    %6640 = vmatpush1.msra.mxu0 0.0
    %6641 = vmatprep.subr.mxu0 0.0
    %6642 = vmatpush1.msra.mxu0 0.0
    %6643 = vmatprep.subr.mxu0 0.0
    %6644 = vmatpush1.msra.mxu0 0.0
    %6645 = vmatprep.subr.mxu0 0.0
    %6646 = vmatpush1.msra.mxu0 0.0
    %6647 = vmatprep.subr.mxu0 0.0
    %6648 = vmatpush1.msra.mxu0 0.0
    %6649 = vmatprep.subr.mxu0 0.0
    %6650 = vmatpush1.msra.mxu0 0.0
    %6651 = vmatprep.subr.mxu0 0.0
    %6652 = vmatpush1.msra.mxu0 0.0
    %6653 = vmatprep.subr.mxu0 0.0
    %6654 = vmatpush1.msra.mxu0 0.0
    %6655 = vmatprep.subr.mxu0 0.0
    %6656 = vmatpush1.msra.mxu0 0.0
    %6657 = vmatprep.subr.mxu0 0.0
    %6658 = vmatpush1.msra.mxu0 0.0
    %6659 = vmatprep.subr.mxu0 0.0
    %6660 = vmatpush1.msra.mxu0 0.0
    %6661 = vmatprep.subr.mxu0 0.0
    %6662 = vmatpush1.msra.mxu0 0.0
    %6663 = vmatprep.subr.mxu0 0.0
    %6664 = vmatpush1.msra.mxu0 0.0
    %6665 = vmatprep.subr.mxu0 0.0
    %6666 = vmatpush1.msra.mxu0 0.0
    %6667 = vmatprep.subr.mxu0 0.0
    %6668 = vmatpush1.msra.mxu0 0.0
    %6669 = vmatprep.mubr.f32.mxu0 0.0
    %v6670 = vand.u32 %v3530, 4294901760
    %6671 = vmatmul.mubr.f32.gmra.mrb[0].mxu0 %v6670
    %v6672 = vpop.f32.mrb[0].mxu0
    %v6673 = vadd.f32 %v6599, %v6672
    %v6674 = vpop.f32.mrb[0].mxu0
    %6675 = vdwg.mxu0
    %6676 = vmatprep.subr.mxu0 0.0
    %v6677 = vand.u32 %v5855, 4294901760
    %6678 = vmatpush1.msra.mxu0 %v6677
    %6679 = vmatprep.subr.mxu0 0.0
    %6680 = vmatpush1.msra.mxu0 0.0
    %6681 = vmatprep.subr.mxu0 0.0
    %6682 = vmatpush1.msra.mxu0 0.0
    %6683 = vmatprep.subr.mxu0 0.0
    %6684 = vmatpush1.msra.mxu0 0.0
    %6685 = vmatprep.subr.mxu0 0.0
    %6686 = vmatpush1.msra.mxu0 0.0
    %6687 = vmatprep.subr.mxu0 0.0
    %6688 = vmatpush1.msra.mxu0 0.0
    %6689 = vmatprep.subr.mxu0 0.0
    %6690 = vmatpush1.msra.mxu0 0.0
    %6691 = vmatprep.subr.mxu0 0.0
    %6692 = vmatpush1.msra.mxu0 0.0
    %6693 = vmatprep.subr.mxu0 0.0
    %6694 = vmatpush1.msra.mxu0 0.0
    %6695 = vmatprep.subr.mxu0 0.0
    %6696 = vmatpush1.msra.mxu0 0.0
    %6697 = vmatprep.subr.mxu0 0.0
    %6698 = vmatpush1.msra.mxu0 0.0
    %6699 = vmatprep.subr.mxu0 0.0
    %6700 = vmatpush1.msra.mxu0 0.0
    %6701 = vmatprep.subr.mxu0 0.0
    %6702 = vmatpush1.msra.mxu0 0.0
    %6703 = vmatprep.subr.mxu0 0.0
    %6704 = vmatpush1.msra.mxu0 0.0
    %6705 = vmatprep.subr.mxu0 0.0
    %6706 = vmatpush1.msra.mxu0 0.0
    %6707 = vmatprep.subr.mxu0 0.0
    %6708 = vmatpush1.msra.mxu0 0.0
    %6709 = vmatprep.subr.mxu0 0.0
    %6710 = vmatpush1.msra.mxu0 0.0
    %6711 = vmatprep.subr.mxu0 0.0
    %6712 = vmatpush1.msra.mxu0 0.0
    %6713 = vmatprep.subr.mxu0 0.0
    %6714 = vmatpush1.msra.mxu0 0.0
    %6715 = vmatprep.subr.mxu0 0.0
    %6716 = vmatpush1.msra.mxu0 0.0
    %6717 = vmatprep.subr.mxu0 0.0
    %6718 = vmatpush1.msra.mxu0 0.0
    %6719 = vmatprep.subr.mxu0 0.0
    %6720 = vmatpush1.msra.mxu0 0.0
    %6721 = vmatprep.subr.mxu0 0.0
    %6722 = vmatpush1.msra.mxu0 0.0
    %6723 = vmatprep.subr.mxu0 0.0
    %6724 = vmatpush1.msra.mxu0 0.0
    %6725 = vmatprep.subr.mxu0 0.0
    %6726 = vmatpush1.msra.mxu0 0.0
    %6727 = vmatprep.subr.mxu0 0.0
    %6728 = vmatpush1.msra.mxu0 0.0
    %6729 = vmatprep.subr.mxu0 0.0
    %6730 = vmatpush1.msra.mxu0 0.0
    %6731 = vmatprep.subr.mxu0 0.0
    %6732 = vmatpush1.msra.mxu0 0.0
    %6733 = vmatprep.subr.mxu0 0.0
    %6734 = vmatpush1.msra.mxu0 0.0
    %6735 = vmatprep.subr.mxu0 0.0
    %6736 = vmatpush1.msra.mxu0 0.0
    %6737 = vmatprep.subr.mxu0 0.0
    %6738 = vmatpush1.msra.mxu0 0.0
    %6739 = vmatprep.subr.mxu0 0.0
    %6740 = vmatpush1.msra.mxu0 0.0
    %6741 = vmatprep.mubr.f32.mxu0 0.0
    %v6742 = vand.u32 %v3530, 4294901760
    %6743 = vmatmul.mubr.f32.gmra.mrb[0].mxu0 %v6742
    %v6744 = vpop.f32.mrb[0].mxu0
    %v6745 = vadd.f32 %v6673, %v6744
    %v6746 = vpop.f32.mrb[0].mxu0
    %6747 = vdwg.mxu0
    %v6748 = vsel %vm3064, 0.0, %v6745
    %v6749 = vadd.f32 %v6299, 1e-06
    %v6750 = vadd.f32 %v6748, 1e-06
    %v6751 = vmul.f32 %v6749, %v6749
    %v6752 = vmul.f32 %v6750, %v6750
    %v6753 = vadd.f32 %v6751, %v6752
    %v6754 = vrsqrt.pop %v6753
    %v6755 = vmul.f32 %v6753, %v6754
    %vm6756 = vcmp.eq.f32.partialorder %v6753, inf
    %v6757 = vsel %vm6756, %v6753, %v6755
    %vm6758 = vcmp.eq.f32.partialorder %v6753, 0.0
    %v6759 = vand.u32 %v6753, 2147483648
    %v6760 = vsel %vm6758, %v6759, %v6757
    %s6761 = scalar_lea.vmem %s10, 8
    %6762 = vst.msk [vmem:[%s6761] sm:$0x1f] %vm3991, %v6760
    %s6763 = scalar_lea.vmem %s11, 8
    %6764 = vst.msk [vmem:[%s6763] sm:$0x1f] %vm3991, %v6299
    %s6765 = scalar_lea.vmem %s12, 8
    %6766 = vst.msk [vmem:[%s6765] sm:$0x1f] %vm3991, %v6748
    // Predicated region
    $region26: #{mff_ft_forward.2} parent=1 // pred_check
      _
    $region27: #{mff_ft_forward.2} parent=1 // pred_check_branch
      %6768 = sbr.rel (0) target = $region29
    $region28: #{mff_ft_forward.2} parent=1 // pred_region
      %s6770 = ssub.s32 16, 16
      %6771 = vsyncadd [#allocation3], %s6770
      %s6773 = sshll.u32 [#allocation2], 4
      %s6774 = int_to_ptr.vmem [resolvable:$true] %s6773
      %6776 = dma.vmem_to_hbm [thread:$0]  %s6774, 16, %s6, [#allocation3]
    $region29: #{mff_ft_forward.2} parent=1 // pred_fallthru
      _
    // Predicated region
    $region30: #{mff_ft_forward.2} parent=1 // pred_check
      _
    $region31: #{mff_ft_forward.2} parent=1 // pred_check_branch
      %6778 = sbr.rel (0) target = $region33
    $region32: #{mff_ft_forward.2} parent=1 // pred_region
      _
    $region33: #{mff_ft_forward.2} parent=1 // pred_fallthru
      _
    // Predicated region
    $region34: #{mff_ft_forward.2} parent=1 // pred_check
      _
    $region35: #{mff_ft_forward.2} parent=1 // pred_check_branch
      %6780 = sbr.rel (0) target = $region37
    $region36: #{mff_ft_forward.2} parent=1 // pred_region
      _
    $region37: #{mff_ft_forward.2} parent=1 // pred_fallthru
      _
    // Predicated region
    $region38: #{mff_ft_forward.2} parent=1 // pred_check
      _
    $region39: #{mff_ft_forward.2} parent=1 // pred_check_branch
      %6782 = sbr.rel (0) target = $region41
    $region40: #{mff_ft_forward.2} parent=1 // pred_region
      _
    $region41: #{mff_ft_forward.2} parent=1 // pred_fallthru
      _
    // Predicated region
    $region42: #{mff_ft_forward.2} parent=1 // pred_check
      _
    $region43: #{mff_ft_forward.2} parent=1 // pred_check_branch
      %6784 = sbr.rel (0) target = $region45
    $region44: #{mff_ft_forward.2} parent=1 // pred_region
      _
    $region45: #{mff_ft_forward.2} parent=1 // pred_fallthru
      _
    // Predicated region
    $region46: #{mff_ft_forward.2} parent=1 // pred_check
      _
    $region47: #{mff_ft_forward.2} parent=1 // pred_check_branch
      %6786 = sbr.rel (0) target = $region49
    $region48: #{mff_ft_forward.2} parent=1 // pred_region
      _
    $region49: #{mff_ft_forward.2} parent=1 // pred_fallthru
      _
    // Predicated region
    $region50: #{mff_ft_forward.2} parent=1 // pred_check
      _
    $region51: #{mff_ft_forward.2} parent=1 // pred_check_branch
      %6788 = sbr.rel (0) target = $region53
    $region52: #{mff_ft_forward.2} parent=1 // pred_region
      _
    $region53: #{mff_ft_forward.2} parent=1 // pred_fallthru
      _
    // Predicated region
    $region54: #{mff_ft_forward.2} parent=1 // pred_check
      _
    $region55: #{mff_ft_forward.2} parent=1 // pred_check_branch
      %6790 = sbr.rel (0) target = $region57
    $region56: #{mff_ft_forward.2} parent=1 // pred_region
      %6791 = dma.done [#allocation3], 16
    $region57: #{mff_ft_forward.2} parent=1 // pred_fallthru
      _
    // Predicated region
    $region58: #{mff_ft_forward.2} parent=1 // pred_check
      _
    $region59: #{mff_ft_forward.2} parent=1 // pred_check_branch
      %6793 = sbr.rel (0) target = $region61
    $region60: #{mff_ft_forward.2} parent=1 // pred_region
      _
    $region61: #{mff_ft_forward.2} parent=1 // pred_fallthru
      _
    // Predicated region
    $region62: #{mff_ft_forward.2} parent=1 // pred_check
      _
    $region63: #{mff_ft_forward.2} parent=1 // pred_check_branch
      %6795 = sbr.rel (0) target = $region65
    $region64: #{mff_ft_forward.2} parent=1 // pred_region
      _
    $region65: #{mff_ft_forward.2} parent=1 // pred_fallthru
      _
    // Predicated region
    $region66: #{mff_ft_forward.2} parent=1 // pred_check
      _
    $region67: #{mff_ft_forward.2} parent=1 // pred_check_branch
      %6797 = sbr.rel (0) target = $region69
    $region68: #{mff_ft_forward.2} parent=1 // pred_region
      _
    $region69: #{mff_ft_forward.2} parent=1 // pred_fallthru
      _
    // Predicated region
    $region70: #{mff_ft_forward.2} parent=1 // pred_check
      _
    $region71: #{mff_ft_forward.2} parent=1 // pred_check_branch
      %6799 = sbr.rel (0) target = $region73
    $region72: #{mff_ft_forward.2} parent=1 // pred_region
      _
    $region73: #{mff_ft_forward.2} parent=1 // pred_fallthru
      _
    // Predicated region
    $region74: #{mff_ft_forward.2} parent=1 // pred_check
      _
    $region75: #{mff_ft_forward.2} parent=1 // pred_check_branch
      %6801 = sbr.rel (0) target = $region77
    $region76: #{mff_ft_forward.2} parent=1 // pred_region
      _
    $region77: #{mff_ft_forward.2} parent=1 // pred_fallthru
      _
    // Predicated region
    $region78: #{mff_ft_forward.2} parent=1 // pred_check
      _
    $region79: #{mff_ft_forward.2} parent=1 // pred_check_branch
      %6803 = sbr.rel (0) target = $region81
    $region80: #{mff_ft_forward.2} parent=1 // pred_region
      _
    $region81: #{mff_ft_forward.2} parent=1 // pred_fallthru
      _
    %6804 = vsyncpa [#allocation3], 1

</llo_original>
